<compile_context>
chip_gen: v5e
topology: v5e:2x2
jax: 0.10.0
libtpu: 0.0.40
codegen_flags: <defaults>
</compile_context>

<pallas_src>
import jax
import jax.numpy as jnp
from jax.experimental import pallas as pl
from jax.experimental.pallas import tpu as pltpu

LATENT_DIM = 4
LATENT_LENGTH = 2
POSE_LENGTH = 1
NUM_LAYERS = 9                                   # number of 512->512 hidden blocks
HIDDEN = 512
MID = 32
OUT = 7 * POSE_LENGTH
OUT_PAD = 128                                    # lane-dense padded output width
IN_FEATURES = LATENT_LENGTH * LATENT_DIM ** 2    # 2 * 16 = 32
BN_EPS = 1e-5

BATCH_TILE = 256                                 # rows per grid step (large-B path)
GRIDLESS_MAX_ROWS = 256                          # <= this -> monolithic call


def _round_up(n, m):
    return ((n + m - 1) // m) * m


# ----------------------------------------------------------------------------
# Kernel (shared by the grid-less and the batch-grid paths)
# ----------------------------------------------------------------------------

def pose_mlp_kernel(x_ref,
                    w_in_ref, b_in_ref,
                    w_hid_ref, s_hid_ref, b_hid_ref,
                    w_mid_ref, b_mid_ref,
                    w_out_ref, b_out_ref,
                    o_ref):
    """Whole MLP: 12 matmuls (bf16 MXU operands, f32 accum) + bias + ReLU.

    Hidden weights arrive as int8; they are widened to bf16 on the VPU and the
    per-output-channel dequant scale is folded into the f32 epilogue.
    """
    h = x_ref[...]                                                   # (B, 32) f32

    # Linear(32 -> 512) [BN folded] + ReLU
    h = jnp.dot(h.astype(jnp.bfloat16), w_in_ref[...],
                preferred_element_type=jnp.float32)
    h = jnp.maximum(h + b_in_ref[...], 0.0)                          # (B, 512)

    # 9 x [Linear(512 -> 512) [BN folded, int8 weights] + ReLU] (static unroll)
    for i in range(NUM_LAYERS):
        w = w_hid_ref[i].astype(jnp.bfloat16)                        # int8 -> bf16 (VPU)
        acc = jnp.dot(h.astype(jnp.bfloat16), w,
                      preferred_element_type=jnp.float32)            # (B, 512) f32
        h = jnp.maximum(acc * s_hid_ref[i] + b_hid_ref[i], 0.0)

    # Linear(512 -> 32) [BN folded] + ReLU
    h = jnp.dot(h.astype(jnp.bfloat16), w_mid_ref[...],
                preferred_element_type=jnp.float32)
    h = jnp.maximum(h + b_mid_ref[...], 0.0)                         # (B, 32)

    # Final Linear(32 -> 7), zero-padded to 128 lanes. No BN / no ReLU.
    o = jnp.dot(h.astype(jnp.bfloat16), w_out_ref[...],
                preferred_element_type=jnp.float32)
    o_ref[...] = o + b_out_ref[...]                                  # (B, 128)


# ----------------------------------------------------------------------------
# Parameter construction (PyTorch-default init), BN folding, int8 quantization
# ----------------------------------------------------------------------------

def _linear_init(key, fan_in, fan_out):
    """PyTorch nn.Linear default init: U(-1/sqrt(fan_in), 1/sqrt(fan_in))."""
    kw, kb = jax.random.split(key)
    bound = 1.0 / jnp.sqrt(jnp.float32(fan_in))
    # Stored as (in, out) so the kernel computes x @ W (== x @ W_pt^T).
    w = jax.random.uniform(kw, (fan_in, fan_out), jnp.float32, -bound, bound)
    b = jax.random.uniform(kb, (1, fan_out), jnp.float32, -bound, bound)
    return w, b


def _bn_scale_shift(key, num_features):
    """Eval-mode BatchNorm1d folded into per-feature scale/shift."""
    kg, kb, km, kv = jax.random.split(key, 4)
    gamma = jax.random.uniform(kg, (1, num_features), jnp.float32, 0.5, 1.5)
    beta = 0.1 * jax.random.normal(kb, (1, num_features), jnp.float32)
    mean = 0.1 * jax.random.normal(km, (1, num_features), jnp.float32)
    var = jax.random.uniform(kv, (1, num_features), jnp.float32, 0.5, 1.5)
    scale = gamma / jnp.sqrt(var + BN_EPS)
    shift = beta - mean * scale
    return scale, shift


def make_params(seed=0):
    """Raw (un-folded, f32) parameters matching the PyTorch module."""
    key = jax.random.PRNGKey(seed)
    keys = jax.random.split(key, 2 * (NUM_LAYERS + 3))
    ki = iter(keys)

    w_in, b_in = _linear_init(next(ki), IN_FEATURES, HIDDEN)
    s_in, t_in = _bn_scale_shift(next(ki), HIDDEN)

    w_hid, b_hid, s_hid, t_hid = [], [], [], []
    for _ in range(NUM_LAYERS):
        w, b = _linear_init(next(ki), HIDDEN, HIDDEN)
        s, t = _bn_scale_shift(next(ki), HIDDEN)
        w_hid.append(w); b_hid.append(b); s_hid.append(s); t_hid.append(t)
    w_hid = jnp.stack(w_hid)            # (9, 512, 512)
    b_hid = jnp.stack(b_hid)            # (9, 1, 512)
    s_hid = jnp.stack(s_hid)            # (9, 1, 512)
    t_hid = jnp.stack(t_hid)            # (9, 1, 512)

    w_mid, b_mid = _linear_init(next(ki), HIDDEN, MID)
    s_mid, t_mid = _bn_scale_shift(next(ki), MID)

    w_out, b_out = _linear_init(next(ki), MID, OUT)

    return dict(w_in=w_in, b_in=b_in, s_in=s_in, t_in=t_in,
                w_hid=w_hid, b_hid=b_hid, s_hid=s_hid, t_hid=t_hid,
                w_mid=w_mid, b_mid=b_mid, s_mid=s_mid, t_mid=t_mid,
                w_out=w_out, b_out=b_out)


def fold_params(raw):
    """Fold eval-mode BN into the preceding Linear, then quantize the hidden
    (512x512) weights to int8 with per-output-channel dequant scales:

        y = relu((x @ W + b)*s + t)
          = relu(x @ (W*s) + (b*s + t))
          = relu((x @ Wq_bf16) * q + b')      with Wq = round((W*s)/q), q per column

    Small layers stay bf16; biases/scales stay f32.  Final layer is padded
    7 -> OUT_PAD for lane-dense stores."""
    w_in = (raw["w_in"] * raw["s_in"]).astype(jnp.bfloat16)             # (32, 512)
    b_in = raw["b_in"] * raw["s_in"] + raw["t_in"]                      # (1, 512) f32

    w_hid_f = raw["w_hid"] * raw["s_hid"]                               # (9, 512, 512) f32
    absmax = jnp.max(jnp.abs(w_hid_f), axis=1, keepdims=True)           # (9, 1, 512)
    s_hid_q = jnp.maximum(absmax, 1e-12) / 127.0                        # dequant scale, f32
    w_hid_q = jnp.clip(jnp.round(w_hid_f / s_hid_q),
                       -127.0, 127.0).astype(jnp.int8)                  # (9, 512, 512) int8
    b_hid = raw["b_hid"] * raw["s_hid"] + raw["t_hid"]                  # (9, 1, 512) f32

    w_mid = (raw["w_mid"] * raw["s_mid"]).astype(jnp.bfloat16)          # (512, 32)
    b_mid = raw["b_mid"] * raw["s_mid"] + raw["t_mid"]                  # (1, 32) f32

    # Final layer has no BN; zero-pad 7 -> OUT_PAD for lane-dense stores.
    w_out = jnp.zeros((MID, OUT_PAD), jnp.float32).at[:, :OUT].set(raw["w_out"])
    b_out = jnp.zeros((1, OUT_PAD), jnp.float32).at[:, :OUT].set(raw["b_out"])
    w_out = w_out.astype(jnp.bfloat16)

    return dict(w_in=w_in, b_in=b_in,
                w_hid=w_hid_q, s_hid=s_hid_q, b_hid=b_hid,
                w_mid=w_mid, b_mid=b_mid, w_out=w_out, b_out=b_out)


# ----------------------------------------------------------------------------
# Wrapper
# ----------------------------------------------------------------------------

def _weight_args(folded):
    return (folded["w_in"], folded["b_in"],
            folded["w_hid"], folded["s_hid"], folded["b_hid"],
            folded["w_mid"], folded["b_mid"],
            folded["w_out"], folded["b_out"])


def pose_mlp_forward(x, folded):
    """x: (B, latent_length, latent_dim, latent_dim) float32, NCHW-style."""
    B = x.shape[0]
    x_flat = x.reshape(B, -1).astype(jnp.float32)   # nn.Flatten(), row-major
    assert x_flat.shape[1] == IN_FEATURES

    if B <= GRIDLESS_MAX_ROWS:
        # ---- small batch: grid-less call, everything resident in VMEM ----
        # Pad batch to a multiple of 16 (bf16 sublane tile); padded rows are
        # zeros and are sliced off below.
        Bp = _round_up(B, 16)
        if Bp != B:
            x_flat = jnp.pad(x_flat, ((0, Bp - B), (0, 0)))

        args = (x_flat,) + _weight_args(folded)
        vmem = pl.BlockSpec(memory_space=pltpu.MemorySpace.VMEM)
        out_padded = pl.pallas_call(
            pose_mlp_kernel,
            out_shape=jax.ShapeDtypeStruct((Bp, OUT_PAD), jnp.float32),
            in_specs=[vmem] * len(args),
            out_specs=vmem,
        )(*args)
        return out_padded[:B, :OUT]

    # ---- large batch: 1-D batch grid, weights resident (constant index_map) ----
    Bp = _round_up(B, BATCH_TILE)
    if Bp != B:
        x_flat = jnp.pad(x_flat, ((0, Bp - B), (0, 0)))
    grid = (Bp // BATCH_TILE,)

    in_specs = [
        pl.BlockSpec((BATCH_TILE, IN_FEATURES), lambda i: (i, 0)),          # x
        pl.BlockSpec((IN_FEATURES, HIDDEN), lambda i: (0, 0)),              # w_in
        pl.BlockSpec((1, HIDDEN), lambda i: (0, 0)),                        # b_in
        pl.BlockSpec((NUM_LAYERS, HIDDEN, HIDDEN), lambda i: (0, 0, 0)),    # w_hid (int8)
        pl.BlockSpec((NUM_LAYERS, 1, HIDDEN), lambda i: (0, 0, 0)),         # s_hid
        pl.BlockSpec((NUM_LAYERS, 1, HIDDEN), lambda i: (0, 0, 0)),         # b_hid
        pl.BlockSpec((HIDDEN, MID), lambda i: (0, 0)),                      # w_mid
        pl.BlockSpec((1, MID), lambda i: (0, 0)),                           # b_mid
        pl.BlockSpec((MID, OUT_PAD), lambda i: (0, 0)),                     # w_out
        pl.BlockSpec((1, OUT_PAD), lambda i: (0, 0)),                       # b_out
    ]
    out_specs = pl.BlockSpec((BATCH_TILE, OUT_PAD), lambda i: (i, 0))

    args = (x_flat,) + _weight_args(folded)
    out_padded = pl.pallas_call(
        pose_mlp_kernel,
        out_shape=jax.ShapeDtypeStruct((Bp, OUT_PAD), jnp.float32),
        grid=grid,
        in_specs=in_specs,
        out_specs=out_specs,
        compiler_params=pltpu.CompilerParams(
            dimension_semantics=("parallel",)),
    )(*args)
    return out_padded[:B, :OUT]


def pose_mlp_reference(x, folded):
    """Pure-JAX reference of the same (BN-folded, int8/bf16-quantized) forward."""
    B = x.shape[0]
    h = x.reshape(B, -1).astype(jnp.float32)
    h = jnp.dot(h.astype(jnp.bfloat16), folded["w_in"],
                preferred_element_type=jnp.float32)
    h = jnp.maximum(h + folded["b_in"], 0.0)
    for i in range(NUM_LAYERS):
        w = folded["w_hid"][i].astype(jnp.bfloat16)
        acc = jnp.dot(h.astype(jnp.bfloat16), w,
                      preferred_element_type=jnp.float32)
        h = jnp.maximum(acc * folded["s_hid"][i] + folded["b_hid"][i], 0.0)
    h = jnp.dot(h.astype(jnp.bfloat16), folded["w_mid"],
                preferred_element_type=jnp.float32)
    h = jnp.maximum(h + folded["b_mid"], 0.0)
    o = jnp.dot(h.astype(jnp.bfloat16), folded["w_out"],
                preferred_element_type=jnp.float32)
    return (o + folded["b_out"])[:, :OUT]


if __name__ == "__main__":
    key = jax.random.PRNGKey(0)
    k_small, k_large = jax.random.split(key)

    raw = make_params(seed=1)
    folded = fold_params(raw)

    # --- small batch: grid-less path ---
    B_small = 8
    x_small = jax.random.normal(
        k_small, (B_small, LATENT_LENGTH, LATENT_DIM, LATENT_DIM), jnp.float32)
    out_small = jax.block_until_ready(pose_mlp_forward(x_small, folded))
    assert out_small.shape == (B_small, OUT), out_small.shape
    ref_small = jax.block_until_ready(pose_mlp_reference(x_small, folded))
    err_small = float(jnp.max(jnp.abs(out_small - ref_small)))
    assert jnp.allclose(out_small, ref_small, atol=5e-3, rtol=5e-3), err_small

    # --- larger batch: 1-D batch-grid path (exercises padding + resident weights) ---
    B_large = 300
    x_large = jax.random.normal(
        k_large, (B_large, LATENT_LENGTH, LATENT_DIM, LATENT_DIM), jnp.float32)
    out_large = jax.block_until_ready(pose_mlp_forward(x_large, folded))
    assert out_large.shape == (B_large, OUT), out_large.shape
    ref_large = jax.block_until_ready(pose_mlp_reference(x_large, folded))
    err_large = float(jnp.max(jnp.abs(out_large - ref_large)))
    assert jnp.allclose(out_large, ref_large, atol=5e-3, rtol=5e-3), err_large

    print("KERNEL_OK")
</pallas_src>

<mosaic_0001>
module attributes {stable_mosaic.version = 11 : i64} {
  func.func @pose_mlp_kernel(%arg0: memref<16x32xf32, #tpu.memory_space<vmem>>, %arg1: memref<32x512xbf16, #tpu.memory_space<vmem>>, %arg2: memref<1x512xf32, #tpu.memory_space<vmem>>, %arg3: memref<9x512x512xi8, #tpu.memory_space<vmem>>, %arg4: memref<9x1x512xf32, #tpu.memory_space<vmem>>, %arg5: memref<9x1x512xf32, #tpu.memory_space<vmem>>, %arg6: memref<512x32xbf16, #tpu.memory_space<vmem>>, %arg7: memref<1x32xf32, #tpu.memory_space<vmem>>, %arg8: memref<32x128xbf16, #tpu.memory_space<vmem>>, %arg9: memref<1x128xf32, #tpu.memory_space<vmem>>, %arg10: memref<16x128xf32, #tpu.memory_space<vmem>>) attributes {dimension_semantics = [], scalar_prefetch = 0 : i64, scratch_operands = 0 : i64, tpu.core_type = #tpu.core_type<tc>} {
    %c0 = arith.constant 0 : index
    %c0_0 = arith.constant 0 : index
    %0 = vector.load %arg0[%c0, %c0_0] : memref<16x32xf32, #tpu.memory_space<vmem>>, vector<16x32xf32>
    %1 = arith.truncf %0 : vector<16x32xf32> to vector<16x32xbf16>
    %c0_1 = arith.constant 0 : index
    %c0_2 = arith.constant 0 : index
    %2 = vector.load %arg1[%c0_1, %c0_2] : memref<32x512xbf16, #tpu.memory_space<vmem>>, vector<32x512xbf16>
    %cst = arith.constant dense<0.000000e+00> : vector<16x512xf32>
    %3 = tpu.matmul %1, %2, %cst {dimension_numbers = #tpu.dot_dimension_numbers<[1], [0], [0], [1], [0, 0, 1, 1], [], []>} : vector<16x32xbf16>, vector<32x512xbf16>, vector<16x512xf32> -> vector<16x512xf32>
    %c0_3 = arith.constant 0 : index
    %c0_4 = arith.constant 0 : index
    %4 = vector.load %arg2[%c0_3, %c0_4] : memref<1x512xf32, #tpu.memory_space<vmem>>, vector<1x512xf32>
    %5 = vector.broadcast %4 : vector<1x512xf32> to vector<16x512xf32>
    %6 = arith.addf %3, %5 : vector<16x512xf32>
    %cst_5 = arith.constant 0.000000e+00 : f32
    %7 = vector.broadcast %cst_5 : f32 to vector<16x512xf32>
    %8 = arith.maximumf %6, %7 : vector<16x512xf32>
    %c0_6 = arith.constant 0 : index
    %c0_7 = arith.constant 0 : index
    %c0_8 = arith.constant 0 : index
    %9 = vector.load %arg3[%c0_6, %c0_7, %c0_8] : memref<9x512x512xi8, #tpu.memory_space<vmem>>, vector<1x512x512xi8>
    %10 = vector.shape_cast %9 : vector<1x512x512xi8> to vector<512x512xi8>
    %11 = arith.sitofp %10 : vector<512x512xi8> to vector<512x512xbf16>
    %12 = arith.truncf %8 : vector<16x512xf32> to vector<16x512xbf16>
    %cst_9 = arith.constant dense<0.000000e+00> : vector<16x512xf32>
    %13 = tpu.matmul %12, %11, %cst_9 {dimension_numbers = #tpu.dot_dimension_numbers<[1], [0], [0], [1], [0, 0, 1, 1], [], []>} : vector<16x512xbf16>, vector<512x512xbf16>, vector<16x512xf32> -> vector<16x512xf32>
    %c0_10 = arith.constant 0 : index
    %c0_11 = arith.constant 0 : index
    %c0_12 = arith.constant 0 : index
    %14 = vector.load %arg4[%c0_10, %c0_11, %c0_12] : memref<9x1x512xf32, #tpu.memory_space<vmem>>, vector<1x1x512xf32>
    %15 = vector.shape_cast %14 : vector<1x1x512xf32> to vector<1x512xf32>
    %16 = vector.broadcast %15 : vector<1x512xf32> to vector<16x512xf32>
    %17 = arith.mulf %13, %16 : vector<16x512xf32>
    %c0_13 = arith.constant 0 : index
    %c0_14 = arith.constant 0 : index
    %c0_15 = arith.constant 0 : index
    %18 = vector.load %arg5[%c0_13, %c0_14, %c0_15] : memref<9x1x512xf32, #tpu.memory_space<vmem>>, vector<1x1x512xf32>
    %19 = vector.shape_cast %18 : vector<1x1x512xf32> to vector<1x512xf32>
    %20 = vector.broadcast %19 : vector<1x512xf32> to vector<16x512xf32>
    %21 = arith.addf %17, %20 : vector<16x512xf32>
    %cst_16 = arith.constant 0.000000e+00 : f32
    %22 = vector.broadcast %cst_16 : f32 to vector<16x512xf32>
    %23 = arith.maximumf %21, %22 : vector<16x512xf32>
    %c1 = arith.constant 1 : index
    %c0_17 = arith.constant 0 : index
    %c0_18 = arith.constant 0 : index
    %24 = vector.load %arg3[%c1, %c0_17, %c0_18] : memref<9x512x512xi8, #tpu.memory_space<vmem>>, vector<1x512x512xi8>
    %25 = vector.shape_cast %24 : vector<1x512x512xi8> to vector<512x512xi8>
    %26 = arith.sitofp %25 : vector<512x512xi8> to vector<512x512xbf16>
    %27 = arith.truncf %23 : vector<16x512xf32> to vector<16x512xbf16>
    %cst_19 = arith.constant dense<0.000000e+00> : vector<16x512xf32>
    %28 = tpu.matmul %27, %26, %cst_19 {dimension_numbers = #tpu.dot_dimension_numbers<[1], [0], [0], [1], [0, 0, 1, 1], [], []>} : vector<16x512xbf16>, vector<512x512xbf16>, vector<16x512xf32> -> vector<16x512xf32>
    %c1_20 = arith.constant 1 : index
    %c0_21 = arith.constant 0 : index
    %c0_22 = arith.constant 0 : index
    %29 = vector.load %arg4[%c1_20, %c0_21, %c0_22] : memref<9x1x512xf32, #tpu.memory_space<vmem>>, vector<1x1x512xf32>
    %30 = vector.shape_cast %29 : vector<1x1x512xf32> to vector<1x512xf32>
    %31 = vector.broadcast %30 : vector<1x512xf32> to vector<16x512xf32>
    %32 = arith.mulf %28, %31 : vector<16x512xf32>
    %c1_23 = arith.constant 1 : index
    %c0_24 = arith.constant 0 : index
    %c0_25 = arith.constant 0 : index
    %33 = vector.load %arg5[%c1_23, %c0_24, %c0_25] : memref<9x1x512xf32, #tpu.memory_space<vmem>>, vector<1x1x512xf32>
    %34 = vector.shape_cast %33 : vector<1x1x512xf32> to vector<1x512xf32>
    %35 = vector.broadcast %34 : vector<1x512xf32> to vector<16x512xf32>
    %36 = arith.addf %32, %35 : vector<16x512xf32>
    %cst_26 = arith.constant 0.000000e+00 : f32
    %37 = vector.broadcast %cst_26 : f32 to vector<16x512xf32>
    %38 = arith.maximumf %36, %37 : vector<16x512xf32>
    %c2 = arith.constant 2 : index
    %c0_27 = arith.constant 0 : index
    %c0_28 = arith.constant 0 : index
    %39 = vector.load %arg3[%c2, %c0_27, %c0_28] : memref<9x512x512xi8, #tpu.memory_space<vmem>>, vector<1x512x512xi8>
    %40 = vector.shape_cast %39 : vector<1x512x512xi8> to vector<512x512xi8>
    %41 = arith.sitofp %40 : vector<512x512xi8> to vector<512x512xbf16>
    %42 = arith.truncf %38 : vector<16x512xf32> to vector<16x512xbf16>
    %cst_29 = arith.constant dense<0.000000e+00> : vector<16x512xf32>
    %43 = tpu.matmul %42, %41, %cst_29 {dimension_numbers = #tpu.dot_dimension_numbers<[1], [0], [0], [1], [0, 0, 1, 1], [], []>} : vector<16x512xbf16>, vector<512x512xbf16>, vector<16x512xf32> -> vector<16x512xf32>
    %c2_30 = arith.constant 2 : index
    %c0_31 = arith.constant 0 : index
    %c0_32 = arith.constant 0 : index
    %44 = vector.load %arg4[%c2_30, %c0_31, %c0_32] : memref<9x1x512xf32, #tpu.memory_space<vmem>>, vector<1x1x512xf32>
    %45 = vector.shape_cast %44 : vector<1x1x512xf32> to vector<1x512xf32>
    %46 = vector.broadcast %45 : vector<1x512xf32> to vector<16x512xf32>
    %47 = arith.mulf %43, %46 : vector<16x512xf32>
    %c2_33 = arith.constant 2 : index
    %c0_34 = arith.constant 0 : index
    %c0_35 = arith.constant 0 : index
    %48 = vector.load %arg5[%c2_33, %c0_34, %c0_35] : memref<9x1x512xf32, #tpu.memory_space<vmem>>, vector<1x1x512xf32>
    %49 = vector.shape_cast %48 : vector<1x1x512xf32> to vector<1x512xf32>
    %50 = vector.broadcast %49 : vector<1x512xf32> to vector<16x512xf32>
    %51 = arith.addf %47, %50 : vector<16x512xf32>
    %cst_36 = arith.constant 0.000000e+00 : f32
    %52 = vector.broadcast %cst_36 : f32 to vector<16x512xf32>
    %53 = arith.maximumf %51, %52 : vector<16x512xf32>
    %c3 = arith.constant 3 : index
    %c0_37 = arith.constant 0 : index
    %c0_38 = arith.constant 0 : index
    %54 = vector.load %arg3[%c3, %c0_37, %c0_38] : memref<9x512x512xi8, #tpu.memory_space<vmem>>, vector<1x512x512xi8>
    %55 = vector.shape_cast %54 : vector<1x512x512xi8> to vector<512x512xi8>
    %56 = arith.sitofp %55 : vector<512x512xi8> to vector<512x512xbf16>
    %57 = arith.truncf %53 : vector<16x512xf32> to vector<16x512xbf16>
    %cst_39 = arith.constant dense<0.000000e+00> : vector<16x512xf32>
    %58 = tpu.matmul %57, %56, %cst_39 {dimension_numbers = #tpu.dot_dimension_numbers<[1], [0], [0], [1], [0, 0, 1, 1], [], []>} : vector<16x512xbf16>, vector<512x512xbf16>, vector<16x512xf32> -> vector<16x512xf32>
    %c3_40 = arith.constant 3 : index
    %c0_41 = arith.constant 0 : index
    %c0_42 = arith.constant 0 : index
    %59 = vector.load %arg4[%c3_40, %c0_41, %c0_42] : memref<9x1x512xf32, #tpu.memory_space<vmem>>, vector<1x1x512xf32>
    %60 = vector.shape_cast %59 : vector<1x1x512xf32> to vector<1x512xf32>
    %61 = vector.broadcast %60 : vector<1x512xf32> to vector<16x512xf32>
    %62 = arith.mulf %58, %61 : vector<16x512xf32>
    %c3_43 = arith.constant 3 : index
    %c0_44 = arith.constant 0 : index
    %c0_45 = arith.constant 0 : index
    %63 = vector.load %arg5[%c3_43, %c0_44, %c0_45] : memref<9x1x512xf32, #tpu.memory_space<vmem>>, vector<1x1x512xf32>
    %64 = vector.shape_cast %63 : vector<1x1x512xf32> to vector<1x512xf32>
    %65 = vector.broadcast %64 : vector<1x512xf32> to vector<16x512xf32>
    %66 = arith.addf %62, %65 : vector<16x512xf32>
    %cst_46 = arith.constant 0.000000e+00 : f32
    %67 = vector.broadcast %cst_46 : f32 to vector<16x512xf32>
    %68 = arith.maximumf %66, %67 : vector<16x512xf32>
    %c4 = arith.constant 4 : index
    %c0_47 = arith.constant 0 : index
    %c0_48 = arith.constant 0 : index
    %69 = vector.load %arg3[%c4, %c0_47, %c0_48] : memref<9x512x512xi8, #tpu.memory_space<vmem>>, vector<1x512x512xi8>
    %70 = vector.shape_cast %69 : vector<1x512x512xi8> to vector<512x512xi8>
    %71 = arith.sitofp %70 : vector<512x512xi8> to vector<512x512xbf16>
    %72 = arith.truncf %68 : vector<16x512xf32> to vector<16x512xbf16>
    %cst_49 = arith.constant dense<0.000000e+00> : vector<16x512xf32>
    %73 = tpu.matmul %72, %71, %cst_49 {dimension_numbers = #tpu.dot_dimension_numbers<[1], [0], [0], [1], [0, 0, 1, 1], [], []>} : vector<16x512xbf16>, vector<512x512xbf16>, vector<16x512xf32> -> vector<16x512xf32>
    %c4_50 = arith.constant 4 : index
    %c0_51 = arith.constant 0 : index
    %c0_52 = arith.constant 0 : index
    %74 = vector.load %arg4[%c4_50, %c0_51, %c0_52] : memref<9x1x512xf32, #tpu.memory_space<vmem>>, vector<1x1x512xf32>
    %75 = vector.shape_cast %74 : vector<1x1x512xf32> to vector<1x512xf32>
    %76 = vector.broadcast %75 : vector<1x512xf32> to vector<16x512xf32>
    %77 = arith.mulf %73, %76 : vector<16x512xf32>
    %c4_53 = arith.constant 4 : index
    %c0_54 = arith.constant 0 : index
    %c0_55 = arith.constant 0 : index
    %78 = vector.load %arg5[%c4_53, %c0_54, %c0_55] : memref<9x1x512xf32, #tpu.memory_space<vmem>>, vector<1x1x512xf32>
    %79 = vector.shape_cast %78 : vector<1x1x512xf32> to vector<1x512xf32>
    %80 = vector.broadcast %79 : vector<1x512xf32> to vector<16x512xf32>
    %81 = arith.addf %77, %80 : vector<16x512xf32>
    %cst_56 = arith.constant 0.000000e+00 : f32
    %82 = vector.broadcast %cst_56 : f32 to vector<16x512xf32>
    %83 = arith.maximumf %81, %82 : vector<16x512xf32>
    %c5 = arith.constant 5 : index
    %c0_57 = arith.constant 0 : index
    %c0_58 = arith.constant 0 : index
    %84 = vector.load %arg3[%c5, %c0_57, %c0_58] : memref<9x512x512xi8, #tpu.memory_space<vmem>>, vector<1x512x512xi8>
    %85 = vector.shape_cast %84 : vector<1x512x512xi8> to vector<512x512xi8>
    %86 = arith.sitofp %85 : vector<512x512xi8> to vector<512x512xbf16>
    %87 = arith.truncf %83 : vector<16x512xf32> to vector<16x512xbf16>
    %cst_59 = arith.constant dense<0.000000e+00> : vector<16x512xf32>
    %88 = tpu.matmul %87, %86, %cst_59 {dimension_numbers = #tpu.dot_dimension_numbers<[1], [0], [0], [1], [0, 0, 1, 1], [], []>} : vector<16x512xbf16>, vector<512x512xbf16>, vector<16x512xf32> -> vector<16x512xf32>
    %c5_60 = arith.constant 5 : index
    %c0_61 = arith.constant 0 : index
    %c0_62 = arith.constant 0 : index
    %89 = vector.load %arg4[%c5_60, %c0_61, %c0_62] : memref<9x1x512xf32, #tpu.memory_space<vmem>>, vector<1x1x512xf32>
    %90 = vector.shape_cast %89 : vector<1x1x512xf32> to vector<1x512xf32>
    %91 = vector.broadcast %90 : vector<1x512xf32> to vector<16x512xf32>
    %92 = arith.mulf %88, %91 : vector<16x512xf32>
    %c5_63 = arith.constant 5 : index
    %c0_64 = arith.constant 0 : index
    %c0_65 = arith.constant 0 : index
    %93 = vector.load %arg5[%c5_63, %c0_64, %c0_65] : memref<9x1x512xf32, #tpu.memory_space<vmem>>, vector<1x1x512xf32>
    %94 = vector.shape_cast %93 : vector<1x1x512xf32> to vector<1x512xf32>
    %95 = vector.broadcast %94 : vector<1x512xf32> to vector<16x512xf32>
    %96 = arith.addf %92, %95 : vector<16x512xf32>
    %cst_66 = arith.constant 0.000000e+00 : f32
    %97 = vector.broadcast %cst_66 : f32 to vector<16x512xf32>
    %98 = arith.maximumf %96, %97 : vector<16x512xf32>
    %c6 = arith.constant 6 : index
    %c0_67 = arith.constant 0 : index
    %c0_68 = arith.constant 0 : index
    %99 = vector.load %arg3[%c6, %c0_67, %c0_68] : memref<9x512x512xi8, #tpu.memory_space<vmem>>, vector<1x512x512xi8>
    %100 = vector.shape_cast %99 : vector<1x512x512xi8> to vector<512x512xi8>
    %101 = arith.sitofp %100 : vector<512x512xi8> to vector<512x512xbf16>
    %102 = arith.truncf %98 : vector<16x512xf32> to vector<16x512xbf16>
    %cst_69 = arith.constant dense<0.000000e+00> : vector<16x512xf32>
    %103 = tpu.matmul %102, %101, %cst_69 {dimension_numbers = #tpu.dot_dimension_numbers<[1], [0], [0], [1], [0, 0, 1, 1], [], []>} : vector<16x512xbf16>, vector<512x512xbf16>, vector<16x512xf32> -> vector<16x512xf32>
    %c6_70 = arith.constant 6 : index
    %c0_71 = arith.constant 0 : index
    %c0_72 = arith.constant 0 : index
    %104 = vector.load %arg4[%c6_70, %c0_71, %c0_72] : memref<9x1x512xf32, #tpu.memory_space<vmem>>, vector<1x1x512xf32>
    %105 = vector.shape_cast %104 : vector<1x1x512xf32> to vector<1x512xf32>
    %106 = vector.broadcast %105 : vector<1x512xf32> to vector<16x512xf32>
    %107 = arith.mulf %103, %106 : vector<16x512xf32>
    %c6_73 = arith.constant 6 : index
    %c0_74 = arith.constant 0 : index
    %c0_75 = arith.constant 0 : index
    %108 = vector.load %arg5[%c6_73, %c0_74, %c0_75] : memref<9x1x512xf32, #tpu.memory_space<vmem>>, vector<1x1x512xf32>
    %109 = vector.shape_cast %108 : vector<1x1x512xf32> to vector<1x512xf32>
    %110 = vector.broadcast %109 : vector<1x512xf32> to vector<16x512xf32>
    %111 = arith.addf %107, %110 : vector<16x512xf32>
    %cst_76 = arith.constant 0.000000e+00 : f32
    %112 = vector.broadcast %cst_76 : f32 to vector<16x512xf32>
    %113 = arith.maximumf %111, %112 : vector<16x512xf32>
    %c7 = arith.constant 7 : index
    %c0_77 = arith.constant 0 : index
    %c0_78 = arith.constant 0 : index
    %114 = vector.load %arg3[%c7, %c0_77, %c0_78] : memref<9x512x512xi8, #tpu.memory_space<vmem>>, vector<1x512x512xi8>
    %115 = vector.shape_cast %114 : vector<1x512x512xi8> to vector<512x512xi8>
    %116 = arith.sitofp %115 : vector<512x512xi8> to vector<512x512xbf16>
    %117 = arith.truncf %113 : vector<16x512xf32> to vector<16x512xbf16>
    %cst_79 = arith.constant dense<0.000000e+00> : vector<16x512xf32>
    %118 = tpu.matmul %117, %116, %cst_79 {dimension_numbers = #tpu.dot_dimension_numbers<[1], [0], [0], [1], [0, 0, 1, 1], [], []>} : vector<16x512xbf16>, vector<512x512xbf16>, vector<16x512xf32> -> vector<16x512xf32>
    %c7_80 = arith.constant 7 : index
    %c0_81 = arith.constant 0 : index
    %c0_82 = arith.constant 0 : index
    %119 = vector.load %arg4[%c7_80, %c0_81, %c0_82] : memref<9x1x512xf32, #tpu.memory_space<vmem>>, vector<1x1x512xf32>
    %120 = vector.shape_cast %119 : vector<1x1x512xf32> to vector<1x512xf32>
    %121 = vector.broadcast %120 : vector<1x512xf32> to vector<16x512xf32>
    %122 = arith.mulf %118, %121 : vector<16x512xf32>
    %c7_83 = arith.constant 7 : index
    %c0_84 = arith.constant 0 : index
    %c0_85 = arith.constant 0 : index
    %123 = vector.load %arg5[%c7_83, %c0_84, %c0_85] : memref<9x1x512xf32, #tpu.memory_space<vmem>>, vector<1x1x512xf32>
    %124 = vector.shape_cast %123 : vector<1x1x512xf32> to vector<1x512xf32>
    %125 = vector.broadcast %124 : vector<1x512xf32> to vector<16x512xf32>
    %126 = arith.addf %122, %125 : vector<16x512xf32>
    %cst_86 = arith.constant 0.000000e+00 : f32
    %127 = vector.broadcast %cst_86 : f32 to vector<16x512xf32>
    %128 = arith.maximumf %126, %127 : vector<16x512xf32>
    %c8 = arith.constant 8 : index
    %c0_87 = arith.constant 0 : index
    %c0_88 = arith.constant 0 : index
    %129 = vector.load %arg3[%c8, %c0_87, %c0_88] : memref<9x512x512xi8, #tpu.memory_space<vmem>>, vector<1x512x512xi8>
    %130 = vector.shape_cast %129 : vector<1x512x512xi8> to vector<512x512xi8>
    %131 = arith.sitofp %130 : vector<512x512xi8> to vector<512x512xbf16>
    %132 = arith.truncf %128 : vector<16x512xf32> to vector<16x512xbf16>
    %cst_89 = arith.constant dense<0.000000e+00> : vector<16x512xf32>
    %133 = tpu.matmul %132, %131, %cst_89 {dimension_numbers = #tpu.dot_dimension_numbers<[1], [0], [0], [1], [0, 0, 1, 1], [], []>} : vector<16x512xbf16>, vector<512x512xbf16>, vector<16x512xf32> -> vector<16x512xf32>
    %c8_90 = arith.constant 8 : index
    %c0_91 = arith.constant 0 : index
    %c0_92 = arith.constant 0 : index
    %134 = vector.load %arg4[%c8_90, %c0_91, %c0_92] : memref<9x1x512xf32, #tpu.memory_space<vmem>>, vector<1x1x512xf32>
    %135 = vector.shape_cast %134 : vector<1x1x512xf32> to vector<1x512xf32>
    %136 = vector.broadcast %135 : vector<1x512xf32> to vector<16x512xf32>
    %137 = arith.mulf %133, %136 : vector<16x512xf32>
    %c8_93 = arith.constant 8 : index
    %c0_94 = arith.constant 0 : index
    %c0_95 = arith.constant 0 : index
    %138 = vector.load %arg5[%c8_93, %c0_94, %c0_95] : memref<9x1x512xf32, #tpu.memory_space<vmem>>, vector<1x1x512xf32>
    %139 = vector.shape_cast %138 : vector<1x1x512xf32> to vector<1x512xf32>
    %140 = vector.broadcast %139 : vector<1x512xf32> to vector<16x512xf32>
    %141 = arith.addf %137, %140 : vector<16x512xf32>
    %cst_96 = arith.constant 0.000000e+00 : f32
    %142 = vector.broadcast %cst_96 : f32 to vector<16x512xf32>
    %143 = arith.maximumf %141, %142 : vector<16x512xf32>
    %144 = arith.truncf %143 : vector<16x512xf32> to vector<16x512xbf16>
    %c0_97 = arith.constant 0 : index
    %c0_98 = arith.constant 0 : index
    %145 = vector.load %arg6[%c0_97, %c0_98] : memref<512x32xbf16, #tpu.memory_space<vmem>>, vector<512x32xbf16>
    %cst_99 = arith.constant dense<0.000000e+00> : vector<16x32xf32>
    %146 = tpu.matmul %144, %145, %cst_99 {dimension_numbers = #tpu.dot_dimension_numbers<[1], [0], [0], [1], [0, 0, 1, 1], [], []>} : vector<16x512xbf16>, vector<512x32xbf16>, vector<16x32xf32> -> vector<16x32xf32>
    %c0_100 = arith.constant 0 : index
    %c0_101 = arith.constant 0 : index
    %147 = vector.load %arg7[%c0_100, %c0_101] : memref<1x32xf32, #tpu.memory_space<vmem>>, vector<1x32xf32>
    %148 = vector.broadcast %147 : vector<1x32xf32> to vector<16x32xf32>
    %149 = arith.addf %146, %148 : vector<16x32xf32>
    %cst_102 = arith.constant 0.000000e+00 : f32
    %150 = vector.broadcast %cst_102 : f32 to vector<16x32xf32>
    %151 = arith.maximumf %149, %150 : vector<16x32xf32>
    %152 = arith.truncf %151 : vector<16x32xf32> to vector<16x32xbf16>
    %c0_103 = arith.constant 0 : index
    %c0_104 = arith.constant 0 : index
    %153 = vector.load %arg8[%c0_103, %c0_104] : memref<32x128xbf16, #tpu.memory_space<vmem>>, vector<32x128xbf16>
    %cst_105 = arith.constant dense<0.000000e+00> : vector<16x128xf32>
    %154 = tpu.matmul %152, %153, %cst_105 {dimension_numbers = #tpu.dot_dimension_numbers<[1], [0], [0], [1], [0, 0, 1, 1], [], []>} : vector<16x32xbf16>, vector<32x128xbf16>, vector<16x128xf32> -> vector<16x128xf32>
    %c0_106 = arith.constant 0 : index
    %c0_107 = arith.constant 0 : index
    %155 = vector.load %arg9[%c0_106, %c0_107] : memref<1x128xf32, #tpu.memory_space<vmem>>, vector<1x128xf32>
    %156 = vector.broadcast %155 : vector<1x128xf32> to vector<16x128xf32>
    %157 = arith.addf %154, %156 : vector<16x128xf32>
    %c0_108 = arith.constant 0 : index
    %c0_109 = arith.constant 0 : index
    %158 = vector.load %arg10[%c0_108, %c0_109] : memref<16x128xf32, #tpu.memory_space<vmem>>, vector<16x128xf32>
    tpu.vector_store %arg10[%c0_108, %c0_109], %157 {strides = array<i32>} : memref<16x128xf32, #tpu.memory_space<vmem>>, vector<16x128xf32>,
    return
  }
}

</mosaic_0001>

<llo_original>
// kernel: tpu_custom_call.1
$region0: #{tpu_custom_call.1}
  #allocation0 [shape = 'u32[]', space=smem, size = 0x4, offset = 0x4, fixed_abs, tag = 'smem constant byte address 0x4 - core index']
  #allocation1 [shape = 'u32[72,128]{1,0:T(1,128)}', space=vmem, size = 0x9000, scoped, tag = 'internal scratch']
  %s0 = inlined_call_operand.hbm [shape: f32[16,32], index: 0, kind: input, shape index: {}]
  %s1 = inlined_call_operand.hbm [shape: bf16[32,512], index: 1, kind: input, shape index: {}]
  %s2 = inlined_call_operand.hbm [shape: f32[1,512], index: 2, kind: input, shape index: {}]
  %s3 = inlined_call_operand.hbm [shape: s8[9,512,512], index: 3, kind: input, shape index: {}]
  %s4 = inlined_call_operand.hbm [shape: f32[9,1,512], index: 4, kind: input, shape index: {}]
  %s5 = inlined_call_operand.hbm [shape: f32[9,1,512], index: 5, kind: input, shape index: {}]
  %s6 = inlined_call_operand.vmem [shape: bf16[512,32], index: 6, kind: input, shape index: {}]
  %s7 = inlined_call_operand.hbm [shape: f32[1,32], index: 7, kind: input, shape index: {}]
  %s8 = inlined_call_operand.hbm [shape: bf16[32,128], index: 8, kind: input, shape index: {}]
  %s9 = inlined_call_operand.hbm [shape: f32[1,128], index: 9, kind: input, shape index: {}]
  %s10 = inlined_call_operand.hbm [shape: f32[16,128], index: 10, kind: output, shape index: {}]
  %s11 = sld [smem:[#allocation0]]
  $region86: #{tpu_custom_call.1} parent=0
    _
  %s13 = ssub.s32 1, %s11
  %s14 = scalar_select 0, %s13, %s11
  $region1: #{tpu_custom_call.1} parent=0
    #allocation2 [shape = 'u8[8192]{0}', space=vmem, size = 0x2000, scoped, tag = 'input window, operand 0, single buffered']
    #allocation3 [shape = 's32[1]{0}', space=sflag, size = 0x4, scoped, tag = 'scoped memory for tpu_custom_call.1']
    #allocation4 [shape = 's32[1]{0}', space=sflag, size = 0x4, scoped, tag = 'scoped memory for tpu_custom_call.1']
    #allocation5 [shape = 'u8[32768]{0}', space=vmem, size = 0x8000, scoped, tag = 'input window, operand 1, single buffered']
    #allocation6 [shape = 's32[1]{0}', space=sflag, size = 0x4, scoped, tag = 'scoped memory for tpu_custom_call.1']
    #allocation7 [shape = 'u8[2048]{0}', space=vmem, size = 0x800, scoped, tag = 'input window, operand 2, single buffered']
    #allocation8 [shape = 'u8[2359296]{0}', space=vmem, size = 0x240000, scoped, tag = 'input window, operand 3, single buffered']
    #allocation9 [shape = 's32[1]{0}', space=sflag, size = 0x4, scoped, tag = 'scoped memory for tpu_custom_call.1']
    #allocation10 [shape = 'u8[18432]{0}', space=vmem, size = 0x4800, scoped, tag = 'input window, operand 4, single buffered']
    #allocation11 [shape = 'u8[18432]{0}', space=vmem, size = 0x4800, scoped, tag = 'input window, operand 5, single buffered']
    #allocation12 [shape = 's32[1]{0}', space=sflag, size = 0x4, scoped, tag = 'scoped memory for tpu_custom_call.1']
    #allocation13 [shape = 'u8[512]{0}', space=vmem, size = 0x400, scoped, tag = 'input window, operand 7, single buffered']
    #allocation14 [shape = 'u8[8192]{0}', space=vmem, size = 0x2000, scoped, tag = 'input window, operand 8, single buffered']
    #allocation15 [shape = 's32[1]{0}', space=sflag, size = 0x4, scoped, tag = 'scoped memory for tpu_custom_call.1']
    #allocation16 [shape = 'u8[512]{0}', space=vmem, size = 0x400, scoped, tag = 'input window, operand 9, single buffered']
    #allocation17 [shape = 'u8[8192]{0}', space=vmem, size = 0x2000, scoped, tag = 'output window, operand 0, single buffered']
    %15 = vsyncpa [#allocation3], 0
    %16 = vsyncpa [#allocation6], 0
    %17 = vsyncpa [#allocation9], 0
    %18 = vsyncpa [#allocation12], 0
    %19 = vsyncpa [#allocation15], 0
    %20 = vsyncpa [#allocation4], 0
    // Predicated region
    $region2: #{tpu_custom_call.1} parent=1 // pred_check
      _
    $region3: #{tpu_custom_call.1} parent=1 // pred_check_branch
      %22 = sbr.rel (0) target = $region5
    $region4: #{tpu_custom_call.1} parent=1 // pred_region
      %24 = vsyncadd [#allocation3], 0
      %s25 = sshll.u32 %s0, 4
      %s26 = int_to_ptr.hbm [resolvable:$true] %s25
      %s27 = sshll.u32 [#allocation2], 4
      %s28 = int_to_ptr.vmem [resolvable:$true] %s27
      %33 = dma.hbm_to_vmem [thread:$0]  %s26, 256, %s28, [#allocation3], 128, 128, 8
    $region5: #{tpu_custom_call.1} parent=1 // pred_fallthru
      _
    // Predicated region
    $region6: #{tpu_custom_call.1} parent=1 // pred_check
      _
    $region7: #{tpu_custom_call.1} parent=1 // pred_check_branch
      %35 = sbr.rel (0) target = $region9
    $region8: #{tpu_custom_call.1} parent=1 // pred_region
      %37 = vsyncadd [#allocation6], 0
      %s38 = sshll.u32 %s1, 4
      %s39 = int_to_ptr.hbm [resolvable:$true] %s38
      %s40 = sshll.u32 [#allocation5], 4
      %s41 = int_to_ptr.vmem [resolvable:$true] %s40
      %46 = dma.hbm_to_vmem [thread:$0]  %s39, 1024, %s41, [#allocation6], 256, 256, 16
    $region9: #{tpu_custom_call.1} parent=1 // pred_fallthru
      _
    // Predicated region
    $region10: #{tpu_custom_call.1} parent=1 // pred_check
      _
    $region11: #{tpu_custom_call.1} parent=1 // pred_check_branch
      %48 = sbr.rel (0) target = $region13
    $region12: #{tpu_custom_call.1} parent=1 // pred_region
      %50 = vsyncadd [#allocation6], 0
      %s52 = sshll.u32 %s2, 4
      %s53 = int_to_ptr.hbm [resolvable:$true] %s52
      %s54 = sshll.u32 [#allocation7], 4
      %s55 = int_to_ptr.vmem [resolvable:$true] %s54
      %57 = dma.hbm_to_vmem [thread:$0]  %s53, 64, %s55, [#allocation6]
    $region13: #{tpu_custom_call.1} parent=1 // pred_fallthru
      _
    // Predicated region
    $region14: #{tpu_custom_call.1} parent=1 // pred_check
      _
    $region15: #{tpu_custom_call.1} parent=1 // pred_check_branch
      %59 = sbr.rel (0) target = $region17
    $region16: #{tpu_custom_call.1} parent=1 // pred_region
      %61 = vsyncadd [#allocation9], 0
      %s62 = sshll.u32 %s3, 4
      %s63 = int_to_ptr.hbm [resolvable:$true] %s62
      %s64 = sshll.u32 [#allocation8], 4
      %s65 = int_to_ptr.vmem [resolvable:$true] %s64
      %70 = dma.hbm_to_vmem [thread:$0]  %s63, 73728, %s65, [#allocation9], 512, 512, 32
    $region17: #{tpu_custom_call.1} parent=1 // pred_fallthru
      _
    // Predicated region
    $region18: #{tpu_custom_call.1} parent=1 // pred_check
      _
    $region19: #{tpu_custom_call.1} parent=1 // pred_check_branch
      %72 = sbr.rel (0) target = $region21
    $region20: #{tpu_custom_call.1} parent=1 // pred_region
      %74 = vsyncadd [#allocation9], 0
      %s75 = sshll.u32 %s4, 4
      %s76 = int_to_ptr.hbm [resolvable:$true] %s75
      %s77 = sshll.u32 [#allocation10], 4
      %s78 = int_to_ptr.vmem [resolvable:$true] %s77
      %83 = dma.hbm_to_vmem [thread:$0]  %s76, 576, %s78, [#allocation9], 64, 64, 4
    $region21: #{tpu_custom_call.1} parent=1 // pred_fallthru
      _
    // Predicated region
    $region22: #{tpu_custom_call.1} parent=1 // pred_check
      _
    $region23: #{tpu_custom_call.1} parent=1 // pred_check_branch
      %85 = sbr.rel (0) target = $region25
    $region24: #{tpu_custom_call.1} parent=1 // pred_region
      %87 = vsyncadd [#allocation12], 0
      %s88 = sshll.u32 %s5, 4
      %s89 = int_to_ptr.hbm [resolvable:$true] %s88
      %s90 = sshll.u32 [#allocation11], 4
      %s91 = int_to_ptr.vmem [resolvable:$true] %s90
      %96 = dma.hbm_to_vmem [thread:$0]  %s89, 576, %s91, [#allocation12], 64, 64, 4
    $region25: #{tpu_custom_call.1} parent=1 // pred_fallthru
      _
    // Predicated region
    $region26: #{tpu_custom_call.1} parent=1 // pred_check
      _
    $region27: #{tpu_custom_call.1} parent=1 // pred_check_branch
      %98 = sbr.rel (0) target = $region29
    $region28: #{tpu_custom_call.1} parent=1 // pred_region
      _
    $region29: #{tpu_custom_call.1} parent=1 // pred_fallthru
      _
    // Predicated region
    $region30: #{tpu_custom_call.1} parent=1 // pred_check
      _
    $region31: #{tpu_custom_call.1} parent=1 // pred_check_branch
      %100 = sbr.rel (0) target = $region33
    $region32: #{tpu_custom_call.1} parent=1 // pred_region
      %102 = vsyncadd [#allocation12], 0
      %s104 = sshll.u32 %s7, 4
      %s105 = int_to_ptr.hbm [resolvable:$true] %s104
      %s106 = sshll.u32 [#allocation13], 4
      %s107 = int_to_ptr.vmem [resolvable:$true] %s106
      %109 = dma.hbm_to_vmem [thread:$0]  %s105, 16, %s107, [#allocation12]
    $region33: #{tpu_custom_call.1} parent=1 // pred_fallthru
      _
    // Predicated region
    $region34: #{tpu_custom_call.1} parent=1 // pred_check
      _
    $region35: #{tpu_custom_call.1} parent=1 // pred_check_branch
      %111 = sbr.rel (0) target = $region37
    $region36: #{tpu_custom_call.1} parent=1 // pred_region
      %113 = vsyncadd [#allocation15], 0
      %s114 = sshll.u32 %s8, 4
      %s115 = int_to_ptr.hbm [resolvable:$true] %s114
      %s116 = sshll.u32 [#allocation14], 4
      %s117 = int_to_ptr.vmem [resolvable:$true] %s116
      %122 = dma.hbm_to_vmem [thread:$0]  %s115, 256, %s117, [#allocation15], 64, 64, 4
    $region37: #{tpu_custom_call.1} parent=1 // pred_fallthru
      _
    // Predicated region
    $region38: #{tpu_custom_call.1} parent=1 // pred_check
      _
    $region39: #{tpu_custom_call.1} parent=1 // pred_check_branch
      %124 = sbr.rel (0) target = $region41
    $region40: #{tpu_custom_call.1} parent=1 // pred_region
      %126 = vsyncadd [#allocation15], 0
      %s128 = sshll.u32 %s9, 4
      %s129 = int_to_ptr.hbm [resolvable:$true] %s128
      %s130 = sshll.u32 [#allocation16], 4
      %s131 = int_to_ptr.vmem [resolvable:$true] %s130
      %133 = dma.hbm_to_vmem [thread:$0]  %s129, 16, %s131, [#allocation15]
    $region41: #{tpu_custom_call.1} parent=1 // pred_fallthru
      _
    // Predicated region
    $region42: #{tpu_custom_call.1} parent=1 // pred_check
      _
    $region43: #{tpu_custom_call.1} parent=1 // pred_check_branch
      %135 = sbr.rel (0) target = $region45
    $region44: #{tpu_custom_call.1} parent=1 // pred_region
      %137 = dma.done [#allocation3], 256
    $region45: #{tpu_custom_call.1} parent=1 // pred_fallthru
      _
    // Predicated region
    $region46: #{tpu_custom_call.1} parent=1 // pred_check
      _
    $region47: #{tpu_custom_call.1} parent=1 // pred_check_branch
      %139 = sbr.rel (0) target = $region49
    $region48: #{tpu_custom_call.1} parent=1 // pred_region
      %141 = dma.done [#allocation6], 1024
    $region49: #{tpu_custom_call.1} parent=1 // pred_fallthru
      _
    // Predicated region
    $region50: #{tpu_custom_call.1} parent=1 // pred_check
      _
    $region51: #{tpu_custom_call.1} parent=1 // pred_check_branch
      %143 = sbr.rel (0) target = $region53
    $region52: #{tpu_custom_call.1} parent=1 // pred_region
      %145 = dma.done [#allocation6], 64
    $region53: #{tpu_custom_call.1} parent=1 // pred_fallthru
      _
    // Predicated region
    $region54: #{tpu_custom_call.1} parent=1 // pred_check
      _
    $region55: #{tpu_custom_call.1} parent=1 // pred_check_branch
      %147 = sbr.rel (0) target = $region57
    $region56: #{tpu_custom_call.1} parent=1 // pred_region
      %149 = dma.done [#allocation9], 73728
    $region57: #{tpu_custom_call.1} parent=1 // pred_fallthru
      _
    // Predicated region
    $region58: #{tpu_custom_call.1} parent=1 // pred_check
      _
    $region59: #{tpu_custom_call.1} parent=1 // pred_check_branch
      %151 = sbr.rel (0) target = $region61
    $region60: #{tpu_custom_call.1} parent=1 // pred_region
      %153 = dma.done [#allocation9], 576
    $region61: #{tpu_custom_call.1} parent=1 // pred_fallthru
      _
    // Predicated region
    $region62: #{tpu_custom_call.1} parent=1 // pred_check
      _
    $region63: #{tpu_custom_call.1} parent=1 // pred_check_branch
      %155 = sbr.rel (0) target = $region65
    $region64: #{tpu_custom_call.1} parent=1 // pred_region
      %157 = dma.done [#allocation12], 576
    $region65: #{tpu_custom_call.1} parent=1 // pred_fallthru
      _
    // Predicated region
    $region66: #{tpu_custom_call.1} parent=1 // pred_check
      _
    $region67: #{tpu_custom_call.1} parent=1 // pred_check_branch
      %159 = sbr.rel (0) target = $region69
    $region68: #{tpu_custom_call.1} parent=1 // pred_region
      %161 = dma.done [#allocation12], 16
    $region69: #{tpu_custom_call.1} parent=1 // pred_fallthru
      _
    // Predicated region
    $region70: #{tpu_custom_call.1} parent=1 // pred_check
      _
    $region71: #{tpu_custom_call.1} parent=1 // pred_check_branch
      %163 = sbr.rel (0) target = $region73
    $region72: #{tpu_custom_call.1} parent=1 // pred_region
      %165 = dma.done [#allocation15], 256
    $region73: #{tpu_custom_call.1} parent=1 // pred_fallthru
      _
    // Predicated region
    $region74: #{tpu_custom_call.1} parent=1 // pred_check
      _
    $region75: #{tpu_custom_call.1} parent=1 // pred_check_branch
      %167 = sbr.rel (0) target = $region77
    $region76: #{tpu_custom_call.1} parent=1 // pred_region
      %169 = dma.done [#allocation15], 16
    $region77: #{tpu_custom_call.1} parent=1 // pred_fallthru
      _
    %v171 = vld [vmem:[#allocation2] sm:$0xff]
    %v172 = vld [vmem:[#allocation2 + $0x8] sm:$0xff]
    %v173 = vpack.c.bf16 %v172, %v171
    %v174 = vld [vmem:[#allocation5] sm:$0xff]
    %v175 = vld [vmem:[#allocation5 + $0x8] sm:$0xff]
    %v176 = vld [vmem:[#allocation5 + $0x10] sm:$0xff]
    %v177 = vld [vmem:[#allocation5 + $0x18] sm:$0xff]
    %v178 = vld [vmem:[#allocation5 + $0x20] sm:$0xff]
    %v179 = vld [vmem:[#allocation5 + $0x28] sm:$0xff]
    %v180 = vld [vmem:[#allocation5 + $0x30] sm:$0xff]
    %v181 = vld [vmem:[#allocation5 + $0x38] sm:$0xff]
    %v182 = vld [vmem:[#allocation7] sm:$0xf]
    %v184 = vperm.slane %v182, 0
    %v185 = vperm.slane %v182, 1
    %v186 = vperm.slane %v182, 2
    %v187 = vperm.slane %v182, 3
    %v200 = vunpack.c.l.b16 %v174
    %v201 = vunpack.c.h.b16 %v174
    %v202 = vunpack.c.l.b16 %v175
    %v203 = vunpack.c.h.b16 %v175
    %v204 = vunpack.c.l.b16 %v176
    %v205 = vunpack.c.h.b16 %v176
    %v206 = vunpack.c.l.b16 %v177
    %v207 = vunpack.c.h.b16 %v177
    %v208 = vunpack.c.l.b16 %v178
    %v209 = vunpack.c.h.b16 %v178
    %v210 = vunpack.c.l.b16 %v179
    %v211 = vunpack.c.h.b16 %v179
    %v212 = vunpack.c.l.b16 %v180
    %v213 = vunpack.c.h.b16 %v180
    %v214 = vunpack.c.l.b16 %v181
    %v215 = vunpack.c.h.b16 %v181
    %v216 = vpack.c.b16 %v204, %v200
    %v217 = vpack.c.b16 %v205, %v201
    %v218 = vpack.c.b16 %v206, %v202
    %v219 = vpack.c.b16 %v207, %v203
    %v220 = vpack.c.b16 %v212, %v208
    %v221 = vpack.c.b16 %v213, %v209
    %v222 = vpack.c.b16 %v214, %v210
    %v223 = vpack.c.b16 %v215, %v211
    %vm232 = vcmask 261120
    %v234 = vsel %vm232, %v173, 0
    %236 = vmatpush.bf16.msra.mxu0 0
    %237 = vmatpush.bf16.msra.mxu0 0
    %238 = vmatpush.bf16.msra.mxu0 0
    %239 = vmatpush.bf16.msra.mxu0 0
    %240 = vmatpush.bf16.msra.mxu0 0
    %241 = vmatpush.bf16.msra.mxu0 0
    %242 = vmatpush.bf16.msra.mxu0 %v220
    %243 = vmatpush.bf16.msra.mxu0 %v216
    %244 = vmatmul.bf16.gmra.mxu0 %v234
    %v245 = vpop.f32.mrf.mxu0
    %v246 = vadd.f32 %v184, %v245
    %v247 = vpop.f32.mrf.mxu0
    %v248 = vadd.f32 %v184, %v247
    %249 = vdwg.mxu0
    %250 = vmatpush.bf16.msra.mxu0 0
    %251 = vmatpush.bf16.msra.mxu0 0
    %252 = vmatpush.bf16.msra.mxu0 0
    %253 = vmatpush.bf16.msra.mxu0 0
    %254 = vmatpush.bf16.msra.mxu0 0
    %255 = vmatpush.bf16.msra.mxu0 0
    %256 = vmatpush.bf16.msra.mxu0 %v221
    %257 = vmatpush.bf16.msra.mxu0 %v217
    %258 = vmatmul.bf16.gmra.mxu0 %v234
    %v259 = vpop.f32.mrf.mxu0
    %v260 = vadd.f32 %v185, %v259
    %v261 = vpop.f32.mrf.mxu0
    %v262 = vadd.f32 %v185, %v261
    %263 = vdwg.mxu0
    %264 = vmatpush.bf16.msra.mxu0 0
    %265 = vmatpush.bf16.msra.mxu0 0
    %266 = vmatpush.bf16.msra.mxu0 0
    %267 = vmatpush.bf16.msra.mxu0 0
    %268 = vmatpush.bf16.msra.mxu0 0
    %269 = vmatpush.bf16.msra.mxu0 0
    %270 = vmatpush.bf16.msra.mxu0 %v222
    %271 = vmatpush.bf16.msra.mxu0 %v218
    %272 = vmatmul.bf16.gmra.mxu0 %v234
    %v273 = vpop.f32.mrf.mxu0
    %v274 = vadd.f32 %v186, %v273
    %v275 = vpop.f32.mrf.mxu0
    %v276 = vadd.f32 %v186, %v275
    %277 = vdwg.mxu0
    %278 = vmatpush.bf16.msra.mxu0 0
    %279 = vmatpush.bf16.msra.mxu0 0
    %280 = vmatpush.bf16.msra.mxu0 0
    %281 = vmatpush.bf16.msra.mxu0 0
    %282 = vmatpush.bf16.msra.mxu0 0
    %283 = vmatpush.bf16.msra.mxu0 0
    %284 = vmatpush.bf16.msra.mxu0 %v223
    %285 = vmatpush.bf16.msra.mxu0 %v219
    %286 = vmatmul.bf16.gmra.mxu0 %v234
    %v287 = vpop.f32.mrf.mxu0
    %v288 = vadd.f32 %v187, %v287
    %v289 = vpop.f32.mrf.mxu0
    %v290 = vadd.f32 %v187, %v289
    %291 = vdwg.mxu0
    %v292 = vmax.f32 %v246, 0.0
    %v293 = vmax.f32 %v260, 0.0
    %v294 = vmax.f32 %v274, 0.0
    %v295 = vmax.f32 %v288, 0.0
    %v296 = vmax.f32 %v248, 0.0
    %v297 = vmax.f32 %v262, 0.0
    %v298 = vmax.f32 %v276, 0.0
    %v299 = vmax.f32 %v290, 0.0
    %v300 = vld [vmem:[#allocation8] sm:$0xff]
    %v301 = vld [vmem:[#allocation8 + $0x8] sm:$0xff]
    %v302 = vld [vmem:[#allocation8 + $0x10] sm:$0xff]
    %v303 = vld [vmem:[#allocation8 + $0x18] sm:$0xff]
    %v304 = vld [vmem:[#allocation8 + $0x20] sm:$0xff]
    %v305 = vld [vmem:[#allocation8 + $0x28] sm:$0xff]
    %v306 = vld [vmem:[#allocation8 + $0x30] sm:$0xff]
    %v307 = vld [vmem:[#allocation8 + $0x38] sm:$0xff]
    %v308 = vld [vmem:[#allocation8 + $0x40] sm:$0xff]
    %v309 = vld [vmem:[#allocation8 + $0x48] sm:$0xff]
    %v310 = vld [vmem:[#allocation8 + $0x50] sm:$0xff]
    %v311 = vld [vmem:[#allocation8 + $0x58] sm:$0xff]
    %v312 = vld [vmem:[#allocation8 + $0x60] sm:$0xff]
    %v313 = vld [vmem:[#allocation8 + $0x68] sm:$0xff]
    %v314 = vld [vmem:[#allocation8 + $0x70] sm:$0xff]
    %v315 = vld [vmem:[#allocation8 + $0x78] sm:$0xff]
    %v316 = vld [vmem:[#allocation8 + $0x80] sm:$0xff]
    %v317 = vld [vmem:[#allocation8 + $0x88] sm:$0xff]
    %v318 = vld [vmem:[#allocation8 + $0x90] sm:$0xff]
    %v319 = vld [vmem:[#allocation8 + $0x98] sm:$0xff]
    %v320 = vld [vmem:[#allocation8 + $0xa0] sm:$0xff]
    %v321 = vld [vmem:[#allocation8 + $0xa8] sm:$0xff]
    %v322 = vld [vmem:[#allocation8 + $0xb0] sm:$0xff]
    %v323 = vld [vmem:[#allocation8 + $0xb8] sm:$0xff]
    %v324 = vld [vmem:[#allocation8 + $0xc0] sm:$0xff]
    %v325 = vld [vmem:[#allocation8 + $0xc8] sm:$0xff]
    %v326 = vld [vmem:[#allocation8 + $0xd0] sm:$0xff]
    %v327 = vld [vmem:[#allocation8 + $0xd8] sm:$0xff]
    %v328 = vld [vmem:[#allocation8 + $0xe0] sm:$0xff]
    %v329 = vld [vmem:[#allocation8 + $0xe8] sm:$0xff]
    %v330 = vld [vmem:[#allocation8 + $0xf0] sm:$0xff]
    %v331 = vld [vmem:[#allocation8 + $0xf8] sm:$0xff]
    %v332 = vld [vmem:[#allocation8 + $0x100] sm:$0xff]
    %v333 = vld [vmem:[#allocation8 + $0x108] sm:$0xff]
    %v334 = vld [vmem:[#allocation8 + $0x110] sm:$0xff]
    %v335 = vld [vmem:[#allocation8 + $0x118] sm:$0xff]
    %v336 = vld [vmem:[#allocation8 + $0x120] sm:$0xff]
    %v337 = vld [vmem:[#allocation8 + $0x128] sm:$0xff]
    %v338 = vld [vmem:[#allocation8 + $0x130] sm:$0xff]
    %v339 = vld [vmem:[#allocation8 + $0x138] sm:$0xff]
    %v340 = vld [vmem:[#allocation8 + $0x140] sm:$0xff]
    %v341 = vld [vmem:[#allocation8 + $0x148] sm:$0xff]
    %v342 = vld [vmem:[#allocation8 + $0x150] sm:$0xff]
    %v343 = vld [vmem:[#allocation8 + $0x158] sm:$0xff]
    %v344 = vld [vmem:[#allocation8 + $0x160] sm:$0xff]
    %v345 = vld [vmem:[#allocation8 + $0x168] sm:$0xff]
    %v346 = vld [vmem:[#allocation8 + $0x170] sm:$0xff]
    %v347 = vld [vmem:[#allocation8 + $0x178] sm:$0xff]
    %v348 = vld [vmem:[#allocation8 + $0x180] sm:$0xff]
    %v349 = vld [vmem:[#allocation8 + $0x188] sm:$0xff]
    %v350 = vld [vmem:[#allocation8 + $0x190] sm:$0xff]
    %v351 = vld [vmem:[#allocation8 + $0x198] sm:$0xff]
    %v352 = vld [vmem:[#allocation8 + $0x1a0] sm:$0xff]
    %v353 = vld [vmem:[#allocation8 + $0x1a8] sm:$0xff]
    %v354 = vld [vmem:[#allocation8 + $0x1b0] sm:$0xff]
    %v355 = vld [vmem:[#allocation8 + $0x1b8] sm:$0xff]
    %v356 = vld [vmem:[#allocation8 + $0x1c0] sm:$0xff]
    %v357 = vld [vmem:[#allocation8 + $0x1c8] sm:$0xff]
    %v358 = vld [vmem:[#allocation8 + $0x1d0] sm:$0xff]
    %v359 = vld [vmem:[#allocation8 + $0x1d8] sm:$0xff]
    %v360 = vld [vmem:[#allocation8 + $0x1e0] sm:$0xff]
    %v361 = vld [vmem:[#allocation8 + $0x1e8] sm:$0xff]
    %v362 = vld [vmem:[#allocation8 + $0x1f0] sm:$0xff]
    %v363 = vld [vmem:[#allocation8 + $0x1f8] sm:$0xff]
    %v364 = vunpack.c.0.s8 %v300
    %v365 = vunpack.c.0.s8 %v301
    %v366 = vunpack.c.0.s8 %v302
    %v367 = vunpack.c.0.s8 %v303
    %v368 = vunpack.c.1.s8 %v300
    %v369 = vunpack.c.1.s8 %v301
    %v370 = vunpack.c.1.s8 %v302
    %v371 = vunpack.c.1.s8 %v303
    %v372 = vunpack.c.2.s8 %v300
    %v373 = vunpack.c.2.s8 %v301
    %v374 = vunpack.c.2.s8 %v302
    %v375 = vunpack.c.2.s8 %v303
    %v376 = vunpack.c.3.s8 %v300
    %v377 = vunpack.c.3.s8 %v301
    %v378 = vunpack.c.3.s8 %v302
    %v379 = vunpack.c.3.s8 %v303
    %v380 = vunpack.c.0.s8 %v304
    %v381 = vunpack.c.0.s8 %v305
    %v382 = vunpack.c.0.s8 %v306
    %v383 = vunpack.c.0.s8 %v307
    %v384 = vunpack.c.1.s8 %v304
    %v385 = vunpack.c.1.s8 %v305
    %v386 = vunpack.c.1.s8 %v306
    %v387 = vunpack.c.1.s8 %v307
    %v388 = vunpack.c.2.s8 %v304
    %v389 = vunpack.c.2.s8 %v305
    %v390 = vunpack.c.2.s8 %v306
    %v391 = vunpack.c.2.s8 %v307
    %v392 = vunpack.c.3.s8 %v304
    %v393 = vunpack.c.3.s8 %v305
    %v394 = vunpack.c.3.s8 %v306
    %v395 = vunpack.c.3.s8 %v307
    %v396 = vunpack.c.0.s8 %v308
    %v397 = vunpack.c.0.s8 %v309
    %v398 = vunpack.c.0.s8 %v310
    %v399 = vunpack.c.0.s8 %v311
    %v400 = vunpack.c.1.s8 %v308
    %v401 = vunpack.c.1.s8 %v309
    %v402 = vunpack.c.1.s8 %v310
    %v403 = vunpack.c.1.s8 %v311
    %v404 = vunpack.c.2.s8 %v308
    %v405 = vunpack.c.2.s8 %v309
    %v406 = vunpack.c.2.s8 %v310
    %v407 = vunpack.c.2.s8 %v311
    %v408 = vunpack.c.3.s8 %v308
    %v409 = vunpack.c.3.s8 %v309
    %v410 = vunpack.c.3.s8 %v310
    %v411 = vunpack.c.3.s8 %v311
    %v412 = vunpack.c.0.s8 %v312
    %v413 = vunpack.c.0.s8 %v313
    %v414 = vunpack.c.0.s8 %v314
    %v415 = vunpack.c.0.s8 %v315
    %v416 = vunpack.c.1.s8 %v312
    %v417 = vunpack.c.1.s8 %v313
    %v418 = vunpack.c.1.s8 %v314
    %v419 = vunpack.c.1.s8 %v315
    %v420 = vunpack.c.2.s8 %v312
    %v421 = vunpack.c.2.s8 %v313
    %v422 = vunpack.c.2.s8 %v314
    %v423 = vunpack.c.2.s8 %v315
    %v424 = vunpack.c.3.s8 %v312
    %v425 = vunpack.c.3.s8 %v313
    %v426 = vunpack.c.3.s8 %v314
    %v427 = vunpack.c.3.s8 %v315
    %v428 = vunpack.c.0.s8 %v316
    %v429 = vunpack.c.0.s8 %v317
    %v430 = vunpack.c.0.s8 %v318
    %v431 = vunpack.c.0.s8 %v319
    %v432 = vunpack.c.1.s8 %v316
    %v433 = vunpack.c.1.s8 %v317
    %v434 = vunpack.c.1.s8 %v318
    %v435 = vunpack.c.1.s8 %v319
    %v436 = vunpack.c.2.s8 %v316
    %v437 = vunpack.c.2.s8 %v317
    %v438 = vunpack.c.2.s8 %v318
    %v439 = vunpack.c.2.s8 %v319
    %v440 = vunpack.c.3.s8 %v316
    %v441 = vunpack.c.3.s8 %v317
    %v442 = vunpack.c.3.s8 %v318
    %v443 = vunpack.c.3.s8 %v319
    %v444 = vunpack.c.0.s8 %v320
    %v445 = vunpack.c.0.s8 %v321
    %v446 = vunpack.c.0.s8 %v322
    %v447 = vunpack.c.0.s8 %v323
    %v448 = vunpack.c.1.s8 %v320
    %v449 = vunpack.c.1.s8 %v321
    %v450 = vunpack.c.1.s8 %v322
    %v451 = vunpack.c.1.s8 %v323
    %v452 = vunpack.c.2.s8 %v320
    %v453 = vunpack.c.2.s8 %v321
    %v454 = vunpack.c.2.s8 %v322
    %v455 = vunpack.c.2.s8 %v323
    %v456 = vunpack.c.3.s8 %v320
    %v457 = vunpack.c.3.s8 %v321
    %v458 = vunpack.c.3.s8 %v322
    %v459 = vunpack.c.3.s8 %v323
    %v460 = vunpack.c.0.s8 %v324
    %v461 = vunpack.c.0.s8 %v325
    %v462 = vunpack.c.0.s8 %v326
    %v463 = vunpack.c.0.s8 %v327
    %v464 = vunpack.c.1.s8 %v324
    %v465 = vunpack.c.1.s8 %v325
    %v466 = vunpack.c.1.s8 %v326
    %v467 = vunpack.c.1.s8 %v327
    %v468 = vunpack.c.2.s8 %v324
    %v469 = vunpack.c.2.s8 %v325
    %v470 = vunpack.c.2.s8 %v326
    %v471 = vunpack.c.2.s8 %v327
    %v472 = vunpack.c.3.s8 %v324
    %v473 = vunpack.c.3.s8 %v325
    %v474 = vunpack.c.3.s8 %v326
    %v475 = vunpack.c.3.s8 %v327
    %v476 = vunpack.c.0.s8 %v328
    %v477 = vunpack.c.0.s8 %v329
    %v478 = vunpack.c.0.s8 %v330
    %v479 = vunpack.c.0.s8 %v331
    %v480 = vunpack.c.1.s8 %v328
    %v481 = vunpack.c.1.s8 %v329
    %v482 = vunpack.c.1.s8 %v330
    %v483 = vunpack.c.1.s8 %v331
    %v484 = vunpack.c.2.s8 %v328
    %v485 = vunpack.c.2.s8 %v329
    %v486 = vunpack.c.2.s8 %v330
    %v487 = vunpack.c.2.s8 %v331
    %v488 = vunpack.c.3.s8 %v328
    %v489 = vunpack.c.3.s8 %v329
    %v490 = vunpack.c.3.s8 %v330
    %v491 = vunpack.c.3.s8 %v331
    %v492 = vunpack.c.0.s8 %v332
    %v493 = vunpack.c.0.s8 %v333
    %v494 = vunpack.c.0.s8 %v334
    %v495 = vunpack.c.0.s8 %v335
    %v496 = vunpack.c.1.s8 %v332
    %v497 = vunpack.c.1.s8 %v333
    %v498 = vunpack.c.1.s8 %v334
    %v499 = vunpack.c.1.s8 %v335
    %v500 = vunpack.c.2.s8 %v332
    %v501 = vunpack.c.2.s8 %v333
    %v502 = vunpack.c.2.s8 %v334
    %v503 = vunpack.c.2.s8 %v335
    %v504 = vunpack.c.3.s8 %v332
    %v505 = vunpack.c.3.s8 %v333
    %v506 = vunpack.c.3.s8 %v334
    %v507 = vunpack.c.3.s8 %v335
    %v508 = vunpack.c.0.s8 %v336
    %v509 = vunpack.c.0.s8 %v337
    %v510 = vunpack.c.0.s8 %v338
    %v511 = vunpack.c.0.s8 %v339
    %v512 = vunpack.c.1.s8 %v336
    %v513 = vunpack.c.1.s8 %v337
    %v514 = vunpack.c.1.s8 %v338
    %v515 = vunpack.c.1.s8 %v339
    %v516 = vunpack.c.2.s8 %v336
    %v517 = vunpack.c.2.s8 %v337
    %v518 = vunpack.c.2.s8 %v338
    %v519 = vunpack.c.2.s8 %v339
    %v520 = vunpack.c.3.s8 %v336
    %v521 = vunpack.c.3.s8 %v337
    %v522 = vunpack.c.3.s8 %v338
    %v523 = vunpack.c.3.s8 %v339
    %v524 = vunpack.c.0.s8 %v340
    %v525 = vunpack.c.0.s8 %v341
    %v526 = vunpack.c.0.s8 %v342
    %v527 = vunpack.c.0.s8 %v343
    %v528 = vunpack.c.1.s8 %v340
    %v529 = vunpack.c.1.s8 %v341
    %v530 = vunpack.c.1.s8 %v342
    %v531 = vunpack.c.1.s8 %v343
    %v532 = vunpack.c.2.s8 %v340
    %v533 = vunpack.c.2.s8 %v341
    %v534 = vunpack.c.2.s8 %v342
    %v535 = vunpack.c.2.s8 %v343
    %v536 = vunpack.c.3.s8 %v340
    %v537 = vunpack.c.3.s8 %v341
    %v538 = vunpack.c.3.s8 %v342
    %v539 = vunpack.c.3.s8 %v343
    %v540 = vunpack.c.0.s8 %v344
    %v541 = vunpack.c.0.s8 %v345
    %v542 = vunpack.c.0.s8 %v346
    %v543 = vunpack.c.0.s8 %v347
    %v544 = vunpack.c.1.s8 %v344
    %v545 = vunpack.c.1.s8 %v345
    %v546 = vunpack.c.1.s8 %v346
    %v547 = vunpack.c.1.s8 %v347
    %v548 = vunpack.c.2.s8 %v344
    %v549 = vunpack.c.2.s8 %v345
    %v550 = vunpack.c.2.s8 %v346
    %v551 = vunpack.c.2.s8 %v347
    %v552 = vunpack.c.3.s8 %v344
    %v553 = vunpack.c.3.s8 %v345
    %v554 = vunpack.c.3.s8 %v346
    %v555 = vunpack.c.3.s8 %v347
    %v556 = vunpack.c.0.s8 %v348
    %v557 = vunpack.c.0.s8 %v349
    %v558 = vunpack.c.0.s8 %v350
    %v559 = vunpack.c.0.s8 %v351
    %v560 = vunpack.c.1.s8 %v348
    %v561 = vunpack.c.1.s8 %v349
    %v562 = vunpack.c.1.s8 %v350
    %v563 = vunpack.c.1.s8 %v351
    %v564 = vunpack.c.2.s8 %v348
    %v565 = vunpack.c.2.s8 %v349
    %v566 = vunpack.c.2.s8 %v350
    %v567 = vunpack.c.2.s8 %v351
    %v568 = vunpack.c.3.s8 %v348
    %v569 = vunpack.c.3.s8 %v349
    %v570 = vunpack.c.3.s8 %v350
    %v571 = vunpack.c.3.s8 %v351
    %v572 = vunpack.c.0.s8 %v352
    %v573 = vunpack.c.0.s8 %v353
    %v574 = vunpack.c.0.s8 %v354
    %v575 = vunpack.c.0.s8 %v355
    %v576 = vunpack.c.1.s8 %v352
    %v577 = vunpack.c.1.s8 %v353
    %v578 = vunpack.c.1.s8 %v354
    %v579 = vunpack.c.1.s8 %v355
    %v580 = vunpack.c.2.s8 %v352
    %v581 = vunpack.c.2.s8 %v353
    %v582 = vunpack.c.2.s8 %v354
    %v583 = vunpack.c.2.s8 %v355
    %v584 = vunpack.c.3.s8 %v352
    %v585 = vunpack.c.3.s8 %v353
    %v586 = vunpack.c.3.s8 %v354
    %v587 = vunpack.c.3.s8 %v355
    %v588 = vunpack.c.0.s8 %v356
    %v589 = vunpack.c.0.s8 %v357
    %v590 = vunpack.c.0.s8 %v358
    %v591 = vunpack.c.0.s8 %v359
    %v592 = vunpack.c.1.s8 %v356
    %v593 = vunpack.c.1.s8 %v357
    %v594 = vunpack.c.1.s8 %v358
    %v595 = vunpack.c.1.s8 %v359
    %v596 = vunpack.c.2.s8 %v356
    %v597 = vunpack.c.2.s8 %v357
    %v598 = vunpack.c.2.s8 %v358
    %v599 = vunpack.c.2.s8 %v359
    %v600 = vunpack.c.3.s8 %v356
    %v601 = vunpack.c.3.s8 %v357
    %v602 = vunpack.c.3.s8 %v358
    %v603 = vunpack.c.3.s8 %v359
    %v604 = vunpack.c.0.s8 %v360
    %v605 = vunpack.c.0.s8 %v361
    %v606 = vunpack.c.0.s8 %v362
    %v607 = vunpack.c.0.s8 %v363
    %v608 = vunpack.c.1.s8 %v360
    %v609 = vunpack.c.1.s8 %v361
    %v610 = vunpack.c.1.s8 %v362
    %v611 = vunpack.c.1.s8 %v363
    %v612 = vunpack.c.2.s8 %v360
    %v613 = vunpack.c.2.s8 %v361
    %v614 = vunpack.c.2.s8 %v362
    %v615 = vunpack.c.2.s8 %v363
    %v616 = vunpack.c.3.s8 %v360
    %v617 = vunpack.c.3.s8 %v361
    %v618 = vunpack.c.3.s8 %v362
    %v619 = vunpack.c.3.s8 %v363
    %v620 = vcvt.s32.f32 %v364
    %v621 = vcvt.s32.f32 %v365
    %v622 = vcvt.s32.f32 %v366
    %v623 = vcvt.s32.f32 %v367
    %v624 = vcvt.s32.f32 %v368
    %v625 = vcvt.s32.f32 %v369
    %v626 = vcvt.s32.f32 %v370
    %v627 = vcvt.s32.f32 %v371
    %v628 = vcvt.s32.f32 %v372
    %v629 = vcvt.s32.f32 %v373
    %v630 = vcvt.s32.f32 %v374
    %v631 = vcvt.s32.f32 %v375
    %v632 = vcvt.s32.f32 %v376
    %v633 = vcvt.s32.f32 %v377
    %v634 = vcvt.s32.f32 %v378
    %v635 = vcvt.s32.f32 %v379
    %v636 = vcvt.s32.f32 %v380
    %v637 = vcvt.s32.f32 %v381
    %v638 = vcvt.s32.f32 %v382
    %v639 = vcvt.s32.f32 %v383
    %v640 = vcvt.s32.f32 %v384
    %v641 = vcvt.s32.f32 %v385
    %v642 = vcvt.s32.f32 %v386
    %v643 = vcvt.s32.f32 %v387
    %v644 = vcvt.s32.f32 %v388
    %v645 = vcvt.s32.f32 %v389
    %v646 = vcvt.s32.f32 %v390
    %v647 = vcvt.s32.f32 %v391
    %v648 = vcvt.s32.f32 %v392
    %v649 = vcvt.s32.f32 %v393
    %v650 = vcvt.s32.f32 %v394
    %v651 = vcvt.s32.f32 %v395
    %v652 = vcvt.s32.f32 %v396
    %v653 = vcvt.s32.f32 %v397
    %v654 = vcvt.s32.f32 %v398
    %v655 = vcvt.s32.f32 %v399
    %v656 = vcvt.s32.f32 %v400
    %v657 = vcvt.s32.f32 %v401
    %v658 = vcvt.s32.f32 %v402
    %v659 = vcvt.s32.f32 %v403
    %v660 = vcvt.s32.f32 %v404
    %v661 = vcvt.s32.f32 %v405
    %v662 = vcvt.s32.f32 %v406
    %v663 = vcvt.s32.f32 %v407
    %v664 = vcvt.s32.f32 %v408
    %v665 = vcvt.s32.f32 %v409
    %v666 = vcvt.s32.f32 %v410
    %v667 = vcvt.s32.f32 %v411
    %v668 = vcvt.s32.f32 %v412
    %v669 = vcvt.s32.f32 %v413
    %v670 = vcvt.s32.f32 %v414
    %v671 = vcvt.s32.f32 %v415
    %v672 = vcvt.s32.f32 %v416
    %v673 = vcvt.s32.f32 %v417
    %v674 = vcvt.s32.f32 %v418
    %v675 = vcvt.s32.f32 %v419
    %v676 = vcvt.s32.f32 %v420
    %v677 = vcvt.s32.f32 %v421
    %v678 = vcvt.s32.f32 %v422
    %v679 = vcvt.s32.f32 %v423
    %v680 = vcvt.s32.f32 %v424
    %v681 = vcvt.s32.f32 %v425
    %v682 = vcvt.s32.f32 %v426
    %v683 = vcvt.s32.f32 %v427
    %v684 = vcvt.s32.f32 %v428
    %v685 = vcvt.s32.f32 %v429
    %v686 = vcvt.s32.f32 %v430
    %v687 = vcvt.s32.f32 %v431
    %v688 = vcvt.s32.f32 %v432
    %v689 = vcvt.s32.f32 %v433
    %v690 = vcvt.s32.f32 %v434
    %v691 = vcvt.s32.f32 %v435
    %v692 = vcvt.s32.f32 %v436
    %v693 = vcvt.s32.f32 %v437
    %v694 = vcvt.s32.f32 %v438
    %v695 = vcvt.s32.f32 %v439
    %v696 = vcvt.s32.f32 %v440
    %v697 = vcvt.s32.f32 %v441
    %v698 = vcvt.s32.f32 %v442
    %v699 = vcvt.s32.f32 %v443
    %v700 = vcvt.s32.f32 %v444
    %v701 = vcvt.s32.f32 %v445
    %v702 = vcvt.s32.f32 %v446
    %v703 = vcvt.s32.f32 %v447
    %v704 = vcvt.s32.f32 %v448
    %v705 = vcvt.s32.f32 %v449
    %v706 = vcvt.s32.f32 %v450
    %v707 = vcvt.s32.f32 %v451
    %v708 = vcvt.s32.f32 %v452
    %v709 = vcvt.s32.f32 %v453
    %v710 = vcvt.s32.f32 %v454
    %v711 = vcvt.s32.f32 %v455
    %v712 = vcvt.s32.f32 %v456
    %v713 = vcvt.s32.f32 %v457
    %v714 = vcvt.s32.f32 %v458
    %v715 = vcvt.s32.f32 %v459
    %v716 = vcvt.s32.f32 %v460
    %v717 = vcvt.s32.f32 %v461
    %v718 = vcvt.s32.f32 %v462
    %v719 = vcvt.s32.f32 %v463
    %v720 = vcvt.s32.f32 %v464
    %v721 = vcvt.s32.f32 %v465
    %v722 = vcvt.s32.f32 %v466
    %v723 = vcvt.s32.f32 %v467
    %v724 = vcvt.s32.f32 %v468
    %v725 = vcvt.s32.f32 %v469
    %v726 = vcvt.s32.f32 %v470
    %v727 = vcvt.s32.f32 %v471
    %v728 = vcvt.s32.f32 %v472
    %v729 = vcvt.s32.f32 %v473
    %v730 = vcvt.s32.f32 %v474
    %v731 = vcvt.s32.f32 %v475
    %v732 = vcvt.s32.f32 %v476
    %v733 = vcvt.s32.f32 %v477
    %v734 = vcvt.s32.f32 %v478
    %v735 = vcvt.s32.f32 %v479
    %v736 = vcvt.s32.f32 %v480
    %v737 = vcvt.s32.f32 %v481
    %v738 = vcvt.s32.f32 %v482
    %v739 = vcvt.s32.f32 %v483
    %v740 = vcvt.s32.f32 %v484
    %v741 = vcvt.s32.f32 %v485
    %v742 = vcvt.s32.f32 %v486
    %v743 = vcvt.s32.f32 %v487
    %v744 = vcvt.s32.f32 %v488
    %v745 = vcvt.s32.f32 %v489
    %v746 = vcvt.s32.f32 %v490
    %v747 = vcvt.s32.f32 %v491
    %v748 = vcvt.s32.f32 %v492
    %v749 = vcvt.s32.f32 %v493
    %v750 = vcvt.s32.f32 %v494
    %v751 = vcvt.s32.f32 %v495
    %v752 = vcvt.s32.f32 %v496
    %v753 = vcvt.s32.f32 %v497
    %v754 = vcvt.s32.f32 %v498
    %v755 = vcvt.s32.f32 %v499
    %v756 = vcvt.s32.f32 %v500
    %v757 = vcvt.s32.f32 %v501
    %v758 = vcvt.s32.f32 %v502
    %v759 = vcvt.s32.f32 %v503
    %v760 = vcvt.s32.f32 %v504
    %v761 = vcvt.s32.f32 %v505
    %v762 = vcvt.s32.f32 %v506
    %v763 = vcvt.s32.f32 %v507
    %v764 = vcvt.s32.f32 %v508
    %v765 = vcvt.s32.f32 %v509
    %v766 = vcvt.s32.f32 %v510
    %v767 = vcvt.s32.f32 %v511
    %v768 = vcvt.s32.f32 %v512
    %v769 = vcvt.s32.f32 %v513
    %v770 = vcvt.s32.f32 %v514
    %v771 = vcvt.s32.f32 %v515
    %v772 = vcvt.s32.f32 %v516
    %v773 = vcvt.s32.f32 %v517
    %v774 = vcvt.s32.f32 %v518
    %v775 = vcvt.s32.f32 %v519
    %v776 = vcvt.s32.f32 %v520
    %v777 = vcvt.s32.f32 %v521
    %v778 = vcvt.s32.f32 %v522
    %v779 = vcvt.s32.f32 %v523
    %v780 = vcvt.s32.f32 %v524
    %v781 = vcvt.s32.f32 %v525
    %v782 = vcvt.s32.f32 %v526
    %v783 = vcvt.s32.f32 %v527
    %v784 = vcvt.s32.f32 %v528
    %v785 = vcvt.s32.f32 %v529
    %v786 = vcvt.s32.f32 %v530
    %v787 = vcvt.s32.f32 %v531
    %v788 = vcvt.s32.f32 %v532
    %v789 = vcvt.s32.f32 %v533
    %v790 = vcvt.s32.f32 %v534
    %v791 = vcvt.s32.f32 %v535
    %v792 = vcvt.s32.f32 %v536
    %v793 = vcvt.s32.f32 %v537
    %v794 = vcvt.s32.f32 %v538
    %v795 = vcvt.s32.f32 %v539
    %v796 = vcvt.s32.f32 %v540
    %v797 = vcvt.s32.f32 %v541
    %v798 = vcvt.s32.f32 %v542
    %v799 = vcvt.s32.f32 %v543
    %v800 = vcvt.s32.f32 %v544
    %v801 = vcvt.s32.f32 %v545
    %v802 = vcvt.s32.f32 %v546
    %v803 = vcvt.s32.f32 %v547
    %v804 = vcvt.s32.f32 %v548
    %v805 = vcvt.s32.f32 %v549
    %v806 = vcvt.s32.f32 %v550
    %v807 = vcvt.s32.f32 %v551
    %v808 = vcvt.s32.f32 %v552
    %v809 = vcvt.s32.f32 %v553
    %v810 = vcvt.s32.f32 %v554
    %v811 = vcvt.s32.f32 %v555
    %v812 = vcvt.s32.f32 %v556
    %v813 = vcvt.s32.f32 %v557
    %v814 = vcvt.s32.f32 %v558
    %v815 = vcvt.s32.f32 %v559
    %v816 = vcvt.s32.f32 %v560
    %v817 = vcvt.s32.f32 %v561
    %v818 = vcvt.s32.f32 %v562
    %v819 = vcvt.s32.f32 %v563
    %v820 = vcvt.s32.f32 %v564
    %v821 = vcvt.s32.f32 %v565
    %v822 = vcvt.s32.f32 %v566
    %v823 = vcvt.s32.f32 %v567
    %v824 = vcvt.s32.f32 %v568
    %v825 = vcvt.s32.f32 %v569
    %v826 = vcvt.s32.f32 %v570
    %v827 = vcvt.s32.f32 %v571
    %v828 = vcvt.s32.f32 %v572
    %v829 = vcvt.s32.f32 %v573
    %v830 = vcvt.s32.f32 %v574
    %v831 = vcvt.s32.f32 %v575
    %v832 = vcvt.s32.f32 %v576
    %v833 = vcvt.s32.f32 %v577
    %v834 = vcvt.s32.f32 %v578
    %v835 = vcvt.s32.f32 %v579
    %v836 = vcvt.s32.f32 %v580
    %v837 = vcvt.s32.f32 %v581
    %v838 = vcvt.s32.f32 %v582
    %v839 = vcvt.s32.f32 %v583
    %v840 = vcvt.s32.f32 %v584
    %v841 = vcvt.s32.f32 %v585
    %v842 = vcvt.s32.f32 %v586
    %v843 = vcvt.s32.f32 %v587
    %v844 = vcvt.s32.f32 %v588
    %v845 = vcvt.s32.f32 %v589
    %v846 = vcvt.s32.f32 %v590
    %v847 = vcvt.s32.f32 %v591
    %v848 = vcvt.s32.f32 %v592
    %v849 = vcvt.s32.f32 %v593
    %v850 = vcvt.s32.f32 %v594
    %v851 = vcvt.s32.f32 %v595
    %v852 = vcvt.s32.f32 %v596
    %v853 = vcvt.s32.f32 %v597
    %v854 = vcvt.s32.f32 %v598
    %v855 = vcvt.s32.f32 %v599
    %v856 = vcvt.s32.f32 %v600
    %v857 = vcvt.s32.f32 %v601
    %v858 = vcvt.s32.f32 %v602
    %v859 = vcvt.s32.f32 %v603
    %v860 = vcvt.s32.f32 %v604
    %v861 = vcvt.s32.f32 %v605
    %v862 = vcvt.s32.f32 %v606
    %v863 = vcvt.s32.f32 %v607
    %v864 = vcvt.s32.f32 %v608
    %v865 = vcvt.s32.f32 %v609
    %v866 = vcvt.s32.f32 %v610
    %v867 = vcvt.s32.f32 %v611
    %v868 = vcvt.s32.f32 %v612
    %v869 = vcvt.s32.f32 %v613
    %v870 = vcvt.s32.f32 %v614
    %v871 = vcvt.s32.f32 %v615
    %v872 = vcvt.s32.f32 %v616
    %v873 = vcvt.s32.f32 %v617
    %v874 = vcvt.s32.f32 %v618
    %v875 = vcvt.s32.f32 %v619
    %v876 = vpack.c.bf16 %v624, %v620
    %v877 = vpack.c.bf16 %v625, %v621
    %v878 = vpack.c.bf16 %v626, %v622
    %v879 = vpack.c.bf16 %v627, %v623
    %v880 = vpack.c.bf16 %v632, %v628
    %v881 = vpack.c.bf16 %v633, %v629
    %v882 = vpack.c.bf16 %v634, %v630
    %v883 = vpack.c.bf16 %v635, %v631
    %v884 = vpack.c.bf16 %v640, %v636
    %v885 = vpack.c.bf16 %v641, %v637
    %v886 = vpack.c.bf16 %v642, %v638
    %v887 = vpack.c.bf16 %v643, %v639
    %v888 = vpack.c.bf16 %v648, %v644
    %v889 = vpack.c.bf16 %v649, %v645
    %v890 = vpack.c.bf16 %v650, %v646
    %v891 = vpack.c.bf16 %v651, %v647
    %v892 = vpack.c.bf16 %v656, %v652
    %v893 = vpack.c.bf16 %v657, %v653
    %v894 = vpack.c.bf16 %v658, %v654
    %v895 = vpack.c.bf16 %v659, %v655
    %v896 = vpack.c.bf16 %v664, %v660
    %v897 = vpack.c.bf16 %v665, %v661
    %v898 = vpack.c.bf16 %v666, %v662
    %v899 = vpack.c.bf16 %v667, %v663
    %v900 = vpack.c.bf16 %v672, %v668
    %v901 = vpack.c.bf16 %v673, %v669
    %v902 = vpack.c.bf16 %v674, %v670
    %v903 = vpack.c.bf16 %v675, %v671
    %v904 = vpack.c.bf16 %v680, %v676
    %v905 = vpack.c.bf16 %v681, %v677
    %v906 = vpack.c.bf16 %v682, %v678
    %v907 = vpack.c.bf16 %v683, %v679
    %v908 = vpack.c.bf16 %v688, %v684
    %v909 = vpack.c.bf16 %v689, %v685
    %v910 = vpack.c.bf16 %v690, %v686
    %v911 = vpack.c.bf16 %v691, %v687
    %v912 = vpack.c.bf16 %v696, %v692
    %v913 = vpack.c.bf16 %v697, %v693
    %v914 = vpack.c.bf16 %v698, %v694
    %v915 = vpack.c.bf16 %v699, %v695
    %v916 = vpack.c.bf16 %v704, %v700
    %v917 = vpack.c.bf16 %v705, %v701
    %v918 = vpack.c.bf16 %v706, %v702
    %v919 = vpack.c.bf16 %v707, %v703
    %v920 = vpack.c.bf16 %v712, %v708
    %v921 = vpack.c.bf16 %v713, %v709
    %v922 = vpack.c.bf16 %v714, %v710
    %v923 = vpack.c.bf16 %v715, %v711
    %v924 = vpack.c.bf16 %v720, %v716
    %v925 = vpack.c.bf16 %v721, %v717
    %v926 = vpack.c.bf16 %v722, %v718
    %v927 = vpack.c.bf16 %v723, %v719
    %v928 = vpack.c.bf16 %v728, %v724
    %v929 = vpack.c.bf16 %v729, %v725
    %v930 = vpack.c.bf16 %v730, %v726
    %v931 = vpack.c.bf16 %v731, %v727
    %v932 = vpack.c.bf16 %v736, %v732
    %v933 = vpack.c.bf16 %v737, %v733
    %v934 = vpack.c.bf16 %v738, %v734
    %v935 = vpack.c.bf16 %v739, %v735
    %v936 = vpack.c.bf16 %v744, %v740
    %v937 = vpack.c.bf16 %v745, %v741
    %v938 = vpack.c.bf16 %v746, %v742
    %v939 = vpack.c.bf16 %v747, %v743
    %v940 = vpack.c.bf16 %v752, %v748
    %v941 = vpack.c.bf16 %v753, %v749
    %v942 = vpack.c.bf16 %v754, %v750
    %v943 = vpack.c.bf16 %v755, %v751
    %v944 = vpack.c.bf16 %v760, %v756
    %v945 = vpack.c.bf16 %v761, %v757
    %v946 = vpack.c.bf16 %v762, %v758
    %v947 = vpack.c.bf16 %v763, %v759
    %v948 = vpack.c.bf16 %v768, %v764
    %v949 = vpack.c.bf16 %v769, %v765
    %v950 = vpack.c.bf16 %v770, %v766
    %v951 = vpack.c.bf16 %v771, %v767
    %v952 = vpack.c.bf16 %v776, %v772
    %v953 = vpack.c.bf16 %v777, %v773
    %v954 = vpack.c.bf16 %v778, %v774
    %v955 = vpack.c.bf16 %v779, %v775
    %v956 = vpack.c.bf16 %v784, %v780
    %v957 = vpack.c.bf16 %v785, %v781
    %v958 = vpack.c.bf16 %v786, %v782
    %v959 = vpack.c.bf16 %v787, %v783
    %v960 = vpack.c.bf16 %v792, %v788
    %v961 = vpack.c.bf16 %v793, %v789
    %v962 = vpack.c.bf16 %v794, %v790
    %v963 = vpack.c.bf16 %v795, %v791
    %v964 = vpack.c.bf16 %v800, %v796
    %v965 = vpack.c.bf16 %v801, %v797
    %v966 = vpack.c.bf16 %v802, %v798
    %v967 = vpack.c.bf16 %v803, %v799
    %v968 = vpack.c.bf16 %v808, %v804
    %v969 = vpack.c.bf16 %v809, %v805
    %v970 = vpack.c.bf16 %v810, %v806
    %v971 = vpack.c.bf16 %v811, %v807
    %v972 = vpack.c.bf16 %v816, %v812
    %v973 = vpack.c.bf16 %v817, %v813
    %v974 = vpack.c.bf16 %v818, %v814
    %v975 = vpack.c.bf16 %v819, %v815
    %v976 = vpack.c.bf16 %v824, %v820
    %v977 = vpack.c.bf16 %v825, %v821
    %v978 = vpack.c.bf16 %v826, %v822
    %v979 = vpack.c.bf16 %v827, %v823
    %v980 = vpack.c.bf16 %v832, %v828
    %v981 = vpack.c.bf16 %v833, %v829
    %v982 = vpack.c.bf16 %v834, %v830
    %v983 = vpack.c.bf16 %v835, %v831
    %v984 = vpack.c.bf16 %v840, %v836
    %v985 = vpack.c.bf16 %v841, %v837
    %v986 = vpack.c.bf16 %v842, %v838
    %v987 = vpack.c.bf16 %v843, %v839
    %v988 = vpack.c.bf16 %v848, %v844
    %v989 = vpack.c.bf16 %v849, %v845
    %v990 = vpack.c.bf16 %v850, %v846
    %v991 = vpack.c.bf16 %v851, %v847
    %v992 = vpack.c.bf16 %v856, %v852
    %v993 = vpack.c.bf16 %v857, %v853
    %v994 = vpack.c.bf16 %v858, %v854
    %v995 = vpack.c.bf16 %v859, %v855
    %v996 = vpack.c.bf16 %v864, %v860
    %v997 = vpack.c.bf16 %v865, %v861
    %v998 = vpack.c.bf16 %v866, %v862
    %v999 = vpack.c.bf16 %v867, %v863
    %v1000 = vpack.c.bf16 %v872, %v868
    %v1001 = vpack.c.bf16 %v873, %v869
    %v1002 = vpack.c.bf16 %v874, %v870
    %v1003 = vpack.c.bf16 %v875, %v871
    %v1004 = vpack.c.bf16 %v296, %v292
    %v1005 = vpack.c.bf16 %v297, %v293
    %v1006 = vpack.c.bf16 %v298, %v294
    %v1007 = vpack.c.bf16 %v299, %v295
    %1008 = vmatpush.bf16.msra.mxu0 %v904
    %1009 = vmatpush.bf16.msra.mxu0 %v900
    %1010 = vmatpush.bf16.msra.mxu0 %v896
    %1011 = vmatpush.bf16.msra.mxu0 %v892
    %1012 = vmatpush.bf16.msra.mxu0 %v888
    %1013 = vmatpush.bf16.msra.mxu0 %v884
    %1014 = vmatpush.bf16.msra.mxu0 %v880
    %1015 = vmatpush.bf16.msra.mxu0 %v876
    %1016 = vmatmul.bf16.gmra.mxu0 %v1004
    %v1017 = vpop.f32.mrf.mxu0
    %v1018 = vadd.f32 0.0, %v1017
    %v1019 = vpop.f32.mrf.mxu0
    %v1020 = vadd.f32 0.0, %v1019
    %1021 = vdwg.mxu0
    %1022 = vmatpush.bf16.msra.mxu0 %v936
    %1023 = vmatpush.bf16.msra.mxu0 %v932
    %1024 = vmatpush.bf16.msra.mxu0 %v928
    %1025 = vmatpush.bf16.msra.mxu0 %v924
    %1026 = vmatpush.bf16.msra.mxu0 %v920
    %1027 = vmatpush.bf16.msra.mxu0 %v916
    %1028 = vmatpush.bf16.msra.mxu0 %v912
    %1029 = vmatpush.bf16.msra.mxu0 %v908
    %1030 = vmatmul.bf16.gmra.mxu0 %v1005
    %v1031 = vpop.f32.mrf.mxu0
    %v1032 = vadd.f32 %v1018, %v1031
    %v1033 = vpop.f32.mrf.mxu0
    %v1034 = vadd.f32 %v1020, %v1033
    %1035 = vdwg.mxu0
    %1036 = vmatpush.bf16.msra.mxu0 %v968
    %1037 = vmatpush.bf16.msra.mxu0 %v964
    %1038 = vmatpush.bf16.msra.mxu0 %v960
    %1039 = vmatpush.bf16.msra.mxu0 %v956
    %1040 = vmatpush.bf16.msra.mxu0 %v952
    %1041 = vmatpush.bf16.msra.mxu0 %v948
    %1042 = vmatpush.bf16.msra.mxu0 %v944
    %1043 = vmatpush.bf16.msra.mxu0 %v940
    %1044 = vmatmul.bf16.gmra.mxu0 %v1006
    %v1045 = vpop.f32.mrf.mxu0
    %v1046 = vadd.f32 %v1032, %v1045
    %v1047 = vpop.f32.mrf.mxu0
    %v1048 = vadd.f32 %v1034, %v1047
    %1049 = vdwg.mxu0
    %1050 = vmatpush.bf16.msra.mxu0 %v1000
    %1051 = vmatpush.bf16.msra.mxu0 %v996
    %1052 = vmatpush.bf16.msra.mxu0 %v992
    %1053 = vmatpush.bf16.msra.mxu0 %v988
    %1054 = vmatpush.bf16.msra.mxu0 %v984
    %1055 = vmatpush.bf16.msra.mxu0 %v980
    %1056 = vmatpush.bf16.msra.mxu0 %v976
    %1057 = vmatpush.bf16.msra.mxu0 %v972
    %1058 = vmatmul.bf16.gmra.mxu0 %v1007
    %v1059 = vpop.f32.mrf.mxu0
    %v1060 = vadd.f32 %v1046, %v1059
    %v1061 = vpop.f32.mrf.mxu0
    %v1062 = vadd.f32 %v1048, %v1061
    %1063 = vdwg.mxu0
    %1064 = vmatpush.bf16.msra.mxu0 %v905
    %1065 = vmatpush.bf16.msra.mxu0 %v901
    %1066 = vmatpush.bf16.msra.mxu0 %v897
    %1067 = vmatpush.bf16.msra.mxu0 %v893
    %1068 = vmatpush.bf16.msra.mxu0 %v889
    %1069 = vmatpush.bf16.msra.mxu0 %v885
    %1070 = vmatpush.bf16.msra.mxu0 %v881
    %1071 = vmatpush.bf16.msra.mxu0 %v877
    %1072 = vmatmul.bf16.gmra.mxu0 %v1004
    %v1073 = vpop.f32.mrf.mxu0
    %v1074 = vadd.f32 0.0, %v1073
    %v1075 = vpop.f32.mrf.mxu0
    %v1076 = vadd.f32 0.0, %v1075
    %1077 = vdwg.mxu0
    %1078 = vmatpush.bf16.msra.mxu0 %v937
    %1079 = vmatpush.bf16.msra.mxu0 %v933
    %1080 = vmatpush.bf16.msra.mxu0 %v929
    %1081 = vmatpush.bf16.msra.mxu0 %v925
    %1082 = vmatpush.bf16.msra.mxu0 %v921
    %1083 = vmatpush.bf16.msra.mxu0 %v917
    %1084 = vmatpush.bf16.msra.mxu0 %v913
    %1085 = vmatpush.bf16.msra.mxu0 %v909
    %1086 = vmatmul.bf16.gmra.mxu0 %v1005
    %v1087 = vpop.f32.mrf.mxu0
    %v1088 = vadd.f32 %v1074, %v1087
    %v1089 = vpop.f32.mrf.mxu0
    %v1090 = vadd.f32 %v1076, %v1089
    %1091 = vdwg.mxu0
    %1092 = vmatpush.bf16.msra.mxu0 %v969
    %1093 = vmatpush.bf16.msra.mxu0 %v965
    %1094 = vmatpush.bf16.msra.mxu0 %v961
    %1095 = vmatpush.bf16.msra.mxu0 %v957
    %1096 = vmatpush.bf16.msra.mxu0 %v953
    %1097 = vmatpush.bf16.msra.mxu0 %v949
    %1098 = vmatpush.bf16.msra.mxu0 %v945
    %1099 = vmatpush.bf16.msra.mxu0 %v941
    %1100 = vmatmul.bf16.gmra.mxu0 %v1006
    %v1101 = vpop.f32.mrf.mxu0
    %v1102 = vadd.f32 %v1088, %v1101
    %v1103 = vpop.f32.mrf.mxu0
    %v1104 = vadd.f32 %v1090, %v1103
    %1105 = vdwg.mxu0
    %1106 = vmatpush.bf16.msra.mxu0 %v1001
    %1107 = vmatpush.bf16.msra.mxu0 %v997
    %1108 = vmatpush.bf16.msra.mxu0 %v993
    %1109 = vmatpush.bf16.msra.mxu0 %v989
    %1110 = vmatpush.bf16.msra.mxu0 %v985
    %1111 = vmatpush.bf16.msra.mxu0 %v981
    %1112 = vmatpush.bf16.msra.mxu0 %v977
    %1113 = vmatpush.bf16.msra.mxu0 %v973
    %1114 = vmatmul.bf16.gmra.mxu0 %v1007
    %v1115 = vpop.f32.mrf.mxu0
    %v1116 = vadd.f32 %v1102, %v1115
    %v1117 = vpop.f32.mrf.mxu0
    %v1118 = vadd.f32 %v1104, %v1117
    %1119 = vdwg.mxu0
    %1120 = vmatpush.bf16.msra.mxu0 %v906
    %1121 = vmatpush.bf16.msra.mxu0 %v902
    %1122 = vmatpush.bf16.msra.mxu0 %v898
    %1123 = vmatpush.bf16.msra.mxu0 %v894
    %1124 = vmatpush.bf16.msra.mxu0 %v890
    %1125 = vmatpush.bf16.msra.mxu0 %v886
    %1126 = vmatpush.bf16.msra.mxu0 %v882
    %1127 = vmatpush.bf16.msra.mxu0 %v878
    %1128 = vmatmul.bf16.gmra.mxu0 %v1004
    %v1129 = vpop.f32.mrf.mxu0
    %v1130 = vadd.f32 0.0, %v1129
    %v1131 = vpop.f32.mrf.mxu0
    %v1132 = vadd.f32 0.0, %v1131
    %1133 = vdwg.mxu0
    %1134 = vmatpush.bf16.msra.mxu0 %v938
    %1135 = vmatpush.bf16.msra.mxu0 %v934
    %1136 = vmatpush.bf16.msra.mxu0 %v930
    %1137 = vmatpush.bf16.msra.mxu0 %v926
    %1138 = vmatpush.bf16.msra.mxu0 %v922
    %1139 = vmatpush.bf16.msra.mxu0 %v918
    %1140 = vmatpush.bf16.msra.mxu0 %v914
    %1141 = vmatpush.bf16.msra.mxu0 %v910
    %1142 = vmatmul.bf16.gmra.mxu0 %v1005
    %v1143 = vpop.f32.mrf.mxu0
    %v1144 = vadd.f32 %v1130, %v1143
    %v1145 = vpop.f32.mrf.mxu0
    %v1146 = vadd.f32 %v1132, %v1145
    %1147 = vdwg.mxu0
    %1148 = vmatpush.bf16.msra.mxu0 %v970
    %1149 = vmatpush.bf16.msra.mxu0 %v966
    %1150 = vmatpush.bf16.msra.mxu0 %v962
    %1151 = vmatpush.bf16.msra.mxu0 %v958
    %1152 = vmatpush.bf16.msra.mxu0 %v954
    %1153 = vmatpush.bf16.msra.mxu0 %v950
    %1154 = vmatpush.bf16.msra.mxu0 %v946
    %1155 = vmatpush.bf16.msra.mxu0 %v942
    %1156 = vmatmul.bf16.gmra.mxu0 %v1006
    %v1157 = vpop.f32.mrf.mxu0
    %v1158 = vadd.f32 %v1144, %v1157
    %v1159 = vpop.f32.mrf.mxu0
    %v1160 = vadd.f32 %v1146, %v1159
    %1161 = vdwg.mxu0
    %1162 = vmatpush.bf16.msra.mxu0 %v1002
    %1163 = vmatpush.bf16.msra.mxu0 %v998
    %1164 = vmatpush.bf16.msra.mxu0 %v994
    %1165 = vmatpush.bf16.msra.mxu0 %v990
    %1166 = vmatpush.bf16.msra.mxu0 %v986
    %1167 = vmatpush.bf16.msra.mxu0 %v982
    %1168 = vmatpush.bf16.msra.mxu0 %v978
    %1169 = vmatpush.bf16.msra.mxu0 %v974
    %1170 = vmatmul.bf16.gmra.mxu0 %v1007
    %v1171 = vpop.f32.mrf.mxu0
    %v1172 = vadd.f32 %v1158, %v1171
    %v1173 = vpop.f32.mrf.mxu0
    %v1174 = vadd.f32 %v1160, %v1173
    %1175 = vdwg.mxu0
    %1176 = vmatpush.bf16.msra.mxu0 %v907
    %1177 = vmatpush.bf16.msra.mxu0 %v903
    %1178 = vmatpush.bf16.msra.mxu0 %v899
    %1179 = vmatpush.bf16.msra.mxu0 %v895
    %1180 = vmatpush.bf16.msra.mxu0 %v891
    %1181 = vmatpush.bf16.msra.mxu0 %v887
    %1182 = vmatpush.bf16.msra.mxu0 %v883
    %1183 = vmatpush.bf16.msra.mxu0 %v879
    %1184 = vmatmul.bf16.gmra.mxu0 %v1004
    %v1185 = vpop.f32.mrf.mxu0
    %v1186 = vadd.f32 0.0, %v1185
    %v1187 = vpop.f32.mrf.mxu0
    %v1188 = vadd.f32 0.0, %v1187
    %1189 = vdwg.mxu0
    %1190 = vmatpush.bf16.msra.mxu0 %v939
    %1191 = vmatpush.bf16.msra.mxu0 %v935
    %1192 = vmatpush.bf16.msra.mxu0 %v931
    %1193 = vmatpush.bf16.msra.mxu0 %v927
    %1194 = vmatpush.bf16.msra.mxu0 %v923
    %1195 = vmatpush.bf16.msra.mxu0 %v919
    %1196 = vmatpush.bf16.msra.mxu0 %v915
    %1197 = vmatpush.bf16.msra.mxu0 %v911
    %1198 = vmatmul.bf16.gmra.mxu0 %v1005
    %v1199 = vpop.f32.mrf.mxu0
    %v1200 = vadd.f32 %v1186, %v1199
    %v1201 = vpop.f32.mrf.mxu0
    %v1202 = vadd.f32 %v1188, %v1201
    %1203 = vdwg.mxu0
    %1204 = vmatpush.bf16.msra.mxu0 %v971
    %1205 = vmatpush.bf16.msra.mxu0 %v967
    %1206 = vmatpush.bf16.msra.mxu0 %v963
    %1207 = vmatpush.bf16.msra.mxu0 %v959
    %1208 = vmatpush.bf16.msra.mxu0 %v955
    %1209 = vmatpush.bf16.msra.mxu0 %v951
    %1210 = vmatpush.bf16.msra.mxu0 %v947
    %1211 = vmatpush.bf16.msra.mxu0 %v943
    %1212 = vmatmul.bf16.gmra.mxu0 %v1006
    %v1213 = vpop.f32.mrf.mxu0
    %v1214 = vadd.f32 %v1200, %v1213
    %v1215 = vpop.f32.mrf.mxu0
    %v1216 = vadd.f32 %v1202, %v1215
    %1217 = vdwg.mxu0
    %1218 = vmatpush.bf16.msra.mxu0 %v1003
    %1219 = vmatpush.bf16.msra.mxu0 %v999
    %1220 = vmatpush.bf16.msra.mxu0 %v995
    %1221 = vmatpush.bf16.msra.mxu0 %v991
    %1222 = vmatpush.bf16.msra.mxu0 %v987
    %1223 = vmatpush.bf16.msra.mxu0 %v983
    %1224 = vmatpush.bf16.msra.mxu0 %v979
    %1225 = vmatpush.bf16.msra.mxu0 %v975
    %1226 = vmatmul.bf16.gmra.mxu0 %v1007
    %v1227 = vpop.f32.mrf.mxu0
    %v1228 = vadd.f32 %v1214, %v1227
    %v1229 = vpop.f32.mrf.mxu0
    %v1230 = vadd.f32 %v1216, %v1229
    %1231 = vdwg.mxu0
    %v1232 = vld [vmem:[#allocation10] sm:$0xf]
    %v1234 = vperm.slane %v1232, 0
    %v1235 = vperm.slane %v1232, 1
    %v1236 = vperm.slane %v1232, 2
    %v1237 = vperm.slane %v1232, 3
    %v1242 = vmul.f32 %v1060, %v1234
    %v1243 = vmul.f32 %v1116, %v1235
    %v1244 = vmul.f32 %v1172, %v1236
    %v1245 = vmul.f32 %v1228, %v1237
    %v1246 = vmul.f32 %v1062, %v1234
    %v1247 = vmul.f32 %v1118, %v1235
    %v1248 = vmul.f32 %v1174, %v1236
    %v1249 = vmul.f32 %v1230, %v1237
    %v1250 = vld [vmem:[#allocation11] sm:$0xf]
    %v1252 = vperm.slane %v1250, 0
    %v1253 = vperm.slane %v1250, 1
    %v1254 = vperm.slane %v1250, 2
    %v1255 = vperm.slane %v1250, 3
    %v1260 = vadd.f32 %v1242, %v1252
    %v1261 = vadd.f32 %v1243, %v1253
    %v1262 = vadd.f32 %v1244, %v1254
    %v1263 = vadd.f32 %v1245, %v1255
    %v1264 = vadd.f32 %v1246, %v1252
    %v1265 = vadd.f32 %v1247, %v1253
    %v1266 = vadd.f32 %v1248, %v1254
    %v1267 = vadd.f32 %v1249, %v1255
    %v1268 = vmax.f32 %v1260, 0.0
    %v1269 = vmax.f32 %v1261, 0.0
    %v1270 = vmax.f32 %v1262, 0.0
    %v1271 = vmax.f32 %v1263, 0.0
    %v1272 = vmax.f32 %v1264, 0.0
    %v1273 = vmax.f32 %v1265, 0.0
    %v1274 = vmax.f32 %v1266, 0.0
    %v1275 = vmax.f32 %v1267, 0.0
    %s1276 = scalar_lea.vmem [#allocation8], 512
    %v1277 = vld [vmem:[%s1276] sm:$0xff]
    %v1278 = vld [vmem:[%s1276 + $0x8] sm:$0xff]
    %v1279 = vld [vmem:[%s1276 + $0x10] sm:$0xff]
    %v1280 = vld [vmem:[%s1276 + $0x18] sm:$0xff]
    %v1281 = vld [vmem:[%s1276 + $0x20] sm:$0xff]
    %v1282 = vld [vmem:[%s1276 + $0x28] sm:$0xff]
    %v1283 = vld [vmem:[%s1276 + $0x30] sm:$0xff]
    %v1284 = vld [vmem:[%s1276 + $0x38] sm:$0xff]
    %v1285 = vld [vmem:[%s1276 + $0x40] sm:$0xff]
    %v1286 = vld [vmem:[%s1276 + $0x48] sm:$0xff]
    %v1287 = vld [vmem:[%s1276 + $0x50] sm:$0xff]
    %v1288 = vld [vmem:[%s1276 + $0x58] sm:$0xff]
    %v1289 = vld [vmem:[%s1276 + $0x60] sm:$0xff]
    %v1290 = vld [vmem:[%s1276 + $0x68] sm:$0xff]
    %v1291 = vld [vmem:[%s1276 + $0x70] sm:$0xff]
    %v1292 = vld [vmem:[%s1276 + $0x78] sm:$0xff]
    %v1293 = vld [vmem:[%s1276 + $0x80] sm:$0xff]
    %v1294 = vld [vmem:[%s1276 + $0x88] sm:$0xff]
    %v1295 = vld [vmem:[%s1276 + $0x90] sm:$0xff]
    %v1296 = vld [vmem:[%s1276 + $0x98] sm:$0xff]
    %v1297 = vld [vmem:[%s1276 + $0xa0] sm:$0xff]
    %v1298 = vld [vmem:[%s1276 + $0xa8] sm:$0xff]
    %v1299 = vld [vmem:[%s1276 + $0xb0] sm:$0xff]
    %v1300 = vld [vmem:[%s1276 + $0xb8] sm:$0xff]
    %v1301 = vld [vmem:[%s1276 + $0xc0] sm:$0xff]
    %v1302 = vld [vmem:[%s1276 + $0xc8] sm:$0xff]
    %v1303 = vld [vmem:[%s1276 + $0xd0] sm:$0xff]
    %v1304 = vld [vmem:[%s1276 + $0xd8] sm:$0xff]
    %v1305 = vld [vmem:[%s1276 + $0xe0] sm:$0xff]
    %v1306 = vld [vmem:[%s1276 + $0xe8] sm:$0xff]
    %v1307 = vld [vmem:[%s1276 + $0xf0] sm:$0xff]
    %v1308 = vld [vmem:[%s1276 + $0xf8] sm:$0xff]
    %v1309 = vld [vmem:[%s1276 + $0x100] sm:$0xff]
    %v1310 = vld [vmem:[%s1276 + $0x108] sm:$0xff]
    %v1311 = vld [vmem:[%s1276 + $0x110] sm:$0xff]
    %v1312 = vld [vmem:[%s1276 + $0x118] sm:$0xff]
    %v1313 = vld [vmem:[%s1276 + $0x120] sm:$0xff]
    %v1314 = vld [vmem:[%s1276 + $0x128] sm:$0xff]
    %v1315 = vld [vmem:[%s1276 + $0x130] sm:$0xff]
    %v1316 = vld [vmem:[%s1276 + $0x138] sm:$0xff]
    %v1317 = vld [vmem:[%s1276 + $0x140] sm:$0xff]
    %v1318 = vld [vmem:[%s1276 + $0x148] sm:$0xff]
    %v1319 = vld [vmem:[%s1276 + $0x150] sm:$0xff]
    %v1320 = vld [vmem:[%s1276 + $0x158] sm:$0xff]
    %v1321 = vld [vmem:[%s1276 + $0x160] sm:$0xff]
    %v1322 = vld [vmem:[%s1276 + $0x168] sm:$0xff]
    %v1323 = vld [vmem:[%s1276 + $0x170] sm:$0xff]
    %v1324 = vld [vmem:[%s1276 + $0x178] sm:$0xff]
    %v1325 = vld [vmem:[%s1276 + $0x180] sm:$0xff]
    %v1326 = vld [vmem:[%s1276 + $0x188] sm:$0xff]
    %v1327 = vld [vmem:[%s1276 + $0x190] sm:$0xff]
    %v1328 = vld [vmem:[%s1276 + $0x198] sm:$0xff]
    %v1329 = vld [vmem:[%s1276 + $0x1a0] sm:$0xff]
    %v1330 = vld [vmem:[%s1276 + $0x1a8] sm:$0xff]
    %v1331 = vld [vmem:[%s1276 + $0x1b0] sm:$0xff]
    %v1332 = vld [vmem:[%s1276 + $0x1b8] sm:$0xff]
    %v1333 = vld [vmem:[%s1276 + $0x1c0] sm:$0xff]
    %v1334 = vld [vmem:[%s1276 + $0x1c8] sm:$0xff]
    %v1335 = vld [vmem:[%s1276 + $0x1d0] sm:$0xff]
    %v1336 = vld [vmem:[%s1276 + $0x1d8] sm:$0xff]
    %v1337 = vld [vmem:[%s1276 + $0x1e0] sm:$0xff]
    %v1338 = vld [vmem:[%s1276 + $0x1e8] sm:$0xff]
    %v1339 = vld [vmem:[%s1276 + $0x1f0] sm:$0xff]
    %v1340 = vld [vmem:[%s1276 + $0x1f8] sm:$0xff]
    %v1341 = vunpack.c.0.s8 %v1277
    %v1342 = vunpack.c.0.s8 %v1278
    %v1343 = vunpack.c.0.s8 %v1279
    %v1344 = vunpack.c.0.s8 %v1280
    %v1345 = vunpack.c.1.s8 %v1277
    %v1346 = vunpack.c.1.s8 %v1278
    %v1347 = vunpack.c.1.s8 %v1279
    %v1348 = vunpack.c.1.s8 %v1280
    %v1349 = vunpack.c.2.s8 %v1277
    %v1350 = vunpack.c.2.s8 %v1278
    %v1351 = vunpack.c.2.s8 %v1279
    %v1352 = vunpack.c.2.s8 %v1280
    %v1353 = vunpack.c.3.s8 %v1277
    %v1354 = vunpack.c.3.s8 %v1278
    %v1355 = vunpack.c.3.s8 %v1279
    %v1356 = vunpack.c.3.s8 %v1280
    %v1357 = vunpack.c.0.s8 %v1281
    %v1358 = vunpack.c.0.s8 %v1282
    %v1359 = vunpack.c.0.s8 %v1283
    %v1360 = vunpack.c.0.s8 %v1284
    %v1361 = vunpack.c.1.s8 %v1281
    %v1362 = vunpack.c.1.s8 %v1282
    %v1363 = vunpack.c.1.s8 %v1283
    %v1364 = vunpack.c.1.s8 %v1284
    %v1365 = vunpack.c.2.s8 %v1281
    %v1366 = vunpack.c.2.s8 %v1282
    %v1367 = vunpack.c.2.s8 %v1283
    %v1368 = vunpack.c.2.s8 %v1284
    %v1369 = vunpack.c.3.s8 %v1281
    %v1370 = vunpack.c.3.s8 %v1282
    %v1371 = vunpack.c.3.s8 %v1283
    %v1372 = vunpack.c.3.s8 %v1284
    %v1373 = vunpack.c.0.s8 %v1285
    %v1374 = vunpack.c.0.s8 %v1286
    %v1375 = vunpack.c.0.s8 %v1287
    %v1376 = vunpack.c.0.s8 %v1288
    %v1377 = vunpack.c.1.s8 %v1285
    %v1378 = vunpack.c.1.s8 %v1286
    %v1379 = vunpack.c.1.s8 %v1287
    %v1380 = vunpack.c.1.s8 %v1288
    %v1381 = vunpack.c.2.s8 %v1285
    %v1382 = vunpack.c.2.s8 %v1286
    %v1383 = vunpack.c.2.s8 %v1287
    %v1384 = vunpack.c.2.s8 %v1288
    %v1385 = vunpack.c.3.s8 %v1285
    %v1386 = vunpack.c.3.s8 %v1286
    %v1387 = vunpack.c.3.s8 %v1287
    %v1388 = vunpack.c.3.s8 %v1288
    %v1389 = vunpack.c.0.s8 %v1289
    %v1390 = vunpack.c.0.s8 %v1290
    %v1391 = vunpack.c.0.s8 %v1291
    %v1392 = vunpack.c.0.s8 %v1292
    %v1393 = vunpack.c.1.s8 %v1289
    %v1394 = vunpack.c.1.s8 %v1290
    %v1395 = vunpack.c.1.s8 %v1291
    %v1396 = vunpack.c.1.s8 %v1292
    %v1397 = vunpack.c.2.s8 %v1289
    %v1398 = vunpack.c.2.s8 %v1290
    %v1399 = vunpack.c.2.s8 %v1291
    %v1400 = vunpack.c.2.s8 %v1292
    %v1401 = vunpack.c.3.s8 %v1289
    %v1402 = vunpack.c.3.s8 %v1290
    %v1403 = vunpack.c.3.s8 %v1291
    %v1404 = vunpack.c.3.s8 %v1292
    %v1405 = vunpack.c.0.s8 %v1293
    %v1406 = vunpack.c.0.s8 %v1294
    %v1407 = vunpack.c.0.s8 %v1295
    %v1408 = vunpack.c.0.s8 %v1296
    %v1409 = vunpack.c.1.s8 %v1293
    %v1410 = vunpack.c.1.s8 %v1294
    %v1411 = vunpack.c.1.s8 %v1295
    %v1412 = vunpack.c.1.s8 %v1296
    %v1413 = vunpack.c.2.s8 %v1293
    %v1414 = vunpack.c.2.s8 %v1294
    %v1415 = vunpack.c.2.s8 %v1295
    %v1416 = vunpack.c.2.s8 %v1296
    %v1417 = vunpack.c.3.s8 %v1293
    %v1418 = vunpack.c.3.s8 %v1294
    %v1419 = vunpack.c.3.s8 %v1295
    %v1420 = vunpack.c.3.s8 %v1296
    %v1421 = vunpack.c.0.s8 %v1297
    %v1422 = vunpack.c.0.s8 %v1298
    %v1423 = vunpack.c.0.s8 %v1299
    %v1424 = vunpack.c.0.s8 %v1300
    %v1425 = vunpack.c.1.s8 %v1297
    %v1426 = vunpack.c.1.s8 %v1298
    %v1427 = vunpack.c.1.s8 %v1299
    %v1428 = vunpack.c.1.s8 %v1300
    %v1429 = vunpack.c.2.s8 %v1297
    %v1430 = vunpack.c.2.s8 %v1298
    %v1431 = vunpack.c.2.s8 %v1299
    %v1432 = vunpack.c.2.s8 %v1300
    %v1433 = vunpack.c.3.s8 %v1297
    %v1434 = vunpack.c.3.s8 %v1298
    %v1435 = vunpack.c.3.s8 %v1299
    %v1436 = vunpack.c.3.s8 %v1300
    %v1437 = vunpack.c.0.s8 %v1301
    %v1438 = vunpack.c.0.s8 %v1302
    %v1439 = vunpack.c.0.s8 %v1303
    %v1440 = vunpack.c.0.s8 %v1304
    %v1441 = vunpack.c.1.s8 %v1301
    %v1442 = vunpack.c.1.s8 %v1302
    %v1443 = vunpack.c.1.s8 %v1303
    %v1444 = vunpack.c.1.s8 %v1304
    %v1445 = vunpack.c.2.s8 %v1301
    %v1446 = vunpack.c.2.s8 %v1302
    %v1447 = vunpack.c.2.s8 %v1303
    %v1448 = vunpack.c.2.s8 %v1304
    %v1449 = vunpack.c.3.s8 %v1301
    %v1450 = vunpack.c.3.s8 %v1302
    %v1451 = vunpack.c.3.s8 %v1303
    %v1452 = vunpack.c.3.s8 %v1304
    %v1453 = vunpack.c.0.s8 %v1305
    %v1454 = vunpack.c.0.s8 %v1306
    %v1455 = vunpack.c.0.s8 %v1307
    %v1456 = vunpack.c.0.s8 %v1308
    %v1457 = vunpack.c.1.s8 %v1305
    %v1458 = vunpack.c.1.s8 %v1306
    %v1459 = vunpack.c.1.s8 %v1307
    %v1460 = vunpack.c.1.s8 %v1308
    %v1461 = vunpack.c.2.s8 %v1305
    %v1462 = vunpack.c.2.s8 %v1306
    %v1463 = vunpack.c.2.s8 %v1307
    %v1464 = vunpack.c.2.s8 %v1308
    %v1465 = vunpack.c.3.s8 %v1305
    %v1466 = vunpack.c.3.s8 %v1306
    %v1467 = vunpack.c.3.s8 %v1307
    %v1468 = vunpack.c.3.s8 %v1308
    %v1469 = vunpack.c.0.s8 %v1309
    %v1470 = vunpack.c.0.s8 %v1310
    %v1471 = vunpack.c.0.s8 %v1311
    %v1472 = vunpack.c.0.s8 %v1312
    %v1473 = vunpack.c.1.s8 %v1309
    %v1474 = vunpack.c.1.s8 %v1310
    %v1475 = vunpack.c.1.s8 %v1311
    %v1476 = vunpack.c.1.s8 %v1312
    %v1477 = vunpack.c.2.s8 %v1309
    %v1478 = vunpack.c.2.s8 %v1310
    %v1479 = vunpack.c.2.s8 %v1311
    %v1480 = vunpack.c.2.s8 %v1312
    %v1481 = vunpack.c.3.s8 %v1309
    %v1482 = vunpack.c.3.s8 %v1310
    %v1483 = vunpack.c.3.s8 %v1311
    %v1484 = vunpack.c.3.s8 %v1312
    %v1485 = vunpack.c.0.s8 %v1313
    %v1486 = vunpack.c.0.s8 %v1314
    %v1487 = vunpack.c.0.s8 %v1315
    %v1488 = vunpack.c.0.s8 %v1316
    %v1489 = vunpack.c.1.s8 %v1313
    %v1490 = vunpack.c.1.s8 %v1314
    %v1491 = vunpack.c.1.s8 %v1315
    %v1492 = vunpack.c.1.s8 %v1316
    %v1493 = vunpack.c.2.s8 %v1313
    %v1494 = vunpack.c.2.s8 %v1314
    %v1495 = vunpack.c.2.s8 %v1315
    %v1496 = vunpack.c.2.s8 %v1316
    %v1497 = vunpack.c.3.s8 %v1313
    %v1498 = vunpack.c.3.s8 %v1314
    %v1499 = vunpack.c.3.s8 %v1315
    %v1500 = vunpack.c.3.s8 %v1316
    %v1501 = vunpack.c.0.s8 %v1317
    %v1502 = vunpack.c.0.s8 %v1318
    %v1503 = vunpack.c.0.s8 %v1319
    %v1504 = vunpack.c.0.s8 %v1320
    %v1505 = vunpack.c.1.s8 %v1317
    %v1506 = vunpack.c.1.s8 %v1318
    %v1507 = vunpack.c.1.s8 %v1319
    %v1508 = vunpack.c.1.s8 %v1320
    %v1509 = vunpack.c.2.s8 %v1317
    %v1510 = vunpack.c.2.s8 %v1318
    %v1511 = vunpack.c.2.s8 %v1319
    %v1512 = vunpack.c.2.s8 %v1320
    %v1513 = vunpack.c.3.s8 %v1317
    %v1514 = vunpack.c.3.s8 %v1318
    %v1515 = vunpack.c.3.s8 %v1319
    %v1516 = vunpack.c.3.s8 %v1320
    %v1517 = vunpack.c.0.s8 %v1321
    %v1518 = vunpack.c.0.s8 %v1322
    %v1519 = vunpack.c.0.s8 %v1323
    %v1520 = vunpack.c.0.s8 %v1324
    %v1521 = vunpack.c.1.s8 %v1321
    %v1522 = vunpack.c.1.s8 %v1322
    %v1523 = vunpack.c.1.s8 %v1323
    %v1524 = vunpack.c.1.s8 %v1324
    %v1525 = vunpack.c.2.s8 %v1321
    %v1526 = vunpack.c.2.s8 %v1322
    %v1527 = vunpack.c.2.s8 %v1323
    %v1528 = vunpack.c.2.s8 %v1324
    %v1529 = vunpack.c.3.s8 %v1321
    %v1530 = vunpack.c.3.s8 %v1322
    %v1531 = vunpack.c.3.s8 %v1323
    %v1532 = vunpack.c.3.s8 %v1324
    %v1533 = vunpack.c.0.s8 %v1325
    %v1534 = vunpack.c.0.s8 %v1326
    %v1535 = vunpack.c.0.s8 %v1327
    %v1536 = vunpack.c.0.s8 %v1328
    %v1537 = vunpack.c.1.s8 %v1325
    %v1538 = vunpack.c.1.s8 %v1326
    %v1539 = vunpack.c.1.s8 %v1327
    %v1540 = vunpack.c.1.s8 %v1328
    %v1541 = vunpack.c.2.s8 %v1325
    %v1542 = vunpack.c.2.s8 %v1326
    %v1543 = vunpack.c.2.s8 %v1327
    %v1544 = vunpack.c.2.s8 %v1328
    %v1545 = vunpack.c.3.s8 %v1325
    %v1546 = vunpack.c.3.s8 %v1326
    %v1547 = vunpack.c.3.s8 %v1327
    %v1548 = vunpack.c.3.s8 %v1328
    %v1549 = vunpack.c.0.s8 %v1329
    %v1550 = vunpack.c.0.s8 %v1330
    %v1551 = vunpack.c.0.s8 %v1331
    %v1552 = vunpack.c.0.s8 %v1332
    %v1553 = vunpack.c.1.s8 %v1329
    %v1554 = vunpack.c.1.s8 %v1330
    %v1555 = vunpack.c.1.s8 %v1331
    %v1556 = vunpack.c.1.s8 %v1332
    %v1557 = vunpack.c.2.s8 %v1329
    %v1558 = vunpack.c.2.s8 %v1330
    %v1559 = vunpack.c.2.s8 %v1331
    %v1560 = vunpack.c.2.s8 %v1332
    %v1561 = vunpack.c.3.s8 %v1329
    %v1562 = vunpack.c.3.s8 %v1330
    %v1563 = vunpack.c.3.s8 %v1331
    %v1564 = vunpack.c.3.s8 %v1332
    %v1565 = vunpack.c.0.s8 %v1333
    %v1566 = vunpack.c.0.s8 %v1334
    %v1567 = vunpack.c.0.s8 %v1335
    %v1568 = vunpack.c.0.s8 %v1336
    %v1569 = vunpack.c.1.s8 %v1333
    %v1570 = vunpack.c.1.s8 %v1334
    %v1571 = vunpack.c.1.s8 %v1335
    %v1572 = vunpack.c.1.s8 %v1336
    %v1573 = vunpack.c.2.s8 %v1333
    %v1574 = vunpack.c.2.s8 %v1334
    %v1575 = vunpack.c.2.s8 %v1335
    %v1576 = vunpack.c.2.s8 %v1336
    %v1577 = vunpack.c.3.s8 %v1333
    %v1578 = vunpack.c.3.s8 %v1334
    %v1579 = vunpack.c.3.s8 %v1335
    %v1580 = vunpack.c.3.s8 %v1336
    %v1581 = vunpack.c.0.s8 %v1337
    %v1582 = vunpack.c.0.s8 %v1338
    %v1583 = vunpack.c.0.s8 %v1339
    %v1584 = vunpack.c.0.s8 %v1340
    %v1585 = vunpack.c.1.s8 %v1337
    %v1586 = vunpack.c.1.s8 %v1338
    %v1587 = vunpack.c.1.s8 %v1339
    %v1588 = vunpack.c.1.s8 %v1340
    %v1589 = vunpack.c.2.s8 %v1337
    %v1590 = vunpack.c.2.s8 %v1338
    %v1591 = vunpack.c.2.s8 %v1339
    %v1592 = vunpack.c.2.s8 %v1340
    %v1593 = vunpack.c.3.s8 %v1337
    %v1594 = vunpack.c.3.s8 %v1338
    %v1595 = vunpack.c.3.s8 %v1339
    %v1596 = vunpack.c.3.s8 %v1340
    %v1597 = vcvt.s32.f32 %v1341
    %v1598 = vcvt.s32.f32 %v1342
    %v1599 = vcvt.s32.f32 %v1343
    %v1600 = vcvt.s32.f32 %v1344
    %v1601 = vcvt.s32.f32 %v1345
    %v1602 = vcvt.s32.f32 %v1346
    %v1603 = vcvt.s32.f32 %v1347
    %v1604 = vcvt.s32.f32 %v1348
    %v1605 = vcvt.s32.f32 %v1349
    %v1606 = vcvt.s32.f32 %v1350
    %v1607 = vcvt.s32.f32 %v1351
    %v1608 = vcvt.s32.f32 %v1352
    %v1609 = vcvt.s32.f32 %v1353
    %v1610 = vcvt.s32.f32 %v1354
    %v1611 = vcvt.s32.f32 %v1355
    %v1612 = vcvt.s32.f32 %v1356
    %v1613 = vcvt.s32.f32 %v1357
    %v1614 = vcvt.s32.f32 %v1358
    %v1615 = vcvt.s32.f32 %v1359
    %v1616 = vcvt.s32.f32 %v1360
    %v1617 = vcvt.s32.f32 %v1361
    %v1618 = vcvt.s32.f32 %v1362
    %v1619 = vcvt.s32.f32 %v1363
    %v1620 = vcvt.s32.f32 %v1364
    %v1621 = vcvt.s32.f32 %v1365
    %v1622 = vcvt.s32.f32 %v1366
    %v1623 = vcvt.s32.f32 %v1367
    %v1624 = vcvt.s32.f32 %v1368
    %v1625 = vcvt.s32.f32 %v1369
    %v1626 = vcvt.s32.f32 %v1370
    %v1627 = vcvt.s32.f32 %v1371
    %v1628 = vcvt.s32.f32 %v1372
    %v1629 = vcvt.s32.f32 %v1373
    %v1630 = vcvt.s32.f32 %v1374
    %v1631 = vcvt.s32.f32 %v1375
    %v1632 = vcvt.s32.f32 %v1376
    %v1633 = vcvt.s32.f32 %v1377
    %v1634 = vcvt.s32.f32 %v1378
    %v1635 = vcvt.s32.f32 %v1379
    %v1636 = vcvt.s32.f32 %v1380
    %v1637 = vcvt.s32.f32 %v1381
    %v1638 = vcvt.s32.f32 %v1382
    %v1639 = vcvt.s32.f32 %v1383
    %v1640 = vcvt.s32.f32 %v1384
    %v1641 = vcvt.s32.f32 %v1385
    %v1642 = vcvt.s32.f32 %v1386
    %v1643 = vcvt.s32.f32 %v1387
    %v1644 = vcvt.s32.f32 %v1388
    %v1645 = vcvt.s32.f32 %v1389
    %v1646 = vcvt.s32.f32 %v1390
    %v1647 = vcvt.s32.f32 %v1391
    %v1648 = vcvt.s32.f32 %v1392
    %v1649 = vcvt.s32.f32 %v1393
    %v1650 = vcvt.s32.f32 %v1394
    %v1651 = vcvt.s32.f32 %v1395
    %v1652 = vcvt.s32.f32 %v1396
    %v1653 = vcvt.s32.f32 %v1397
    %v1654 = vcvt.s32.f32 %v1398
    %v1655 = vcvt.s32.f32 %v1399
    %v1656 = vcvt.s32.f32 %v1400
    %v1657 = vcvt.s32.f32 %v1401
    %v1658 = vcvt.s32.f32 %v1402
    %v1659 = vcvt.s32.f32 %v1403
    %v1660 = vcvt.s32.f32 %v1404
    %v1661 = vcvt.s32.f32 %v1405
    %v1662 = vcvt.s32.f32 %v1406
    %v1663 = vcvt.s32.f32 %v1407
    %v1664 = vcvt.s32.f32 %v1408
    %v1665 = vcvt.s32.f32 %v1409
    %v1666 = vcvt.s32.f32 %v1410
    %v1667 = vcvt.s32.f32 %v1411
    %v1668 = vcvt.s32.f32 %v1412
    %v1669 = vcvt.s32.f32 %v1413
    %v1670 = vcvt.s32.f32 %v1414
    %v1671 = vcvt.s32.f32 %v1415
    %v1672 = vcvt.s32.f32 %v1416
    %v1673 = vcvt.s32.f32 %v1417
    %v1674 = vcvt.s32.f32 %v1418
    %v1675 = vcvt.s32.f32 %v1419
    %v1676 = vcvt.s32.f32 %v1420
    %v1677 = vcvt.s32.f32 %v1421
    %v1678 = vcvt.s32.f32 %v1422
    %v1679 = vcvt.s32.f32 %v1423
    %v1680 = vcvt.s32.f32 %v1424
    %v1681 = vcvt.s32.f32 %v1425
    %v1682 = vcvt.s32.f32 %v1426
    %v1683 = vcvt.s32.f32 %v1427
    %v1684 = vcvt.s32.f32 %v1428
    %v1685 = vcvt.s32.f32 %v1429
    %v1686 = vcvt.s32.f32 %v1430
    %v1687 = vcvt.s32.f32 %v1431
    %v1688 = vcvt.s32.f32 %v1432
    %v1689 = vcvt.s32.f32 %v1433
    %v1690 = vcvt.s32.f32 %v1434
    %v1691 = vcvt.s32.f32 %v1435
    %v1692 = vcvt.s32.f32 %v1436
    %v1693 = vcvt.s32.f32 %v1437
    %v1694 = vcvt.s32.f32 %v1438
    %v1695 = vcvt.s32.f32 %v1439
    %v1696 = vcvt.s32.f32 %v1440
    %v1697 = vcvt.s32.f32 %v1441
    %v1698 = vcvt.s32.f32 %v1442
    %v1699 = vcvt.s32.f32 %v1443
    %v1700 = vcvt.s32.f32 %v1444
    %v1701 = vcvt.s32.f32 %v1445
    %v1702 = vcvt.s32.f32 %v1446
    %v1703 = vcvt.s32.f32 %v1447
    %v1704 = vcvt.s32.f32 %v1448
    %v1705 = vcvt.s32.f32 %v1449
    %v1706 = vcvt.s32.f32 %v1450
    %v1707 = vcvt.s32.f32 %v1451
    %v1708 = vcvt.s32.f32 %v1452
    %v1709 = vcvt.s32.f32 %v1453
    %v1710 = vcvt.s32.f32 %v1454
    %v1711 = vcvt.s32.f32 %v1455
    %v1712 = vcvt.s32.f32 %v1456
    %v1713 = vcvt.s32.f32 %v1457
    %v1714 = vcvt.s32.f32 %v1458
    %v1715 = vcvt.s32.f32 %v1459
    %v1716 = vcvt.s32.f32 %v1460
    %v1717 = vcvt.s32.f32 %v1461
    %v1718 = vcvt.s32.f32 %v1462
    %v1719 = vcvt.s32.f32 %v1463
    %v1720 = vcvt.s32.f32 %v1464
    %v1721 = vcvt.s32.f32 %v1465
    %v1722 = vcvt.s32.f32 %v1466
    %v1723 = vcvt.s32.f32 %v1467
    %v1724 = vcvt.s32.f32 %v1468
    %v1725 = vcvt.s32.f32 %v1469
    %v1726 = vcvt.s32.f32 %v1470
    %v1727 = vcvt.s32.f32 %v1471
    %v1728 = vcvt.s32.f32 %v1472
    %v1729 = vcvt.s32.f32 %v1473
    %v1730 = vcvt.s32.f32 %v1474
    %v1731 = vcvt.s32.f32 %v1475
    %v1732 = vcvt.s32.f32 %v1476
    %v1733 = vcvt.s32.f32 %v1477
    %v1734 = vcvt.s32.f32 %v1478
    %v1735 = vcvt.s32.f32 %v1479
    %v1736 = vcvt.s32.f32 %v1480
    %v1737 = vcvt.s32.f32 %v1481
    %v1738 = vcvt.s32.f32 %v1482
    %v1739 = vcvt.s32.f32 %v1483
    %v1740 = vcvt.s32.f32 %v1484
    %v1741 = vcvt.s32.f32 %v1485
    %v1742 = vcvt.s32.f32 %v1486
    %v1743 = vcvt.s32.f32 %v1487
    %v1744 = vcvt.s32.f32 %v1488
    %v1745 = vcvt.s32.f32 %v1489
    %v1746 = vcvt.s32.f32 %v1490
    %v1747 = vcvt.s32.f32 %v1491
    %v1748 = vcvt.s32.f32 %v1492
    %v1749 = vcvt.s32.f32 %v1493
    %v1750 = vcvt.s32.f32 %v1494
    %v1751 = vcvt.s32.f32 %v1495
    %v1752 = vcvt.s32.f32 %v1496
    %v1753 = vcvt.s32.f32 %v1497
    %v1754 = vcvt.s32.f32 %v1498
    %v1755 = vcvt.s32.f32 %v1499
    %v1756 = vcvt.s32.f32 %v1500
    %v1757 = vcvt.s32.f32 %v1501
    %v1758 = vcvt.s32.f32 %v1502
    %v1759 = vcvt.s32.f32 %v1503
    %v1760 = vcvt.s32.f32 %v1504
    %v1761 = vcvt.s32.f32 %v1505
    %v1762 = vcvt.s32.f32 %v1506
    %v1763 = vcvt.s32.f32 %v1507
    %v1764 = vcvt.s32.f32 %v1508
    %v1765 = vcvt.s32.f32 %v1509
    %v1766 = vcvt.s32.f32 %v1510
    %v1767 = vcvt.s32.f32 %v1511
    %v1768 = vcvt.s32.f32 %v1512
    %v1769 = vcvt.s32.f32 %v1513
    %v1770 = vcvt.s32.f32 %v1514
    %v1771 = vcvt.s32.f32 %v1515
    %v1772 = vcvt.s32.f32 %v1516
    %v1773 = vcvt.s32.f32 %v1517
    %v1774 = vcvt.s32.f32 %v1518
    %v1775 = vcvt.s32.f32 %v1519
    %v1776 = vcvt.s32.f32 %v1520
    %v1777 = vcvt.s32.f32 %v1521
    %v1778 = vcvt.s32.f32 %v1522
    %v1779 = vcvt.s32.f32 %v1523
    %v1780 = vcvt.s32.f32 %v1524
    %v1781 = vcvt.s32.f32 %v1525
    %v1782 = vcvt.s32.f32 %v1526
    %v1783 = vcvt.s32.f32 %v1527
    %v1784 = vcvt.s32.f32 %v1528
    %v1785 = vcvt.s32.f32 %v1529
    %v1786 = vcvt.s32.f32 %v1530
    %v1787 = vcvt.s32.f32 %v1531
    %v1788 = vcvt.s32.f32 %v1532
    %v1789 = vcvt.s32.f32 %v1533
    %v1790 = vcvt.s32.f32 %v1534
    %v1791 = vcvt.s32.f32 %v1535
    %v1792 = vcvt.s32.f32 %v1536
    %v1793 = vcvt.s32.f32 %v1537
    %v1794 = vcvt.s32.f32 %v1538
    %v1795 = vcvt.s32.f32 %v1539
    %v1796 = vcvt.s32.f32 %v1540
    %v1797 = vcvt.s32.f32 %v1541
    %v1798 = vcvt.s32.f32 %v1542
    %v1799 = vcvt.s32.f32 %v1543
    %v1800 = vcvt.s32.f32 %v1544
    %v1801 = vcvt.s32.f32 %v1545
    %v1802 = vcvt.s32.f32 %v1546
    %v1803 = vcvt.s32.f32 %v1547
    %v1804 = vcvt.s32.f32 %v1548
    %v1805 = vcvt.s32.f32 %v1549
    %v1806 = vcvt.s32.f32 %v1550
    %v1807 = vcvt.s32.f32 %v1551
    %v1808 = vcvt.s32.f32 %v1552
    %v1809 = vcvt.s32.f32 %v1553
    %v1810 = vcvt.s32.f32 %v1554
    %v1811 = vcvt.s32.f32 %v1555
    %v1812 = vcvt.s32.f32 %v1556
    %v1813 = vcvt.s32.f32 %v1557
    %v1814 = vcvt.s32.f32 %v1558
    %v1815 = vcvt.s32.f32 %v1559
    %v1816 = vcvt.s32.f32 %v1560
    %v1817 = vcvt.s32.f32 %v1561
    %v1818 = vcvt.s32.f32 %v1562
    %v1819 = vcvt.s32.f32 %v1563
    %v1820 = vcvt.s32.f32 %v1564
    %v1821 = vcvt.s32.f32 %v1565
    %v1822 = vcvt.s32.f32 %v1566
    %v1823 = vcvt.s32.f32 %v1567
    %v1824 = vcvt.s32.f32 %v1568
    %v1825 = vcvt.s32.f32 %v1569
    %v1826 = vcvt.s32.f32 %v1570
    %v1827 = vcvt.s32.f32 %v1571
    %v1828 = vcvt.s32.f32 %v1572
    %v1829 = vcvt.s32.f32 %v1573
    %v1830 = vcvt.s32.f32 %v1574
    %v1831 = vcvt.s32.f32 %v1575
    %v1832 = vcvt.s32.f32 %v1576
    %v1833 = vcvt.s32.f32 %v1577
    %v1834 = vcvt.s32.f32 %v1578
    %v1835 = vcvt.s32.f32 %v1579
    %v1836 = vcvt.s32.f32 %v1580
    %v1837 = vcvt.s32.f32 %v1581
    %v1838 = vcvt.s32.f32 %v1582
    %v1839 = vcvt.s32.f32 %v1583
    %v1840 = vcvt.s32.f32 %v1584
    %v1841 = vcvt.s32.f32 %v1585
    %v1842 = vcvt.s32.f32 %v1586
    %v1843 = vcvt.s32.f32 %v1587
    %v1844 = vcvt.s32.f32 %v1588
    %v1845 = vcvt.s32.f32 %v1589
    %v1846 = vcvt.s32.f32 %v1590
    %v1847 = vcvt.s32.f32 %v1591
    %v1848 = vcvt.s32.f32 %v1592
    %v1849 = vcvt.s32.f32 %v1593
    %v1850 = vcvt.s32.f32 %v1594
    %v1851 = vcvt.s32.f32 %v1595
    %v1852 = vcvt.s32.f32 %v1596
    %v1853 = vpack.c.bf16 %v1601, %v1597
    %v1854 = vpack.c.bf16 %v1602, %v1598
    %v1855 = vpack.c.bf16 %v1603, %v1599
    %v1856 = vpack.c.bf16 %v1604, %v1600
    %v1857 = vpack.c.bf16 %v1609, %v1605
    %v1858 = vpack.c.bf16 %v1610, %v1606
    %v1859 = vpack.c.bf16 %v1611, %v1607
    %v1860 = vpack.c.bf16 %v1612, %v1608
    %v1861 = vpack.c.bf16 %v1617, %v1613
    %v1862 = vpack.c.bf16 %v1618, %v1614
    %v1863 = vpack.c.bf16 %v1619, %v1615
    %v1864 = vpack.c.bf16 %v1620, %v1616
    %v1865 = vpack.c.bf16 %v1625, %v1621
    %v1866 = vpack.c.bf16 %v1626, %v1622
    %v1867 = vpack.c.bf16 %v1627, %v1623
    %v1868 = vpack.c.bf16 %v1628, %v1624
    %v1869 = vpack.c.bf16 %v1633, %v1629
    %v1870 = vpack.c.bf16 %v1634, %v1630
    %v1871 = vpack.c.bf16 %v1635, %v1631
    %v1872 = vpack.c.bf16 %v1636, %v1632
    %v1873 = vpack.c.bf16 %v1641, %v1637
    %v1874 = vpack.c.bf16 %v1642, %v1638
    %v1875 = vpack.c.bf16 %v1643, %v1639
    %v1876 = vpack.c.bf16 %v1644, %v1640
    %v1877 = vpack.c.bf16 %v1649, %v1645
    %v1878 = vpack.c.bf16 %v1650, %v1646
    %v1879 = vpack.c.bf16 %v1651, %v1647
    %v1880 = vpack.c.bf16 %v1652, %v1648
    %v1881 = vpack.c.bf16 %v1657, %v1653
    %v1882 = vpack.c.bf16 %v1658, %v1654
    %v1883 = vpack.c.bf16 %v1659, %v1655
    %v1884 = vpack.c.bf16 %v1660, %v1656
    %v1885 = vpack.c.bf16 %v1665, %v1661
    %v1886 = vpack.c.bf16 %v1666, %v1662
    %v1887 = vpack.c.bf16 %v1667, %v1663
    %v1888 = vpack.c.bf16 %v1668, %v1664
    %v1889 = vpack.c.bf16 %v1673, %v1669
    %v1890 = vpack.c.bf16 %v1674, %v1670
    %v1891 = vpack.c.bf16 %v1675, %v1671
    %v1892 = vpack.c.bf16 %v1676, %v1672
    %v1893 = vpack.c.bf16 %v1681, %v1677
    %v1894 = vpack.c.bf16 %v1682, %v1678
    %v1895 = vpack.c.bf16 %v1683, %v1679
    %v1896 = vpack.c.bf16 %v1684, %v1680
    %v1897 = vpack.c.bf16 %v1689, %v1685
    %v1898 = vpack.c.bf16 %v1690, %v1686
    %v1899 = vpack.c.bf16 %v1691, %v1687
    %v1900 = vpack.c.bf16 %v1692, %v1688
    %v1901 = vpack.c.bf16 %v1697, %v1693
    %v1902 = vpack.c.bf16 %v1698, %v1694
    %v1903 = vpack.c.bf16 %v1699, %v1695
    %v1904 = vpack.c.bf16 %v1700, %v1696
    %v1905 = vpack.c.bf16 %v1705, %v1701
    %v1906 = vpack.c.bf16 %v1706, %v1702
    %v1907 = vpack.c.bf16 %v1707, %v1703
    %v1908 = vpack.c.bf16 %v1708, %v1704
    %v1909 = vpack.c.bf16 %v1713, %v1709
    %v1910 = vpack.c.bf16 %v1714, %v1710
    %v1911 = vpack.c.bf16 %v1715, %v1711
    %v1912 = vpack.c.bf16 %v1716, %v1712
    %v1913 = vpack.c.bf16 %v1721, %v1717
    %v1914 = vpack.c.bf16 %v1722, %v1718
    %v1915 = vpack.c.bf16 %v1723, %v1719
    %v1916 = vpack.c.bf16 %v1724, %v1720
    %v1917 = vpack.c.bf16 %v1729, %v1725
    %v1918 = vpack.c.bf16 %v1730, %v1726
    %v1919 = vpack.c.bf16 %v1731, %v1727
    %v1920 = vpack.c.bf16 %v1732, %v1728
    %v1921 = vpack.c.bf16 %v1737, %v1733
    %v1922 = vpack.c.bf16 %v1738, %v1734
    %v1923 = vpack.c.bf16 %v1739, %v1735
    %v1924 = vpack.c.bf16 %v1740, %v1736
    %v1925 = vpack.c.bf16 %v1745, %v1741
    %v1926 = vpack.c.bf16 %v1746, %v1742
    %v1927 = vpack.c.bf16 %v1747, %v1743
    %v1928 = vpack.c.bf16 %v1748, %v1744
    %v1929 = vpack.c.bf16 %v1753, %v1749
    %v1930 = vpack.c.bf16 %v1754, %v1750
    %v1931 = vpack.c.bf16 %v1755, %v1751
    %v1932 = vpack.c.bf16 %v1756, %v1752
    %v1933 = vpack.c.bf16 %v1761, %v1757
    %v1934 = vpack.c.bf16 %v1762, %v1758
    %v1935 = vpack.c.bf16 %v1763, %v1759
    %v1936 = vpack.c.bf16 %v1764, %v1760
    %v1937 = vpack.c.bf16 %v1769, %v1765
    %v1938 = vpack.c.bf16 %v1770, %v1766
    %v1939 = vpack.c.bf16 %v1771, %v1767
    %v1940 = vpack.c.bf16 %v1772, %v1768
    %v1941 = vpack.c.bf16 %v1777, %v1773
    %v1942 = vpack.c.bf16 %v1778, %v1774
    %v1943 = vpack.c.bf16 %v1779, %v1775
    %v1944 = vpack.c.bf16 %v1780, %v1776
    %v1945 = vpack.c.bf16 %v1785, %v1781
    %v1946 = vpack.c.bf16 %v1786, %v1782
    %v1947 = vpack.c.bf16 %v1787, %v1783
    %v1948 = vpack.c.bf16 %v1788, %v1784
    %v1949 = vpack.c.bf16 %v1793, %v1789
    %v1950 = vpack.c.bf16 %v1794, %v1790
    %v1951 = vpack.c.bf16 %v1795, %v1791
    %v1952 = vpack.c.bf16 %v1796, %v1792
    %v1953 = vpack.c.bf16 %v1801, %v1797
    %v1954 = vpack.c.bf16 %v1802, %v1798
    %v1955 = vpack.c.bf16 %v1803, %v1799
    %v1956 = vpack.c.bf16 %v1804, %v1800
    %v1957 = vpack.c.bf16 %v1809, %v1805
    %v1958 = vpack.c.bf16 %v1810, %v1806
    %v1959 = vpack.c.bf16 %v1811, %v1807
    %v1960 = vpack.c.bf16 %v1812, %v1808
    %v1961 = vpack.c.bf16 %v1817, %v1813
    %v1962 = vpack.c.bf16 %v1818, %v1814
    %v1963 = vpack.c.bf16 %v1819, %v1815
    %v1964 = vpack.c.bf16 %v1820, %v1816
    %v1965 = vpack.c.bf16 %v1825, %v1821
    %v1966 = vpack.c.bf16 %v1826, %v1822
    %v1967 = vpack.c.bf16 %v1827, %v1823
    %v1968 = vpack.c.bf16 %v1828, %v1824
    %v1969 = vpack.c.bf16 %v1833, %v1829
    %v1970 = vpack.c.bf16 %v1834, %v1830
    %v1971 = vpack.c.bf16 %v1835, %v1831
    %v1972 = vpack.c.bf16 %v1836, %v1832
    %v1973 = vpack.c.bf16 %v1841, %v1837
    %v1974 = vpack.c.bf16 %v1842, %v1838
    %v1975 = vpack.c.bf16 %v1843, %v1839
    %v1976 = vpack.c.bf16 %v1844, %v1840
    %v1977 = vpack.c.bf16 %v1849, %v1845
    %v1978 = vpack.c.bf16 %v1850, %v1846
    %v1979 = vpack.c.bf16 %v1851, %v1847
    %v1980 = vpack.c.bf16 %v1852, %v1848
    %v1981 = vpack.c.bf16 %v1272, %v1268
    %v1982 = vpack.c.bf16 %v1273, %v1269
    %v1983 = vpack.c.bf16 %v1274, %v1270
    %v1984 = vpack.c.bf16 %v1275, %v1271
    %1985 = vmatpush.bf16.msra.mxu0 %v1881
    %1986 = vmatpush.bf16.msra.mxu0 %v1877
    %1987 = vmatpush.bf16.msra.mxu0 %v1873
    %1988 = vmatpush.bf16.msra.mxu0 %v1869
    %1989 = vmatpush.bf16.msra.mxu0 %v1865
    %1990 = vmatpush.bf16.msra.mxu0 %v1861
    %1991 = vmatpush.bf16.msra.mxu0 %v1857
    %1992 = vmatpush.bf16.msra.mxu0 %v1853
    %1993 = vmatmul.bf16.gmra.mxu0 %v1981
    %v1994 = vpop.f32.mrf.mxu0
    %v1995 = vadd.f32 0.0, %v1994
    %v1996 = vpop.f32.mrf.mxu0
    %v1997 = vadd.f32 0.0, %v1996
    %1998 = vdwg.mxu0
    %1999 = vmatpush.bf16.msra.mxu0 %v1913
    %2000 = vmatpush.bf16.msra.mxu0 %v1909
    %2001 = vmatpush.bf16.msra.mxu0 %v1905
    %2002 = vmatpush.bf16.msra.mxu0 %v1901
    %2003 = vmatpush.bf16.msra.mxu0 %v1897
    %2004 = vmatpush.bf16.msra.mxu0 %v1893
    %2005 = vmatpush.bf16.msra.mxu0 %v1889
    %2006 = vmatpush.bf16.msra.mxu0 %v1885
    %2007 = vmatmul.bf16.gmra.mxu0 %v1982
    %v2008 = vpop.f32.mrf.mxu0
    %v2009 = vadd.f32 %v1995, %v2008
    %v2010 = vpop.f32.mrf.mxu0
    %v2011 = vadd.f32 %v1997, %v2010
    %2012 = vdwg.mxu0
    %2013 = vmatpush.bf16.msra.mxu0 %v1945
    %2014 = vmatpush.bf16.msra.mxu0 %v1941
    %2015 = vmatpush.bf16.msra.mxu0 %v1937
    %2016 = vmatpush.bf16.msra.mxu0 %v1933
    %2017 = vmatpush.bf16.msra.mxu0 %v1929
    %2018 = vmatpush.bf16.msra.mxu0 %v1925
    %2019 = vmatpush.bf16.msra.mxu0 %v1921
    %2020 = vmatpush.bf16.msra.mxu0 %v1917
    %2021 = vmatmul.bf16.gmra.mxu0 %v1983
    %v2022 = vpop.f32.mrf.mxu0
    %v2023 = vadd.f32 %v2009, %v2022
    %v2024 = vpop.f32.mrf.mxu0
    %v2025 = vadd.f32 %v2011, %v2024
    %2026 = vdwg.mxu0
    %2027 = vmatpush.bf16.msra.mxu0 %v1977
    %2028 = vmatpush.bf16.msra.mxu0 %v1973
    %2029 = vmatpush.bf16.msra.mxu0 %v1969
    %2030 = vmatpush.bf16.msra.mxu0 %v1965
    %2031 = vmatpush.bf16.msra.mxu0 %v1961
    %2032 = vmatpush.bf16.msra.mxu0 %v1957
    %2033 = vmatpush.bf16.msra.mxu0 %v1953
    %2034 = vmatpush.bf16.msra.mxu0 %v1949
    %2035 = vmatmul.bf16.gmra.mxu0 %v1984
    %v2036 = vpop.f32.mrf.mxu0
    %v2037 = vadd.f32 %v2023, %v2036
    %v2038 = vpop.f32.mrf.mxu0
    %v2039 = vadd.f32 %v2025, %v2038
    %2040 = vdwg.mxu0
    %2041 = vmatpush.bf16.msra.mxu0 %v1882
    %2042 = vmatpush.bf16.msra.mxu0 %v1878
    %2043 = vmatpush.bf16.msra.mxu0 %v1874
    %2044 = vmatpush.bf16.msra.mxu0 %v1870
    %2045 = vmatpush.bf16.msra.mxu0 %v1866
    %2046 = vmatpush.bf16.msra.mxu0 %v1862
    %2047 = vmatpush.bf16.msra.mxu0 %v1858
    %2048 = vmatpush.bf16.msra.mxu0 %v1854
    %2049 = vmatmul.bf16.gmra.mxu0 %v1981
    %v2050 = vpop.f32.mrf.mxu0
    %v2051 = vadd.f32 0.0, %v2050
    %v2052 = vpop.f32.mrf.mxu0
    %v2053 = vadd.f32 0.0, %v2052
    %2054 = vdwg.mxu0
    %2055 = vmatpush.bf16.msra.mxu0 %v1914
    %2056 = vmatpush.bf16.msra.mxu0 %v1910
    %2057 = vmatpush.bf16.msra.mxu0 %v1906
    %2058 = vmatpush.bf16.msra.mxu0 %v1902
    %2059 = vmatpush.bf16.msra.mxu0 %v1898
    %2060 = vmatpush.bf16.msra.mxu0 %v1894
    %2061 = vmatpush.bf16.msra.mxu0 %v1890
    %2062 = vmatpush.bf16.msra.mxu0 %v1886
    %2063 = vmatmul.bf16.gmra.mxu0 %v1982
    %v2064 = vpop.f32.mrf.mxu0
    %v2065 = vadd.f32 %v2051, %v2064
    %v2066 = vpop.f32.mrf.mxu0
    %v2067 = vadd.f32 %v2053, %v2066
    %2068 = vdwg.mxu0
    %2069 = vmatpush.bf16.msra.mxu0 %v1946
    %2070 = vmatpush.bf16.msra.mxu0 %v1942
    %2071 = vmatpush.bf16.msra.mxu0 %v1938
    %2072 = vmatpush.bf16.msra.mxu0 %v1934
    %2073 = vmatpush.bf16.msra.mxu0 %v1930
    %2074 = vmatpush.bf16.msra.mxu0 %v1926
    %2075 = vmatpush.bf16.msra.mxu0 %v1922
    %2076 = vmatpush.bf16.msra.mxu0 %v1918
    %2077 = vmatmul.bf16.gmra.mxu0 %v1983
    %v2078 = vpop.f32.mrf.mxu0
    %v2079 = vadd.f32 %v2065, %v2078
    %v2080 = vpop.f32.mrf.mxu0
    %v2081 = vadd.f32 %v2067, %v2080
    %2082 = vdwg.mxu0
    %2083 = vmatpush.bf16.msra.mxu0 %v1978
    %2084 = vmatpush.bf16.msra.mxu0 %v1974
    %2085 = vmatpush.bf16.msra.mxu0 %v1970
    %2086 = vmatpush.bf16.msra.mxu0 %v1966
    %2087 = vmatpush.bf16.msra.mxu0 %v1962
    %2088 = vmatpush.bf16.msra.mxu0 %v1958
    %2089 = vmatpush.bf16.msra.mxu0 %v1954
    %2090 = vmatpush.bf16.msra.mxu0 %v1950
    %2091 = vmatmul.bf16.gmra.mxu0 %v1984
    %v2092 = vpop.f32.mrf.mxu0
    %v2093 = vadd.f32 %v2079, %v2092
    %v2094 = vpop.f32.mrf.mxu0
    %v2095 = vadd.f32 %v2081, %v2094
    %2096 = vdwg.mxu0
    %2097 = vmatpush.bf16.msra.mxu0 %v1883
    %2098 = vmatpush.bf16.msra.mxu0 %v1879
    %2099 = vmatpush.bf16.msra.mxu0 %v1875
    %2100 = vmatpush.bf16.msra.mxu0 %v1871
    %2101 = vmatpush.bf16.msra.mxu0 %v1867
    %2102 = vmatpush.bf16.msra.mxu0 %v1863
    %2103 = vmatpush.bf16.msra.mxu0 %v1859
    %2104 = vmatpush.bf16.msra.mxu0 %v1855
    %2105 = vmatmul.bf16.gmra.mxu0 %v1981
    %v2106 = vpop.f32.mrf.mxu0
    %v2107 = vadd.f32 0.0, %v2106
    %v2108 = vpop.f32.mrf.mxu0
    %v2109 = vadd.f32 0.0, %v2108
    %2110 = vdwg.mxu0
    %2111 = vmatpush.bf16.msra.mxu0 %v1915
    %2112 = vmatpush.bf16.msra.mxu0 %v1911
    %2113 = vmatpush.bf16.msra.mxu0 %v1907
    %2114 = vmatpush.bf16.msra.mxu0 %v1903
    %2115 = vmatpush.bf16.msra.mxu0 %v1899
    %2116 = vmatpush.bf16.msra.mxu0 %v1895
    %2117 = vmatpush.bf16.msra.mxu0 %v1891
    %2118 = vmatpush.bf16.msra.mxu0 %v1887
    %2119 = vmatmul.bf16.gmra.mxu0 %v1982
    %v2120 = vpop.f32.mrf.mxu0
    %v2121 = vadd.f32 %v2107, %v2120
    %v2122 = vpop.f32.mrf.mxu0
    %v2123 = vadd.f32 %v2109, %v2122
    %2124 = vdwg.mxu0
    %2125 = vmatpush.bf16.msra.mxu0 %v1947
    %2126 = vmatpush.bf16.msra.mxu0 %v1943
    %2127 = vmatpush.bf16.msra.mxu0 %v1939
    %2128 = vmatpush.bf16.msra.mxu0 %v1935
    %2129 = vmatpush.bf16.msra.mxu0 %v1931
    %2130 = vmatpush.bf16.msra.mxu0 %v1927
    %2131 = vmatpush.bf16.msra.mxu0 %v1923
    %2132 = vmatpush.bf16.msra.mxu0 %v1919
    %2133 = vmatmul.bf16.gmra.mxu0 %v1983
    %v2134 = vpop.f32.mrf.mxu0
    %v2135 = vadd.f32 %v2121, %v2134
    %v2136 = vpop.f32.mrf.mxu0
    %v2137 = vadd.f32 %v2123, %v2136
    %2138 = vdwg.mxu0
    %2139 = vmatpush.bf16.msra.mxu0 %v1979
    %2140 = vmatpush.bf16.msra.mxu0 %v1975
    %2141 = vmatpush.bf16.msra.mxu0 %v1971
    %2142 = vmatpush.bf16.msra.mxu0 %v1967
    %2143 = vmatpush.bf16.msra.mxu0 %v1963
    %2144 = vmatpush.bf16.msra.mxu0 %v1959
    %2145 = vmatpush.bf16.msra.mxu0 %v1955
    %2146 = vmatpush.bf16.msra.mxu0 %v1951
    %2147 = vmatmul.bf16.gmra.mxu0 %v1984
    %v2148 = vpop.f32.mrf.mxu0
    %v2149 = vadd.f32 %v2135, %v2148
    %v2150 = vpop.f32.mrf.mxu0
    %v2151 = vadd.f32 %v2137, %v2150
    %2152 = vdwg.mxu0
    %2153 = vmatpush.bf16.msra.mxu0 %v1884
    %2154 = vmatpush.bf16.msra.mxu0 %v1880
    %2155 = vmatpush.bf16.msra.mxu0 %v1876
    %2156 = vmatpush.bf16.msra.mxu0 %v1872
    %2157 = vmatpush.bf16.msra.mxu0 %v1868
    %2158 = vmatpush.bf16.msra.mxu0 %v1864
    %2159 = vmatpush.bf16.msra.mxu0 %v1860
    %2160 = vmatpush.bf16.msra.mxu0 %v1856
    %2161 = vmatmul.bf16.gmra.mxu0 %v1981
    %v2162 = vpop.f32.mrf.mxu0
    %v2163 = vadd.f32 0.0, %v2162
    %v2164 = vpop.f32.mrf.mxu0
    %v2165 = vadd.f32 0.0, %v2164
    %2166 = vdwg.mxu0
    %2167 = vmatpush.bf16.msra.mxu0 %v1916
    %2168 = vmatpush.bf16.msra.mxu0 %v1912
    %2169 = vmatpush.bf16.msra.mxu0 %v1908
    %2170 = vmatpush.bf16.msra.mxu0 %v1904
    %2171 = vmatpush.bf16.msra.mxu0 %v1900
    %2172 = vmatpush.bf16.msra.mxu0 %v1896
    %2173 = vmatpush.bf16.msra.mxu0 %v1892
    %2174 = vmatpush.bf16.msra.mxu0 %v1888
    %2175 = vmatmul.bf16.gmra.mxu0 %v1982
    %v2176 = vpop.f32.mrf.mxu0
    %v2177 = vadd.f32 %v2163, %v2176
    %v2178 = vpop.f32.mrf.mxu0
    %v2179 = vadd.f32 %v2165, %v2178
    %2180 = vdwg.mxu0
    %2181 = vmatpush.bf16.msra.mxu0 %v1948
    %2182 = vmatpush.bf16.msra.mxu0 %v1944
    %2183 = vmatpush.bf16.msra.mxu0 %v1940
    %2184 = vmatpush.bf16.msra.mxu0 %v1936
    %2185 = vmatpush.bf16.msra.mxu0 %v1932
    %2186 = vmatpush.bf16.msra.mxu0 %v1928
    %2187 = vmatpush.bf16.msra.mxu0 %v1924
    %2188 = vmatpush.bf16.msra.mxu0 %v1920
    %2189 = vmatmul.bf16.gmra.mxu0 %v1983
    %v2190 = vpop.f32.mrf.mxu0
    %v2191 = vadd.f32 %v2177, %v2190
    %v2192 = vpop.f32.mrf.mxu0
    %v2193 = vadd.f32 %v2179, %v2192
    %2194 = vdwg.mxu0
    %2195 = vmatpush.bf16.msra.mxu0 %v1980
    %2196 = vmatpush.bf16.msra.mxu0 %v1976
    %2197 = vmatpush.bf16.msra.mxu0 %v1972
    %2198 = vmatpush.bf16.msra.mxu0 %v1968
    %2199 = vmatpush.bf16.msra.mxu0 %v1964
    %2200 = vmatpush.bf16.msra.mxu0 %v1960
    %2201 = vmatpush.bf16.msra.mxu0 %v1956
    %2202 = vmatpush.bf16.msra.mxu0 %v1952
    %2203 = vmatmul.bf16.gmra.mxu0 %v1984
    %v2204 = vpop.f32.mrf.mxu0
    %v2205 = vadd.f32 %v2191, %v2204
    %v2206 = vpop.f32.mrf.mxu0
    %v2207 = vadd.f32 %v2193, %v2206
    %2208 = vdwg.mxu0
    %s2209 = scalar_lea.vmem [#allocation10], 4
    %v2210 = vld [vmem:[%s2209] sm:$0xf]
    %v2212 = vperm.slane %v2210, 0
    %v2213 = vperm.slane %v2210, 1
    %v2214 = vperm.slane %v2210, 2
    %v2215 = vperm.slane %v2210, 3
    %v2220 = vmul.f32 %v2037, %v2212
    %v2221 = vmul.f32 %v2093, %v2213
    %v2222 = vmul.f32 %v2149, %v2214
    %v2223 = vmul.f32 %v2205, %v2215
    %v2224 = vmul.f32 %v2039, %v2212
    %v2225 = vmul.f32 %v2095, %v2213
    %v2226 = vmul.f32 %v2151, %v2214
    %v2227 = vmul.f32 %v2207, %v2215
    %s2228 = scalar_lea.vmem [#allocation11], 4
    %v2229 = vld [vmem:[%s2228] sm:$0xf]
    %v2231 = vperm.slane %v2229, 0
    %v2232 = vperm.slane %v2229, 1
    %v2233 = vperm.slane %v2229, 2
    %v2234 = vperm.slane %v2229, 3
    %v2239 = vadd.f32 %v2220, %v2231
    %v2240 = vadd.f32 %v2221, %v2232
    %v2241 = vadd.f32 %v2222, %v2233
    %v2242 = vadd.f32 %v2223, %v2234
    %v2243 = vadd.f32 %v2224, %v2231
    %v2244 = vadd.f32 %v2225, %v2232
    %v2245 = vadd.f32 %v2226, %v2233
    %v2246 = vadd.f32 %v2227, %v2234
    %v2247 = vmax.f32 %v2239, 0.0
    %v2248 = vmax.f32 %v2240, 0.0
    %v2249 = vmax.f32 %v2241, 0.0
    %v2250 = vmax.f32 %v2242, 0.0
    %v2251 = vmax.f32 %v2243, 0.0
    %v2252 = vmax.f32 %v2244, 0.0
    %v2253 = vmax.f32 %v2245, 0.0
    %v2254 = vmax.f32 %v2246, 0.0
    %s2255 = scalar_lea.vmem [#allocation8], 1024
    %v2256 = vld [vmem:[%s2255] sm:$0xff]
    %v2257 = vld [vmem:[%s2255 + $0x8] sm:$0xff]
    %v2258 = vld [vmem:[%s2255 + $0x10] sm:$0xff]
    %v2259 = vld [vmem:[%s2255 + $0x18] sm:$0xff]
    %v2260 = vld [vmem:[%s2255 + $0x20] sm:$0xff]
    %v2261 = vld [vmem:[%s2255 + $0x28] sm:$0xff]
    %v2262 = vld [vmem:[%s2255 + $0x30] sm:$0xff]
    %v2263 = vld [vmem:[%s2255 + $0x38] sm:$0xff]
    %v2264 = vld [vmem:[%s2255 + $0x40] sm:$0xff]
    %v2265 = vld [vmem:[%s2255 + $0x48] sm:$0xff]
    %v2266 = vld [vmem:[%s2255 + $0x50] sm:$0xff]
    %v2267 = vld [vmem:[%s2255 + $0x58] sm:$0xff]
    %v2268 = vld [vmem:[%s2255 + $0x60] sm:$0xff]
    %v2269 = vld [vmem:[%s2255 + $0x68] sm:$0xff]
    %v2270 = vld [vmem:[%s2255 + $0x70] sm:$0xff]
    %v2271 = vld [vmem:[%s2255 + $0x78] sm:$0xff]
    %v2272 = vld [vmem:[%s2255 + $0x80] sm:$0xff]
    %v2273 = vld [vmem:[%s2255 + $0x88] sm:$0xff]
    %v2274 = vld [vmem:[%s2255 + $0x90] sm:$0xff]
    %v2275 = vld [vmem:[%s2255 + $0x98] sm:$0xff]
    %v2276 = vld [vmem:[%s2255 + $0xa0] sm:$0xff]
    %v2277 = vld [vmem:[%s2255 + $0xa8] sm:$0xff]
    %v2278 = vld [vmem:[%s2255 + $0xb0] sm:$0xff]
    %v2279 = vld [vmem:[%s2255 + $0xb8] sm:$0xff]
    %v2280 = vld [vmem:[%s2255 + $0xc0] sm:$0xff]
    %v2281 = vld [vmem:[%s2255 + $0xc8] sm:$0xff]
    %v2282 = vld [vmem:[%s2255 + $0xd0] sm:$0xff]
    %v2283 = vld [vmem:[%s2255 + $0xd8] sm:$0xff]
    %v2284 = vld [vmem:[%s2255 + $0xe0] sm:$0xff]
    %v2285 = vld [vmem:[%s2255 + $0xe8] sm:$0xff]
    %v2286 = vld [vmem:[%s2255 + $0xf0] sm:$0xff]
    %v2287 = vld [vmem:[%s2255 + $0xf8] sm:$0xff]
    %v2288 = vld [vmem:[%s2255 + $0x100] sm:$0xff]
    %v2289 = vld [vmem:[%s2255 + $0x108] sm:$0xff]
    %v2290 = vld [vmem:[%s2255 + $0x110] sm:$0xff]
    %v2291 = vld [vmem:[%s2255 + $0x118] sm:$0xff]
    %v2292 = vld [vmem:[%s2255 + $0x120] sm:$0xff]
    %v2293 = vld [vmem:[%s2255 + $0x128] sm:$0xff]
    %v2294 = vld [vmem:[%s2255 + $0x130] sm:$0xff]
    %v2295 = vld [vmem:[%s2255 + $0x138] sm:$0xff]
    %v2296 = vld [vmem:[%s2255 + $0x140] sm:$0xff]
    %v2297 = vld [vmem:[%s2255 + $0x148] sm:$0xff]
    %v2298 = vld [vmem:[%s2255 + $0x150] sm:$0xff]
    %v2299 = vld [vmem:[%s2255 + $0x158] sm:$0xff]
    %v2300 = vld [vmem:[%s2255 + $0x160] sm:$0xff]
    %v2301 = vld [vmem:[%s2255 + $0x168] sm:$0xff]
    %v2302 = vld [vmem:[%s2255 + $0x170] sm:$0xff]
    %v2303 = vld [vmem:[%s2255 + $0x178] sm:$0xff]
    %v2304 = vld [vmem:[%s2255 + $0x180] sm:$0xff]
    %v2305 = vld [vmem:[%s2255 + $0x188] sm:$0xff]
    %v2306 = vld [vmem:[%s2255 + $0x190] sm:$0xff]
    %v2307 = vld [vmem:[%s2255 + $0x198] sm:$0xff]
    %v2308 = vld [vmem:[%s2255 + $0x1a0] sm:$0xff]
    %v2309 = vld [vmem:[%s2255 + $0x1a8] sm:$0xff]
    %v2310 = vld [vmem:[%s2255 + $0x1b0] sm:$0xff]
    %v2311 = vld [vmem:[%s2255 + $0x1b8] sm:$0xff]
    %v2312 = vld [vmem:[%s2255 + $0x1c0] sm:$0xff]
    %v2313 = vld [vmem:[%s2255 + $0x1c8] sm:$0xff]
    %v2314 = vld [vmem:[%s2255 + $0x1d0] sm:$0xff]
    %v2315 = vld [vmem:[%s2255 + $0x1d8] sm:$0xff]
    %v2316 = vld [vmem:[%s2255 + $0x1e0] sm:$0xff]
    %v2317 = vld [vmem:[%s2255 + $0x1e8] sm:$0xff]
    %v2318 = vld [vmem:[%s2255 + $0x1f0] sm:$0xff]
    %v2319 = vld [vmem:[%s2255 + $0x1f8] sm:$0xff]
    %v2320 = vunpack.c.0.s8 %v2256
    %v2321 = vunpack.c.0.s8 %v2257
    %v2322 = vunpack.c.0.s8 %v2258
    %v2323 = vunpack.c.0.s8 %v2259
    %v2324 = vunpack.c.1.s8 %v2256
    %v2325 = vunpack.c.1.s8 %v2257
    %v2326 = vunpack.c.1.s8 %v2258
    %v2327 = vunpack.c.1.s8 %v2259
    %v2328 = vunpack.c.2.s8 %v2256
    %v2329 = vunpack.c.2.s8 %v2257
    %v2330 = vunpack.c.2.s8 %v2258
    %v2331 = vunpack.c.2.s8 %v2259
    %v2332 = vunpack.c.3.s8 %v2256
    %v2333 = vunpack.c.3.s8 %v2257
    %v2334 = vunpack.c.3.s8 %v2258
    %v2335 = vunpack.c.3.s8 %v2259
    %v2336 = vunpack.c.0.s8 %v2260
    %v2337 = vunpack.c.0.s8 %v2261
    %v2338 = vunpack.c.0.s8 %v2262
    %v2339 = vunpack.c.0.s8 %v2263
    %v2340 = vunpack.c.1.s8 %v2260
    %v2341 = vunpack.c.1.s8 %v2261
    %v2342 = vunpack.c.1.s8 %v2262
    %v2343 = vunpack.c.1.s8 %v2263
    %v2344 = vunpack.c.2.s8 %v2260
    %v2345 = vunpack.c.2.s8 %v2261
    %v2346 = vunpack.c.2.s8 %v2262
    %v2347 = vunpack.c.2.s8 %v2263
    %v2348 = vunpack.c.3.s8 %v2260
    %v2349 = vunpack.c.3.s8 %v2261
    %v2350 = vunpack.c.3.s8 %v2262
    %v2351 = vunpack.c.3.s8 %v2263
    %v2352 = vunpack.c.0.s8 %v2264
    %v2353 = vunpack.c.0.s8 %v2265
    %v2354 = vunpack.c.0.s8 %v2266
    %v2355 = vunpack.c.0.s8 %v2267
    %v2356 = vunpack.c.1.s8 %v2264
    %v2357 = vunpack.c.1.s8 %v2265
    %v2358 = vunpack.c.1.s8 %v2266
    %v2359 = vunpack.c.1.s8 %v2267
    %v2360 = vunpack.c.2.s8 %v2264
    %v2361 = vunpack.c.2.s8 %v2265
    %v2362 = vunpack.c.2.s8 %v2266
    %v2363 = vunpack.c.2.s8 %v2267
    %v2364 = vunpack.c.3.s8 %v2264
    %v2365 = vunpack.c.3.s8 %v2265
    %v2366 = vunpack.c.3.s8 %v2266
    %v2367 = vunpack.c.3.s8 %v2267
    %v2368 = vunpack.c.0.s8 %v2268
    %v2369 = vunpack.c.0.s8 %v2269
    %v2370 = vunpack.c.0.s8 %v2270
    %v2371 = vunpack.c.0.s8 %v2271
    %v2372 = vunpack.c.1.s8 %v2268
    %v2373 = vunpack.c.1.s8 %v2269
    %v2374 = vunpack.c.1.s8 %v2270
    %v2375 = vunpack.c.1.s8 %v2271
    %v2376 = vunpack.c.2.s8 %v2268
    %v2377 = vunpack.c.2.s8 %v2269
    %v2378 = vunpack.c.2.s8 %v2270
    %v2379 = vunpack.c.2.s8 %v2271
    %v2380 = vunpack.c.3.s8 %v2268
    %v2381 = vunpack.c.3.s8 %v2269
    %v2382 = vunpack.c.3.s8 %v2270
    %v2383 = vunpack.c.3.s8 %v2271
    %v2384 = vunpack.c.0.s8 %v2272
    %v2385 = vunpack.c.0.s8 %v2273
    %v2386 = vunpack.c.0.s8 %v2274
    %v2387 = vunpack.c.0.s8 %v2275
    %v2388 = vunpack.c.1.s8 %v2272
    %v2389 = vunpack.c.1.s8 %v2273
    %v2390 = vunpack.c.1.s8 %v2274
    %v2391 = vunpack.c.1.s8 %v2275
    %v2392 = vunpack.c.2.s8 %v2272
    %v2393 = vunpack.c.2.s8 %v2273
    %v2394 = vunpack.c.2.s8 %v2274
    %v2395 = vunpack.c.2.s8 %v2275
    %v2396 = vunpack.c.3.s8 %v2272
    %v2397 = vunpack.c.3.s8 %v2273
    %v2398 = vunpack.c.3.s8 %v2274
    %v2399 = vunpack.c.3.s8 %v2275
    %v2400 = vunpack.c.0.s8 %v2276
    %v2401 = vunpack.c.0.s8 %v2277
    %v2402 = vunpack.c.0.s8 %v2278
    %v2403 = vunpack.c.0.s8 %v2279
    %v2404 = vunpack.c.1.s8 %v2276
    %v2405 = vunpack.c.1.s8 %v2277
    %v2406 = vunpack.c.1.s8 %v2278
    %v2407 = vunpack.c.1.s8 %v2279
    %v2408 = vunpack.c.2.s8 %v2276
    %v2409 = vunpack.c.2.s8 %v2277
    %v2410 = vunpack.c.2.s8 %v2278
    %v2411 = vunpack.c.2.s8 %v2279
    %v2412 = vunpack.c.3.s8 %v2276
    %v2413 = vunpack.c.3.s8 %v2277
    %v2414 = vunpack.c.3.s8 %v2278
    %v2415 = vunpack.c.3.s8 %v2279
    %v2416 = vunpack.c.0.s8 %v2280
    %v2417 = vunpack.c.0.s8 %v2281
    %v2418 = vunpack.c.0.s8 %v2282
    %v2419 = vunpack.c.0.s8 %v2283
    %v2420 = vunpack.c.1.s8 %v2280
    %v2421 = vunpack.c.1.s8 %v2281
    %v2422 = vunpack.c.1.s8 %v2282
    %v2423 = vunpack.c.1.s8 %v2283
    %v2424 = vunpack.c.2.s8 %v2280
    %v2425 = vunpack.c.2.s8 %v2281
    %v2426 = vunpack.c.2.s8 %v2282
    %v2427 = vunpack.c.2.s8 %v2283
    %v2428 = vunpack.c.3.s8 %v2280
    %v2429 = vunpack.c.3.s8 %v2281
    %v2430 = vunpack.c.3.s8 %v2282
    %v2431 = vunpack.c.3.s8 %v2283
    %v2432 = vunpack.c.0.s8 %v2284
    %v2433 = vunpack.c.0.s8 %v2285
    %v2434 = vunpack.c.0.s8 %v2286
    %v2435 = vunpack.c.0.s8 %v2287
    %v2436 = vunpack.c.1.s8 %v2284
    %v2437 = vunpack.c.1.s8 %v2285
    %v2438 = vunpack.c.1.s8 %v2286
    %v2439 = vunpack.c.1.s8 %v2287
    %v2440 = vunpack.c.2.s8 %v2284
    %v2441 = vunpack.c.2.s8 %v2285
    %v2442 = vunpack.c.2.s8 %v2286
    %v2443 = vunpack.c.2.s8 %v2287
    %v2444 = vunpack.c.3.s8 %v2284
    %v2445 = vunpack.c.3.s8 %v2285
    %v2446 = vunpack.c.3.s8 %v2286
    %v2447 = vunpack.c.3.s8 %v2287
    %v2448 = vunpack.c.0.s8 %v2288
    %v2449 = vunpack.c.0.s8 %v2289
    %v2450 = vunpack.c.0.s8 %v2290
    %v2451 = vunpack.c.0.s8 %v2291
    %v2452 = vunpack.c.1.s8 %v2288
    %v2453 = vunpack.c.1.s8 %v2289
    %v2454 = vunpack.c.1.s8 %v2290
    %v2455 = vunpack.c.1.s8 %v2291
    %v2456 = vunpack.c.2.s8 %v2288
    %v2457 = vunpack.c.2.s8 %v2289
    %v2458 = vunpack.c.2.s8 %v2290
    %v2459 = vunpack.c.2.s8 %v2291
    %v2460 = vunpack.c.3.s8 %v2288
    %v2461 = vunpack.c.3.s8 %v2289
    %v2462 = vunpack.c.3.s8 %v2290
    %v2463 = vunpack.c.3.s8 %v2291
    %v2464 = vunpack.c.0.s8 %v2292
    %v2465 = vunpack.c.0.s8 %v2293
    %v2466 = vunpack.c.0.s8 %v2294
    %v2467 = vunpack.c.0.s8 %v2295
    %v2468 = vunpack.c.1.s8 %v2292
    %v2469 = vunpack.c.1.s8 %v2293
    %v2470 = vunpack.c.1.s8 %v2294
    %v2471 = vunpack.c.1.s8 %v2295
    %v2472 = vunpack.c.2.s8 %v2292
    %v2473 = vunpack.c.2.s8 %v2293
    %v2474 = vunpack.c.2.s8 %v2294
    %v2475 = vunpack.c.2.s8 %v2295
    %v2476 = vunpack.c.3.s8 %v2292
    %v2477 = vunpack.c.3.s8 %v2293
    %v2478 = vunpack.c.3.s8 %v2294
    %v2479 = vunpack.c.3.s8 %v2295
    %v2480 = vunpack.c.0.s8 %v2296
    %v2481 = vunpack.c.0.s8 %v2297
    %v2482 = vunpack.c.0.s8 %v2298
    %v2483 = vunpack.c.0.s8 %v2299
    %v2484 = vunpack.c.1.s8 %v2296
    %v2485 = vunpack.c.1.s8 %v2297
    %v2486 = vunpack.c.1.s8 %v2298
    %v2487 = vunpack.c.1.s8 %v2299
    %v2488 = vunpack.c.2.s8 %v2296
    %v2489 = vunpack.c.2.s8 %v2297
    %v2490 = vunpack.c.2.s8 %v2298
    %v2491 = vunpack.c.2.s8 %v2299
    %v2492 = vunpack.c.3.s8 %v2296
    %v2493 = vunpack.c.3.s8 %v2297
    %v2494 = vunpack.c.3.s8 %v2298
    %v2495 = vunpack.c.3.s8 %v2299
    %v2496 = vunpack.c.0.s8 %v2300
    %v2497 = vunpack.c.0.s8 %v2301
    %v2498 = vunpack.c.0.s8 %v2302
    %v2499 = vunpack.c.0.s8 %v2303
    %v2500 = vunpack.c.1.s8 %v2300
    %v2501 = vunpack.c.1.s8 %v2301
    %v2502 = vunpack.c.1.s8 %v2302
    %v2503 = vunpack.c.1.s8 %v2303
    %v2504 = vunpack.c.2.s8 %v2300
    %v2505 = vunpack.c.2.s8 %v2301
    %v2506 = vunpack.c.2.s8 %v2302
    %v2507 = vunpack.c.2.s8 %v2303
    %v2508 = vunpack.c.3.s8 %v2300
    %v2509 = vunpack.c.3.s8 %v2301
    %v2510 = vunpack.c.3.s8 %v2302
    %v2511 = vunpack.c.3.s8 %v2303
    %v2512 = vunpack.c.0.s8 %v2304
    %v2513 = vunpack.c.0.s8 %v2305
    %v2514 = vunpack.c.0.s8 %v2306
    %v2515 = vunpack.c.0.s8 %v2307
    %v2516 = vunpack.c.1.s8 %v2304
    %v2517 = vunpack.c.1.s8 %v2305
    %v2518 = vunpack.c.1.s8 %v2306
    %v2519 = vunpack.c.1.s8 %v2307
    %v2520 = vunpack.c.2.s8 %v2304
    %v2521 = vunpack.c.2.s8 %v2305
    %v2522 = vunpack.c.2.s8 %v2306
    %v2523 = vunpack.c.2.s8 %v2307
    %v2524 = vunpack.c.3.s8 %v2304
    %v2525 = vunpack.c.3.s8 %v2305
    %v2526 = vunpack.c.3.s8 %v2306
    %v2527 = vunpack.c.3.s8 %v2307
    %v2528 = vunpack.c.0.s8 %v2308
    %v2529 = vunpack.c.0.s8 %v2309
    %v2530 = vunpack.c.0.s8 %v2310
    %v2531 = vunpack.c.0.s8 %v2311
    %v2532 = vunpack.c.1.s8 %v2308
    %v2533 = vunpack.c.1.s8 %v2309
    %v2534 = vunpack.c.1.s8 %v2310
    %v2535 = vunpack.c.1.s8 %v2311
    %v2536 = vunpack.c.2.s8 %v2308
    %v2537 = vunpack.c.2.s8 %v2309
    %v2538 = vunpack.c.2.s8 %v2310
    %v2539 = vunpack.c.2.s8 %v2311
    %v2540 = vunpack.c.3.s8 %v2308
    %v2541 = vunpack.c.3.s8 %v2309
    %v2542 = vunpack.c.3.s8 %v2310
    %v2543 = vunpack.c.3.s8 %v2311
    %v2544 = vunpack.c.0.s8 %v2312
    %v2545 = vunpack.c.0.s8 %v2313
    %v2546 = vunpack.c.0.s8 %v2314
    %v2547 = vunpack.c.0.s8 %v2315
    %v2548 = vunpack.c.1.s8 %v2312
    %v2549 = vunpack.c.1.s8 %v2313
    %v2550 = vunpack.c.1.s8 %v2314
    %v2551 = vunpack.c.1.s8 %v2315
    %v2552 = vunpack.c.2.s8 %v2312
    %v2553 = vunpack.c.2.s8 %v2313
    %v2554 = vunpack.c.2.s8 %v2314
    %v2555 = vunpack.c.2.s8 %v2315
    %v2556 = vunpack.c.3.s8 %v2312
    %v2557 = vunpack.c.3.s8 %v2313
    %v2558 = vunpack.c.3.s8 %v2314
    %v2559 = vunpack.c.3.s8 %v2315
    %v2560 = vunpack.c.0.s8 %v2316
    %v2561 = vunpack.c.0.s8 %v2317
    %v2562 = vunpack.c.0.s8 %v2318
    %v2563 = vunpack.c.0.s8 %v2319
    %v2564 = vunpack.c.1.s8 %v2316
    %v2565 = vunpack.c.1.s8 %v2317
    %v2566 = vunpack.c.1.s8 %v2318
    %v2567 = vunpack.c.1.s8 %v2319
    %v2568 = vunpack.c.2.s8 %v2316
    %v2569 = vunpack.c.2.s8 %v2317
    %v2570 = vunpack.c.2.s8 %v2318
    %v2571 = vunpack.c.2.s8 %v2319
    %v2572 = vunpack.c.3.s8 %v2316
    %v2573 = vunpack.c.3.s8 %v2317
    %v2574 = vunpack.c.3.s8 %v2318
    %v2575 = vunpack.c.3.s8 %v2319
    %v2576 = vcvt.s32.f32 %v2320
    %v2577 = vcvt.s32.f32 %v2321
    %v2578 = vcvt.s32.f32 %v2322
    %v2579 = vcvt.s32.f32 %v2323
    %v2580 = vcvt.s32.f32 %v2324
    %v2581 = vcvt.s32.f32 %v2325
    %v2582 = vcvt.s32.f32 %v2326
    %v2583 = vcvt.s32.f32 %v2327
    %v2584 = vcvt.s32.f32 %v2328
    %v2585 = vcvt.s32.f32 %v2329
    %v2586 = vcvt.s32.f32 %v2330
    %v2587 = vcvt.s32.f32 %v2331
    %v2588 = vcvt.s32.f32 %v2332
    %v2589 = vcvt.s32.f32 %v2333
    %v2590 = vcvt.s32.f32 %v2334
    %v2591 = vcvt.s32.f32 %v2335
    %v2592 = vcvt.s32.f32 %v2336
    %v2593 = vcvt.s32.f32 %v2337
    %v2594 = vcvt.s32.f32 %v2338
    %v2595 = vcvt.s32.f32 %v2339
    %v2596 = vcvt.s32.f32 %v2340
    %v2597 = vcvt.s32.f32 %v2341
    %v2598 = vcvt.s32.f32 %v2342
    %v2599 = vcvt.s32.f32 %v2343
    %v2600 = vcvt.s32.f32 %v2344
    %v2601 = vcvt.s32.f32 %v2345
    %v2602 = vcvt.s32.f32 %v2346
    %v2603 = vcvt.s32.f32 %v2347
    %v2604 = vcvt.s32.f32 %v2348
    %v2605 = vcvt.s32.f32 %v2349
    %v2606 = vcvt.s32.f32 %v2350
    %v2607 = vcvt.s32.f32 %v2351
    %v2608 = vcvt.s32.f32 %v2352
    %v2609 = vcvt.s32.f32 %v2353
    %v2610 = vcvt.s32.f32 %v2354
    %v2611 = vcvt.s32.f32 %v2355
    %v2612 = vcvt.s32.f32 %v2356
    %v2613 = vcvt.s32.f32 %v2357
    %v2614 = vcvt.s32.f32 %v2358
    %v2615 = vcvt.s32.f32 %v2359
    %v2616 = vcvt.s32.f32 %v2360
    %v2617 = vcvt.s32.f32 %v2361
    %v2618 = vcvt.s32.f32 %v2362
    %v2619 = vcvt.s32.f32 %v2363
    %v2620 = vcvt.s32.f32 %v2364
    %v2621 = vcvt.s32.f32 %v2365
    %v2622 = vcvt.s32.f32 %v2366
    %v2623 = vcvt.s32.f32 %v2367
    %v2624 = vcvt.s32.f32 %v2368
    %v2625 = vcvt.s32.f32 %v2369
    %v2626 = vcvt.s32.f32 %v2370
    %v2627 = vcvt.s32.f32 %v2371
    %v2628 = vcvt.s32.f32 %v2372
    %v2629 = vcvt.s32.f32 %v2373
    %v2630 = vcvt.s32.f32 %v2374
    %v2631 = vcvt.s32.f32 %v2375
    %v2632 = vcvt.s32.f32 %v2376
    %v2633 = vcvt.s32.f32 %v2377
    %v2634 = vcvt.s32.f32 %v2378
    %v2635 = vcvt.s32.f32 %v2379
    %v2636 = vcvt.s32.f32 %v2380
    %v2637 = vcvt.s32.f32 %v2381
    %v2638 = vcvt.s32.f32 %v2382
    %v2639 = vcvt.s32.f32 %v2383
    %v2640 = vcvt.s32.f32 %v2384
    %v2641 = vcvt.s32.f32 %v2385
    %v2642 = vcvt.s32.f32 %v2386
    %v2643 = vcvt.s32.f32 %v2387
    %v2644 = vcvt.s32.f32 %v2388
    %v2645 = vcvt.s32.f32 %v2389
    %v2646 = vcvt.s32.f32 %v2390
    %v2647 = vcvt.s32.f32 %v2391
    %v2648 = vcvt.s32.f32 %v2392
    %v2649 = vcvt.s32.f32 %v2393
    %v2650 = vcvt.s32.f32 %v2394
    %v2651 = vcvt.s32.f32 %v2395
    %v2652 = vcvt.s32.f32 %v2396
    %v2653 = vcvt.s32.f32 %v2397
    %v2654 = vcvt.s32.f32 %v2398
    %v2655 = vcvt.s32.f32 %v2399
    %v2656 = vcvt.s32.f32 %v2400
    %v2657 = vcvt.s32.f32 %v2401
    %v2658 = vcvt.s32.f32 %v2402
    %v2659 = vcvt.s32.f32 %v2403
    %v2660 = vcvt.s32.f32 %v2404
    %v2661 = vcvt.s32.f32 %v2405
    %v2662 = vcvt.s32.f32 %v2406
    %v2663 = vcvt.s32.f32 %v2407
    %v2664 = vcvt.s32.f32 %v2408
    %v2665 = vcvt.s32.f32 %v2409
    %v2666 = vcvt.s32.f32 %v2410
    %v2667 = vcvt.s32.f32 %v2411
    %v2668 = vcvt.s32.f32 %v2412
    %v2669 = vcvt.s32.f32 %v2413
    %v2670 = vcvt.s32.f32 %v2414
    %v2671 = vcvt.s32.f32 %v2415
    %v2672 = vcvt.s32.f32 %v2416
    %v2673 = vcvt.s32.f32 %v2417
    %v2674 = vcvt.s32.f32 %v2418
    %v2675 = vcvt.s32.f32 %v2419
    %v2676 = vcvt.s32.f32 %v2420
    %v2677 = vcvt.s32.f32 %v2421
    %v2678 = vcvt.s32.f32 %v2422
    %v2679 = vcvt.s32.f32 %v2423
    %v2680 = vcvt.s32.f32 %v2424
    %v2681 = vcvt.s32.f32 %v2425
    %v2682 = vcvt.s32.f32 %v2426
    %v2683 = vcvt.s32.f32 %v2427
    %v2684 = vcvt.s32.f32 %v2428
    %v2685 = vcvt.s32.f32 %v2429
    %v2686 = vcvt.s32.f32 %v2430
    %v2687 = vcvt.s32.f32 %v2431
    %v2688 = vcvt.s32.f32 %v2432
    %v2689 = vcvt.s32.f32 %v2433
    %v2690 = vcvt.s32.f32 %v2434
    %v2691 = vcvt.s32.f32 %v2435
    %v2692 = vcvt.s32.f32 %v2436
    %v2693 = vcvt.s32.f32 %v2437
    %v2694 = vcvt.s32.f32 %v2438
    %v2695 = vcvt.s32.f32 %v2439
    %v2696 = vcvt.s32.f32 %v2440
    %v2697 = vcvt.s32.f32 %v2441
    %v2698 = vcvt.s32.f32 %v2442
    %v2699 = vcvt.s32.f32 %v2443
    %v2700 = vcvt.s32.f32 %v2444
    %v2701 = vcvt.s32.f32 %v2445
    %v2702 = vcvt.s32.f32 %v2446
    %v2703 = vcvt.s32.f32 %v2447
    %v2704 = vcvt.s32.f32 %v2448
    %v2705 = vcvt.s32.f32 %v2449
    %v2706 = vcvt.s32.f32 %v2450
    %v2707 = vcvt.s32.f32 %v2451
    %v2708 = vcvt.s32.f32 %v2452
    %v2709 = vcvt.s32.f32 %v2453
    %v2710 = vcvt.s32.f32 %v2454
    %v2711 = vcvt.s32.f32 %v2455
    %v2712 = vcvt.s32.f32 %v2456
    %v2713 = vcvt.s32.f32 %v2457
    %v2714 = vcvt.s32.f32 %v2458
    %v2715 = vcvt.s32.f32 %v2459
    %v2716 = vcvt.s32.f32 %v2460
    %v2717 = vcvt.s32.f32 %v2461
    %v2718 = vcvt.s32.f32 %v2462
    %v2719 = vcvt.s32.f32 %v2463
    %v2720 = vcvt.s32.f32 %v2464
    %v2721 = vcvt.s32.f32 %v2465
    %v2722 = vcvt.s32.f32 %v2466
    %v2723 = vcvt.s32.f32 %v2467
    %v2724 = vcvt.s32.f32 %v2468
    %v2725 = vcvt.s32.f32 %v2469
    %v2726 = vcvt.s32.f32 %v2470
    %v2727 = vcvt.s32.f32 %v2471
    %v2728 = vcvt.s32.f32 %v2472
    %v2729 = vcvt.s32.f32 %v2473
    %v2730 = vcvt.s32.f32 %v2474
    %v2731 = vcvt.s32.f32 %v2475
    %v2732 = vcvt.s32.f32 %v2476
    %v2733 = vcvt.s32.f32 %v2477
    %v2734 = vcvt.s32.f32 %v2478
    %v2735 = vcvt.s32.f32 %v2479
    %v2736 = vcvt.s32.f32 %v2480
    %v2737 = vcvt.s32.f32 %v2481
    %v2738 = vcvt.s32.f32 %v2482
    %v2739 = vcvt.s32.f32 %v2483
    %v2740 = vcvt.s32.f32 %v2484
    %v2741 = vcvt.s32.f32 %v2485
    %v2742 = vcvt.s32.f32 %v2486
    %v2743 = vcvt.s32.f32 %v2487
    %v2744 = vcvt.s32.f32 %v2488
    %v2745 = vcvt.s32.f32 %v2489
    %v2746 = vcvt.s32.f32 %v2490
    %v2747 = vcvt.s32.f32 %v2491
    %v2748 = vcvt.s32.f32 %v2492
    %v2749 = vcvt.s32.f32 %v2493
    %v2750 = vcvt.s32.f32 %v2494
    %v2751 = vcvt.s32.f32 %v2495
    %v2752 = vcvt.s32.f32 %v2496
    %v2753 = vcvt.s32.f32 %v2497
    %v2754 = vcvt.s32.f32 %v2498
    %v2755 = vcvt.s32.f32 %v2499
    %v2756 = vcvt.s32.f32 %v2500
    %v2757 = vcvt.s32.f32 %v2501
    %v2758 = vcvt.s32.f32 %v2502
    %v2759 = vcvt.s32.f32 %v2503
    %v2760 = vcvt.s32.f32 %v2504
    %v2761 = vcvt.s32.f32 %v2505
    %v2762 = vcvt.s32.f32 %v2506
    %v2763 = vcvt.s32.f32 %v2507
    %v2764 = vcvt.s32.f32 %v2508
    %v2765 = vcvt.s32.f32 %v2509
    %v2766 = vcvt.s32.f32 %v2510
    %v2767 = vcvt.s32.f32 %v2511
    %v2768 = vcvt.s32.f32 %v2512
    %v2769 = vcvt.s32.f32 %v2513
    %v2770 = vcvt.s32.f32 %v2514
    %v2771 = vcvt.s32.f32 %v2515
    %v2772 = vcvt.s32.f32 %v2516
    %v2773 = vcvt.s32.f32 %v2517
    %v2774 = vcvt.s32.f32 %v2518
    %v2775 = vcvt.s32.f32 %v2519
    %v2776 = vcvt.s32.f32 %v2520
    %v2777 = vcvt.s32.f32 %v2521
    %v2778 = vcvt.s32.f32 %v2522
    %v2779 = vcvt.s32.f32 %v2523
    %v2780 = vcvt.s32.f32 %v2524
    %v2781 = vcvt.s32.f32 %v2525
    %v2782 = vcvt.s32.f32 %v2526
    %v2783 = vcvt.s32.f32 %v2527
    %v2784 = vcvt.s32.f32 %v2528
    %v2785 = vcvt.s32.f32 %v2529
    %v2786 = vcvt.s32.f32 %v2530
    %v2787 = vcvt.s32.f32 %v2531
    %v2788 = vcvt.s32.f32 %v2532
    %v2789 = vcvt.s32.f32 %v2533
    %v2790 = vcvt.s32.f32 %v2534
    %v2791 = vcvt.s32.f32 %v2535
    %v2792 = vcvt.s32.f32 %v2536
    %v2793 = vcvt.s32.f32 %v2537
    %v2794 = vcvt.s32.f32 %v2538
    %v2795 = vcvt.s32.f32 %v2539
    %v2796 = vcvt.s32.f32 %v2540
    %v2797 = vcvt.s32.f32 %v2541
    %v2798 = vcvt.s32.f32 %v2542
    %v2799 = vcvt.s32.f32 %v2543
    %v2800 = vcvt.s32.f32 %v2544
    %v2801 = vcvt.s32.f32 %v2545
    %v2802 = vcvt.s32.f32 %v2546
    %v2803 = vcvt.s32.f32 %v2547
    %v2804 = vcvt.s32.f32 %v2548
    %v2805 = vcvt.s32.f32 %v2549
    %v2806 = vcvt.s32.f32 %v2550
    %v2807 = vcvt.s32.f32 %v2551
    %v2808 = vcvt.s32.f32 %v2552
    %v2809 = vcvt.s32.f32 %v2553
    %v2810 = vcvt.s32.f32 %v2554
    %v2811 = vcvt.s32.f32 %v2555
    %v2812 = vcvt.s32.f32 %v2556
    %v2813 = vcvt.s32.f32 %v2557
    %v2814 = vcvt.s32.f32 %v2558
    %v2815 = vcvt.s32.f32 %v2559
    %v2816 = vcvt.s32.f32 %v2560
    %v2817 = vcvt.s32.f32 %v2561
    %v2818 = vcvt.s32.f32 %v2562
    %v2819 = vcvt.s32.f32 %v2563
    %v2820 = vcvt.s32.f32 %v2564
    %v2821 = vcvt.s32.f32 %v2565
    %v2822 = vcvt.s32.f32 %v2566
    %v2823 = vcvt.s32.f32 %v2567
    %v2824 = vcvt.s32.f32 %v2568
    %v2825 = vcvt.s32.f32 %v2569
    %v2826 = vcvt.s32.f32 %v2570
    %v2827 = vcvt.s32.f32 %v2571
    %v2828 = vcvt.s32.f32 %v2572
    %v2829 = vcvt.s32.f32 %v2573
    %v2830 = vcvt.s32.f32 %v2574
    %v2831 = vcvt.s32.f32 %v2575
    %v2832 = vpack.c.bf16 %v2580, %v2576
    %v2833 = vpack.c.bf16 %v2581, %v2577
    %v2834 = vpack.c.bf16 %v2582, %v2578
    %v2835 = vpack.c.bf16 %v2583, %v2579
    %v2836 = vpack.c.bf16 %v2588, %v2584
    %v2837 = vpack.c.bf16 %v2589, %v2585
    %v2838 = vpack.c.bf16 %v2590, %v2586
    %v2839 = vpack.c.bf16 %v2591, %v2587
    %v2840 = vpack.c.bf16 %v2596, %v2592
    %v2841 = vpack.c.bf16 %v2597, %v2593
    %v2842 = vpack.c.bf16 %v2598, %v2594
    %v2843 = vpack.c.bf16 %v2599, %v2595
    %v2844 = vpack.c.bf16 %v2604, %v2600
    %v2845 = vpack.c.bf16 %v2605, %v2601
    %v2846 = vpack.c.bf16 %v2606, %v2602
    %v2847 = vpack.c.bf16 %v2607, %v2603
    %v2848 = vpack.c.bf16 %v2612, %v2608
    %v2849 = vpack.c.bf16 %v2613, %v2609
    %v2850 = vpack.c.bf16 %v2614, %v2610
    %v2851 = vpack.c.bf16 %v2615, %v2611
    %v2852 = vpack.c.bf16 %v2620, %v2616
    %v2853 = vpack.c.bf16 %v2621, %v2617
    %v2854 = vpack.c.bf16 %v2622, %v2618
    %v2855 = vpack.c.bf16 %v2623, %v2619
    %v2856 = vpack.c.bf16 %v2628, %v2624
    %v2857 = vpack.c.bf16 %v2629, %v2625
    %v2858 = vpack.c.bf16 %v2630, %v2626
    %v2859 = vpack.c.bf16 %v2631, %v2627
    %v2860 = vpack.c.bf16 %v2636, %v2632
    %v2861 = vpack.c.bf16 %v2637, %v2633
    %v2862 = vpack.c.bf16 %v2638, %v2634
    %v2863 = vpack.c.bf16 %v2639, %v2635
    %v2864 = vpack.c.bf16 %v2644, %v2640
    %v2865 = vpack.c.bf16 %v2645, %v2641
    %v2866 = vpack.c.bf16 %v2646, %v2642
    %v2867 = vpack.c.bf16 %v2647, %v2643
    %v2868 = vpack.c.bf16 %v2652, %v2648
    %v2869 = vpack.c.bf16 %v2653, %v2649
    %v2870 = vpack.c.bf16 %v2654, %v2650
    %v2871 = vpack.c.bf16 %v2655, %v2651
    %v2872 = vpack.c.bf16 %v2660, %v2656
    %v2873 = vpack.c.bf16 %v2661, %v2657
    %v2874 = vpack.c.bf16 %v2662, %v2658
    %v2875 = vpack.c.bf16 %v2663, %v2659
    %v2876 = vpack.c.bf16 %v2668, %v2664
    %v2877 = vpack.c.bf16 %v2669, %v2665
    %v2878 = vpack.c.bf16 %v2670, %v2666
    %v2879 = vpack.c.bf16 %v2671, %v2667
    %v2880 = vpack.c.bf16 %v2676, %v2672
    %v2881 = vpack.c.bf16 %v2677, %v2673
    %v2882 = vpack.c.bf16 %v2678, %v2674
    %v2883 = vpack.c.bf16 %v2679, %v2675
    %v2884 = vpack.c.bf16 %v2684, %v2680
    %v2885 = vpack.c.bf16 %v2685, %v2681
    %v2886 = vpack.c.bf16 %v2686, %v2682
    %v2887 = vpack.c.bf16 %v2687, %v2683
    %v2888 = vpack.c.bf16 %v2692, %v2688
    %v2889 = vpack.c.bf16 %v2693, %v2689
    %v2890 = vpack.c.bf16 %v2694, %v2690
    %v2891 = vpack.c.bf16 %v2695, %v2691
    %v2892 = vpack.c.bf16 %v2700, %v2696
    %v2893 = vpack.c.bf16 %v2701, %v2697
    %v2894 = vpack.c.bf16 %v2702, %v2698
    %v2895 = vpack.c.bf16 %v2703, %v2699
    %v2896 = vpack.c.bf16 %v2708, %v2704
    %v2897 = vpack.c.bf16 %v2709, %v2705
    %v2898 = vpack.c.bf16 %v2710, %v2706
    %v2899 = vpack.c.bf16 %v2711, %v2707
    %v2900 = vpack.c.bf16 %v2716, %v2712
    %v2901 = vpack.c.bf16 %v2717, %v2713
    %v2902 = vpack.c.bf16 %v2718, %v2714
    %v2903 = vpack.c.bf16 %v2719, %v2715
    %v2904 = vpack.c.bf16 %v2724, %v2720
    %v2905 = vpack.c.bf16 %v2725, %v2721
    %v2906 = vpack.c.bf16 %v2726, %v2722
    %v2907 = vpack.c.bf16 %v2727, %v2723
    %v2908 = vpack.c.bf16 %v2732, %v2728
    %v2909 = vpack.c.bf16 %v2733, %v2729
    %v2910 = vpack.c.bf16 %v2734, %v2730
    %v2911 = vpack.c.bf16 %v2735, %v2731
    %v2912 = vpack.c.bf16 %v2740, %v2736
    %v2913 = vpack.c.bf16 %v2741, %v2737
    %v2914 = vpack.c.bf16 %v2742, %v2738
    %v2915 = vpack.c.bf16 %v2743, %v2739
    %v2916 = vpack.c.bf16 %v2748, %v2744
    %v2917 = vpack.c.bf16 %v2749, %v2745
    %v2918 = vpack.c.bf16 %v2750, %v2746
    %v2919 = vpack.c.bf16 %v2751, %v2747
    %v2920 = vpack.c.bf16 %v2756, %v2752
    %v2921 = vpack.c.bf16 %v2757, %v2753
    %v2922 = vpack.c.bf16 %v2758, %v2754
    %v2923 = vpack.c.bf16 %v2759, %v2755
    %v2924 = vpack.c.bf16 %v2764, %v2760
    %v2925 = vpack.c.bf16 %v2765, %v2761
    %v2926 = vpack.c.bf16 %v2766, %v2762
    %v2927 = vpack.c.bf16 %v2767, %v2763
    %v2928 = vpack.c.bf16 %v2772, %v2768
    %v2929 = vpack.c.bf16 %v2773, %v2769
    %v2930 = vpack.c.bf16 %v2774, %v2770
    %v2931 = vpack.c.bf16 %v2775, %v2771
    %v2932 = vpack.c.bf16 %v2780, %v2776
    %v2933 = vpack.c.bf16 %v2781, %v2777
    %v2934 = vpack.c.bf16 %v2782, %v2778
    %v2935 = vpack.c.bf16 %v2783, %v2779
    %v2936 = vpack.c.bf16 %v2788, %v2784
    %v2937 = vpack.c.bf16 %v2789, %v2785
    %v2938 = vpack.c.bf16 %v2790, %v2786
    %v2939 = vpack.c.bf16 %v2791, %v2787
    %v2940 = vpack.c.bf16 %v2796, %v2792
    %v2941 = vpack.c.bf16 %v2797, %v2793
    %v2942 = vpack.c.bf16 %v2798, %v2794
    %v2943 = vpack.c.bf16 %v2799, %v2795
    %v2944 = vpack.c.bf16 %v2804, %v2800
    %v2945 = vpack.c.bf16 %v2805, %v2801
    %v2946 = vpack.c.bf16 %v2806, %v2802
    %v2947 = vpack.c.bf16 %v2807, %v2803
    %v2948 = vpack.c.bf16 %v2812, %v2808
    %v2949 = vpack.c.bf16 %v2813, %v2809
    %v2950 = vpack.c.bf16 %v2814, %v2810
    %v2951 = vpack.c.bf16 %v2815, %v2811
    %v2952 = vpack.c.bf16 %v2820, %v2816
    %v2953 = vpack.c.bf16 %v2821, %v2817
    %v2954 = vpack.c.bf16 %v2822, %v2818
    %v2955 = vpack.c.bf16 %v2823, %v2819
    %v2956 = vpack.c.bf16 %v2828, %v2824
    %v2957 = vpack.c.bf16 %v2829, %v2825
    %v2958 = vpack.c.bf16 %v2830, %v2826
    %v2959 = vpack.c.bf16 %v2831, %v2827
    %v2960 = vpack.c.bf16 %v2251, %v2247
    %v2961 = vpack.c.bf16 %v2252, %v2248
    %v2962 = vpack.c.bf16 %v2253, %v2249
    %v2963 = vpack.c.bf16 %v2254, %v2250
    %2964 = vmatpush.bf16.msra.mxu0 %v2860
    %2965 = vmatpush.bf16.msra.mxu0 %v2856
    %2966 = vmatpush.bf16.msra.mxu0 %v2852
    %2967 = vmatpush.bf16.msra.mxu0 %v2848
    %2968 = vmatpush.bf16.msra.mxu0 %v2844
    %2969 = vmatpush.bf16.msra.mxu0 %v2840
    %2970 = vmatpush.bf16.msra.mxu0 %v2836
    %2971 = vmatpush.bf16.msra.mxu0 %v2832
    %2972 = vmatmul.bf16.gmra.mxu0 %v2960
    %v2973 = vpop.f32.mrf.mxu0
    %v2974 = vadd.f32 0.0, %v2973
    %v2975 = vpop.f32.mrf.mxu0
    %v2976 = vadd.f32 0.0, %v2975
    %2977 = vdwg.mxu0
    %2978 = vmatpush.bf16.msra.mxu0 %v2892
    %2979 = vmatpush.bf16.msra.mxu0 %v2888
    %2980 = vmatpush.bf16.msra.mxu0 %v2884
    %2981 = vmatpush.bf16.msra.mxu0 %v2880
    %2982 = vmatpush.bf16.msra.mxu0 %v2876
    %2983 = vmatpush.bf16.msra.mxu0 %v2872
    %2984 = vmatpush.bf16.msra.mxu0 %v2868
    %2985 = vmatpush.bf16.msra.mxu0 %v2864
    %2986 = vmatmul.bf16.gmra.mxu0 %v2961
    %v2987 = vpop.f32.mrf.mxu0
    %v2988 = vadd.f32 %v2974, %v2987
    %v2989 = vpop.f32.mrf.mxu0
    %v2990 = vadd.f32 %v2976, %v2989
    %2991 = vdwg.mxu0
    %2992 = vmatpush.bf16.msra.mxu0 %v2924
    %2993 = vmatpush.bf16.msra.mxu0 %v2920
    %2994 = vmatpush.bf16.msra.mxu0 %v2916
    %2995 = vmatpush.bf16.msra.mxu0 %v2912
    %2996 = vmatpush.bf16.msra.mxu0 %v2908
    %2997 = vmatpush.bf16.msra.mxu0 %v2904
    %2998 = vmatpush.bf16.msra.mxu0 %v2900
    %2999 = vmatpush.bf16.msra.mxu0 %v2896
    %3000 = vmatmul.bf16.gmra.mxu0 %v2962
    %v3001 = vpop.f32.mrf.mxu0
    %v3002 = vadd.f32 %v2988, %v3001
    %v3003 = vpop.f32.mrf.mxu0
    %v3004 = vadd.f32 %v2990, %v3003
    %3005 = vdwg.mxu0
    %3006 = vmatpush.bf16.msra.mxu0 %v2956
    %3007 = vmatpush.bf16.msra.mxu0 %v2952
    %3008 = vmatpush.bf16.msra.mxu0 %v2948
    %3009 = vmatpush.bf16.msra.mxu0 %v2944
    %3010 = vmatpush.bf16.msra.mxu0 %v2940
    %3011 = vmatpush.bf16.msra.mxu0 %v2936
    %3012 = vmatpush.bf16.msra.mxu0 %v2932
    %3013 = vmatpush.bf16.msra.mxu0 %v2928
    %3014 = vmatmul.bf16.gmra.mxu0 %v2963
    %v3015 = vpop.f32.mrf.mxu0
    %v3016 = vadd.f32 %v3002, %v3015
    %v3017 = vpop.f32.mrf.mxu0
    %v3018 = vadd.f32 %v3004, %v3017
    %3019 = vdwg.mxu0
    %3020 = vmatpush.bf16.msra.mxu0 %v2861
    %3021 = vmatpush.bf16.msra.mxu0 %v2857
    %3022 = vmatpush.bf16.msra.mxu0 %v2853
    %3023 = vmatpush.bf16.msra.mxu0 %v2849
    %3024 = vmatpush.bf16.msra.mxu0 %v2845
    %3025 = vmatpush.bf16.msra.mxu0 %v2841
    %3026 = vmatpush.bf16.msra.mxu0 %v2837
    %3027 = vmatpush.bf16.msra.mxu0 %v2833
    %3028 = vmatmul.bf16.gmra.mxu0 %v2960
    %v3029 = vpop.f32.mrf.mxu0
    %v3030 = vadd.f32 0.0, %v3029
    %v3031 = vpop.f32.mrf.mxu0
    %v3032 = vadd.f32 0.0, %v3031
    %3033 = vdwg.mxu0
    %3034 = vmatpush.bf16.msra.mxu0 %v2893
    %3035 = vmatpush.bf16.msra.mxu0 %v2889
    %3036 = vmatpush.bf16.msra.mxu0 %v2885
    %3037 = vmatpush.bf16.msra.mxu0 %v2881
    %3038 = vmatpush.bf16.msra.mxu0 %v2877
    %3039 = vmatpush.bf16.msra.mxu0 %v2873
    %3040 = vmatpush.bf16.msra.mxu0 %v2869
    %3041 = vmatpush.bf16.msra.mxu0 %v2865
    %3042 = vmatmul.bf16.gmra.mxu0 %v2961
    %v3043 = vpop.f32.mrf.mxu0
    %v3044 = vadd.f32 %v3030, %v3043
    %v3045 = vpop.f32.mrf.mxu0
    %v3046 = vadd.f32 %v3032, %v3045
    %3047 = vdwg.mxu0
    %3048 = vmatpush.bf16.msra.mxu0 %v2925
    %3049 = vmatpush.bf16.msra.mxu0 %v2921
    %3050 = vmatpush.bf16.msra.mxu0 %v2917
    %3051 = vmatpush.bf16.msra.mxu0 %v2913
    %3052 = vmatpush.bf16.msra.mxu0 %v2909
    %3053 = vmatpush.bf16.msra.mxu0 %v2905
    %3054 = vmatpush.bf16.msra.mxu0 %v2901
    %3055 = vmatpush.bf16.msra.mxu0 %v2897
    %3056 = vmatmul.bf16.gmra.mxu0 %v2962
    %v3057 = vpop.f32.mrf.mxu0
    %v3058 = vadd.f32 %v3044, %v3057
    %v3059 = vpop.f32.mrf.mxu0
    %v3060 = vadd.f32 %v3046, %v3059
    %3061 = vdwg.mxu0
    %3062 = vmatpush.bf16.msra.mxu0 %v2957
    %3063 = vmatpush.bf16.msra.mxu0 %v2953
    %3064 = vmatpush.bf16.msra.mxu0 %v2949
    %3065 = vmatpush.bf16.msra.mxu0 %v2945
    %3066 = vmatpush.bf16.msra.mxu0 %v2941
    %3067 = vmatpush.bf16.msra.mxu0 %v2937
    %3068 = vmatpush.bf16.msra.mxu0 %v2933
    %3069 = vmatpush.bf16.msra.mxu0 %v2929
    %3070 = vmatmul.bf16.gmra.mxu0 %v2963
    %v3071 = vpop.f32.mrf.mxu0
    %v3072 = vadd.f32 %v3058, %v3071
    %v3073 = vpop.f32.mrf.mxu0
    %v3074 = vadd.f32 %v3060, %v3073
    %3075 = vdwg.mxu0
    %3076 = vmatpush.bf16.msra.mxu0 %v2862
    %3077 = vmatpush.bf16.msra.mxu0 %v2858
    %3078 = vmatpush.bf16.msra.mxu0 %v2854
    %3079 = vmatpush.bf16.msra.mxu0 %v2850
    %3080 = vmatpush.bf16.msra.mxu0 %v2846
    %3081 = vmatpush.bf16.msra.mxu0 %v2842
    %3082 = vmatpush.bf16.msra.mxu0 %v2838
    %3083 = vmatpush.bf16.msra.mxu0 %v2834
    %3084 = vmatmul.bf16.gmra.mxu0 %v2960
    %v3085 = vpop.f32.mrf.mxu0
    %v3086 = vadd.f32 0.0, %v3085
    %v3087 = vpop.f32.mrf.mxu0
    %v3088 = vadd.f32 0.0, %v3087
    %3089 = vdwg.mxu0
    %3090 = vmatpush.bf16.msra.mxu0 %v2894
    %3091 = vmatpush.bf16.msra.mxu0 %v2890
    %3092 = vmatpush.bf16.msra.mxu0 %v2886
    %3093 = vmatpush.bf16.msra.mxu0 %v2882
    %3094 = vmatpush.bf16.msra.mxu0 %v2878
    %3095 = vmatpush.bf16.msra.mxu0 %v2874
    %3096 = vmatpush.bf16.msra.mxu0 %v2870
    %3097 = vmatpush.bf16.msra.mxu0 %v2866
    %3098 = vmatmul.bf16.gmra.mxu0 %v2961
    %v3099 = vpop.f32.mrf.mxu0
    %v3100 = vadd.f32 %v3086, %v3099
    %v3101 = vpop.f32.mrf.mxu0
    %v3102 = vadd.f32 %v3088, %v3101
    %3103 = vdwg.mxu0
    %3104 = vmatpush.bf16.msra.mxu0 %v2926
    %3105 = vmatpush.bf16.msra.mxu0 %v2922
    %3106 = vmatpush.bf16.msra.mxu0 %v2918
    %3107 = vmatpush.bf16.msra.mxu0 %v2914
    %3108 = vmatpush.bf16.msra.mxu0 %v2910
    %3109 = vmatpush.bf16.msra.mxu0 %v2906
    %3110 = vmatpush.bf16.msra.mxu0 %v2902
    %3111 = vmatpush.bf16.msra.mxu0 %v2898
    %3112 = vmatmul.bf16.gmra.mxu0 %v2962
    %v3113 = vpop.f32.mrf.mxu0
    %v3114 = vadd.f32 %v3100, %v3113
    %v3115 = vpop.f32.mrf.mxu0
    %v3116 = vadd.f32 %v3102, %v3115
    %3117 = vdwg.mxu0
    %3118 = vmatpush.bf16.msra.mxu0 %v2958
    %3119 = vmatpush.bf16.msra.mxu0 %v2954
    %3120 = vmatpush.bf16.msra.mxu0 %v2950
    %3121 = vmatpush.bf16.msra.mxu0 %v2946
    %3122 = vmatpush.bf16.msra.mxu0 %v2942
    %3123 = vmatpush.bf16.msra.mxu0 %v2938
    %3124 = vmatpush.bf16.msra.mxu0 %v2934
    %3125 = vmatpush.bf16.msra.mxu0 %v2930
    %3126 = vmatmul.bf16.gmra.mxu0 %v2963
    %v3127 = vpop.f32.mrf.mxu0
    %v3128 = vadd.f32 %v3114, %v3127
    %v3129 = vpop.f32.mrf.mxu0
    %v3130 = vadd.f32 %v3116, %v3129
    %3131 = vdwg.mxu0
    %3132 = vmatpush.bf16.msra.mxu0 %v2863
    %3133 = vmatpush.bf16.msra.mxu0 %v2859
    %3134 = vmatpush.bf16.msra.mxu0 %v2855
    %3135 = vmatpush.bf16.msra.mxu0 %v2851
    %3136 = vmatpush.bf16.msra.mxu0 %v2847
    %3137 = vmatpush.bf16.msra.mxu0 %v2843
    %3138 = vmatpush.bf16.msra.mxu0 %v2839
    %3139 = vmatpush.bf16.msra.mxu0 %v2835
    %3140 = vmatmul.bf16.gmra.mxu0 %v2960
    %v3141 = vpop.f32.mrf.mxu0
    %v3142 = vadd.f32 0.0, %v3141
    %v3143 = vpop.f32.mrf.mxu0
    %v3144 = vadd.f32 0.0, %v3143
    %3145 = vdwg.mxu0
    %3146 = vmatpush.bf16.msra.mxu0 %v2895
    %3147 = vmatpush.bf16.msra.mxu0 %v2891
    %3148 = vmatpush.bf16.msra.mxu0 %v2887
    %3149 = vmatpush.bf16.msra.mxu0 %v2883
    %3150 = vmatpush.bf16.msra.mxu0 %v2879
    %3151 = vmatpush.bf16.msra.mxu0 %v2875
    %3152 = vmatpush.bf16.msra.mxu0 %v2871
    %3153 = vmatpush.bf16.msra.mxu0 %v2867
    %3154 = vmatmul.bf16.gmra.mxu0 %v2961
    %v3155 = vpop.f32.mrf.mxu0
    %v3156 = vadd.f32 %v3142, %v3155
    %v3157 = vpop.f32.mrf.mxu0
    %v3158 = vadd.f32 %v3144, %v3157
    %3159 = vdwg.mxu0
    %3160 = vmatpush.bf16.msra.mxu0 %v2927
    %3161 = vmatpush.bf16.msra.mxu0 %v2923
    %3162 = vmatpush.bf16.msra.mxu0 %v2919
    %3163 = vmatpush.bf16.msra.mxu0 %v2915
    %3164 = vmatpush.bf16.msra.mxu0 %v2911
    %3165 = vmatpush.bf16.msra.mxu0 %v2907
    %3166 = vmatpush.bf16.msra.mxu0 %v2903
    %3167 = vmatpush.bf16.msra.mxu0 %v2899
    %3168 = vmatmul.bf16.gmra.mxu0 %v2962
    %v3169 = vpop.f32.mrf.mxu0
    %v3170 = vadd.f32 %v3156, %v3169
    %v3171 = vpop.f32.mrf.mxu0
    %v3172 = vadd.f32 %v3158, %v3171
    %3173 = vdwg.mxu0
    %3174 = vmatpush.bf16.msra.mxu0 %v2959
    %3175 = vmatpush.bf16.msra.mxu0 %v2955
    %3176 = vmatpush.bf16.msra.mxu0 %v2951
    %3177 = vmatpush.bf16.msra.mxu0 %v2947
    %3178 = vmatpush.bf16.msra.mxu0 %v2943
    %3179 = vmatpush.bf16.msra.mxu0 %v2939
    %3180 = vmatpush.bf16.msra.mxu0 %v2935
    %3181 = vmatpush.bf16.msra.mxu0 %v2931
    %3182 = vmatmul.bf16.gmra.mxu0 %v2963
    %v3183 = vpop.f32.mrf.mxu0
    %v3184 = vadd.f32 %v3170, %v3183
    %v3185 = vpop.f32.mrf.mxu0
    %v3186 = vadd.f32 %v3172, %v3185
    %3187 = vdwg.mxu0
    %s3188 = scalar_lea.vmem [#allocation10], 8
    %v3189 = vld [vmem:[%s3188] sm:$0xf]
    %v3191 = vperm.slane %v3189, 0
    %v3192 = vperm.slane %v3189, 1
    %v3193 = vperm.slane %v3189, 2
    %v3194 = vperm.slane %v3189, 3
    %v3199 = vmul.f32 %v3016, %v3191
    %v3200 = vmul.f32 %v3072, %v3192
    %v3201 = vmul.f32 %v3128, %v3193
    %v3202 = vmul.f32 %v3184, %v3194
    %v3203 = vmul.f32 %v3018, %v3191
    %v3204 = vmul.f32 %v3074, %v3192
    %v3205 = vmul.f32 %v3130, %v3193
    %v3206 = vmul.f32 %v3186, %v3194
    %s3207 = scalar_lea.vmem [#allocation11], 8
    %v3208 = vld [vmem:[%s3207] sm:$0xf]
    %v3210 = vperm.slane %v3208, 0
    %v3211 = vperm.slane %v3208, 1
    %v3212 = vperm.slane %v3208, 2
    %v3213 = vperm.slane %v3208, 3
    %v3218 = vadd.f32 %v3199, %v3210
    %v3219 = vadd.f32 %v3200, %v3211
    %v3220 = vadd.f32 %v3201, %v3212
    %v3221 = vadd.f32 %v3202, %v3213
    %v3222 = vadd.f32 %v3203, %v3210
    %v3223 = vadd.f32 %v3204, %v3211
    %v3224 = vadd.f32 %v3205, %v3212
    %v3225 = vadd.f32 %v3206, %v3213
    %v3226 = vmax.f32 %v3218, 0.0
    %v3227 = vmax.f32 %v3219, 0.0
    %v3228 = vmax.f32 %v3220, 0.0
    %v3229 = vmax.f32 %v3221, 0.0
    %v3230 = vmax.f32 %v3222, 0.0
    %v3231 = vmax.f32 %v3223, 0.0
    %v3232 = vmax.f32 %v3224, 0.0
    %v3233 = vmax.f32 %v3225, 0.0
    %s3234 = scalar_lea.vmem [#allocation8], 1536
    %v3235 = vld [vmem:[%s3234] sm:$0xff]
    %v3236 = vld [vmem:[%s3234 + $0x8] sm:$0xff]
    %v3237 = vld [vmem:[%s3234 + $0x10] sm:$0xff]
    %v3238 = vld [vmem:[%s3234 + $0x18] sm:$0xff]
    %v3239 = vld [vmem:[%s3234 + $0x20] sm:$0xff]
    %v3240 = vld [vmem:[%s3234 + $0x28] sm:$0xff]
    %v3241 = vld [vmem:[%s3234 + $0x30] sm:$0xff]
    %v3242 = vld [vmem:[%s3234 + $0x38] sm:$0xff]
    %v3243 = vld [vmem:[%s3234 + $0x40] sm:$0xff]
    %v3244 = vld [vmem:[%s3234 + $0x48] sm:$0xff]
    %v3245 = vld [vmem:[%s3234 + $0x50] sm:$0xff]
    %v3246 = vld [vmem:[%s3234 + $0x58] sm:$0xff]
    %v3247 = vld [vmem:[%s3234 + $0x60] sm:$0xff]
    %v3248 = vld [vmem:[%s3234 + $0x68] sm:$0xff]
    %v3249 = vld [vmem:[%s3234 + $0x70] sm:$0xff]
    %v3250 = vld [vmem:[%s3234 + $0x78] sm:$0xff]
    %v3251 = vld [vmem:[%s3234 + $0x80] sm:$0xff]
    %v3252 = vld [vmem:[%s3234 + $0x88] sm:$0xff]
    %v3253 = vld [vmem:[%s3234 + $0x90] sm:$0xff]
    %v3254 = vld [vmem:[%s3234 + $0x98] sm:$0xff]
    %v3255 = vld [vmem:[%s3234 + $0xa0] sm:$0xff]
    %v3256 = vld [vmem:[%s3234 + $0xa8] sm:$0xff]
    %v3257 = vld [vmem:[%s3234 + $0xb0] sm:$0xff]
    %v3258 = vld [vmem:[%s3234 + $0xb8] sm:$0xff]
    %v3259 = vld [vmem:[%s3234 + $0xc0] sm:$0xff]
    %v3260 = vld [vmem:[%s3234 + $0xc8] sm:$0xff]
    %v3261 = vld [vmem:[%s3234 + $0xd0] sm:$0xff]
    %v3262 = vld [vmem:[%s3234 + $0xd8] sm:$0xff]
    %v3263 = vld [vmem:[%s3234 + $0xe0] sm:$0xff]
    %v3264 = vld [vmem:[%s3234 + $0xe8] sm:$0xff]
    %v3265 = vld [vmem:[%s3234 + $0xf0] sm:$0xff]
    %v3266 = vld [vmem:[%s3234 + $0xf8] sm:$0xff]
    %v3267 = vld [vmem:[%s3234 + $0x100] sm:$0xff]
    %v3268 = vld [vmem:[%s3234 + $0x108] sm:$0xff]
    %v3269 = vld [vmem:[%s3234 + $0x110] sm:$0xff]
    %v3270 = vld [vmem:[%s3234 + $0x118] sm:$0xff]
    %v3271 = vld [vmem:[%s3234 + $0x120] sm:$0xff]
    %v3272 = vld [vmem:[%s3234 + $0x128] sm:$0xff]
    %v3273 = vld [vmem:[%s3234 + $0x130] sm:$0xff]
    %v3274 = vld [vmem:[%s3234 + $0x138] sm:$0xff]
    %v3275 = vld [vmem:[%s3234 + $0x140] sm:$0xff]
    %v3276 = vld [vmem:[%s3234 + $0x148] sm:$0xff]
    %v3277 = vld [vmem:[%s3234 + $0x150] sm:$0xff]
    %v3278 = vld [vmem:[%s3234 + $0x158] sm:$0xff]
    %v3279 = vld [vmem:[%s3234 + $0x160] sm:$0xff]
    %v3280 = vld [vmem:[%s3234 + $0x168] sm:$0xff]
    %v3281 = vld [vmem:[%s3234 + $0x170] sm:$0xff]
    %v3282 = vld [vmem:[%s3234 + $0x178] sm:$0xff]
    %v3283 = vld [vmem:[%s3234 + $0x180] sm:$0xff]
    %v3284 = vld [vmem:[%s3234 + $0x188] sm:$0xff]
    %v3285 = vld [vmem:[%s3234 + $0x190] sm:$0xff]
    %v3286 = vld [vmem:[%s3234 + $0x198] sm:$0xff]
    %v3287 = vld [vmem:[%s3234 + $0x1a0] sm:$0xff]
    %v3288 = vld [vmem:[%s3234 + $0x1a8] sm:$0xff]
    %v3289 = vld [vmem:[%s3234 + $0x1b0] sm:$0xff]
    %v3290 = vld [vmem:[%s3234 + $0x1b8] sm:$0xff]
    %v3291 = vld [vmem:[%s3234 + $0x1c0] sm:$0xff]
    %v3292 = vld [vmem:[%s3234 + $0x1c8] sm:$0xff]
    %v3293 = vld [vmem:[%s3234 + $0x1d0] sm:$0xff]
    %v3294 = vld [vmem:[%s3234 + $0x1d8] sm:$0xff]
    %v3295 = vld [vmem:[%s3234 + $0x1e0] sm:$0xff]
    %v3296 = vld [vmem:[%s3234 + $0x1e8] sm:$0xff]
    %v3297 = vld [vmem:[%s3234 + $0x1f0] sm:$0xff]
    %v3298 = vld [vmem:[%s3234 + $0x1f8] sm:$0xff]
    %v3299 = vunpack.c.0.s8 %v3235
    %v3300 = vunpack.c.0.s8 %v3236
    %v3301 = vunpack.c.0.s8 %v3237
    %v3302 = vunpack.c.0.s8 %v3238
    %v3303 = vunpack.c.1.s8 %v3235
    %v3304 = vunpack.c.1.s8 %v3236
    %v3305 = vunpack.c.1.s8 %v3237
    %v3306 = vunpack.c.1.s8 %v3238
    %v3307 = vunpack.c.2.s8 %v3235
    %v3308 = vunpack.c.2.s8 %v3236
    %v3309 = vunpack.c.2.s8 %v3237
    %v3310 = vunpack.c.2.s8 %v3238
    %v3311 = vunpack.c.3.s8 %v3235
    %v3312 = vunpack.c.3.s8 %v3236
    %v3313 = vunpack.c.3.s8 %v3237
    %v3314 = vunpack.c.3.s8 %v3238
    %v3315 = vunpack.c.0.s8 %v3239
    %v3316 = vunpack.c.0.s8 %v3240
    %v3317 = vunpack.c.0.s8 %v3241
    %v3318 = vunpack.c.0.s8 %v3242
    %v3319 = vunpack.c.1.s8 %v3239
    %v3320 = vunpack.c.1.s8 %v3240
    %v3321 = vunpack.c.1.s8 %v3241
    %v3322 = vunpack.c.1.s8 %v3242
    %v3323 = vunpack.c.2.s8 %v3239
    %v3324 = vunpack.c.2.s8 %v3240
    %v3325 = vunpack.c.2.s8 %v3241
    %v3326 = vunpack.c.2.s8 %v3242
    %v3327 = vunpack.c.3.s8 %v3239
    %v3328 = vunpack.c.3.s8 %v3240
    %v3329 = vunpack.c.3.s8 %v3241
    %v3330 = vunpack.c.3.s8 %v3242
    %v3331 = vunpack.c.0.s8 %v3243
    %v3332 = vunpack.c.0.s8 %v3244
    %v3333 = vunpack.c.0.s8 %v3245
    %v3334 = vunpack.c.0.s8 %v3246
    %v3335 = vunpack.c.1.s8 %v3243
    %v3336 = vunpack.c.1.s8 %v3244
    %v3337 = vunpack.c.1.s8 %v3245
    %v3338 = vunpack.c.1.s8 %v3246
    %v3339 = vunpack.c.2.s8 %v3243
    %v3340 = vunpack.c.2.s8 %v3244
    %v3341 = vunpack.c.2.s8 %v3245
    %v3342 = vunpack.c.2.s8 %v3246
    %v3343 = vunpack.c.3.s8 %v3243
    %v3344 = vunpack.c.3.s8 %v3244
    %v3345 = vunpack.c.3.s8 %v3245
    %v3346 = vunpack.c.3.s8 %v3246
    %v3347 = vunpack.c.0.s8 %v3247
    %v3348 = vunpack.c.0.s8 %v3248
    %v3349 = vunpack.c.0.s8 %v3249
    %v3350 = vunpack.c.0.s8 %v3250
    %v3351 = vunpack.c.1.s8 %v3247
    %v3352 = vunpack.c.1.s8 %v3248
    %v3353 = vunpack.c.1.s8 %v3249
    %v3354 = vunpack.c.1.s8 %v3250
    %v3355 = vunpack.c.2.s8 %v3247
    %v3356 = vunpack.c.2.s8 %v3248
    %v3357 = vunpack.c.2.s8 %v3249
    %v3358 = vunpack.c.2.s8 %v3250
    %v3359 = vunpack.c.3.s8 %v3247
    %v3360 = vunpack.c.3.s8 %v3248
    %v3361 = vunpack.c.3.s8 %v3249
    %v3362 = vunpack.c.3.s8 %v3250
    %v3363 = vunpack.c.0.s8 %v3251
    %v3364 = vunpack.c.0.s8 %v3252
    %v3365 = vunpack.c.0.s8 %v3253
    %v3366 = vunpack.c.0.s8 %v3254
    %v3367 = vunpack.c.1.s8 %v3251
    %v3368 = vunpack.c.1.s8 %v3252
    %v3369 = vunpack.c.1.s8 %v3253
    %v3370 = vunpack.c.1.s8 %v3254
    %v3371 = vunpack.c.2.s8 %v3251
    %v3372 = vunpack.c.2.s8 %v3252
    %v3373 = vunpack.c.2.s8 %v3253
    %v3374 = vunpack.c.2.s8 %v3254
    %v3375 = vunpack.c.3.s8 %v3251
    %v3376 = vunpack.c.3.s8 %v3252
    %v3377 = vunpack.c.3.s8 %v3253
    %v3378 = vunpack.c.3.s8 %v3254
    %v3379 = vunpack.c.0.s8 %v3255
    %v3380 = vunpack.c.0.s8 %v3256
    %v3381 = vunpack.c.0.s8 %v3257
    %v3382 = vunpack.c.0.s8 %v3258
    %v3383 = vunpack.c.1.s8 %v3255
    %v3384 = vunpack.c.1.s8 %v3256
    %v3385 = vunpack.c.1.s8 %v3257
    %v3386 = vunpack.c.1.s8 %v3258
    %v3387 = vunpack.c.2.s8 %v3255
    %v3388 = vunpack.c.2.s8 %v3256
    %v3389 = vunpack.c.2.s8 %v3257
    %v3390 = vunpack.c.2.s8 %v3258
    %v3391 = vunpack.c.3.s8 %v3255
    %v3392 = vunpack.c.3.s8 %v3256
    %v3393 = vunpack.c.3.s8 %v3257
    %v3394 = vunpack.c.3.s8 %v3258
    %v3395 = vunpack.c.0.s8 %v3259
    %v3396 = vunpack.c.0.s8 %v3260
    %v3397 = vunpack.c.0.s8 %v3261
    %v3398 = vunpack.c.0.s8 %v3262
    %v3399 = vunpack.c.1.s8 %v3259
    %v3400 = vunpack.c.1.s8 %v3260
    %v3401 = vunpack.c.1.s8 %v3261
    %v3402 = vunpack.c.1.s8 %v3262
    %v3403 = vunpack.c.2.s8 %v3259
    %v3404 = vunpack.c.2.s8 %v3260
    %v3405 = vunpack.c.2.s8 %v3261
    %v3406 = vunpack.c.2.s8 %v3262
    %v3407 = vunpack.c.3.s8 %v3259
    %v3408 = vunpack.c.3.s8 %v3260
    %v3409 = vunpack.c.3.s8 %v3261
    %v3410 = vunpack.c.3.s8 %v3262
    %v3411 = vunpack.c.0.s8 %v3263
    %v3412 = vunpack.c.0.s8 %v3264
    %v3413 = vunpack.c.0.s8 %v3265
    %v3414 = vunpack.c.0.s8 %v3266
    %v3415 = vunpack.c.1.s8 %v3263
    %v3416 = vunpack.c.1.s8 %v3264
    %v3417 = vunpack.c.1.s8 %v3265
    %v3418 = vunpack.c.1.s8 %v3266
    %v3419 = vunpack.c.2.s8 %v3263
    %v3420 = vunpack.c.2.s8 %v3264
    %v3421 = vunpack.c.2.s8 %v3265
    %v3422 = vunpack.c.2.s8 %v3266
    %v3423 = vunpack.c.3.s8 %v3263
    %v3424 = vunpack.c.3.s8 %v3264
    %v3425 = vunpack.c.3.s8 %v3265
    %v3426 = vunpack.c.3.s8 %v3266
    %v3427 = vunpack.c.0.s8 %v3267
    %v3428 = vunpack.c.0.s8 %v3268
    %v3429 = vunpack.c.0.s8 %v3269
    %v3430 = vunpack.c.0.s8 %v3270
    %v3431 = vunpack.c.1.s8 %v3267
    %v3432 = vunpack.c.1.s8 %v3268
    %v3433 = vunpack.c.1.s8 %v3269
    %v3434 = vunpack.c.1.s8 %v3270
    %v3435 = vunpack.c.2.s8 %v3267
    %v3436 = vunpack.c.2.s8 %v3268
    %v3437 = vunpack.c.2.s8 %v3269
    %v3438 = vunpack.c.2.s8 %v3270
    %v3439 = vunpack.c.3.s8 %v3267
    %v3440 = vunpack.c.3.s8 %v3268
    %v3441 = vunpack.c.3.s8 %v3269
    %v3442 = vunpack.c.3.s8 %v3270
    %v3443 = vunpack.c.0.s8 %v3271
    %v3444 = vunpack.c.0.s8 %v3272
    %v3445 = vunpack.c.0.s8 %v3273
    %v3446 = vunpack.c.0.s8 %v3274
    %v3447 = vunpack.c.1.s8 %v3271
    %v3448 = vunpack.c.1.s8 %v3272
    %v3449 = vunpack.c.1.s8 %v3273
    %v3450 = vunpack.c.1.s8 %v3274
    %v3451 = vunpack.c.2.s8 %v3271
    %v3452 = vunpack.c.2.s8 %v3272
    %v3453 = vunpack.c.2.s8 %v3273
    %v3454 = vunpack.c.2.s8 %v3274
    %v3455 = vunpack.c.3.s8 %v3271
    %v3456 = vunpack.c.3.s8 %v3272
    %v3457 = vunpack.c.3.s8 %v3273
    %v3458 = vunpack.c.3.s8 %v3274
    %v3459 = vunpack.c.0.s8 %v3275
    %v3460 = vunpack.c.0.s8 %v3276
    %v3461 = vunpack.c.0.s8 %v3277
    %v3462 = vunpack.c.0.s8 %v3278
    %v3463 = vunpack.c.1.s8 %v3275
    %v3464 = vunpack.c.1.s8 %v3276
    %v3465 = vunpack.c.1.s8 %v3277
    %v3466 = vunpack.c.1.s8 %v3278
    %v3467 = vunpack.c.2.s8 %v3275
    %v3468 = vunpack.c.2.s8 %v3276
    %v3469 = vunpack.c.2.s8 %v3277
    %v3470 = vunpack.c.2.s8 %v3278
    %v3471 = vunpack.c.3.s8 %v3275
    %v3472 = vunpack.c.3.s8 %v3276
    %v3473 = vunpack.c.3.s8 %v3277
    %v3474 = vunpack.c.3.s8 %v3278
    %v3475 = vunpack.c.0.s8 %v3279
    %v3476 = vunpack.c.0.s8 %v3280
    %v3477 = vunpack.c.0.s8 %v3281
    %v3478 = vunpack.c.0.s8 %v3282
    %v3479 = vunpack.c.1.s8 %v3279
    %v3480 = vunpack.c.1.s8 %v3280
    %v3481 = vunpack.c.1.s8 %v3281
    %v3482 = vunpack.c.1.s8 %v3282
    %v3483 = vunpack.c.2.s8 %v3279
    %v3484 = vunpack.c.2.s8 %v3280
    %v3485 = vunpack.c.2.s8 %v3281
    %v3486 = vunpack.c.2.s8 %v3282
    %v3487 = vunpack.c.3.s8 %v3279
    %v3488 = vunpack.c.3.s8 %v3280
    %v3489 = vunpack.c.3.s8 %v3281
    %v3490 = vunpack.c.3.s8 %v3282
    %v3491 = vunpack.c.0.s8 %v3283
    %v3492 = vunpack.c.0.s8 %v3284
    %v3493 = vunpack.c.0.s8 %v3285
    %v3494 = vunpack.c.0.s8 %v3286
    %v3495 = vunpack.c.1.s8 %v3283
    %v3496 = vunpack.c.1.s8 %v3284
    %v3497 = vunpack.c.1.s8 %v3285
    %v3498 = vunpack.c.1.s8 %v3286
    %v3499 = vunpack.c.2.s8 %v3283
    %v3500 = vunpack.c.2.s8 %v3284
    %v3501 = vunpack.c.2.s8 %v3285
    %v3502 = vunpack.c.2.s8 %v3286
    %v3503 = vunpack.c.3.s8 %v3283
    %v3504 = vunpack.c.3.s8 %v3284
    %v3505 = vunpack.c.3.s8 %v3285
    %v3506 = vunpack.c.3.s8 %v3286
    %v3507 = vunpack.c.0.s8 %v3287
    %v3508 = vunpack.c.0.s8 %v3288
    %v3509 = vunpack.c.0.s8 %v3289
    %v3510 = vunpack.c.0.s8 %v3290
    %v3511 = vunpack.c.1.s8 %v3287
    %v3512 = vunpack.c.1.s8 %v3288
    %v3513 = vunpack.c.1.s8 %v3289
    %v3514 = vunpack.c.1.s8 %v3290
    %v3515 = vunpack.c.2.s8 %v3287
    %v3516 = vunpack.c.2.s8 %v3288
    %v3517 = vunpack.c.2.s8 %v3289
    %v3518 = vunpack.c.2.s8 %v3290
    %v3519 = vunpack.c.3.s8 %v3287
    %v3520 = vunpack.c.3.s8 %v3288
    %v3521 = vunpack.c.3.s8 %v3289
    %v3522 = vunpack.c.3.s8 %v3290
    %v3523 = vunpack.c.0.s8 %v3291
    %v3524 = vunpack.c.0.s8 %v3292
    %v3525 = vunpack.c.0.s8 %v3293
    %v3526 = vunpack.c.0.s8 %v3294
    %v3527 = vunpack.c.1.s8 %v3291
    %v3528 = vunpack.c.1.s8 %v3292
    %v3529 = vunpack.c.1.s8 %v3293
    %v3530 = vunpack.c.1.s8 %v3294
    %v3531 = vunpack.c.2.s8 %v3291
    %v3532 = vunpack.c.2.s8 %v3292
    %v3533 = vunpack.c.2.s8 %v3293
    %v3534 = vunpack.c.2.s8 %v3294
    %v3535 = vunpack.c.3.s8 %v3291
    %v3536 = vunpack.c.3.s8 %v3292
    %v3537 = vunpack.c.3.s8 %v3293
    %v3538 = vunpack.c.3.s8 %v3294
    %v3539 = vunpack.c.0.s8 %v3295
    %v3540 = vunpack.c.0.s8 %v3296
    %v3541 = vunpack.c.0.s8 %v3297
    %v3542 = vunpack.c.0.s8 %v3298
    %v3543 = vunpack.c.1.s8 %v3295
    %v3544 = vunpack.c.1.s8 %v3296
    %v3545 = vunpack.c.1.s8 %v3297
    %v3546 = vunpack.c.1.s8 %v3298
    %v3547 = vunpack.c.2.s8 %v3295
    %v3548 = vunpack.c.2.s8 %v3296
    %v3549 = vunpack.c.2.s8 %v3297
    %v3550 = vunpack.c.2.s8 %v3298
    %v3551 = vunpack.c.3.s8 %v3295
    %v3552 = vunpack.c.3.s8 %v3296
    %v3553 = vunpack.c.3.s8 %v3297
    %v3554 = vunpack.c.3.s8 %v3298
    %v3555 = vcvt.s32.f32 %v3299
    %v3556 = vcvt.s32.f32 %v3300
    %v3557 = vcvt.s32.f32 %v3301
    %v3558 = vcvt.s32.f32 %v3302
    %v3559 = vcvt.s32.f32 %v3303
    %v3560 = vcvt.s32.f32 %v3304
    %v3561 = vcvt.s32.f32 %v3305
    %v3562 = vcvt.s32.f32 %v3306
    %v3563 = vcvt.s32.f32 %v3307
    %v3564 = vcvt.s32.f32 %v3308
    %v3565 = vcvt.s32.f32 %v3309
    %v3566 = vcvt.s32.f32 %v3310
    %v3567 = vcvt.s32.f32 %v3311
    %v3568 = vcvt.s32.f32 %v3312
    %v3569 = vcvt.s32.f32 %v3313
    %v3570 = vcvt.s32.f32 %v3314
    %v3571 = vcvt.s32.f32 %v3315
    %v3572 = vcvt.s32.f32 %v3316
    %v3573 = vcvt.s32.f32 %v3317
    %v3574 = vcvt.s32.f32 %v3318
    %v3575 = vcvt.s32.f32 %v3319
    %v3576 = vcvt.s32.f32 %v3320
    %v3577 = vcvt.s32.f32 %v3321
    %v3578 = vcvt.s32.f32 %v3322
    %v3579 = vcvt.s32.f32 %v3323
    %v3580 = vcvt.s32.f32 %v3324
    %v3581 = vcvt.s32.f32 %v3325
    %v3582 = vcvt.s32.f32 %v3326
    %v3583 = vcvt.s32.f32 %v3327
    %v3584 = vcvt.s32.f32 %v3328
    %v3585 = vcvt.s32.f32 %v3329
    %v3586 = vcvt.s32.f32 %v3330
    %v3587 = vcvt.s32.f32 %v3331
    %v3588 = vcvt.s32.f32 %v3332
    %v3589 = vcvt.s32.f32 %v3333
    %v3590 = vcvt.s32.f32 %v3334
    %v3591 = vcvt.s32.f32 %v3335
    %v3592 = vcvt.s32.f32 %v3336
    %v3593 = vcvt.s32.f32 %v3337
    %v3594 = vcvt.s32.f32 %v3338
    %v3595 = vcvt.s32.f32 %v3339
    %v3596 = vcvt.s32.f32 %v3340
    %v3597 = vcvt.s32.f32 %v3341
    %v3598 = vcvt.s32.f32 %v3342
    %v3599 = vcvt.s32.f32 %v3343
    %v3600 = vcvt.s32.f32 %v3344
    %v3601 = vcvt.s32.f32 %v3345
    %v3602 = vcvt.s32.f32 %v3346
    %v3603 = vcvt.s32.f32 %v3347
    %v3604 = vcvt.s32.f32 %v3348
    %v3605 = vcvt.s32.f32 %v3349
    %v3606 = vcvt.s32.f32 %v3350
    %v3607 = vcvt.s32.f32 %v3351
    %v3608 = vcvt.s32.f32 %v3352
    %v3609 = vcvt.s32.f32 %v3353
    %v3610 = vcvt.s32.f32 %v3354
    %v3611 = vcvt.s32.f32 %v3355
    %v3612 = vcvt.s32.f32 %v3356
    %v3613 = vcvt.s32.f32 %v3357
    %v3614 = vcvt.s32.f32 %v3358
    %v3615 = vcvt.s32.f32 %v3359
    %v3616 = vcvt.s32.f32 %v3360
    %v3617 = vcvt.s32.f32 %v3361
    %v3618 = vcvt.s32.f32 %v3362
    %v3619 = vcvt.s32.f32 %v3363
    %v3620 = vcvt.s32.f32 %v3364
    %v3621 = vcvt.s32.f32 %v3365
    %v3622 = vcvt.s32.f32 %v3366
    %v3623 = vcvt.s32.f32 %v3367
    %v3624 = vcvt.s32.f32 %v3368
    %v3625 = vcvt.s32.f32 %v3369
    %v3626 = vcvt.s32.f32 %v3370
    %v3627 = vcvt.s32.f32 %v3371
    %v3628 = vcvt.s32.f32 %v3372
    %v3629 = vcvt.s32.f32 %v3373
    %v3630 = vcvt.s32.f32 %v3374
    %v3631 = vcvt.s32.f32 %v3375
    %v3632 = vcvt.s32.f32 %v3376
    %v3633 = vcvt.s32.f32 %v3377
    %v3634 = vcvt.s32.f32 %v3378
    %v3635 = vcvt.s32.f32 %v3379
    %v3636 = vcvt.s32.f32 %v3380
    %v3637 = vcvt.s32.f32 %v3381
    %v3638 = vcvt.s32.f32 %v3382
    %v3639 = vcvt.s32.f32 %v3383
    %v3640 = vcvt.s32.f32 %v3384
    %v3641 = vcvt.s32.f32 %v3385
    %v3642 = vcvt.s32.f32 %v3386
    %v3643 = vcvt.s32.f32 %v3387
    %v3644 = vcvt.s32.f32 %v3388
    %v3645 = vcvt.s32.f32 %v3389
    %v3646 = vcvt.s32.f32 %v3390
    %v3647 = vcvt.s32.f32 %v3391
    %v3648 = vcvt.s32.f32 %v3392
    %v3649 = vcvt.s32.f32 %v3393
    %v3650 = vcvt.s32.f32 %v3394
    %v3651 = vcvt.s32.f32 %v3395
    %v3652 = vcvt.s32.f32 %v3396
    %v3653 = vcvt.s32.f32 %v3397
    %v3654 = vcvt.s32.f32 %v3398
    %v3655 = vcvt.s32.f32 %v3399
    %v3656 = vcvt.s32.f32 %v3400
    %v3657 = vcvt.s32.f32 %v3401
    %v3658 = vcvt.s32.f32 %v3402
    %v3659 = vcvt.s32.f32 %v3403
    %v3660 = vcvt.s32.f32 %v3404
    %v3661 = vcvt.s32.f32 %v3405
    %v3662 = vcvt.s32.f32 %v3406
    %v3663 = vcvt.s32.f32 %v3407
    %v3664 = vcvt.s32.f32 %v3408
    %v3665 = vcvt.s32.f32 %v3409
    %v3666 = vcvt.s32.f32 %v3410
    %v3667 = vcvt.s32.f32 %v3411
    %v3668 = vcvt.s32.f32 %v3412
    %v3669 = vcvt.s32.f32 %v3413
    %v3670 = vcvt.s32.f32 %v3414
    %v3671 = vcvt.s32.f32 %v3415
    %v3672 = vcvt.s32.f32 %v3416
    %v3673 = vcvt.s32.f32 %v3417
    %v3674 = vcvt.s32.f32 %v3418
    %v3675 = vcvt.s32.f32 %v3419
    %v3676 = vcvt.s32.f32 %v3420
    %v3677 = vcvt.s32.f32 %v3421
    %v3678 = vcvt.s32.f32 %v3422
    %v3679 = vcvt.s32.f32 %v3423
    %v3680 = vcvt.s32.f32 %v3424
    %v3681 = vcvt.s32.f32 %v3425
    %v3682 = vcvt.s32.f32 %v3426
    %v3683 = vcvt.s32.f32 %v3427
    %v3684 = vcvt.s32.f32 %v3428
    %v3685 = vcvt.s32.f32 %v3429
    %v3686 = vcvt.s32.f32 %v3430
    %v3687 = vcvt.s32.f32 %v3431
    %v3688 = vcvt.s32.f32 %v3432
    %v3689 = vcvt.s32.f32 %v3433
    %v3690 = vcvt.s32.f32 %v3434
    %v3691 = vcvt.s32.f32 %v3435
    %v3692 = vcvt.s32.f32 %v3436
    %v3693 = vcvt.s32.f32 %v3437
    %v3694 = vcvt.s32.f32 %v3438
    %v3695 = vcvt.s32.f32 %v3439
    %v3696 = vcvt.s32.f32 %v3440
    %v3697 = vcvt.s32.f32 %v3441
    %v3698 = vcvt.s32.f32 %v3442
    %v3699 = vcvt.s32.f32 %v3443
    %v3700 = vcvt.s32.f32 %v3444
    %v3701 = vcvt.s32.f32 %v3445
    %v3702 = vcvt.s32.f32 %v3446
    %v3703 = vcvt.s32.f32 %v3447
    %v3704 = vcvt.s32.f32 %v3448
    %v3705 = vcvt.s32.f32 %v3449
    %v3706 = vcvt.s32.f32 %v3450
    %v3707 = vcvt.s32.f32 %v3451
    %v3708 = vcvt.s32.f32 %v3452
    %v3709 = vcvt.s32.f32 %v3453
    %v3710 = vcvt.s32.f32 %v3454
    %v3711 = vcvt.s32.f32 %v3455
    %v3712 = vcvt.s32.f32 %v3456
    %v3713 = vcvt.s32.f32 %v3457
    %v3714 = vcvt.s32.f32 %v3458
    %v3715 = vcvt.s32.f32 %v3459
    %v3716 = vcvt.s32.f32 %v3460
    %v3717 = vcvt.s32.f32 %v3461
    %v3718 = vcvt.s32.f32 %v3462
    %v3719 = vcvt.s32.f32 %v3463
    %v3720 = vcvt.s32.f32 %v3464
    %v3721 = vcvt.s32.f32 %v3465
    %v3722 = vcvt.s32.f32 %v3466
    %v3723 = vcvt.s32.f32 %v3467
    %v3724 = vcvt.s32.f32 %v3468
    %v3725 = vcvt.s32.f32 %v3469
    %v3726 = vcvt.s32.f32 %v3470
    %v3727 = vcvt.s32.f32 %v3471
    %v3728 = vcvt.s32.f32 %v3472
    %v3729 = vcvt.s32.f32 %v3473
    %v3730 = vcvt.s32.f32 %v3474
    %v3731 = vcvt.s32.f32 %v3475
    %v3732 = vcvt.s32.f32 %v3476
    %v3733 = vcvt.s32.f32 %v3477
    %v3734 = vcvt.s32.f32 %v3478
    %v3735 = vcvt.s32.f32 %v3479
    %v3736 = vcvt.s32.f32 %v3480
    %v3737 = vcvt.s32.f32 %v3481
    %v3738 = vcvt.s32.f32 %v3482
    %v3739 = vcvt.s32.f32 %v3483
    %v3740 = vcvt.s32.f32 %v3484
    %v3741 = vcvt.s32.f32 %v3485
    %v3742 = vcvt.s32.f32 %v3486
    %v3743 = vcvt.s32.f32 %v3487
    %v3744 = vcvt.s32.f32 %v3488
    %v3745 = vcvt.s32.f32 %v3489
    %v3746 = vcvt.s32.f32 %v3490
    %v3747 = vcvt.s32.f32 %v3491
    %v3748 = vcvt.s32.f32 %v3492
    %v3749 = vcvt.s32.f32 %v3493
    %v3750 = vcvt.s32.f32 %v3494
    %v3751 = vcvt.s32.f32 %v3495
    %v3752 = vcvt.s32.f32 %v3496
    %v3753 = vcvt.s32.f32 %v3497
    %v3754 = vcvt.s32.f32 %v3498
    %v3755 = vcvt.s32.f32 %v3499
    %v3756 = vcvt.s32.f32 %v3500
    %v3757 = vcvt.s32.f32 %v3501
    %v3758 = vcvt.s32.f32 %v3502
    %v3759 = vcvt.s32.f32 %v3503
    %v3760 = vcvt.s32.f32 %v3504
    %v3761 = vcvt.s32.f32 %v3505
    %v3762 = vcvt.s32.f32 %v3506
    %v3763 = vcvt.s32.f32 %v3507
    %v3764 = vcvt.s32.f32 %v3508
    %v3765 = vcvt.s32.f32 %v3509
    %v3766 = vcvt.s32.f32 %v3510
    %v3767 = vcvt.s32.f32 %v3511
    %v3768 = vcvt.s32.f32 %v3512
    %v3769 = vcvt.s32.f32 %v3513
    %v3770 = vcvt.s32.f32 %v3514
    %v3771 = vcvt.s32.f32 %v3515
    %v3772 = vcvt.s32.f32 %v3516
    %v3773 = vcvt.s32.f32 %v3517
    %v3774 = vcvt.s32.f32 %v3518
    %v3775 = vcvt.s32.f32 %v3519
    %v3776 = vcvt.s32.f32 %v3520
    %v3777 = vcvt.s32.f32 %v3521
    %v3778 = vcvt.s32.f32 %v3522
    %v3779 = vcvt.s32.f32 %v3523
    %v3780 = vcvt.s32.f32 %v3524
    %v3781 = vcvt.s32.f32 %v3525
    %v3782 = vcvt.s32.f32 %v3526
    %v3783 = vcvt.s32.f32 %v3527
    %v3784 = vcvt.s32.f32 %v3528
    %v3785 = vcvt.s32.f32 %v3529
    %v3786 = vcvt.s32.f32 %v3530
    %v3787 = vcvt.s32.f32 %v3531
    %v3788 = vcvt.s32.f32 %v3532
    %v3789 = vcvt.s32.f32 %v3533
    %v3790 = vcvt.s32.f32 %v3534
    %v3791 = vcvt.s32.f32 %v3535
    %v3792 = vcvt.s32.f32 %v3536
    %v3793 = vcvt.s32.f32 %v3537
    %v3794 = vcvt.s32.f32 %v3538
    %v3795 = vcvt.s32.f32 %v3539
    %v3796 = vcvt.s32.f32 %v3540
    %v3797 = vcvt.s32.f32 %v3541
    %v3798 = vcvt.s32.f32 %v3542
    %v3799 = vcvt.s32.f32 %v3543
    %v3800 = vcvt.s32.f32 %v3544
    %v3801 = vcvt.s32.f32 %v3545
    %v3802 = vcvt.s32.f32 %v3546
    %v3803 = vcvt.s32.f32 %v3547
    %v3804 = vcvt.s32.f32 %v3548
    %v3805 = vcvt.s32.f32 %v3549
    %v3806 = vcvt.s32.f32 %v3550
    %v3807 = vcvt.s32.f32 %v3551
    %v3808 = vcvt.s32.f32 %v3552
    %v3809 = vcvt.s32.f32 %v3553
    %v3810 = vcvt.s32.f32 %v3554
    %v3811 = vpack.c.bf16 %v3559, %v3555
    %v3812 = vpack.c.bf16 %v3560, %v3556
    %v3813 = vpack.c.bf16 %v3561, %v3557
    %v3814 = vpack.c.bf16 %v3562, %v3558
    %v3815 = vpack.c.bf16 %v3567, %v3563
    %v3816 = vpack.c.bf16 %v3568, %v3564
    %v3817 = vpack.c.bf16 %v3569, %v3565
    %v3818 = vpack.c.bf16 %v3570, %v3566
    %v3819 = vpack.c.bf16 %v3575, %v3571
    %v3820 = vpack.c.bf16 %v3576, %v3572
    %v3821 = vpack.c.bf16 %v3577, %v3573
    %v3822 = vpack.c.bf16 %v3578, %v3574
    %v3823 = vpack.c.bf16 %v3583, %v3579
    %v3824 = vpack.c.bf16 %v3584, %v3580
    %v3825 = vpack.c.bf16 %v3585, %v3581
    %v3826 = vpack.c.bf16 %v3586, %v3582
    %v3827 = vpack.c.bf16 %v3591, %v3587
    %v3828 = vpack.c.bf16 %v3592, %v3588
    %v3829 = vpack.c.bf16 %v3593, %v3589
    %v3830 = vpack.c.bf16 %v3594, %v3590
    %v3831 = vpack.c.bf16 %v3599, %v3595
    %v3832 = vpack.c.bf16 %v3600, %v3596
    %v3833 = vpack.c.bf16 %v3601, %v3597
    %v3834 = vpack.c.bf16 %v3602, %v3598
    %v3835 = vpack.c.bf16 %v3607, %v3603
    %v3836 = vpack.c.bf16 %v3608, %v3604
    %v3837 = vpack.c.bf16 %v3609, %v3605
    %v3838 = vpack.c.bf16 %v3610, %v3606
    %v3839 = vpack.c.bf16 %v3615, %v3611
    %v3840 = vpack.c.bf16 %v3616, %v3612
    %v3841 = vpack.c.bf16 %v3617, %v3613
    %v3842 = vpack.c.bf16 %v3618, %v3614
    %v3843 = vpack.c.bf16 %v3623, %v3619
    %v3844 = vpack.c.bf16 %v3624, %v3620
    %v3845 = vpack.c.bf16 %v3625, %v3621
    %v3846 = vpack.c.bf16 %v3626, %v3622
    %v3847 = vpack.c.bf16 %v3631, %v3627
    %v3848 = vpack.c.bf16 %v3632, %v3628
    %v3849 = vpack.c.bf16 %v3633, %v3629
    %v3850 = vpack.c.bf16 %v3634, %v3630
    %v3851 = vpack.c.bf16 %v3639, %v3635
    %v3852 = vpack.c.bf16 %v3640, %v3636
    %v3853 = vpack.c.bf16 %v3641, %v3637
    %v3854 = vpack.c.bf16 %v3642, %v3638
    %v3855 = vpack.c.bf16 %v3647, %v3643
    %v3856 = vpack.c.bf16 %v3648, %v3644
    %v3857 = vpack.c.bf16 %v3649, %v3645
    %v3858 = vpack.c.bf16 %v3650, %v3646
    %v3859 = vpack.c.bf16 %v3655, %v3651
    %v3860 = vpack.c.bf16 %v3656, %v3652
    %v3861 = vpack.c.bf16 %v3657, %v3653
    %v3862 = vpack.c.bf16 %v3658, %v3654
    %v3863 = vpack.c.bf16 %v3663, %v3659
    %v3864 = vpack.c.bf16 %v3664, %v3660
    %v3865 = vpack.c.bf16 %v3665, %v3661
    %v3866 = vpack.c.bf16 %v3666, %v3662
    %v3867 = vpack.c.bf16 %v3671, %v3667
    %v3868 = vpack.c.bf16 %v3672, %v3668
    %v3869 = vpack.c.bf16 %v3673, %v3669
    %v3870 = vpack.c.bf16 %v3674, %v3670
    %v3871 = vpack.c.bf16 %v3679, %v3675
    %v3872 = vpack.c.bf16 %v3680, %v3676
    %v3873 = vpack.c.bf16 %v3681, %v3677
    %v3874 = vpack.c.bf16 %v3682, %v3678
    %v3875 = vpack.c.bf16 %v3687, %v3683
    %v3876 = vpack.c.bf16 %v3688, %v3684
    %v3877 = vpack.c.bf16 %v3689, %v3685
    %v3878 = vpack.c.bf16 %v3690, %v3686
    %v3879 = vpack.c.bf16 %v3695, %v3691
    %v3880 = vpack.c.bf16 %v3696, %v3692
    %v3881 = vpack.c.bf16 %v3697, %v3693
    %v3882 = vpack.c.bf16 %v3698, %v3694
    %v3883 = vpack.c.bf16 %v3703, %v3699
    %v3884 = vpack.c.bf16 %v3704, %v3700
    %v3885 = vpack.c.bf16 %v3705, %v3701
    %v3886 = vpack.c.bf16 %v3706, %v3702
    %v3887 = vpack.c.bf16 %v3711, %v3707
    %v3888 = vpack.c.bf16 %v3712, %v3708
    %v3889 = vpack.c.bf16 %v3713, %v3709
    %v3890 = vpack.c.bf16 %v3714, %v3710
    %v3891 = vpack.c.bf16 %v3719, %v3715
    %v3892 = vpack.c.bf16 %v3720, %v3716
    %v3893 = vpack.c.bf16 %v3721, %v3717
    %v3894 = vpack.c.bf16 %v3722, %v3718
    %v3895 = vpack.c.bf16 %v3727, %v3723
    %v3896 = vpack.c.bf16 %v3728, %v3724
    %v3897 = vpack.c.bf16 %v3729, %v3725
    %v3898 = vpack.c.bf16 %v3730, %v3726
    %v3899 = vpack.c.bf16 %v3735, %v3731
    %v3900 = vpack.c.bf16 %v3736, %v3732
    %v3901 = vpack.c.bf16 %v3737, %v3733
    %v3902 = vpack.c.bf16 %v3738, %v3734
    %v3903 = vpack.c.bf16 %v3743, %v3739
    %v3904 = vpack.c.bf16 %v3744, %v3740
    %v3905 = vpack.c.bf16 %v3745, %v3741
    %v3906 = vpack.c.bf16 %v3746, %v3742
    %v3907 = vpack.c.bf16 %v3751, %v3747
    %v3908 = vpack.c.bf16 %v3752, %v3748
    %v3909 = vpack.c.bf16 %v3753, %v3749
    %v3910 = vpack.c.bf16 %v3754, %v3750
    %v3911 = vpack.c.bf16 %v3759, %v3755
    %v3912 = vpack.c.bf16 %v3760, %v3756
    %v3913 = vpack.c.bf16 %v3761, %v3757
    %v3914 = vpack.c.bf16 %v3762, %v3758
    %v3915 = vpack.c.bf16 %v3767, %v3763
    %v3916 = vpack.c.bf16 %v3768, %v3764
    %v3917 = vpack.c.bf16 %v3769, %v3765
    %v3918 = vpack.c.bf16 %v3770, %v3766
    %v3919 = vpack.c.bf16 %v3775, %v3771
    %v3920 = vpack.c.bf16 %v3776, %v3772
    %v3921 = vpack.c.bf16 %v3777, %v3773
    %v3922 = vpack.c.bf16 %v3778, %v3774
    %v3923 = vpack.c.bf16 %v3783, %v3779
    %v3924 = vpack.c.bf16 %v3784, %v3780
    %v3925 = vpack.c.bf16 %v3785, %v3781
    %v3926 = vpack.c.bf16 %v3786, %v3782
    %v3927 = vpack.c.bf16 %v3791, %v3787
    %v3928 = vpack.c.bf16 %v3792, %v3788
    %v3929 = vpack.c.bf16 %v3793, %v3789
    %v3930 = vpack.c.bf16 %v3794, %v3790
    %v3931 = vpack.c.bf16 %v3799, %v3795
    %v3932 = vpack.c.bf16 %v3800, %v3796
    %v3933 = vpack.c.bf16 %v3801, %v3797
    %v3934 = vpack.c.bf16 %v3802, %v3798
    %v3935 = vpack.c.bf16 %v3807, %v3803
    %v3936 = vpack.c.bf16 %v3808, %v3804
    %v3937 = vpack.c.bf16 %v3809, %v3805
    %v3938 = vpack.c.bf16 %v3810, %v3806
    %v3939 = vpack.c.bf16 %v3230, %v3226
    %v3940 = vpack.c.bf16 %v3231, %v3227
    %v3941 = vpack.c.bf16 %v3232, %v3228
    %v3942 = vpack.c.bf16 %v3233, %v3229
    %3943 = vmatpush.bf16.msra.mxu0 %v3839
    %3944 = vmatpush.bf16.msra.mxu0 %v3835
    %3945 = vmatpush.bf16.msra.mxu0 %v3831
    %3946 = vmatpush.bf16.msra.mxu0 %v3827
    %3947 = vmatpush.bf16.msra.mxu0 %v3823
    %3948 = vmatpush.bf16.msra.mxu0 %v3819
    %3949 = vmatpush.bf16.msra.mxu0 %v3815
    %3950 = vmatpush.bf16.msra.mxu0 %v3811
    %3951 = vmatmul.bf16.gmra.mxu0 %v3939
    %v3952 = vpop.f32.mrf.mxu0
    %v3953 = vadd.f32 0.0, %v3952
    %v3954 = vpop.f32.mrf.mxu0
    %v3955 = vadd.f32 0.0, %v3954
    %3956 = vdwg.mxu0
    %3957 = vmatpush.bf16.msra.mxu0 %v3871
    %3958 = vmatpush.bf16.msra.mxu0 %v3867
    %3959 = vmatpush.bf16.msra.mxu0 %v3863
    %3960 = vmatpush.bf16.msra.mxu0 %v3859
    %3961 = vmatpush.bf16.msra.mxu0 %v3855
    %3962 = vmatpush.bf16.msra.mxu0 %v3851
    %3963 = vmatpush.bf16.msra.mxu0 %v3847
    %3964 = vmatpush.bf16.msra.mxu0 %v3843
    %3965 = vmatmul.bf16.gmra.mxu0 %v3940
    %v3966 = vpop.f32.mrf.mxu0
    %v3967 = vadd.f32 %v3953, %v3966
    %v3968 = vpop.f32.mrf.mxu0
    %v3969 = vadd.f32 %v3955, %v3968
    %3970 = vdwg.mxu0
    %3971 = vmatpush.bf16.msra.mxu0 %v3903
    %3972 = vmatpush.bf16.msra.mxu0 %v3899
    %3973 = vmatpush.bf16.msra.mxu0 %v3895
    %3974 = vmatpush.bf16.msra.mxu0 %v3891
    %3975 = vmatpush.bf16.msra.mxu0 %v3887
    %3976 = vmatpush.bf16.msra.mxu0 %v3883
    %3977 = vmatpush.bf16.msra.mxu0 %v3879
    %3978 = vmatpush.bf16.msra.mxu0 %v3875
    %3979 = vmatmul.bf16.gmra.mxu0 %v3941
    %v3980 = vpop.f32.mrf.mxu0
    %v3981 = vadd.f32 %v3967, %v3980
    %v3982 = vpop.f32.mrf.mxu0
    %v3983 = vadd.f32 %v3969, %v3982
    %3984 = vdwg.mxu0
    %3985 = vmatpush.bf16.msra.mxu0 %v3935
    %3986 = vmatpush.bf16.msra.mxu0 %v3931
    %3987 = vmatpush.bf16.msra.mxu0 %v3927
    %3988 = vmatpush.bf16.msra.mxu0 %v3923
    %3989 = vmatpush.bf16.msra.mxu0 %v3919
    %3990 = vmatpush.bf16.msra.mxu0 %v3915
    %3991 = vmatpush.bf16.msra.mxu0 %v3911
    %3992 = vmatpush.bf16.msra.mxu0 %v3907
    %3993 = vmatmul.bf16.gmra.mxu0 %v3942
    %v3994 = vpop.f32.mrf.mxu0
    %v3995 = vadd.f32 %v3981, %v3994
    %v3996 = vpop.f32.mrf.mxu0
    %v3997 = vadd.f32 %v3983, %v3996
    %3998 = vdwg.mxu0
    %3999 = vmatpush.bf16.msra.mxu0 %v3840
    %4000 = vmatpush.bf16.msra.mxu0 %v3836
    %4001 = vmatpush.bf16.msra.mxu0 %v3832
    %4002 = vmatpush.bf16.msra.mxu0 %v3828
    %4003 = vmatpush.bf16.msra.mxu0 %v3824
    %4004 = vmatpush.bf16.msra.mxu0 %v3820
    %4005 = vmatpush.bf16.msra.mxu0 %v3816
    %4006 = vmatpush.bf16.msra.mxu0 %v3812
    %4007 = vmatmul.bf16.gmra.mxu0 %v3939
    %v4008 = vpop.f32.mrf.mxu0
    %v4009 = vadd.f32 0.0, %v4008
    %v4010 = vpop.f32.mrf.mxu0
    %v4011 = vadd.f32 0.0, %v4010
    %4012 = vdwg.mxu0
    %4013 = vmatpush.bf16.msra.mxu0 %v3872
    %4014 = vmatpush.bf16.msra.mxu0 %v3868
    %4015 = vmatpush.bf16.msra.mxu0 %v3864
    %4016 = vmatpush.bf16.msra.mxu0 %v3860
    %4017 = vmatpush.bf16.msra.mxu0 %v3856
    %4018 = vmatpush.bf16.msra.mxu0 %v3852
    %4019 = vmatpush.bf16.msra.mxu0 %v3848
    %4020 = vmatpush.bf16.msra.mxu0 %v3844
    %4021 = vmatmul.bf16.gmra.mxu0 %v3940
    %v4022 = vpop.f32.mrf.mxu0
    %v4023 = vadd.f32 %v4009, %v4022
    %v4024 = vpop.f32.mrf.mxu0
    %v4025 = vadd.f32 %v4011, %v4024
    %4026 = vdwg.mxu0
    %4027 = vmatpush.bf16.msra.mxu0 %v3904
    %4028 = vmatpush.bf16.msra.mxu0 %v3900
    %4029 = vmatpush.bf16.msra.mxu0 %v3896
    %4030 = vmatpush.bf16.msra.mxu0 %v3892
    %4031 = vmatpush.bf16.msra.mxu0 %v3888
    %4032 = vmatpush.bf16.msra.mxu0 %v3884
    %4033 = vmatpush.bf16.msra.mxu0 %v3880
    %4034 = vmatpush.bf16.msra.mxu0 %v3876
    %4035 = vmatmul.bf16.gmra.mxu0 %v3941
    %v4036 = vpop.f32.mrf.mxu0
    %v4037 = vadd.f32 %v4023, %v4036
    %v4038 = vpop.f32.mrf.mxu0
    %v4039 = vadd.f32 %v4025, %v4038
    %4040 = vdwg.mxu0
    %4041 = vmatpush.bf16.msra.mxu0 %v3936
    %4042 = vmatpush.bf16.msra.mxu0 %v3932
    %4043 = vmatpush.bf16.msra.mxu0 %v3928
    %4044 = vmatpush.bf16.msra.mxu0 %v3924
    %4045 = vmatpush.bf16.msra.mxu0 %v3920
    %4046 = vmatpush.bf16.msra.mxu0 %v3916
    %4047 = vmatpush.bf16.msra.mxu0 %v3912
    %4048 = vmatpush.bf16.msra.mxu0 %v3908
    %4049 = vmatmul.bf16.gmra.mxu0 %v3942
    %v4050 = vpop.f32.mrf.mxu0
    %v4051 = vadd.f32 %v4037, %v4050
    %v4052 = vpop.f32.mrf.mxu0
    %v4053 = vadd.f32 %v4039, %v4052
    %4054 = vdwg.mxu0
    %4055 = vmatpush.bf16.msra.mxu0 %v3841
    %4056 = vmatpush.bf16.msra.mxu0 %v3837
    %4057 = vmatpush.bf16.msra.mxu0 %v3833
    %4058 = vmatpush.bf16.msra.mxu0 %v3829
    %4059 = vmatpush.bf16.msra.mxu0 %v3825
    %4060 = vmatpush.bf16.msra.mxu0 %v3821
    %4061 = vmatpush.bf16.msra.mxu0 %v3817
    %4062 = vmatpush.bf16.msra.mxu0 %v3813
    %4063 = vmatmul.bf16.gmra.mxu0 %v3939
    %v4064 = vpop.f32.mrf.mxu0
    %v4065 = vadd.f32 0.0, %v4064
    %v4066 = vpop.f32.mrf.mxu0
    %v4067 = vadd.f32 0.0, %v4066
    %4068 = vdwg.mxu0
    %4069 = vmatpush.bf16.msra.mxu0 %v3873
    %4070 = vmatpush.bf16.msra.mxu0 %v3869
    %4071 = vmatpush.bf16.msra.mxu0 %v3865
    %4072 = vmatpush.bf16.msra.mxu0 %v3861
    %4073 = vmatpush.bf16.msra.mxu0 %v3857
    %4074 = vmatpush.bf16.msra.mxu0 %v3853
    %4075 = vmatpush.bf16.msra.mxu0 %v3849
    %4076 = vmatpush.bf16.msra.mxu0 %v3845
    %4077 = vmatmul.bf16.gmra.mxu0 %v3940
    %v4078 = vpop.f32.mrf.mxu0
    %v4079 = vadd.f32 %v4065, %v4078
    %v4080 = vpop.f32.mrf.mxu0
    %v4081 = vadd.f32 %v4067, %v4080
    %4082 = vdwg.mxu0
    %4083 = vmatpush.bf16.msra.mxu0 %v3905
    %4084 = vmatpush.bf16.msra.mxu0 %v3901
    %4085 = vmatpush.bf16.msra.mxu0 %v3897
    %4086 = vmatpush.bf16.msra.mxu0 %v3893
    %4087 = vmatpush.bf16.msra.mxu0 %v3889
    %4088 = vmatpush.bf16.msra.mxu0 %v3885
    %4089 = vmatpush.bf16.msra.mxu0 %v3881
    %4090 = vmatpush.bf16.msra.mxu0 %v3877
    %4091 = vmatmul.bf16.gmra.mxu0 %v3941
    %v4092 = vpop.f32.mrf.mxu0
    %v4093 = vadd.f32 %v4079, %v4092
    %v4094 = vpop.f32.mrf.mxu0
    %v4095 = vadd.f32 %v4081, %v4094
    %4096 = vdwg.mxu0
    %4097 = vmatpush.bf16.msra.mxu0 %v3937
    %4098 = vmatpush.bf16.msra.mxu0 %v3933
    %4099 = vmatpush.bf16.msra.mxu0 %v3929
    %4100 = vmatpush.bf16.msra.mxu0 %v3925
    %4101 = vmatpush.bf16.msra.mxu0 %v3921
    %4102 = vmatpush.bf16.msra.mxu0 %v3917
    %4103 = vmatpush.bf16.msra.mxu0 %v3913
    %4104 = vmatpush.bf16.msra.mxu0 %v3909
    %4105 = vmatmul.bf16.gmra.mxu0 %v3942
    %v4106 = vpop.f32.mrf.mxu0
    %v4107 = vadd.f32 %v4093, %v4106
    %v4108 = vpop.f32.mrf.mxu0
    %v4109 = vadd.f32 %v4095, %v4108
    %4110 = vdwg.mxu0
    %4111 = vmatpush.bf16.msra.mxu0 %v3842
    %4112 = vmatpush.bf16.msra.mxu0 %v3838
    %4113 = vmatpush.bf16.msra.mxu0 %v3834
    %4114 = vmatpush.bf16.msra.mxu0 %v3830
    %4115 = vmatpush.bf16.msra.mxu0 %v3826
    %4116 = vmatpush.bf16.msra.mxu0 %v3822
    %4117 = vmatpush.bf16.msra.mxu0 %v3818
    %4118 = vmatpush.bf16.msra.mxu0 %v3814
    %4119 = vmatmul.bf16.gmra.mxu0 %v3939
    %v4120 = vpop.f32.mrf.mxu0
    %v4121 = vadd.f32 0.0, %v4120
    %v4122 = vpop.f32.mrf.mxu0
    %v4123 = vadd.f32 0.0, %v4122
    %4124 = vdwg.mxu0
    %4125 = vmatpush.bf16.msra.mxu0 %v3874
    %4126 = vmatpush.bf16.msra.mxu0 %v3870
    %4127 = vmatpush.bf16.msra.mxu0 %v3866
    %4128 = vmatpush.bf16.msra.mxu0 %v3862
    %4129 = vmatpush.bf16.msra.mxu0 %v3858
    %4130 = vmatpush.bf16.msra.mxu0 %v3854
    %4131 = vmatpush.bf16.msra.mxu0 %v3850
    %4132 = vmatpush.bf16.msra.mxu0 %v3846
    %4133 = vmatmul.bf16.gmra.mxu0 %v3940
    %v4134 = vpop.f32.mrf.mxu0
    %v4135 = vadd.f32 %v4121, %v4134
    %v4136 = vpop.f32.mrf.mxu0
    %v4137 = vadd.f32 %v4123, %v4136
    %4138 = vdwg.mxu0
    %4139 = vmatpush.bf16.msra.mxu0 %v3906
    %4140 = vmatpush.bf16.msra.mxu0 %v3902
    %4141 = vmatpush.bf16.msra.mxu0 %v3898
    %4142 = vmatpush.bf16.msra.mxu0 %v3894
    %4143 = vmatpush.bf16.msra.mxu0 %v3890
    %4144 = vmatpush.bf16.msra.mxu0 %v3886
    %4145 = vmatpush.bf16.msra.mxu0 %v3882
    %4146 = vmatpush.bf16.msra.mxu0 %v3878
    %4147 = vmatmul.bf16.gmra.mxu0 %v3941
    %v4148 = vpop.f32.mrf.mxu0
    %v4149 = vadd.f32 %v4135, %v4148
    %v4150 = vpop.f32.mrf.mxu0
    %v4151 = vadd.f32 %v4137, %v4150
    %4152 = vdwg.mxu0
    %4153 = vmatpush.bf16.msra.mxu0 %v3938
    %4154 = vmatpush.bf16.msra.mxu0 %v3934
    %4155 = vmatpush.bf16.msra.mxu0 %v3930
    %4156 = vmatpush.bf16.msra.mxu0 %v3926
    %4157 = vmatpush.bf16.msra.mxu0 %v3922
    %4158 = vmatpush.bf16.msra.mxu0 %v3918
    %4159 = vmatpush.bf16.msra.mxu0 %v3914
    %4160 = vmatpush.bf16.msra.mxu0 %v3910
    %4161 = vmatmul.bf16.gmra.mxu0 %v3942
    %v4162 = vpop.f32.mrf.mxu0
    %v4163 = vadd.f32 %v4149, %v4162
    %v4164 = vpop.f32.mrf.mxu0
    %v4165 = vadd.f32 %v4151, %v4164
    %4166 = vdwg.mxu0
    %s4167 = scalar_lea.vmem [#allocation10], 12
    %v4168 = vld [vmem:[%s4167] sm:$0xf]
    %v4170 = vperm.slane %v4168, 0
    %v4171 = vperm.slane %v4168, 1
    %v4172 = vperm.slane %v4168, 2
    %v4173 = vperm.slane %v4168, 3
    %v4178 = vmul.f32 %v3995, %v4170
    %v4179 = vmul.f32 %v4051, %v4171
    %v4180 = vmul.f32 %v4107, %v4172
    %v4181 = vmul.f32 %v4163, %v4173
    %v4182 = vmul.f32 %v3997, %v4170
    %v4183 = vmul.f32 %v4053, %v4171
    %v4184 = vmul.f32 %v4109, %v4172
    %v4185 = vmul.f32 %v4165, %v4173
    %s4186 = scalar_lea.vmem [#allocation11], 12
    %v4187 = vld [vmem:[%s4186] sm:$0xf]
    %v4189 = vperm.slane %v4187, 0
    %v4190 = vperm.slane %v4187, 1
    %v4191 = vperm.slane %v4187, 2
    %v4192 = vperm.slane %v4187, 3
    %v4197 = vadd.f32 %v4178, %v4189
    %v4198 = vadd.f32 %v4179, %v4190
    %v4199 = vadd.f32 %v4180, %v4191
    %v4200 = vadd.f32 %v4181, %v4192
    %v4201 = vadd.f32 %v4182, %v4189
    %v4202 = vadd.f32 %v4183, %v4190
    %v4203 = vadd.f32 %v4184, %v4191
    %v4204 = vadd.f32 %v4185, %v4192
    %v4205 = vmax.f32 %v4197, 0.0
    %v4206 = vmax.f32 %v4198, 0.0
    %v4207 = vmax.f32 %v4199, 0.0
    %v4208 = vmax.f32 %v4200, 0.0
    %v4209 = vmax.f32 %v4201, 0.0
    %v4210 = vmax.f32 %v4202, 0.0
    %v4211 = vmax.f32 %v4203, 0.0
    %v4212 = vmax.f32 %v4204, 0.0
    %s4213 = scalar_lea.vmem [#allocation8], 2048
    %v4214 = vld [vmem:[%s4213] sm:$0xff]
    %v4215 = vld [vmem:[%s4213 + $0x8] sm:$0xff]
    %v4216 = vld [vmem:[%s4213 + $0x10] sm:$0xff]
    %v4217 = vld [vmem:[%s4213 + $0x18] sm:$0xff]
    %v4218 = vld [vmem:[%s4213 + $0x20] sm:$0xff]
    %v4219 = vld [vmem:[%s4213 + $0x28] sm:$0xff]
    %v4220 = vld [vmem:[%s4213 + $0x30] sm:$0xff]
    %v4221 = vld [vmem:[%s4213 + $0x38] sm:$0xff]
    %v4222 = vld [vmem:[%s4213 + $0x40] sm:$0xff]
    %v4223 = vld [vmem:[%s4213 + $0x48] sm:$0xff]
    %v4224 = vld [vmem:[%s4213 + $0x50] sm:$0xff]
    %v4225 = vld [vmem:[%s4213 + $0x58] sm:$0xff]
    %v4226 = vld [vmem:[%s4213 + $0x60] sm:$0xff]
    %v4227 = vld [vmem:[%s4213 + $0x68] sm:$0xff]
    %v4228 = vld [vmem:[%s4213 + $0x70] sm:$0xff]
    %v4229 = vld [vmem:[%s4213 + $0x78] sm:$0xff]
    %v4230 = vld [vmem:[%s4213 + $0x80] sm:$0xff]
    %v4231 = vld [vmem:[%s4213 + $0x88] sm:$0xff]
    %v4232 = vld [vmem:[%s4213 + $0x90] sm:$0xff]
    %v4233 = vld [vmem:[%s4213 + $0x98] sm:$0xff]
    %v4234 = vld [vmem:[%s4213 + $0xa0] sm:$0xff]
    %v4235 = vld [vmem:[%s4213 + $0xa8] sm:$0xff]
    %v4236 = vld [vmem:[%s4213 + $0xb0] sm:$0xff]
    %v4237 = vld [vmem:[%s4213 + $0xb8] sm:$0xff]
    %v4238 = vld [vmem:[%s4213 + $0xc0] sm:$0xff]
    %v4239 = vld [vmem:[%s4213 + $0xc8] sm:$0xff]
    %v4240 = vld [vmem:[%s4213 + $0xd0] sm:$0xff]
    %v4241 = vld [vmem:[%s4213 + $0xd8] sm:$0xff]
    %v4242 = vld [vmem:[%s4213 + $0xe0] sm:$0xff]
    %v4243 = vld [vmem:[%s4213 + $0xe8] sm:$0xff]
    %v4244 = vld [vmem:[%s4213 + $0xf0] sm:$0xff]
    %v4245 = vld [vmem:[%s4213 + $0xf8] sm:$0xff]
    %v4246 = vld [vmem:[%s4213 + $0x100] sm:$0xff]
    %v4247 = vld [vmem:[%s4213 + $0x108] sm:$0xff]
    %v4248 = vld [vmem:[%s4213 + $0x110] sm:$0xff]
    %v4249 = vld [vmem:[%s4213 + $0x118] sm:$0xff]
    %v4250 = vld [vmem:[%s4213 + $0x120] sm:$0xff]
    %v4251 = vld [vmem:[%s4213 + $0x128] sm:$0xff]
    %v4252 = vld [vmem:[%s4213 + $0x130] sm:$0xff]
    %v4253 = vld [vmem:[%s4213 + $0x138] sm:$0xff]
    %v4254 = vld [vmem:[%s4213 + $0x140] sm:$0xff]
    %v4255 = vld [vmem:[%s4213 + $0x148] sm:$0xff]
    %v4256 = vld [vmem:[%s4213 + $0x150] sm:$0xff]
    %v4257 = vld [vmem:[%s4213 + $0x158] sm:$0xff]
    %v4258 = vld [vmem:[%s4213 + $0x160] sm:$0xff]
    %v4259 = vld [vmem:[%s4213 + $0x168] sm:$0xff]
    %v4260 = vld [vmem:[%s4213 + $0x170] sm:$0xff]
    %v4261 = vld [vmem:[%s4213 + $0x178] sm:$0xff]
    %v4262 = vld [vmem:[%s4213 + $0x180] sm:$0xff]
    %v4263 = vld [vmem:[%s4213 + $0x188] sm:$0xff]
    %v4264 = vld [vmem:[%s4213 + $0x190] sm:$0xff]
    %v4265 = vld [vmem:[%s4213 + $0x198] sm:$0xff]
    %v4266 = vld [vmem:[%s4213 + $0x1a0] sm:$0xff]
    %v4267 = vld [vmem:[%s4213 + $0x1a8] sm:$0xff]
    %v4268 = vld [vmem:[%s4213 + $0x1b0] sm:$0xff]
    %v4269 = vld [vmem:[%s4213 + $0x1b8] sm:$0xff]
    %v4270 = vld [vmem:[%s4213 + $0x1c0] sm:$0xff]
    %v4271 = vld [vmem:[%s4213 + $0x1c8] sm:$0xff]
    %v4272 = vld [vmem:[%s4213 + $0x1d0] sm:$0xff]
    %v4273 = vld [vmem:[%s4213 + $0x1d8] sm:$0xff]
    %v4274 = vld [vmem:[%s4213 + $0x1e0] sm:$0xff]
    %v4275 = vld [vmem:[%s4213 + $0x1e8] sm:$0xff]
    %v4276 = vld [vmem:[%s4213 + $0x1f0] sm:$0xff]
    %v4277 = vld [vmem:[%s4213 + $0x1f8] sm:$0xff]
    %v4278 = vunpack.c.0.s8 %v4214
    %v4279 = vunpack.c.0.s8 %v4215
    %v4280 = vunpack.c.0.s8 %v4216
    %v4281 = vunpack.c.0.s8 %v4217
    %v4282 = vunpack.c.1.s8 %v4214
    %v4283 = vunpack.c.1.s8 %v4215
    %v4284 = vunpack.c.1.s8 %v4216
    %v4285 = vunpack.c.1.s8 %v4217
    %v4286 = vunpack.c.2.s8 %v4214
    %v4287 = vunpack.c.2.s8 %v4215
    %v4288 = vunpack.c.2.s8 %v4216
    %v4289 = vunpack.c.2.s8 %v4217
    %v4290 = vunpack.c.3.s8 %v4214
    %v4291 = vunpack.c.3.s8 %v4215
    %v4292 = vunpack.c.3.s8 %v4216
    %v4293 = vunpack.c.3.s8 %v4217
    %v4294 = vunpack.c.0.s8 %v4218
    %v4295 = vunpack.c.0.s8 %v4219
    %v4296 = vunpack.c.0.s8 %v4220
    %v4297 = vunpack.c.0.s8 %v4221
    %v4298 = vunpack.c.1.s8 %v4218
    %v4299 = vunpack.c.1.s8 %v4219
    %v4300 = vunpack.c.1.s8 %v4220
    %v4301 = vunpack.c.1.s8 %v4221
    %v4302 = vunpack.c.2.s8 %v4218
    %v4303 = vunpack.c.2.s8 %v4219
    %v4304 = vunpack.c.2.s8 %v4220
    %v4305 = vunpack.c.2.s8 %v4221
    %v4306 = vunpack.c.3.s8 %v4218
    %v4307 = vunpack.c.3.s8 %v4219
    %v4308 = vunpack.c.3.s8 %v4220
    %v4309 = vunpack.c.3.s8 %v4221
    %v4310 = vunpack.c.0.s8 %v4222
    %v4311 = vunpack.c.0.s8 %v4223
    %v4312 = vunpack.c.0.s8 %v4224
    %v4313 = vunpack.c.0.s8 %v4225
    %v4314 = vunpack.c.1.s8 %v4222
    %v4315 = vunpack.c.1.s8 %v4223
    %v4316 = vunpack.c.1.s8 %v4224
    %v4317 = vunpack.c.1.s8 %v4225
    %v4318 = vunpack.c.2.s8 %v4222
    %v4319 = vunpack.c.2.s8 %v4223
    %v4320 = vunpack.c.2.s8 %v4224
    %v4321 = vunpack.c.2.s8 %v4225
    %v4322 = vunpack.c.3.s8 %v4222
    %v4323 = vunpack.c.3.s8 %v4223
    %v4324 = vunpack.c.3.s8 %v4224
    %v4325 = vunpack.c.3.s8 %v4225
    %v4326 = vunpack.c.0.s8 %v4226
    %v4327 = vunpack.c.0.s8 %v4227
    %v4328 = vunpack.c.0.s8 %v4228
    %v4329 = vunpack.c.0.s8 %v4229
    %v4330 = vunpack.c.1.s8 %v4226
    %v4331 = vunpack.c.1.s8 %v4227
    %v4332 = vunpack.c.1.s8 %v4228
    %v4333 = vunpack.c.1.s8 %v4229
    %v4334 = vunpack.c.2.s8 %v4226
    %v4335 = vunpack.c.2.s8 %v4227
    %v4336 = vunpack.c.2.s8 %v4228
    %v4337 = vunpack.c.2.s8 %v4229
    %v4338 = vunpack.c.3.s8 %v4226
    %v4339 = vunpack.c.3.s8 %v4227
    %v4340 = vunpack.c.3.s8 %v4228
    %v4341 = vunpack.c.3.s8 %v4229
    %v4342 = vunpack.c.0.s8 %v4230
    %v4343 = vunpack.c.0.s8 %v4231
    %v4344 = vunpack.c.0.s8 %v4232
    %v4345 = vunpack.c.0.s8 %v4233
    %v4346 = vunpack.c.1.s8 %v4230
    %v4347 = vunpack.c.1.s8 %v4231
    %v4348 = vunpack.c.1.s8 %v4232
    %v4349 = vunpack.c.1.s8 %v4233
    %v4350 = vunpack.c.2.s8 %v4230
    %v4351 = vunpack.c.2.s8 %v4231
    %v4352 = vunpack.c.2.s8 %v4232
    %v4353 = vunpack.c.2.s8 %v4233
    %v4354 = vunpack.c.3.s8 %v4230
    %v4355 = vunpack.c.3.s8 %v4231
    %v4356 = vunpack.c.3.s8 %v4232
    %v4357 = vunpack.c.3.s8 %v4233
    %v4358 = vunpack.c.0.s8 %v4234
    %v4359 = vunpack.c.0.s8 %v4235
    %v4360 = vunpack.c.0.s8 %v4236
    %v4361 = vunpack.c.0.s8 %v4237
    %v4362 = vunpack.c.1.s8 %v4234
    %v4363 = vunpack.c.1.s8 %v4235
    %v4364 = vunpack.c.1.s8 %v4236
    %v4365 = vunpack.c.1.s8 %v4237
    %v4366 = vunpack.c.2.s8 %v4234
    %v4367 = vunpack.c.2.s8 %v4235
    %v4368 = vunpack.c.2.s8 %v4236
    %v4369 = vunpack.c.2.s8 %v4237
    %v4370 = vunpack.c.3.s8 %v4234
    %v4371 = vunpack.c.3.s8 %v4235
    %v4372 = vunpack.c.3.s8 %v4236
    %v4373 = vunpack.c.3.s8 %v4237
    %v4374 = vunpack.c.0.s8 %v4238
    %v4375 = vunpack.c.0.s8 %v4239
    %v4376 = vunpack.c.0.s8 %v4240
    %v4377 = vunpack.c.0.s8 %v4241
    %v4378 = vunpack.c.1.s8 %v4238
    %v4379 = vunpack.c.1.s8 %v4239
    %v4380 = vunpack.c.1.s8 %v4240
    %v4381 = vunpack.c.1.s8 %v4241
    %v4382 = vunpack.c.2.s8 %v4238
    %v4383 = vunpack.c.2.s8 %v4239
    %v4384 = vunpack.c.2.s8 %v4240
    %v4385 = vunpack.c.2.s8 %v4241
    %v4386 = vunpack.c.3.s8 %v4238
    %v4387 = vunpack.c.3.s8 %v4239
    %v4388 = vunpack.c.3.s8 %v4240
    %v4389 = vunpack.c.3.s8 %v4241
    %v4390 = vunpack.c.0.s8 %v4242
    %v4391 = vunpack.c.0.s8 %v4243
    %v4392 = vunpack.c.0.s8 %v4244
    %v4393 = vunpack.c.0.s8 %v4245
    %v4394 = vunpack.c.1.s8 %v4242
    %v4395 = vunpack.c.1.s8 %v4243
    %v4396 = vunpack.c.1.s8 %v4244
    %v4397 = vunpack.c.1.s8 %v4245
    %v4398 = vunpack.c.2.s8 %v4242
    %v4399 = vunpack.c.2.s8 %v4243
    %v4400 = vunpack.c.2.s8 %v4244
    %v4401 = vunpack.c.2.s8 %v4245
    %v4402 = vunpack.c.3.s8 %v4242
    %v4403 = vunpack.c.3.s8 %v4243
    %v4404 = vunpack.c.3.s8 %v4244
    %v4405 = vunpack.c.3.s8 %v4245
    %v4406 = vunpack.c.0.s8 %v4246
    %v4407 = vunpack.c.0.s8 %v4247
    %v4408 = vunpack.c.0.s8 %v4248
    %v4409 = vunpack.c.0.s8 %v4249
    %v4410 = vunpack.c.1.s8 %v4246
    %v4411 = vunpack.c.1.s8 %v4247
    %v4412 = vunpack.c.1.s8 %v4248
    %v4413 = vunpack.c.1.s8 %v4249
    %v4414 = vunpack.c.2.s8 %v4246
    %v4415 = vunpack.c.2.s8 %v4247
    %v4416 = vunpack.c.2.s8 %v4248
    %v4417 = vunpack.c.2.s8 %v4249
    %v4418 = vunpack.c.3.s8 %v4246
    %v4419 = vunpack.c.3.s8 %v4247
    %v4420 = vunpack.c.3.s8 %v4248
    %v4421 = vunpack.c.3.s8 %v4249
    %v4422 = vunpack.c.0.s8 %v4250
    %v4423 = vunpack.c.0.s8 %v4251
    %v4424 = vunpack.c.0.s8 %v4252
    %v4425 = vunpack.c.0.s8 %v4253
    %v4426 = vunpack.c.1.s8 %v4250
    %v4427 = vunpack.c.1.s8 %v4251
    %v4428 = vunpack.c.1.s8 %v4252
    %v4429 = vunpack.c.1.s8 %v4253
    %v4430 = vunpack.c.2.s8 %v4250
    %v4431 = vunpack.c.2.s8 %v4251
    %v4432 = vunpack.c.2.s8 %v4252
    %v4433 = vunpack.c.2.s8 %v4253
    %v4434 = vunpack.c.3.s8 %v4250
    %v4435 = vunpack.c.3.s8 %v4251
    %v4436 = vunpack.c.3.s8 %v4252
    %v4437 = vunpack.c.3.s8 %v4253
    %v4438 = vunpack.c.0.s8 %v4254
    %v4439 = vunpack.c.0.s8 %v4255
    %v4440 = vunpack.c.0.s8 %v4256
    %v4441 = vunpack.c.0.s8 %v4257
    %v4442 = vunpack.c.1.s8 %v4254
    %v4443 = vunpack.c.1.s8 %v4255
    %v4444 = vunpack.c.1.s8 %v4256
    %v4445 = vunpack.c.1.s8 %v4257
    %v4446 = vunpack.c.2.s8 %v4254
    %v4447 = vunpack.c.2.s8 %v4255
    %v4448 = vunpack.c.2.s8 %v4256
    %v4449 = vunpack.c.2.s8 %v4257
    %v4450 = vunpack.c.3.s8 %v4254
    %v4451 = vunpack.c.3.s8 %v4255
    %v4452 = vunpack.c.3.s8 %v4256
    %v4453 = vunpack.c.3.s8 %v4257
    %v4454 = vunpack.c.0.s8 %v4258
    %v4455 = vunpack.c.0.s8 %v4259
    %v4456 = vunpack.c.0.s8 %v4260
    %v4457 = vunpack.c.0.s8 %v4261
    %v4458 = vunpack.c.1.s8 %v4258
    %v4459 = vunpack.c.1.s8 %v4259
    %v4460 = vunpack.c.1.s8 %v4260
    %v4461 = vunpack.c.1.s8 %v4261
    %v4462 = vunpack.c.2.s8 %v4258
    %v4463 = vunpack.c.2.s8 %v4259
    %v4464 = vunpack.c.2.s8 %v4260
    %v4465 = vunpack.c.2.s8 %v4261
    %v4466 = vunpack.c.3.s8 %v4258
    %v4467 = vunpack.c.3.s8 %v4259
    %v4468 = vunpack.c.3.s8 %v4260
    %v4469 = vunpack.c.3.s8 %v4261
    %v4470 = vunpack.c.0.s8 %v4262
    %v4471 = vunpack.c.0.s8 %v4263
    %v4472 = vunpack.c.0.s8 %v4264
    %v4473 = vunpack.c.0.s8 %v4265
    %v4474 = vunpack.c.1.s8 %v4262
    %v4475 = vunpack.c.1.s8 %v4263
    %v4476 = vunpack.c.1.s8 %v4264
    %v4477 = vunpack.c.1.s8 %v4265
    %v4478 = vunpack.c.2.s8 %v4262
    %v4479 = vunpack.c.2.s8 %v4263
    %v4480 = vunpack.c.2.s8 %v4264
    %v4481 = vunpack.c.2.s8 %v4265
    %v4482 = vunpack.c.3.s8 %v4262
    %v4483 = vunpack.c.3.s8 %v4263
    %v4484 = vunpack.c.3.s8 %v4264
    %v4485 = vunpack.c.3.s8 %v4265
    %v4486 = vunpack.c.0.s8 %v4266
    %v4487 = vunpack.c.0.s8 %v4267
    %v4488 = vunpack.c.0.s8 %v4268
    %v4489 = vunpack.c.0.s8 %v4269
    %v4490 = vunpack.c.1.s8 %v4266
    %v4491 = vunpack.c.1.s8 %v4267
    %v4492 = vunpack.c.1.s8 %v4268
    %v4493 = vunpack.c.1.s8 %v4269
    %v4494 = vunpack.c.2.s8 %v4266
    %v4495 = vunpack.c.2.s8 %v4267
    %v4496 = vunpack.c.2.s8 %v4268
    %v4497 = vunpack.c.2.s8 %v4269
    %v4498 = vunpack.c.3.s8 %v4266
    %v4499 = vunpack.c.3.s8 %v4267
    %v4500 = vunpack.c.3.s8 %v4268
    %v4501 = vunpack.c.3.s8 %v4269
    %v4502 = vunpack.c.0.s8 %v4270
    %v4503 = vunpack.c.0.s8 %v4271
    %v4504 = vunpack.c.0.s8 %v4272
    %v4505 = vunpack.c.0.s8 %v4273
    %v4506 = vunpack.c.1.s8 %v4270
    %v4507 = vunpack.c.1.s8 %v4271
    %v4508 = vunpack.c.1.s8 %v4272
    %v4509 = vunpack.c.1.s8 %v4273
    %v4510 = vunpack.c.2.s8 %v4270
    %v4511 = vunpack.c.2.s8 %v4271
    %v4512 = vunpack.c.2.s8 %v4272
    %v4513 = vunpack.c.2.s8 %v4273
    %v4514 = vunpack.c.3.s8 %v4270
    %v4515 = vunpack.c.3.s8 %v4271
    %v4516 = vunpack.c.3.s8 %v4272
    %v4517 = vunpack.c.3.s8 %v4273
    %v4518 = vunpack.c.0.s8 %v4274
    %v4519 = vunpack.c.0.s8 %v4275
    %v4520 = vunpack.c.0.s8 %v4276
    %v4521 = vunpack.c.0.s8 %v4277
    %v4522 = vunpack.c.1.s8 %v4274
    %v4523 = vunpack.c.1.s8 %v4275
    %v4524 = vunpack.c.1.s8 %v4276
    %v4525 = vunpack.c.1.s8 %v4277
    %v4526 = vunpack.c.2.s8 %v4274
    %v4527 = vunpack.c.2.s8 %v4275
    %v4528 = vunpack.c.2.s8 %v4276
    %v4529 = vunpack.c.2.s8 %v4277
    %v4530 = vunpack.c.3.s8 %v4274
    %v4531 = vunpack.c.3.s8 %v4275
    %v4532 = vunpack.c.3.s8 %v4276
    %v4533 = vunpack.c.3.s8 %v4277
    %v4534 = vcvt.s32.f32 %v4278
    %v4535 = vcvt.s32.f32 %v4279
    %v4536 = vcvt.s32.f32 %v4280
    %v4537 = vcvt.s32.f32 %v4281
    %v4538 = vcvt.s32.f32 %v4282
    %v4539 = vcvt.s32.f32 %v4283
    %v4540 = vcvt.s32.f32 %v4284
    %v4541 = vcvt.s32.f32 %v4285
    %v4542 = vcvt.s32.f32 %v4286
    %v4543 = vcvt.s32.f32 %v4287
    %v4544 = vcvt.s32.f32 %v4288
    %v4545 = vcvt.s32.f32 %v4289
    %v4546 = vcvt.s32.f32 %v4290
    %v4547 = vcvt.s32.f32 %v4291
    %v4548 = vcvt.s32.f32 %v4292
    %v4549 = vcvt.s32.f32 %v4293
    %v4550 = vcvt.s32.f32 %v4294
    %v4551 = vcvt.s32.f32 %v4295
    %v4552 = vcvt.s32.f32 %v4296
    %v4553 = vcvt.s32.f32 %v4297
    %v4554 = vcvt.s32.f32 %v4298
    %v4555 = vcvt.s32.f32 %v4299
    %v4556 = vcvt.s32.f32 %v4300
    %v4557 = vcvt.s32.f32 %v4301
    %v4558 = vcvt.s32.f32 %v4302
    %v4559 = vcvt.s32.f32 %v4303
    %v4560 = vcvt.s32.f32 %v4304
    %v4561 = vcvt.s32.f32 %v4305
    %v4562 = vcvt.s32.f32 %v4306
    %v4563 = vcvt.s32.f32 %v4307
    %v4564 = vcvt.s32.f32 %v4308
    %v4565 = vcvt.s32.f32 %v4309
    %v4566 = vcvt.s32.f32 %v4310
    %v4567 = vcvt.s32.f32 %v4311
    %v4568 = vcvt.s32.f32 %v4312
    %v4569 = vcvt.s32.f32 %v4313
    %v4570 = vcvt.s32.f32 %v4314
    %v4571 = vcvt.s32.f32 %v4315
    %v4572 = vcvt.s32.f32 %v4316
    %v4573 = vcvt.s32.f32 %v4317
    %v4574 = vcvt.s32.f32 %v4318
    %v4575 = vcvt.s32.f32 %v4319
    %v4576 = vcvt.s32.f32 %v4320
    %v4577 = vcvt.s32.f32 %v4321
    %v4578 = vcvt.s32.f32 %v4322
    %v4579 = vcvt.s32.f32 %v4323
    %v4580 = vcvt.s32.f32 %v4324
    %v4581 = vcvt.s32.f32 %v4325
    %v4582 = vcvt.s32.f32 %v4326
    %v4583 = vcvt.s32.f32 %v4327
    %v4584 = vcvt.s32.f32 %v4328
    %v4585 = vcvt.s32.f32 %v4329
    %v4586 = vcvt.s32.f32 %v4330
    %v4587 = vcvt.s32.f32 %v4331
    %v4588 = vcvt.s32.f32 %v4332
    %v4589 = vcvt.s32.f32 %v4333
    %v4590 = vcvt.s32.f32 %v4334
    %v4591 = vcvt.s32.f32 %v4335
    %v4592 = vcvt.s32.f32 %v4336
    %v4593 = vcvt.s32.f32 %v4337
    %v4594 = vcvt.s32.f32 %v4338
    %v4595 = vcvt.s32.f32 %v4339
    %v4596 = vcvt.s32.f32 %v4340
    %v4597 = vcvt.s32.f32 %v4341
    %v4598 = vcvt.s32.f32 %v4342
    %v4599 = vcvt.s32.f32 %v4343
    %v4600 = vcvt.s32.f32 %v4344
    %v4601 = vcvt.s32.f32 %v4345
    %v4602 = vcvt.s32.f32 %v4346
    %v4603 = vcvt.s32.f32 %v4347
    %v4604 = vcvt.s32.f32 %v4348
    %v4605 = vcvt.s32.f32 %v4349
    %v4606 = vcvt.s32.f32 %v4350
    %v4607 = vcvt.s32.f32 %v4351
    %v4608 = vcvt.s32.f32 %v4352
    %v4609 = vcvt.s32.f32 %v4353
    %v4610 = vcvt.s32.f32 %v4354
    %v4611 = vcvt.s32.f32 %v4355
    %v4612 = vcvt.s32.f32 %v4356
    %v4613 = vcvt.s32.f32 %v4357
    %v4614 = vcvt.s32.f32 %v4358
    %v4615 = vcvt.s32.f32 %v4359
    %v4616 = vcvt.s32.f32 %v4360
    %v4617 = vcvt.s32.f32 %v4361
    %v4618 = vcvt.s32.f32 %v4362
    %v4619 = vcvt.s32.f32 %v4363
    %v4620 = vcvt.s32.f32 %v4364
    %v4621 = vcvt.s32.f32 %v4365
    %v4622 = vcvt.s32.f32 %v4366
    %v4623 = vcvt.s32.f32 %v4367
    %v4624 = vcvt.s32.f32 %v4368
    %v4625 = vcvt.s32.f32 %v4369
    %v4626 = vcvt.s32.f32 %v4370
    %v4627 = vcvt.s32.f32 %v4371
    %v4628 = vcvt.s32.f32 %v4372
    %v4629 = vcvt.s32.f32 %v4373
    %v4630 = vcvt.s32.f32 %v4374
    %v4631 = vcvt.s32.f32 %v4375
    %v4632 = vcvt.s32.f32 %v4376
    %v4633 = vcvt.s32.f32 %v4377
    %v4634 = vcvt.s32.f32 %v4378
    %v4635 = vcvt.s32.f32 %v4379
    %v4636 = vcvt.s32.f32 %v4380
    %v4637 = vcvt.s32.f32 %v4381
    %v4638 = vcvt.s32.f32 %v4382
    %v4639 = vcvt.s32.f32 %v4383
    %v4640 = vcvt.s32.f32 %v4384
    %v4641 = vcvt.s32.f32 %v4385
    %v4642 = vcvt.s32.f32 %v4386
    %v4643 = vcvt.s32.f32 %v4387
    %v4644 = vcvt.s32.f32 %v4388
    %v4645 = vcvt.s32.f32 %v4389
    %v4646 = vcvt.s32.f32 %v4390
    %v4647 = vcvt.s32.f32 %v4391
    %v4648 = vcvt.s32.f32 %v4392
    %v4649 = vcvt.s32.f32 %v4393
    %v4650 = vcvt.s32.f32 %v4394
    %v4651 = vcvt.s32.f32 %v4395
    %v4652 = vcvt.s32.f32 %v4396
    %v4653 = vcvt.s32.f32 %v4397
    %v4654 = vcvt.s32.f32 %v4398
    %v4655 = vcvt.s32.f32 %v4399
    %v4656 = vcvt.s32.f32 %v4400
    %v4657 = vcvt.s32.f32 %v4401
    %v4658 = vcvt.s32.f32 %v4402
    %v4659 = vcvt.s32.f32 %v4403
    %v4660 = vcvt.s32.f32 %v4404
    %v4661 = vcvt.s32.f32 %v4405
    %v4662 = vcvt.s32.f32 %v4406
    %v4663 = vcvt.s32.f32 %v4407
    %v4664 = vcvt.s32.f32 %v4408
    %v4665 = vcvt.s32.f32 %v4409
    %v4666 = vcvt.s32.f32 %v4410
    %v4667 = vcvt.s32.f32 %v4411
    %v4668 = vcvt.s32.f32 %v4412
    %v4669 = vcvt.s32.f32 %v4413
    %v4670 = vcvt.s32.f32 %v4414
    %v4671 = vcvt.s32.f32 %v4415
    %v4672 = vcvt.s32.f32 %v4416
    %v4673 = vcvt.s32.f32 %v4417
    %v4674 = vcvt.s32.f32 %v4418
    %v4675 = vcvt.s32.f32 %v4419
    %v4676 = vcvt.s32.f32 %v4420
    %v4677 = vcvt.s32.f32 %v4421
    %v4678 = vcvt.s32.f32 %v4422
    %v4679 = vcvt.s32.f32 %v4423
    %v4680 = vcvt.s32.f32 %v4424
    %v4681 = vcvt.s32.f32 %v4425
    %v4682 = vcvt.s32.f32 %v4426
    %v4683 = vcvt.s32.f32 %v4427
    %v4684 = vcvt.s32.f32 %v4428
    %v4685 = vcvt.s32.f32 %v4429
    %v4686 = vcvt.s32.f32 %v4430
    %v4687 = vcvt.s32.f32 %v4431
    %v4688 = vcvt.s32.f32 %v4432
    %v4689 = vcvt.s32.f32 %v4433
    %v4690 = vcvt.s32.f32 %v4434
    %v4691 = vcvt.s32.f32 %v4435
    %v4692 = vcvt.s32.f32 %v4436
    %v4693 = vcvt.s32.f32 %v4437
    %v4694 = vcvt.s32.f32 %v4438
    %v4695 = vcvt.s32.f32 %v4439
    %v4696 = vcvt.s32.f32 %v4440
    %v4697 = vcvt.s32.f32 %v4441
    %v4698 = vcvt.s32.f32 %v4442
    %v4699 = vcvt.s32.f32 %v4443
    %v4700 = vcvt.s32.f32 %v4444
    %v4701 = vcvt.s32.f32 %v4445
    %v4702 = vcvt.s32.f32 %v4446
    %v4703 = vcvt.s32.f32 %v4447
    %v4704 = vcvt.s32.f32 %v4448
    %v4705 = vcvt.s32.f32 %v4449
    %v4706 = vcvt.s32.f32 %v4450
    %v4707 = vcvt.s32.f32 %v4451
    %v4708 = vcvt.s32.f32 %v4452
    %v4709 = vcvt.s32.f32 %v4453
    %v4710 = vcvt.s32.f32 %v4454
    %v4711 = vcvt.s32.f32 %v4455
    %v4712 = vcvt.s32.f32 %v4456
    %v4713 = vcvt.s32.f32 %v4457
    %v4714 = vcvt.s32.f32 %v4458
    %v4715 = vcvt.s32.f32 %v4459
    %v4716 = vcvt.s32.f32 %v4460
    %v4717 = vcvt.s32.f32 %v4461
    %v4718 = vcvt.s32.f32 %v4462
    %v4719 = vcvt.s32.f32 %v4463
    %v4720 = vcvt.s32.f32 %v4464
    %v4721 = vcvt.s32.f32 %v4465
    %v4722 = vcvt.s32.f32 %v4466
    %v4723 = vcvt.s32.f32 %v4467
    %v4724 = vcvt.s32.f32 %v4468
    %v4725 = vcvt.s32.f32 %v4469
    %v4726 = vcvt.s32.f32 %v4470
    %v4727 = vcvt.s32.f32 %v4471
    %v4728 = vcvt.s32.f32 %v4472
    %v4729 = vcvt.s32.f32 %v4473
    %v4730 = vcvt.s32.f32 %v4474
    %v4731 = vcvt.s32.f32 %v4475
    %v4732 = vcvt.s32.f32 %v4476
    %v4733 = vcvt.s32.f32 %v4477
    %v4734 = vcvt.s32.f32 %v4478
    %v4735 = vcvt.s32.f32 %v4479
    %v4736 = vcvt.s32.f32 %v4480
    %v4737 = vcvt.s32.f32 %v4481
    %v4738 = vcvt.s32.f32 %v4482
    %v4739 = vcvt.s32.f32 %v4483
    %v4740 = vcvt.s32.f32 %v4484
    %v4741 = vcvt.s32.f32 %v4485
    %v4742 = vcvt.s32.f32 %v4486
    %v4743 = vcvt.s32.f32 %v4487
    %v4744 = vcvt.s32.f32 %v4488
    %v4745 = vcvt.s32.f32 %v4489
    %v4746 = vcvt.s32.f32 %v4490
    %v4747 = vcvt.s32.f32 %v4491
    %v4748 = vcvt.s32.f32 %v4492
    %v4749 = vcvt.s32.f32 %v4493
    %v4750 = vcvt.s32.f32 %v4494
    %v4751 = vcvt.s32.f32 %v4495
    %v4752 = vcvt.s32.f32 %v4496
    %v4753 = vcvt.s32.f32 %v4497
    %v4754 = vcvt.s32.f32 %v4498
    %v4755 = vcvt.s32.f32 %v4499
    %v4756 = vcvt.s32.f32 %v4500
    %v4757 = vcvt.s32.f32 %v4501
    %v4758 = vcvt.s32.f32 %v4502
    %v4759 = vcvt.s32.f32 %v4503
    %v4760 = vcvt.s32.f32 %v4504
    %v4761 = vcvt.s32.f32 %v4505
    %v4762 = vcvt.s32.f32 %v4506
    %v4763 = vcvt.s32.f32 %v4507
    %v4764 = vcvt.s32.f32 %v4508
    %v4765 = vcvt.s32.f32 %v4509
    %v4766 = vcvt.s32.f32 %v4510
    %v4767 = vcvt.s32.f32 %v4511
    %v4768 = vcvt.s32.f32 %v4512
    %v4769 = vcvt.s32.f32 %v4513
    %v4770 = vcvt.s32.f32 %v4514
    %v4771 = vcvt.s32.f32 %v4515
    %v4772 = vcvt.s32.f32 %v4516
    %v4773 = vcvt.s32.f32 %v4517
    %v4774 = vcvt.s32.f32 %v4518
    %v4775 = vcvt.s32.f32 %v4519
    %v4776 = vcvt.s32.f32 %v4520
    %v4777 = vcvt.s32.f32 %v4521
    %v4778 = vcvt.s32.f32 %v4522
    %v4779 = vcvt.s32.f32 %v4523
    %v4780 = vcvt.s32.f32 %v4524
    %v4781 = vcvt.s32.f32 %v4525
    %v4782 = vcvt.s32.f32 %v4526
    %v4783 = vcvt.s32.f32 %v4527
    %v4784 = vcvt.s32.f32 %v4528
    %v4785 = vcvt.s32.f32 %v4529
    %v4786 = vcvt.s32.f32 %v4530
    %v4787 = vcvt.s32.f32 %v4531
    %v4788 = vcvt.s32.f32 %v4532
    %v4789 = vcvt.s32.f32 %v4533
    %v4790 = vpack.c.bf16 %v4538, %v4534
    %v4791 = vpack.c.bf16 %v4539, %v4535
    %v4792 = vpack.c.bf16 %v4540, %v4536
    %v4793 = vpack.c.bf16 %v4541, %v4537
    %v4794 = vpack.c.bf16 %v4546, %v4542
    %v4795 = vpack.c.bf16 %v4547, %v4543
    %v4796 = vpack.c.bf16 %v4548, %v4544
    %v4797 = vpack.c.bf16 %v4549, %v4545
    %v4798 = vpack.c.bf16 %v4554, %v4550
    %v4799 = vpack.c.bf16 %v4555, %v4551
    %v4800 = vpack.c.bf16 %v4556, %v4552
    %v4801 = vpack.c.bf16 %v4557, %v4553
    %v4802 = vpack.c.bf16 %v4562, %v4558
    %v4803 = vpack.c.bf16 %v4563, %v4559
    %v4804 = vpack.c.bf16 %v4564, %v4560
    %v4805 = vpack.c.bf16 %v4565, %v4561
    %v4806 = vpack.c.bf16 %v4570, %v4566
    %v4807 = vpack.c.bf16 %v4571, %v4567
    %v4808 = vpack.c.bf16 %v4572, %v4568
    %v4809 = vpack.c.bf16 %v4573, %v4569
    %v4810 = vpack.c.bf16 %v4578, %v4574
    %v4811 = vpack.c.bf16 %v4579, %v4575
    %v4812 = vpack.c.bf16 %v4580, %v4576
    %v4813 = vpack.c.bf16 %v4581, %v4577
    %v4814 = vpack.c.bf16 %v4586, %v4582
    %v4815 = vpack.c.bf16 %v4587, %v4583
    %v4816 = vpack.c.bf16 %v4588, %v4584
    %v4817 = vpack.c.bf16 %v4589, %v4585
    %v4818 = vpack.c.bf16 %v4594, %v4590
    %v4819 = vpack.c.bf16 %v4595, %v4591
    %v4820 = vpack.c.bf16 %v4596, %v4592
    %v4821 = vpack.c.bf16 %v4597, %v4593
    %v4822 = vpack.c.bf16 %v4602, %v4598
    %v4823 = vpack.c.bf16 %v4603, %v4599
    %v4824 = vpack.c.bf16 %v4604, %v4600
    %v4825 = vpack.c.bf16 %v4605, %v4601
    %v4826 = vpack.c.bf16 %v4610, %v4606
    %v4827 = vpack.c.bf16 %v4611, %v4607
    %v4828 = vpack.c.bf16 %v4612, %v4608
    %v4829 = vpack.c.bf16 %v4613, %v4609
    %v4830 = vpack.c.bf16 %v4618, %v4614
    %v4831 = vpack.c.bf16 %v4619, %v4615
    %v4832 = vpack.c.bf16 %v4620, %v4616
    %v4833 = vpack.c.bf16 %v4621, %v4617
    %v4834 = vpack.c.bf16 %v4626, %v4622
    %v4835 = vpack.c.bf16 %v4627, %v4623
    %v4836 = vpack.c.bf16 %v4628, %v4624
    %v4837 = vpack.c.bf16 %v4629, %v4625
    %v4838 = vpack.c.bf16 %v4634, %v4630
    %v4839 = vpack.c.bf16 %v4635, %v4631
    %v4840 = vpack.c.bf16 %v4636, %v4632
    %v4841 = vpack.c.bf16 %v4637, %v4633
    %v4842 = vpack.c.bf16 %v4642, %v4638
    %v4843 = vpack.c.bf16 %v4643, %v4639
    %v4844 = vpack.c.bf16 %v4644, %v4640
    %v4845 = vpack.c.bf16 %v4645, %v4641
    %v4846 = vpack.c.bf16 %v4650, %v4646
    %v4847 = vpack.c.bf16 %v4651, %v4647
    %v4848 = vpack.c.bf16 %v4652, %v4648
    %v4849 = vpack.c.bf16 %v4653, %v4649
    %v4850 = vpack.c.bf16 %v4658, %v4654
    %v4851 = vpack.c.bf16 %v4659, %v4655
    %v4852 = vpack.c.bf16 %v4660, %v4656
    %v4853 = vpack.c.bf16 %v4661, %v4657
    %v4854 = vpack.c.bf16 %v4666, %v4662
    %v4855 = vpack.c.bf16 %v4667, %v4663
    %v4856 = vpack.c.bf16 %v4668, %v4664
    %v4857 = vpack.c.bf16 %v4669, %v4665
    %v4858 = vpack.c.bf16 %v4674, %v4670
    %v4859 = vpack.c.bf16 %v4675, %v4671
    %v4860 = vpack.c.bf16 %v4676, %v4672
    %v4861 = vpack.c.bf16 %v4677, %v4673
    %v4862 = vpack.c.bf16 %v4682, %v4678
    %v4863 = vpack.c.bf16 %v4683, %v4679
    %v4864 = vpack.c.bf16 %v4684, %v4680
    %v4865 = vpack.c.bf16 %v4685, %v4681
    %v4866 = vpack.c.bf16 %v4690, %v4686
    %v4867 = vpack.c.bf16 %v4691, %v4687
    %v4868 = vpack.c.bf16 %v4692, %v4688
    %v4869 = vpack.c.bf16 %v4693, %v4689
    %v4870 = vpack.c.bf16 %v4698, %v4694
    %v4871 = vpack.c.bf16 %v4699, %v4695
    %v4872 = vpack.c.bf16 %v4700, %v4696
    %v4873 = vpack.c.bf16 %v4701, %v4697
    %v4874 = vpack.c.bf16 %v4706, %v4702
    %v4875 = vpack.c.bf16 %v4707, %v4703
    %v4876 = vpack.c.bf16 %v4708, %v4704
    %v4877 = vpack.c.bf16 %v4709, %v4705
    %v4878 = vpack.c.bf16 %v4714, %v4710
    %v4879 = vpack.c.bf16 %v4715, %v4711
    %v4880 = vpack.c.bf16 %v4716, %v4712
    %v4881 = vpack.c.bf16 %v4717, %v4713
    %v4882 = vpack.c.bf16 %v4722, %v4718
    %v4883 = vpack.c.bf16 %v4723, %v4719
    %v4884 = vpack.c.bf16 %v4724, %v4720
    %v4885 = vpack.c.bf16 %v4725, %v4721
    %v4886 = vpack.c.bf16 %v4730, %v4726
    %v4887 = vpack.c.bf16 %v4731, %v4727
    %v4888 = vpack.c.bf16 %v4732, %v4728
    %v4889 = vpack.c.bf16 %v4733, %v4729
    %v4890 = vpack.c.bf16 %v4738, %v4734
    %v4891 = vpack.c.bf16 %v4739, %v4735
    %v4892 = vpack.c.bf16 %v4740, %v4736
    %v4893 = vpack.c.bf16 %v4741, %v4737
    %v4894 = vpack.c.bf16 %v4746, %v4742
    %v4895 = vpack.c.bf16 %v4747, %v4743
    %v4896 = vpack.c.bf16 %v4748, %v4744
    %v4897 = vpack.c.bf16 %v4749, %v4745
    %v4898 = vpack.c.bf16 %v4754, %v4750
    %v4899 = vpack.c.bf16 %v4755, %v4751
    %v4900 = vpack.c.bf16 %v4756, %v4752
    %v4901 = vpack.c.bf16 %v4757, %v4753
    %v4902 = vpack.c.bf16 %v4762, %v4758
    %v4903 = vpack.c.bf16 %v4763, %v4759
    %v4904 = vpack.c.bf16 %v4764, %v4760
    %v4905 = vpack.c.bf16 %v4765, %v4761
    %v4906 = vpack.c.bf16 %v4770, %v4766
    %v4907 = vpack.c.bf16 %v4771, %v4767
    %v4908 = vpack.c.bf16 %v4772, %v4768
    %v4909 = vpack.c.bf16 %v4773, %v4769
    %v4910 = vpack.c.bf16 %v4778, %v4774
    %v4911 = vpack.c.bf16 %v4779, %v4775
    %v4912 = vpack.c.bf16 %v4780, %v4776
    %v4913 = vpack.c.bf16 %v4781, %v4777
    %v4914 = vpack.c.bf16 %v4786, %v4782
    %v4915 = vpack.c.bf16 %v4787, %v4783
    %v4916 = vpack.c.bf16 %v4788, %v4784
    %v4917 = vpack.c.bf16 %v4789, %v4785
    %v4918 = vpack.c.bf16 %v4209, %v4205
    %v4919 = vpack.c.bf16 %v4210, %v4206
    %v4920 = vpack.c.bf16 %v4211, %v4207
    %v4921 = vpack.c.bf16 %v4212, %v4208
    %4922 = vmatpush.bf16.msra.mxu0 %v4818
    %4923 = vmatpush.bf16.msra.mxu0 %v4814
    %4924 = vmatpush.bf16.msra.mxu0 %v4810
    %4925 = vmatpush.bf16.msra.mxu0 %v4806
    %4926 = vmatpush.bf16.msra.mxu0 %v4802
    %4927 = vmatpush.bf16.msra.mxu0 %v4798
    %4928 = vmatpush.bf16.msra.mxu0 %v4794
    %4929 = vmatpush.bf16.msra.mxu0 %v4790
    %4930 = vmatmul.bf16.gmra.mxu0 %v4918
    %v4931 = vpop.f32.mrf.mxu0
    %v4932 = vadd.f32 0.0, %v4931
    %v4933 = vpop.f32.mrf.mxu0
    %v4934 = vadd.f32 0.0, %v4933
    %4935 = vdwg.mxu0
    %4936 = vmatpush.bf16.msra.mxu0 %v4850
    %4937 = vmatpush.bf16.msra.mxu0 %v4846
    %4938 = vmatpush.bf16.msra.mxu0 %v4842
    %4939 = vmatpush.bf16.msra.mxu0 %v4838
    %4940 = vmatpush.bf16.msra.mxu0 %v4834
    %4941 = vmatpush.bf16.msra.mxu0 %v4830
    %4942 = vmatpush.bf16.msra.mxu0 %v4826
    %4943 = vmatpush.bf16.msra.mxu0 %v4822
    %4944 = vmatmul.bf16.gmra.mxu0 %v4919
    %v4945 = vpop.f32.mrf.mxu0
    %v4946 = vadd.f32 %v4932, %v4945
    %v4947 = vpop.f32.mrf.mxu0
    %v4948 = vadd.f32 %v4934, %v4947
    %4949 = vdwg.mxu0
    %4950 = vmatpush.bf16.msra.mxu0 %v4882
    %4951 = vmatpush.bf16.msra.mxu0 %v4878
    %4952 = vmatpush.bf16.msra.mxu0 %v4874
    %4953 = vmatpush.bf16.msra.mxu0 %v4870
    %4954 = vmatpush.bf16.msra.mxu0 %v4866
    %4955 = vmatpush.bf16.msra.mxu0 %v4862
    %4956 = vmatpush.bf16.msra.mxu0 %v4858
    %4957 = vmatpush.bf16.msra.mxu0 %v4854
    %4958 = vmatmul.bf16.gmra.mxu0 %v4920
    %v4959 = vpop.f32.mrf.mxu0
    %v4960 = vadd.f32 %v4946, %v4959
    %v4961 = vpop.f32.mrf.mxu0
    %v4962 = vadd.f32 %v4948, %v4961
    %4963 = vdwg.mxu0
    %4964 = vmatpush.bf16.msra.mxu0 %v4914
    %4965 = vmatpush.bf16.msra.mxu0 %v4910
    %4966 = vmatpush.bf16.msra.mxu0 %v4906
    %4967 = vmatpush.bf16.msra.mxu0 %v4902
    %4968 = vmatpush.bf16.msra.mxu0 %v4898
    %4969 = vmatpush.bf16.msra.mxu0 %v4894
    %4970 = vmatpush.bf16.msra.mxu0 %v4890
    %4971 = vmatpush.bf16.msra.mxu0 %v4886
    %4972 = vmatmul.bf16.gmra.mxu0 %v4921
    %v4973 = vpop.f32.mrf.mxu0
    %v4974 = vadd.f32 %v4960, %v4973
    %v4975 = vpop.f32.mrf.mxu0
    %v4976 = vadd.f32 %v4962, %v4975
    %4977 = vdwg.mxu0
    %4978 = vmatpush.bf16.msra.mxu0 %v4819
    %4979 = vmatpush.bf16.msra.mxu0 %v4815
    %4980 = vmatpush.bf16.msra.mxu0 %v4811
    %4981 = vmatpush.bf16.msra.mxu0 %v4807
    %4982 = vmatpush.bf16.msra.mxu0 %v4803
    %4983 = vmatpush.bf16.msra.mxu0 %v4799
    %4984 = vmatpush.bf16.msra.mxu0 %v4795
    %4985 = vmatpush.bf16.msra.mxu0 %v4791
    %4986 = vmatmul.bf16.gmra.mxu0 %v4918
    %v4987 = vpop.f32.mrf.mxu0
    %v4988 = vadd.f32 0.0, %v4987
    %v4989 = vpop.f32.mrf.mxu0
    %v4990 = vadd.f32 0.0, %v4989
    %4991 = vdwg.mxu0
    %4992 = vmatpush.bf16.msra.mxu0 %v4851
    %4993 = vmatpush.bf16.msra.mxu0 %v4847
    %4994 = vmatpush.bf16.msra.mxu0 %v4843
    %4995 = vmatpush.bf16.msra.mxu0 %v4839
    %4996 = vmatpush.bf16.msra.mxu0 %v4835
    %4997 = vmatpush.bf16.msra.mxu0 %v4831
    %4998 = vmatpush.bf16.msra.mxu0 %v4827
    %4999 = vmatpush.bf16.msra.mxu0 %v4823
    %5000 = vmatmul.bf16.gmra.mxu0 %v4919
    %v5001 = vpop.f32.mrf.mxu0
    %v5002 = vadd.f32 %v4988, %v5001
    %v5003 = vpop.f32.mrf.mxu0
    %v5004 = vadd.f32 %v4990, %v5003
    %5005 = vdwg.mxu0
    %5006 = vmatpush.bf16.msra.mxu0 %v4883
    %5007 = vmatpush.bf16.msra.mxu0 %v4879
    %5008 = vmatpush.bf16.msra.mxu0 %v4875
    %5009 = vmatpush.bf16.msra.mxu0 %v4871
    %5010 = vmatpush.bf16.msra.mxu0 %v4867
    %5011 = vmatpush.bf16.msra.mxu0 %v4863
    %5012 = vmatpush.bf16.msra.mxu0 %v4859
    %5013 = vmatpush.bf16.msra.mxu0 %v4855
    %5014 = vmatmul.bf16.gmra.mxu0 %v4920
    %v5015 = vpop.f32.mrf.mxu0
    %v5016 = vadd.f32 %v5002, %v5015
    %v5017 = vpop.f32.mrf.mxu0
    %v5018 = vadd.f32 %v5004, %v5017
    %5019 = vdwg.mxu0
    %5020 = vmatpush.bf16.msra.mxu0 %v4915
    %5021 = vmatpush.bf16.msra.mxu0 %v4911
    %5022 = vmatpush.bf16.msra.mxu0 %v4907
    %5023 = vmatpush.bf16.msra.mxu0 %v4903
    %5024 = vmatpush.bf16.msra.mxu0 %v4899
    %5025 = vmatpush.bf16.msra.mxu0 %v4895
    %5026 = vmatpush.bf16.msra.mxu0 %v4891
    %5027 = vmatpush.bf16.msra.mxu0 %v4887
    %5028 = vmatmul.bf16.gmra.mxu0 %v4921
    %v5029 = vpop.f32.mrf.mxu0
    %v5030 = vadd.f32 %v5016, %v5029
    %v5031 = vpop.f32.mrf.mxu0
    %v5032 = vadd.f32 %v5018, %v5031
    %5033 = vdwg.mxu0
    %5034 = vmatpush.bf16.msra.mxu0 %v4820
    %5035 = vmatpush.bf16.msra.mxu0 %v4816
    %5036 = vmatpush.bf16.msra.mxu0 %v4812
    %5037 = vmatpush.bf16.msra.mxu0 %v4808
    %5038 = vmatpush.bf16.msra.mxu0 %v4804
    %5039 = vmatpush.bf16.msra.mxu0 %v4800
    %5040 = vmatpush.bf16.msra.mxu0 %v4796
    %5041 = vmatpush.bf16.msra.mxu0 %v4792
    %5042 = vmatmul.bf16.gmra.mxu0 %v4918
    %v5043 = vpop.f32.mrf.mxu0
    %v5044 = vadd.f32 0.0, %v5043
    %v5045 = vpop.f32.mrf.mxu0
    %v5046 = vadd.f32 0.0, %v5045
    %5047 = vdwg.mxu0
    %5048 = vmatpush.bf16.msra.mxu0 %v4852
    %5049 = vmatpush.bf16.msra.mxu0 %v4848
    %5050 = vmatpush.bf16.msra.mxu0 %v4844
    %5051 = vmatpush.bf16.msra.mxu0 %v4840
    %5052 = vmatpush.bf16.msra.mxu0 %v4836
    %5053 = vmatpush.bf16.msra.mxu0 %v4832
    %5054 = vmatpush.bf16.msra.mxu0 %v4828
    %5055 = vmatpush.bf16.msra.mxu0 %v4824
    %5056 = vmatmul.bf16.gmra.mxu0 %v4919
    %v5057 = vpop.f32.mrf.mxu0
    %v5058 = vadd.f32 %v5044, %v5057
    %v5059 = vpop.f32.mrf.mxu0
    %v5060 = vadd.f32 %v5046, %v5059
    %5061 = vdwg.mxu0
    %5062 = vmatpush.bf16.msra.mxu0 %v4884
    %5063 = vmatpush.bf16.msra.mxu0 %v4880
    %5064 = vmatpush.bf16.msra.mxu0 %v4876
    %5065 = vmatpush.bf16.msra.mxu0 %v4872
    %5066 = vmatpush.bf16.msra.mxu0 %v4868
    %5067 = vmatpush.bf16.msra.mxu0 %v4864
    %5068 = vmatpush.bf16.msra.mxu0 %v4860
    %5069 = vmatpush.bf16.msra.mxu0 %v4856
    %5070 = vmatmul.bf16.gmra.mxu0 %v4920
    %v5071 = vpop.f32.mrf.mxu0
    %v5072 = vadd.f32 %v5058, %v5071
    %v5073 = vpop.f32.mrf.mxu0
    %v5074 = vadd.f32 %v5060, %v5073
    %5075 = vdwg.mxu0
    %5076 = vmatpush.bf16.msra.mxu0 %v4916
    %5077 = vmatpush.bf16.msra.mxu0 %v4912
    %5078 = vmatpush.bf16.msra.mxu0 %v4908
    %5079 = vmatpush.bf16.msra.mxu0 %v4904
    %5080 = vmatpush.bf16.msra.mxu0 %v4900
    %5081 = vmatpush.bf16.msra.mxu0 %v4896
    %5082 = vmatpush.bf16.msra.mxu0 %v4892
    %5083 = vmatpush.bf16.msra.mxu0 %v4888
    %5084 = vmatmul.bf16.gmra.mxu0 %v4921
    %v5085 = vpop.f32.mrf.mxu0
    %v5086 = vadd.f32 %v5072, %v5085
    %v5087 = vpop.f32.mrf.mxu0
    %v5088 = vadd.f32 %v5074, %v5087
    %5089 = vdwg.mxu0
    %5090 = vmatpush.bf16.msra.mxu0 %v4821
    %5091 = vmatpush.bf16.msra.mxu0 %v4817
    %5092 = vmatpush.bf16.msra.mxu0 %v4813
    %5093 = vmatpush.bf16.msra.mxu0 %v4809
    %5094 = vmatpush.bf16.msra.mxu0 %v4805
    %5095 = vmatpush.bf16.msra.mxu0 %v4801
    %5096 = vmatpush.bf16.msra.mxu0 %v4797
    %5097 = vmatpush.bf16.msra.mxu0 %v4793
    %5098 = vmatmul.bf16.gmra.mxu0 %v4918
    %v5099 = vpop.f32.mrf.mxu0
    %v5100 = vadd.f32 0.0, %v5099
    %v5101 = vpop.f32.mrf.mxu0
    %v5102 = vadd.f32 0.0, %v5101
    %5103 = vdwg.mxu0
    %5104 = vmatpush.bf16.msra.mxu0 %v4853
    %5105 = vmatpush.bf16.msra.mxu0 %v4849
    %5106 = vmatpush.bf16.msra.mxu0 %v4845
    %5107 = vmatpush.bf16.msra.mxu0 %v4841
    %5108 = vmatpush.bf16.msra.mxu0 %v4837
    %5109 = vmatpush.bf16.msra.mxu0 %v4833
    %5110 = vmatpush.bf16.msra.mxu0 %v4829
    %5111 = vmatpush.bf16.msra.mxu0 %v4825
    %5112 = vmatmul.bf16.gmra.mxu0 %v4919
    %v5113 = vpop.f32.mrf.mxu0
    %v5114 = vadd.f32 %v5100, %v5113
    %v5115 = vpop.f32.mrf.mxu0
    %v5116 = vadd.f32 %v5102, %v5115
    %5117 = vdwg.mxu0
    %5118 = vmatpush.bf16.msra.mxu0 %v4885
    %5119 = vmatpush.bf16.msra.mxu0 %v4881
    %5120 = vmatpush.bf16.msra.mxu0 %v4877
    %5121 = vmatpush.bf16.msra.mxu0 %v4873
    %5122 = vmatpush.bf16.msra.mxu0 %v4869
    %5123 = vmatpush.bf16.msra.mxu0 %v4865
    %5124 = vmatpush.bf16.msra.mxu0 %v4861
    %5125 = vmatpush.bf16.msra.mxu0 %v4857
    %5126 = vmatmul.bf16.gmra.mxu0 %v4920
    %v5127 = vpop.f32.mrf.mxu0
    %v5128 = vadd.f32 %v5114, %v5127
    %v5129 = vpop.f32.mrf.mxu0
    %v5130 = vadd.f32 %v5116, %v5129
    %5131 = vdwg.mxu0
    %5132 = vmatpush.bf16.msra.mxu0 %v4917
    %5133 = vmatpush.bf16.msra.mxu0 %v4913
    %5134 = vmatpush.bf16.msra.mxu0 %v4909
    %5135 = vmatpush.bf16.msra.mxu0 %v4905
    %5136 = vmatpush.bf16.msra.mxu0 %v4901
    %5137 = vmatpush.bf16.msra.mxu0 %v4897
    %5138 = vmatpush.bf16.msra.mxu0 %v4893
    %5139 = vmatpush.bf16.msra.mxu0 %v4889
    %5140 = vmatmul.bf16.gmra.mxu0 %v4921
    %v5141 = vpop.f32.mrf.mxu0
    %v5142 = vadd.f32 %v5128, %v5141
    %v5143 = vpop.f32.mrf.mxu0
    %v5144 = vadd.f32 %v5130, %v5143
    %5145 = vdwg.mxu0
    %s5146 = scalar_lea.vmem [#allocation10], 16
    %v5147 = vld [vmem:[%s5146] sm:$0xf]
    %v5149 = vperm.slane %v5147, 0
    %v5150 = vperm.slane %v5147, 1
    %v5151 = vperm.slane %v5147, 2
    %v5152 = vperm.slane %v5147, 3
    %v5157 = vmul.f32 %v4974, %v5149
    %v5158 = vmul.f32 %v5030, %v5150
    %v5159 = vmul.f32 %v5086, %v5151
    %v5160 = vmul.f32 %v5142, %v5152
    %v5161 = vmul.f32 %v4976, %v5149
    %v5162 = vmul.f32 %v5032, %v5150
    %v5163 = vmul.f32 %v5088, %v5151
    %v5164 = vmul.f32 %v5144, %v5152
    %s5165 = scalar_lea.vmem [#allocation11], 16
    %v5166 = vld [vmem:[%s5165] sm:$0xf]
    %v5168 = vperm.slane %v5166, 0
    %v5169 = vperm.slane %v5166, 1
    %v5170 = vperm.slane %v5166, 2
    %v5171 = vperm.slane %v5166, 3
    %v5176 = vadd.f32 %v5157, %v5168
    %v5177 = vadd.f32 %v5158, %v5169
    %v5178 = vadd.f32 %v5159, %v5170
    %v5179 = vadd.f32 %v5160, %v5171
    %v5180 = vadd.f32 %v5161, %v5168
    %v5181 = vadd.f32 %v5162, %v5169
    %v5182 = vadd.f32 %v5163, %v5170
    %v5183 = vadd.f32 %v5164, %v5171
    %v5184 = vmax.f32 %v5176, 0.0
    %v5185 = vmax.f32 %v5177, 0.0
    %v5186 = vmax.f32 %v5178, 0.0
    %v5187 = vmax.f32 %v5179, 0.0
    %v5188 = vmax.f32 %v5180, 0.0
    %v5189 = vmax.f32 %v5181, 0.0
    %v5190 = vmax.f32 %v5182, 0.0
    %v5191 = vmax.f32 %v5183, 0.0
    %s5192 = scalar_lea.vmem [#allocation8], 2560
    %v5193 = vld [vmem:[%s5192] sm:$0xff]
    %v5194 = vld [vmem:[%s5192 + $0x8] sm:$0xff]
    %v5195 = vld [vmem:[%s5192 + $0x10] sm:$0xff]
    %v5196 = vld [vmem:[%s5192 + $0x18] sm:$0xff]
    %v5197 = vld [vmem:[%s5192 + $0x20] sm:$0xff]
    %v5198 = vld [vmem:[%s5192 + $0x28] sm:$0xff]
    %v5199 = vld [vmem:[%s5192 + $0x30] sm:$0xff]
    %v5200 = vld [vmem:[%s5192 + $0x38] sm:$0xff]
    %v5201 = vld [vmem:[%s5192 + $0x40] sm:$0xff]
    %v5202 = vld [vmem:[%s5192 + $0x48] sm:$0xff]
    %v5203 = vld [vmem:[%s5192 + $0x50] sm:$0xff]
    %v5204 = vld [vmem:[%s5192 + $0x58] sm:$0xff]
    %v5205 = vld [vmem:[%s5192 + $0x60] sm:$0xff]
    %v5206 = vld [vmem:[%s5192 + $0x68] sm:$0xff]
    %v5207 = vld [vmem:[%s5192 + $0x70] sm:$0xff]
    %v5208 = vld [vmem:[%s5192 + $0x78] sm:$0xff]
    %v5209 = vld [vmem:[%s5192 + $0x80] sm:$0xff]
    %v5210 = vld [vmem:[%s5192 + $0x88] sm:$0xff]
    %v5211 = vld [vmem:[%s5192 + $0x90] sm:$0xff]
    %v5212 = vld [vmem:[%s5192 + $0x98] sm:$0xff]
    %v5213 = vld [vmem:[%s5192 + $0xa0] sm:$0xff]
    %v5214 = vld [vmem:[%s5192 + $0xa8] sm:$0xff]
    %v5215 = vld [vmem:[%s5192 + $0xb0] sm:$0xff]
    %v5216 = vld [vmem:[%s5192 + $0xb8] sm:$0xff]
    %v5217 = vld [vmem:[%s5192 + $0xc0] sm:$0xff]
    %v5218 = vld [vmem:[%s5192 + $0xc8] sm:$0xff]
    %v5219 = vld [vmem:[%s5192 + $0xd0] sm:$0xff]
    %v5220 = vld [vmem:[%s5192 + $0xd8] sm:$0xff]
    %v5221 = vld [vmem:[%s5192 + $0xe0] sm:$0xff]
    %v5222 = vld [vmem:[%s5192 + $0xe8] sm:$0xff]
    %v5223 = vld [vmem:[%s5192 + $0xf0] sm:$0xff]
    %v5224 = vld [vmem:[%s5192 + $0xf8] sm:$0xff]
    %v5225 = vld [vmem:[%s5192 + $0x100] sm:$0xff]
    %v5226 = vld [vmem:[%s5192 + $0x108] sm:$0xff]
    %v5227 = vld [vmem:[%s5192 + $0x110] sm:$0xff]
    %v5228 = vld [vmem:[%s5192 + $0x118] sm:$0xff]
    %v5229 = vld [vmem:[%s5192 + $0x120] sm:$0xff]
    %v5230 = vld [vmem:[%s5192 + $0x128] sm:$0xff]
    %v5231 = vld [vmem:[%s5192 + $0x130] sm:$0xff]
    %v5232 = vld [vmem:[%s5192 + $0x138] sm:$0xff]
    %v5233 = vld [vmem:[%s5192 + $0x140] sm:$0xff]
    %v5234 = vld [vmem:[%s5192 + $0x148] sm:$0xff]
    %v5235 = vld [vmem:[%s5192 + $0x150] sm:$0xff]
    %v5236 = vld [vmem:[%s5192 + $0x158] sm:$0xff]
    %v5237 = vld [vmem:[%s5192 + $0x160] sm:$0xff]
    %v5238 = vld [vmem:[%s5192 + $0x168] sm:$0xff]
    %v5239 = vld [vmem:[%s5192 + $0x170] sm:$0xff]
    %v5240 = vld [vmem:[%s5192 + $0x178] sm:$0xff]
    %v5241 = vld [vmem:[%s5192 + $0x180] sm:$0xff]
    %v5242 = vld [vmem:[%s5192 + $0x188] sm:$0xff]
    %v5243 = vld [vmem:[%s5192 + $0x190] sm:$0xff]
    %v5244 = vld [vmem:[%s5192 + $0x198] sm:$0xff]
    %v5245 = vld [vmem:[%s5192 + $0x1a0] sm:$0xff]
    %v5246 = vld [vmem:[%s5192 + $0x1a8] sm:$0xff]
    %v5247 = vld [vmem:[%s5192 + $0x1b0] sm:$0xff]
    %v5248 = vld [vmem:[%s5192 + $0x1b8] sm:$0xff]
    %v5249 = vld [vmem:[%s5192 + $0x1c0] sm:$0xff]
    %v5250 = vld [vmem:[%s5192 + $0x1c8] sm:$0xff]
    %v5251 = vld [vmem:[%s5192 + $0x1d0] sm:$0xff]
    %v5252 = vld [vmem:[%s5192 + $0x1d8] sm:$0xff]
    %v5253 = vld [vmem:[%s5192 + $0x1e0] sm:$0xff]
    %v5254 = vld [vmem:[%s5192 + $0x1e8] sm:$0xff]
    %v5255 = vld [vmem:[%s5192 + $0x1f0] sm:$0xff]
    %v5256 = vld [vmem:[%s5192 + $0x1f8] sm:$0xff]
    %v5257 = vunpack.c.0.s8 %v5193
    %v5258 = vunpack.c.0.s8 %v5194
    %v5259 = vunpack.c.0.s8 %v5195
    %v5260 = vunpack.c.0.s8 %v5196
    %v5261 = vunpack.c.1.s8 %v5193
    %v5262 = vunpack.c.1.s8 %v5194
    %v5263 = vunpack.c.1.s8 %v5195
    %v5264 = vunpack.c.1.s8 %v5196
    %v5265 = vunpack.c.2.s8 %v5193
    %v5266 = vunpack.c.2.s8 %v5194
    %v5267 = vunpack.c.2.s8 %v5195
    %v5268 = vunpack.c.2.s8 %v5196
    %v5269 = vunpack.c.3.s8 %v5193
    %v5270 = vunpack.c.3.s8 %v5194
    %v5271 = vunpack.c.3.s8 %v5195
    %v5272 = vunpack.c.3.s8 %v5196
    %v5273 = vunpack.c.0.s8 %v5197
    %v5274 = vunpack.c.0.s8 %v5198
    %v5275 = vunpack.c.0.s8 %v5199
    %v5276 = vunpack.c.0.s8 %v5200
    %v5277 = vunpack.c.1.s8 %v5197
    %v5278 = vunpack.c.1.s8 %v5198
    %v5279 = vunpack.c.1.s8 %v5199
    %v5280 = vunpack.c.1.s8 %v5200
    %v5281 = vunpack.c.2.s8 %v5197
    %v5282 = vunpack.c.2.s8 %v5198
    %v5283 = vunpack.c.2.s8 %v5199
    %v5284 = vunpack.c.2.s8 %v5200
    %v5285 = vunpack.c.3.s8 %v5197
    %v5286 = vunpack.c.3.s8 %v5198
    %v5287 = vunpack.c.3.s8 %v5199
    %v5288 = vunpack.c.3.s8 %v5200
    %v5289 = vunpack.c.0.s8 %v5201
    %v5290 = vunpack.c.0.s8 %v5202
    %v5291 = vunpack.c.0.s8 %v5203
    %v5292 = vunpack.c.0.s8 %v5204
    %v5293 = vunpack.c.1.s8 %v5201
    %v5294 = vunpack.c.1.s8 %v5202
    %v5295 = vunpack.c.1.s8 %v5203
    %v5296 = vunpack.c.1.s8 %v5204
    %v5297 = vunpack.c.2.s8 %v5201
    %v5298 = vunpack.c.2.s8 %v5202
    %v5299 = vunpack.c.2.s8 %v5203
    %v5300 = vunpack.c.2.s8 %v5204
    %v5301 = vunpack.c.3.s8 %v5201
    %v5302 = vunpack.c.3.s8 %v5202
    %v5303 = vunpack.c.3.s8 %v5203
    %v5304 = vunpack.c.3.s8 %v5204
    %v5305 = vunpack.c.0.s8 %v5205
    %v5306 = vunpack.c.0.s8 %v5206
    %v5307 = vunpack.c.0.s8 %v5207
    %v5308 = vunpack.c.0.s8 %v5208
    %v5309 = vunpack.c.1.s8 %v5205
    %v5310 = vunpack.c.1.s8 %v5206
    %v5311 = vunpack.c.1.s8 %v5207
    %v5312 = vunpack.c.1.s8 %v5208
    %v5313 = vunpack.c.2.s8 %v5205
    %v5314 = vunpack.c.2.s8 %v5206
    %v5315 = vunpack.c.2.s8 %v5207
    %v5316 = vunpack.c.2.s8 %v5208
    %v5317 = vunpack.c.3.s8 %v5205
    %v5318 = vunpack.c.3.s8 %v5206
    %v5319 = vunpack.c.3.s8 %v5207
    %v5320 = vunpack.c.3.s8 %v5208
    %v5321 = vunpack.c.0.s8 %v5209
    %v5322 = vunpack.c.0.s8 %v5210
    %v5323 = vunpack.c.0.s8 %v5211
    %v5324 = vunpack.c.0.s8 %v5212
    %v5325 = vunpack.c.1.s8 %v5209
    %v5326 = vunpack.c.1.s8 %v5210
    %v5327 = vunpack.c.1.s8 %v5211
    %v5328 = vunpack.c.1.s8 %v5212
    %v5329 = vunpack.c.2.s8 %v5209
    %v5330 = vunpack.c.2.s8 %v5210
    %v5331 = vunpack.c.2.s8 %v5211
    %v5332 = vunpack.c.2.s8 %v5212
    %v5333 = vunpack.c.3.s8 %v5209
    %v5334 = vunpack.c.3.s8 %v5210
    %v5335 = vunpack.c.3.s8 %v5211
    %v5336 = vunpack.c.3.s8 %v5212
    %v5337 = vunpack.c.0.s8 %v5213
    %v5338 = vunpack.c.0.s8 %v5214
    %v5339 = vunpack.c.0.s8 %v5215
    %v5340 = vunpack.c.0.s8 %v5216
    %v5341 = vunpack.c.1.s8 %v5213
    %v5342 = vunpack.c.1.s8 %v5214
    %v5343 = vunpack.c.1.s8 %v5215
    %v5344 = vunpack.c.1.s8 %v5216
    %v5345 = vunpack.c.2.s8 %v5213
    %v5346 = vunpack.c.2.s8 %v5214
    %v5347 = vunpack.c.2.s8 %v5215
    %v5348 = vunpack.c.2.s8 %v5216
    %v5349 = vunpack.c.3.s8 %v5213
    %v5350 = vunpack.c.3.s8 %v5214
    %v5351 = vunpack.c.3.s8 %v5215
    %v5352 = vunpack.c.3.s8 %v5216
    %v5353 = vunpack.c.0.s8 %v5217
    %v5354 = vunpack.c.0.s8 %v5218
    %v5355 = vunpack.c.0.s8 %v5219
    %v5356 = vunpack.c.0.s8 %v5220
    %v5357 = vunpack.c.1.s8 %v5217
    %v5358 = vunpack.c.1.s8 %v5218
    %v5359 = vunpack.c.1.s8 %v5219
    %v5360 = vunpack.c.1.s8 %v5220
    %v5361 = vunpack.c.2.s8 %v5217
    %v5362 = vunpack.c.2.s8 %v5218
    %v5363 = vunpack.c.2.s8 %v5219
    %v5364 = vunpack.c.2.s8 %v5220
    %v5365 = vunpack.c.3.s8 %v5217
    %v5366 = vunpack.c.3.s8 %v5218
    %v5367 = vunpack.c.3.s8 %v5219
    %v5368 = vunpack.c.3.s8 %v5220
    %v5369 = vunpack.c.0.s8 %v5221
    %v5370 = vunpack.c.0.s8 %v5222
    %v5371 = vunpack.c.0.s8 %v5223
    %v5372 = vunpack.c.0.s8 %v5224
    %v5373 = vunpack.c.1.s8 %v5221
    %v5374 = vunpack.c.1.s8 %v5222
    %v5375 = vunpack.c.1.s8 %v5223
    %v5376 = vunpack.c.1.s8 %v5224
    %v5377 = vunpack.c.2.s8 %v5221
    %v5378 = vunpack.c.2.s8 %v5222
    %v5379 = vunpack.c.2.s8 %v5223
    %v5380 = vunpack.c.2.s8 %v5224
    %v5381 = vunpack.c.3.s8 %v5221
    %v5382 = vunpack.c.3.s8 %v5222
    %v5383 = vunpack.c.3.s8 %v5223
    %v5384 = vunpack.c.3.s8 %v5224
    %v5385 = vunpack.c.0.s8 %v5225
    %v5386 = vunpack.c.0.s8 %v5226
    %v5387 = vunpack.c.0.s8 %v5227
    %v5388 = vunpack.c.0.s8 %v5228
    %v5389 = vunpack.c.1.s8 %v5225
    %v5390 = vunpack.c.1.s8 %v5226
    %v5391 = vunpack.c.1.s8 %v5227
    %v5392 = vunpack.c.1.s8 %v5228
    %v5393 = vunpack.c.2.s8 %v5225
    %v5394 = vunpack.c.2.s8 %v5226
    %v5395 = vunpack.c.2.s8 %v5227
    %v5396 = vunpack.c.2.s8 %v5228
    %v5397 = vunpack.c.3.s8 %v5225
    %v5398 = vunpack.c.3.s8 %v5226
    %v5399 = vunpack.c.3.s8 %v5227
    %v5400 = vunpack.c.3.s8 %v5228
    %v5401 = vunpack.c.0.s8 %v5229
    %v5402 = vunpack.c.0.s8 %v5230
    %v5403 = vunpack.c.0.s8 %v5231
    %v5404 = vunpack.c.0.s8 %v5232
    %v5405 = vunpack.c.1.s8 %v5229
    %v5406 = vunpack.c.1.s8 %v5230
    %v5407 = vunpack.c.1.s8 %v5231
    %v5408 = vunpack.c.1.s8 %v5232
    %v5409 = vunpack.c.2.s8 %v5229
    %v5410 = vunpack.c.2.s8 %v5230
    %v5411 = vunpack.c.2.s8 %v5231
    %v5412 = vunpack.c.2.s8 %v5232
    %v5413 = vunpack.c.3.s8 %v5229
    %v5414 = vunpack.c.3.s8 %v5230
    %v5415 = vunpack.c.3.s8 %v5231
    %v5416 = vunpack.c.3.s8 %v5232
    %v5417 = vunpack.c.0.s8 %v5233
    %v5418 = vunpack.c.0.s8 %v5234
    %v5419 = vunpack.c.0.s8 %v5235
    %v5420 = vunpack.c.0.s8 %v5236
    %v5421 = vunpack.c.1.s8 %v5233
    %v5422 = vunpack.c.1.s8 %v5234
    %v5423 = vunpack.c.1.s8 %v5235
    %v5424 = vunpack.c.1.s8 %v5236
    %v5425 = vunpack.c.2.s8 %v5233
    %v5426 = vunpack.c.2.s8 %v5234
    %v5427 = vunpack.c.2.s8 %v5235
    %v5428 = vunpack.c.2.s8 %v5236
    %v5429 = vunpack.c.3.s8 %v5233
    %v5430 = vunpack.c.3.s8 %v5234
    %v5431 = vunpack.c.3.s8 %v5235
    %v5432 = vunpack.c.3.s8 %v5236
    %v5433 = vunpack.c.0.s8 %v5237
    %v5434 = vunpack.c.0.s8 %v5238
    %v5435 = vunpack.c.0.s8 %v5239
    %v5436 = vunpack.c.0.s8 %v5240
    %v5437 = vunpack.c.1.s8 %v5237
    %v5438 = vunpack.c.1.s8 %v5238
    %v5439 = vunpack.c.1.s8 %v5239
    %v5440 = vunpack.c.1.s8 %v5240
    %v5441 = vunpack.c.2.s8 %v5237
    %v5442 = vunpack.c.2.s8 %v5238
    %v5443 = vunpack.c.2.s8 %v5239
    %v5444 = vunpack.c.2.s8 %v5240
    %v5445 = vunpack.c.3.s8 %v5237
    %v5446 = vunpack.c.3.s8 %v5238
    %v5447 = vunpack.c.3.s8 %v5239
    %v5448 = vunpack.c.3.s8 %v5240
    %v5449 = vunpack.c.0.s8 %v5241
    %v5450 = vunpack.c.0.s8 %v5242
    %v5451 = vunpack.c.0.s8 %v5243
    %v5452 = vunpack.c.0.s8 %v5244
    %v5453 = vunpack.c.1.s8 %v5241
    %v5454 = vunpack.c.1.s8 %v5242
    %v5455 = vunpack.c.1.s8 %v5243
    %v5456 = vunpack.c.1.s8 %v5244
    %v5457 = vunpack.c.2.s8 %v5241
    %v5458 = vunpack.c.2.s8 %v5242
    %v5459 = vunpack.c.2.s8 %v5243
    %v5460 = vunpack.c.2.s8 %v5244
    %v5461 = vunpack.c.3.s8 %v5241
    %v5462 = vunpack.c.3.s8 %v5242
    %v5463 = vunpack.c.3.s8 %v5243
    %v5464 = vunpack.c.3.s8 %v5244
    %v5465 = vunpack.c.0.s8 %v5245
    %v5466 = vunpack.c.0.s8 %v5246
    %v5467 = vunpack.c.0.s8 %v5247
    %v5468 = vunpack.c.0.s8 %v5248
    %v5469 = vunpack.c.1.s8 %v5245
    %v5470 = vunpack.c.1.s8 %v5246
    %v5471 = vunpack.c.1.s8 %v5247
    %v5472 = vunpack.c.1.s8 %v5248
    %v5473 = vunpack.c.2.s8 %v5245
    %v5474 = vunpack.c.2.s8 %v5246
    %v5475 = vunpack.c.2.s8 %v5247
    %v5476 = vunpack.c.2.s8 %v5248
    %v5477 = vunpack.c.3.s8 %v5245
    %v5478 = vunpack.c.3.s8 %v5246
    %v5479 = vunpack.c.3.s8 %v5247
    %v5480 = vunpack.c.3.s8 %v5248
    %v5481 = vunpack.c.0.s8 %v5249
    %v5482 = vunpack.c.0.s8 %v5250
    %v5483 = vunpack.c.0.s8 %v5251
    %v5484 = vunpack.c.0.s8 %v5252
    %v5485 = vunpack.c.1.s8 %v5249
    %v5486 = vunpack.c.1.s8 %v5250
    %v5487 = vunpack.c.1.s8 %v5251
    %v5488 = vunpack.c.1.s8 %v5252
    %v5489 = vunpack.c.2.s8 %v5249
    %v5490 = vunpack.c.2.s8 %v5250
    %v5491 = vunpack.c.2.s8 %v5251
    %v5492 = vunpack.c.2.s8 %v5252
    %v5493 = vunpack.c.3.s8 %v5249
    %v5494 = vunpack.c.3.s8 %v5250
    %v5495 = vunpack.c.3.s8 %v5251
    %v5496 = vunpack.c.3.s8 %v5252
    %v5497 = vunpack.c.0.s8 %v5253
    %v5498 = vunpack.c.0.s8 %v5254
    %v5499 = vunpack.c.0.s8 %v5255
    %v5500 = vunpack.c.0.s8 %v5256
    %v5501 = vunpack.c.1.s8 %v5253
    %v5502 = vunpack.c.1.s8 %v5254
    %v5503 = vunpack.c.1.s8 %v5255
    %v5504 = vunpack.c.1.s8 %v5256
    %v5505 = vunpack.c.2.s8 %v5253
    %v5506 = vunpack.c.2.s8 %v5254
    %v5507 = vunpack.c.2.s8 %v5255
    %v5508 = vunpack.c.2.s8 %v5256
    %v5509 = vunpack.c.3.s8 %v5253
    %v5510 = vunpack.c.3.s8 %v5254
    %v5511 = vunpack.c.3.s8 %v5255
    %v5512 = vunpack.c.3.s8 %v5256
    %v5513 = vcvt.s32.f32 %v5257
    %v5514 = vcvt.s32.f32 %v5258
    %v5515 = vcvt.s32.f32 %v5259
    %v5516 = vcvt.s32.f32 %v5260
    %v5517 = vcvt.s32.f32 %v5261
    %v5518 = vcvt.s32.f32 %v5262
    %v5519 = vcvt.s32.f32 %v5263
    %v5520 = vcvt.s32.f32 %v5264
    %v5521 = vcvt.s32.f32 %v5265
    %v5522 = vcvt.s32.f32 %v5266
    %v5523 = vcvt.s32.f32 %v5267
    %v5524 = vcvt.s32.f32 %v5268
    %v5525 = vcvt.s32.f32 %v5269
    %v5526 = vcvt.s32.f32 %v5270
    %v5527 = vcvt.s32.f32 %v5271
    %v5528 = vcvt.s32.f32 %v5272
    %v5529 = vcvt.s32.f32 %v5273
    %v5530 = vcvt.s32.f32 %v5274
    %v5531 = vcvt.s32.f32 %v5275
    %v5532 = vcvt.s32.f32 %v5276
    %v5533 = vcvt.s32.f32 %v5277
    %v5534 = vcvt.s32.f32 %v5278
    %v5535 = vcvt.s32.f32 %v5279
    %v5536 = vcvt.s32.f32 %v5280
    %v5537 = vcvt.s32.f32 %v5281
    %v5538 = vcvt.s32.f32 %v5282
    %v5539 = vcvt.s32.f32 %v5283
    %v5540 = vcvt.s32.f32 %v5284
    %v5541 = vcvt.s32.f32 %v5285
    %v5542 = vcvt.s32.f32 %v5286
    %v5543 = vcvt.s32.f32 %v5287
    %v5544 = vcvt.s32.f32 %v5288
    %v5545 = vcvt.s32.f32 %v5289
    %v5546 = vcvt.s32.f32 %v5290
    %v5547 = vcvt.s32.f32 %v5291
    %v5548 = vcvt.s32.f32 %v5292
    %v5549 = vcvt.s32.f32 %v5293
    %v5550 = vcvt.s32.f32 %v5294
    %v5551 = vcvt.s32.f32 %v5295
    %v5552 = vcvt.s32.f32 %v5296
    %v5553 = vcvt.s32.f32 %v5297
    %v5554 = vcvt.s32.f32 %v5298
    %v5555 = vcvt.s32.f32 %v5299
    %v5556 = vcvt.s32.f32 %v5300
    %v5557 = vcvt.s32.f32 %v5301
    %v5558 = vcvt.s32.f32 %v5302
    %v5559 = vcvt.s32.f32 %v5303
    %v5560 = vcvt.s32.f32 %v5304
    %v5561 = vcvt.s32.f32 %v5305
    %v5562 = vcvt.s32.f32 %v5306
    %v5563 = vcvt.s32.f32 %v5307
    %v5564 = vcvt.s32.f32 %v5308
    %v5565 = vcvt.s32.f32 %v5309
    %v5566 = vcvt.s32.f32 %v5310
    %v5567 = vcvt.s32.f32 %v5311
    %v5568 = vcvt.s32.f32 %v5312
    %v5569 = vcvt.s32.f32 %v5313
    %v5570 = vcvt.s32.f32 %v5314
    %v5571 = vcvt.s32.f32 %v5315
    %v5572 = vcvt.s32.f32 %v5316
    %v5573 = vcvt.s32.f32 %v5317
    %v5574 = vcvt.s32.f32 %v5318
    %v5575 = vcvt.s32.f32 %v5319
    %v5576 = vcvt.s32.f32 %v5320
    %v5577 = vcvt.s32.f32 %v5321
    %v5578 = vcvt.s32.f32 %v5322
    %v5579 = vcvt.s32.f32 %v5323
    %v5580 = vcvt.s32.f32 %v5324
    %v5581 = vcvt.s32.f32 %v5325
    %v5582 = vcvt.s32.f32 %v5326
    %v5583 = vcvt.s32.f32 %v5327
    %v5584 = vcvt.s32.f32 %v5328
    %v5585 = vcvt.s32.f32 %v5329
    %v5586 = vcvt.s32.f32 %v5330
    %v5587 = vcvt.s32.f32 %v5331
    %v5588 = vcvt.s32.f32 %v5332
    %v5589 = vcvt.s32.f32 %v5333
    %v5590 = vcvt.s32.f32 %v5334
    %v5591 = vcvt.s32.f32 %v5335
    %v5592 = vcvt.s32.f32 %v5336
    %v5593 = vcvt.s32.f32 %v5337
    %v5594 = vcvt.s32.f32 %v5338
    %v5595 = vcvt.s32.f32 %v5339
    %v5596 = vcvt.s32.f32 %v5340
    %v5597 = vcvt.s32.f32 %v5341
    %v5598 = vcvt.s32.f32 %v5342
    %v5599 = vcvt.s32.f32 %v5343
    %v5600 = vcvt.s32.f32 %v5344
    %v5601 = vcvt.s32.f32 %v5345
    %v5602 = vcvt.s32.f32 %v5346
    %v5603 = vcvt.s32.f32 %v5347
    %v5604 = vcvt.s32.f32 %v5348
    %v5605 = vcvt.s32.f32 %v5349
    %v5606 = vcvt.s32.f32 %v5350
    %v5607 = vcvt.s32.f32 %v5351
    %v5608 = vcvt.s32.f32 %v5352
    %v5609 = vcvt.s32.f32 %v5353
    %v5610 = vcvt.s32.f32 %v5354
    %v5611 = vcvt.s32.f32 %v5355
    %v5612 = vcvt.s32.f32 %v5356
    %v5613 = vcvt.s32.f32 %v5357
    %v5614 = vcvt.s32.f32 %v5358
    %v5615 = vcvt.s32.f32 %v5359
    %v5616 = vcvt.s32.f32 %v5360
    %v5617 = vcvt.s32.f32 %v5361
    %v5618 = vcvt.s32.f32 %v5362
    %v5619 = vcvt.s32.f32 %v5363
    %v5620 = vcvt.s32.f32 %v5364
    %v5621 = vcvt.s32.f32 %v5365
    %v5622 = vcvt.s32.f32 %v5366
    %v5623 = vcvt.s32.f32 %v5367
    %v5624 = vcvt.s32.f32 %v5368
    %v5625 = vcvt.s32.f32 %v5369
    %v5626 = vcvt.s32.f32 %v5370
    %v5627 = vcvt.s32.f32 %v5371
    %v5628 = vcvt.s32.f32 %v5372
    %v5629 = vcvt.s32.f32 %v5373
    %v5630 = vcvt.s32.f32 %v5374
    %v5631 = vcvt.s32.f32 %v5375
    %v5632 = vcvt.s32.f32 %v5376
    %v5633 = vcvt.s32.f32 %v5377
    %v5634 = vcvt.s32.f32 %v5378
    %v5635 = vcvt.s32.f32 %v5379
    %v5636 = vcvt.s32.f32 %v5380
    %v5637 = vcvt.s32.f32 %v5381
    %v5638 = vcvt.s32.f32 %v5382
    %v5639 = vcvt.s32.f32 %v5383
    %v5640 = vcvt.s32.f32 %v5384
    %v5641 = vcvt.s32.f32 %v5385
    %v5642 = vcvt.s32.f32 %v5386
    %v5643 = vcvt.s32.f32 %v5387
    %v5644 = vcvt.s32.f32 %v5388
    %v5645 = vcvt.s32.f32 %v5389
    %v5646 = vcvt.s32.f32 %v5390
    %v5647 = vcvt.s32.f32 %v5391
    %v5648 = vcvt.s32.f32 %v5392
    %v5649 = vcvt.s32.f32 %v5393
    %v5650 = vcvt.s32.f32 %v5394
    %v5651 = vcvt.s32.f32 %v5395
    %v5652 = vcvt.s32.f32 %v5396
    %v5653 = vcvt.s32.f32 %v5397
    %v5654 = vcvt.s32.f32 %v5398
    %v5655 = vcvt.s32.f32 %v5399
    %v5656 = vcvt.s32.f32 %v5400
    %v5657 = vcvt.s32.f32 %v5401
    %v5658 = vcvt.s32.f32 %v5402
    %v5659 = vcvt.s32.f32 %v5403
    %v5660 = vcvt.s32.f32 %v5404
    %v5661 = vcvt.s32.f32 %v5405
    %v5662 = vcvt.s32.f32 %v5406
    %v5663 = vcvt.s32.f32 %v5407
    %v5664 = vcvt.s32.f32 %v5408
    %v5665 = vcvt.s32.f32 %v5409
    %v5666 = vcvt.s32.f32 %v5410
    %v5667 = vcvt.s32.f32 %v5411
    %v5668 = vcvt.s32.f32 %v5412
    %v5669 = vcvt.s32.f32 %v5413
    %v5670 = vcvt.s32.f32 %v5414
    %v5671 = vcvt.s32.f32 %v5415
    %v5672 = vcvt.s32.f32 %v5416
    %v5673 = vcvt.s32.f32 %v5417
    %v5674 = vcvt.s32.f32 %v5418
    %v5675 = vcvt.s32.f32 %v5419
    %v5676 = vcvt.s32.f32 %v5420
    %v5677 = vcvt.s32.f32 %v5421
    %v5678 = vcvt.s32.f32 %v5422
    %v5679 = vcvt.s32.f32 %v5423
    %v5680 = vcvt.s32.f32 %v5424
    %v5681 = vcvt.s32.f32 %v5425
    %v5682 = vcvt.s32.f32 %v5426
    %v5683 = vcvt.s32.f32 %v5427
    %v5684 = vcvt.s32.f32 %v5428
    %v5685 = vcvt.s32.f32 %v5429
    %v5686 = vcvt.s32.f32 %v5430
    %v5687 = vcvt.s32.f32 %v5431
    %v5688 = vcvt.s32.f32 %v5432
    %v5689 = vcvt.s32.f32 %v5433
    %v5690 = vcvt.s32.f32 %v5434
    %v5691 = vcvt.s32.f32 %v5435
    %v5692 = vcvt.s32.f32 %v5436
    %v5693 = vcvt.s32.f32 %v5437
    %v5694 = vcvt.s32.f32 %v5438
    %v5695 = vcvt.s32.f32 %v5439
    %v5696 = vcvt.s32.f32 %v5440
    %v5697 = vcvt.s32.f32 %v5441
    %v5698 = vcvt.s32.f32 %v5442
    %v5699 = vcvt.s32.f32 %v5443
    %v5700 = vcvt.s32.f32 %v5444
    %v5701 = vcvt.s32.f32 %v5445
    %v5702 = vcvt.s32.f32 %v5446
    %v5703 = vcvt.s32.f32 %v5447
    %v5704 = vcvt.s32.f32 %v5448
    %v5705 = vcvt.s32.f32 %v5449
    %v5706 = vcvt.s32.f32 %v5450
    %v5707 = vcvt.s32.f32 %v5451
    %v5708 = vcvt.s32.f32 %v5452
    %v5709 = vcvt.s32.f32 %v5453
    %v5710 = vcvt.s32.f32 %v5454
    %v5711 = vcvt.s32.f32 %v5455
    %v5712 = vcvt.s32.f32 %v5456
    %v5713 = vcvt.s32.f32 %v5457
    %v5714 = vcvt.s32.f32 %v5458
    %v5715 = vcvt.s32.f32 %v5459
    %v5716 = vcvt.s32.f32 %v5460
    %v5717 = vcvt.s32.f32 %v5461
    %v5718 = vcvt.s32.f32 %v5462
    %v5719 = vcvt.s32.f32 %v5463
    %v5720 = vcvt.s32.f32 %v5464
    %v5721 = vcvt.s32.f32 %v5465
    %v5722 = vcvt.s32.f32 %v5466
    %v5723 = vcvt.s32.f32 %v5467
    %v5724 = vcvt.s32.f32 %v5468
    %v5725 = vcvt.s32.f32 %v5469
    %v5726 = vcvt.s32.f32 %v5470
    %v5727 = vcvt.s32.f32 %v5471
    %v5728 = vcvt.s32.f32 %v5472
    %v5729 = vcvt.s32.f32 %v5473
    %v5730 = vcvt.s32.f32 %v5474
    %v5731 = vcvt.s32.f32 %v5475
    %v5732 = vcvt.s32.f32 %v5476
    %v5733 = vcvt.s32.f32 %v5477
    %v5734 = vcvt.s32.f32 %v5478
    %v5735 = vcvt.s32.f32 %v5479
    %v5736 = vcvt.s32.f32 %v5480
    %v5737 = vcvt.s32.f32 %v5481
    %v5738 = vcvt.s32.f32 %v5482
    %v5739 = vcvt.s32.f32 %v5483
    %v5740 = vcvt.s32.f32 %v5484
    %v5741 = vcvt.s32.f32 %v5485
    %v5742 = vcvt.s32.f32 %v5486
    %v5743 = vcvt.s32.f32 %v5487
    %v5744 = vcvt.s32.f32 %v5488
    %v5745 = vcvt.s32.f32 %v5489
    %v5746 = vcvt.s32.f32 %v5490
    %v5747 = vcvt.s32.f32 %v5491
    %v5748 = vcvt.s32.f32 %v5492
    %v5749 = vcvt.s32.f32 %v5493
    %v5750 = vcvt.s32.f32 %v5494
    %v5751 = vcvt.s32.f32 %v5495
    %v5752 = vcvt.s32.f32 %v5496
    %v5753 = vcvt.s32.f32 %v5497
    %v5754 = vcvt.s32.f32 %v5498
    %v5755 = vcvt.s32.f32 %v5499
    %v5756 = vcvt.s32.f32 %v5500
    %v5757 = vcvt.s32.f32 %v5501
    %v5758 = vcvt.s32.f32 %v5502
    %v5759 = vcvt.s32.f32 %v5503
    %v5760 = vcvt.s32.f32 %v5504
    %v5761 = vcvt.s32.f32 %v5505
    %v5762 = vcvt.s32.f32 %v5506
    %v5763 = vcvt.s32.f32 %v5507
    %v5764 = vcvt.s32.f32 %v5508
    %v5765 = vcvt.s32.f32 %v5509
    %v5766 = vcvt.s32.f32 %v5510
    %v5767 = vcvt.s32.f32 %v5511
    %v5768 = vcvt.s32.f32 %v5512
    %v5769 = vpack.c.bf16 %v5517, %v5513
    %v5770 = vpack.c.bf16 %v5518, %v5514
    %v5771 = vpack.c.bf16 %v5519, %v5515
    %v5772 = vpack.c.bf16 %v5520, %v5516
    %v5773 = vpack.c.bf16 %v5525, %v5521
    %v5774 = vpack.c.bf16 %v5526, %v5522
    %v5775 = vpack.c.bf16 %v5527, %v5523
    %v5776 = vpack.c.bf16 %v5528, %v5524
    %v5777 = vpack.c.bf16 %v5533, %v5529
    %v5778 = vpack.c.bf16 %v5534, %v5530
    %v5779 = vpack.c.bf16 %v5535, %v5531
    %v5780 = vpack.c.bf16 %v5536, %v5532
    %v5781 = vpack.c.bf16 %v5541, %v5537
    %v5782 = vpack.c.bf16 %v5542, %v5538
    %v5783 = vpack.c.bf16 %v5543, %v5539
    %v5784 = vpack.c.bf16 %v5544, %v5540
    %v5785 = vpack.c.bf16 %v5549, %v5545
    %v5786 = vpack.c.bf16 %v5550, %v5546
    %v5787 = vpack.c.bf16 %v5551, %v5547
    %v5788 = vpack.c.bf16 %v5552, %v5548
    %v5789 = vpack.c.bf16 %v5557, %v5553
    %v5790 = vpack.c.bf16 %v5558, %v5554
    %v5791 = vpack.c.bf16 %v5559, %v5555
    %v5792 = vpack.c.bf16 %v5560, %v5556
    %v5793 = vpack.c.bf16 %v5565, %v5561
    %v5794 = vpack.c.bf16 %v5566, %v5562
    %v5795 = vpack.c.bf16 %v5567, %v5563
    %v5796 = vpack.c.bf16 %v5568, %v5564
    %v5797 = vpack.c.bf16 %v5573, %v5569
    %v5798 = vpack.c.bf16 %v5574, %v5570
    %v5799 = vpack.c.bf16 %v5575, %v5571
    %v5800 = vpack.c.bf16 %v5576, %v5572
    %v5801 = vpack.c.bf16 %v5581, %v5577
    %v5802 = vpack.c.bf16 %v5582, %v5578
    %v5803 = vpack.c.bf16 %v5583, %v5579
    %v5804 = vpack.c.bf16 %v5584, %v5580
    %v5805 = vpack.c.bf16 %v5589, %v5585
    %v5806 = vpack.c.bf16 %v5590, %v5586
    %v5807 = vpack.c.bf16 %v5591, %v5587
    %v5808 = vpack.c.bf16 %v5592, %v5588
    %v5809 = vpack.c.bf16 %v5597, %v5593
    %v5810 = vpack.c.bf16 %v5598, %v5594
    %v5811 = vpack.c.bf16 %v5599, %v5595
    %v5812 = vpack.c.bf16 %v5600, %v5596
    %v5813 = vpack.c.bf16 %v5605, %v5601
    %v5814 = vpack.c.bf16 %v5606, %v5602
    %v5815 = vpack.c.bf16 %v5607, %v5603
    %v5816 = vpack.c.bf16 %v5608, %v5604
    %v5817 = vpack.c.bf16 %v5613, %v5609
    %v5818 = vpack.c.bf16 %v5614, %v5610
    %v5819 = vpack.c.bf16 %v5615, %v5611
    %v5820 = vpack.c.bf16 %v5616, %v5612
    %v5821 = vpack.c.bf16 %v5621, %v5617
    %v5822 = vpack.c.bf16 %v5622, %v5618
    %v5823 = vpack.c.bf16 %v5623, %v5619
    %v5824 = vpack.c.bf16 %v5624, %v5620
    %v5825 = vpack.c.bf16 %v5629, %v5625
    %v5826 = vpack.c.bf16 %v5630, %v5626
    %v5827 = vpack.c.bf16 %v5631, %v5627
    %v5828 = vpack.c.bf16 %v5632, %v5628
    %v5829 = vpack.c.bf16 %v5637, %v5633
    %v5830 = vpack.c.bf16 %v5638, %v5634
    %v5831 = vpack.c.bf16 %v5639, %v5635
    %v5832 = vpack.c.bf16 %v5640, %v5636
    %v5833 = vpack.c.bf16 %v5645, %v5641
    %v5834 = vpack.c.bf16 %v5646, %v5642
    %v5835 = vpack.c.bf16 %v5647, %v5643
    %v5836 = vpack.c.bf16 %v5648, %v5644
    %v5837 = vpack.c.bf16 %v5653, %v5649
    %v5838 = vpack.c.bf16 %v5654, %v5650
    %v5839 = vpack.c.bf16 %v5655, %v5651
    %v5840 = vpack.c.bf16 %v5656, %v5652
    %v5841 = vpack.c.bf16 %v5661, %v5657
    %v5842 = vpack.c.bf16 %v5662, %v5658
    %v5843 = vpack.c.bf16 %v5663, %v5659
    %v5844 = vpack.c.bf16 %v5664, %v5660
    %v5845 = vpack.c.bf16 %v5669, %v5665
    %v5846 = vpack.c.bf16 %v5670, %v5666
    %v5847 = vpack.c.bf16 %v5671, %v5667
    %v5848 = vpack.c.bf16 %v5672, %v5668
    %v5849 = vpack.c.bf16 %v5677, %v5673
    %v5850 = vpack.c.bf16 %v5678, %v5674
    %v5851 = vpack.c.bf16 %v5679, %v5675
    %v5852 = vpack.c.bf16 %v5680, %v5676
    %v5853 = vpack.c.bf16 %v5685, %v5681
    %v5854 = vpack.c.bf16 %v5686, %v5682
    %v5855 = vpack.c.bf16 %v5687, %v5683
    %v5856 = vpack.c.bf16 %v5688, %v5684
    %v5857 = vpack.c.bf16 %v5693, %v5689
    %v5858 = vpack.c.bf16 %v5694, %v5690
    %v5859 = vpack.c.bf16 %v5695, %v5691
    %v5860 = vpack.c.bf16 %v5696, %v5692
    %v5861 = vpack.c.bf16 %v5701, %v5697
    %v5862 = vpack.c.bf16 %v5702, %v5698
    %v5863 = vpack.c.bf16 %v5703, %v5699
    %v5864 = vpack.c.bf16 %v5704, %v5700
    %v5865 = vpack.c.bf16 %v5709, %v5705
    %v5866 = vpack.c.bf16 %v5710, %v5706
    %v5867 = vpack.c.bf16 %v5711, %v5707
    %v5868 = vpack.c.bf16 %v5712, %v5708
    %v5869 = vpack.c.bf16 %v5717, %v5713
    %v5870 = vpack.c.bf16 %v5718, %v5714
    %v5871 = vpack.c.bf16 %v5719, %v5715
    %v5872 = vpack.c.bf16 %v5720, %v5716
    %v5873 = vpack.c.bf16 %v5725, %v5721
    %v5874 = vpack.c.bf16 %v5726, %v5722
    %v5875 = vpack.c.bf16 %v5727, %v5723
    %v5876 = vpack.c.bf16 %v5728, %v5724
    %v5877 = vpack.c.bf16 %v5733, %v5729
    %v5878 = vpack.c.bf16 %v5734, %v5730
    %v5879 = vpack.c.bf16 %v5735, %v5731
    %v5880 = vpack.c.bf16 %v5736, %v5732
    %v5881 = vpack.c.bf16 %v5741, %v5737
    %v5882 = vpack.c.bf16 %v5742, %v5738
    %v5883 = vpack.c.bf16 %v5743, %v5739
    %v5884 = vpack.c.bf16 %v5744, %v5740
    %v5885 = vpack.c.bf16 %v5749, %v5745
    %v5886 = vpack.c.bf16 %v5750, %v5746
    %v5887 = vpack.c.bf16 %v5751, %v5747
    %v5888 = vpack.c.bf16 %v5752, %v5748
    %v5889 = vpack.c.bf16 %v5757, %v5753
    %v5890 = vpack.c.bf16 %v5758, %v5754
    %v5891 = vpack.c.bf16 %v5759, %v5755
    %v5892 = vpack.c.bf16 %v5760, %v5756
    %v5893 = vpack.c.bf16 %v5765, %v5761
    %v5894 = vpack.c.bf16 %v5766, %v5762
    %v5895 = vpack.c.bf16 %v5767, %v5763
    %v5896 = vpack.c.bf16 %v5768, %v5764
    %v5897 = vpack.c.bf16 %v5188, %v5184
    %v5898 = vpack.c.bf16 %v5189, %v5185
    %v5899 = vpack.c.bf16 %v5190, %v5186
    %v5900 = vpack.c.bf16 %v5191, %v5187
    %5901 = vmatpush.bf16.msra.mxu0 %v5797
    %5902 = vmatpush.bf16.msra.mxu0 %v5793
    %5903 = vmatpush.bf16.msra.mxu0 %v5789
    %5904 = vmatpush.bf16.msra.mxu0 %v5785
    %5905 = vmatpush.bf16.msra.mxu0 %v5781
    %5906 = vmatpush.bf16.msra.mxu0 %v5777
    %5907 = vmatpush.bf16.msra.mxu0 %v5773
    %5908 = vmatpush.bf16.msra.mxu0 %v5769
    %5909 = vmatmul.bf16.gmra.mxu0 %v5897
    %v5910 = vpop.f32.mrf.mxu0
    %v5911 = vadd.f32 0.0, %v5910
    %v5912 = vpop.f32.mrf.mxu0
    %v5913 = vadd.f32 0.0, %v5912
    %5914 = vdwg.mxu0
    %5915 = vmatpush.bf16.msra.mxu0 %v5829
    %5916 = vmatpush.bf16.msra.mxu0 %v5825
    %5917 = vmatpush.bf16.msra.mxu0 %v5821
    %5918 = vmatpush.bf16.msra.mxu0 %v5817
    %5919 = vmatpush.bf16.msra.mxu0 %v5813
    %5920 = vmatpush.bf16.msra.mxu0 %v5809
    %5921 = vmatpush.bf16.msra.mxu0 %v5805
    %5922 = vmatpush.bf16.msra.mxu0 %v5801
    %5923 = vmatmul.bf16.gmra.mxu0 %v5898
    %v5924 = vpop.f32.mrf.mxu0
    %v5925 = vadd.f32 %v5911, %v5924
    %v5926 = vpop.f32.mrf.mxu0
    %v5927 = vadd.f32 %v5913, %v5926
    %5928 = vdwg.mxu0
    %5929 = vmatpush.bf16.msra.mxu0 %v5861
    %5930 = vmatpush.bf16.msra.mxu0 %v5857
    %5931 = vmatpush.bf16.msra.mxu0 %v5853
    %5932 = vmatpush.bf16.msra.mxu0 %v5849
    %5933 = vmatpush.bf16.msra.mxu0 %v5845
    %5934 = vmatpush.bf16.msra.mxu0 %v5841
    %5935 = vmatpush.bf16.msra.mxu0 %v5837
    %5936 = vmatpush.bf16.msra.mxu0 %v5833
    %5937 = vmatmul.bf16.gmra.mxu0 %v5899
    %v5938 = vpop.f32.mrf.mxu0
    %v5939 = vadd.f32 %v5925, %v5938
    %v5940 = vpop.f32.mrf.mxu0
    %v5941 = vadd.f32 %v5927, %v5940
    %5942 = vdwg.mxu0
    %5943 = vmatpush.bf16.msra.mxu0 %v5893
    %5944 = vmatpush.bf16.msra.mxu0 %v5889
    %5945 = vmatpush.bf16.msra.mxu0 %v5885
    %5946 = vmatpush.bf16.msra.mxu0 %v5881
    %5947 = vmatpush.bf16.msra.mxu0 %v5877
    %5948 = vmatpush.bf16.msra.mxu0 %v5873
    %5949 = vmatpush.bf16.msra.mxu0 %v5869
    %5950 = vmatpush.bf16.msra.mxu0 %v5865
    %5951 = vmatmul.bf16.gmra.mxu0 %v5900
    %v5952 = vpop.f32.mrf.mxu0
    %v5953 = vadd.f32 %v5939, %v5952
    %v5954 = vpop.f32.mrf.mxu0
    %v5955 = vadd.f32 %v5941, %v5954
    %5956 = vdwg.mxu0
    %5957 = vmatpush.bf16.msra.mxu0 %v5798
    %5958 = vmatpush.bf16.msra.mxu0 %v5794
    %5959 = vmatpush.bf16.msra.mxu0 %v5790
    %5960 = vmatpush.bf16.msra.mxu0 %v5786
    %5961 = vmatpush.bf16.msra.mxu0 %v5782
    %5962 = vmatpush.bf16.msra.mxu0 %v5778
    %5963 = vmatpush.bf16.msra.mxu0 %v5774
    %5964 = vmatpush.bf16.msra.mxu0 %v5770
    %5965 = vmatmul.bf16.gmra.mxu0 %v5897
    %v5966 = vpop.f32.mrf.mxu0
    %v5967 = vadd.f32 0.0, %v5966
    %v5968 = vpop.f32.mrf.mxu0
    %v5969 = vadd.f32 0.0, %v5968
    %5970 = vdwg.mxu0
    %5971 = vmatpush.bf16.msra.mxu0 %v5830
    %5972 = vmatpush.bf16.msra.mxu0 %v5826
    %5973 = vmatpush.bf16.msra.mxu0 %v5822
    %5974 = vmatpush.bf16.msra.mxu0 %v5818
    %5975 = vmatpush.bf16.msra.mxu0 %v5814
    %5976 = vmatpush.bf16.msra.mxu0 %v5810
    %5977 = vmatpush.bf16.msra.mxu0 %v5806
    %5978 = vmatpush.bf16.msra.mxu0 %v5802
    %5979 = vmatmul.bf16.gmra.mxu0 %v5898
    %v5980 = vpop.f32.mrf.mxu0
    %v5981 = vadd.f32 %v5967, %v5980
    %v5982 = vpop.f32.mrf.mxu0
    %v5983 = vadd.f32 %v5969, %v5982
    %5984 = vdwg.mxu0
    %5985 = vmatpush.bf16.msra.mxu0 %v5862
    %5986 = vmatpush.bf16.msra.mxu0 %v5858
    %5987 = vmatpush.bf16.msra.mxu0 %v5854
    %5988 = vmatpush.bf16.msra.mxu0 %v5850
    %5989 = vmatpush.bf16.msra.mxu0 %v5846
    %5990 = vmatpush.bf16.msra.mxu0 %v5842
    %5991 = vmatpush.bf16.msra.mxu0 %v5838
    %5992 = vmatpush.bf16.msra.mxu0 %v5834
    %5993 = vmatmul.bf16.gmra.mxu0 %v5899
    %v5994 = vpop.f32.mrf.mxu0
    %v5995 = vadd.f32 %v5981, %v5994
    %v5996 = vpop.f32.mrf.mxu0
    %v5997 = vadd.f32 %v5983, %v5996
    %5998 = vdwg.mxu0
    %5999 = vmatpush.bf16.msra.mxu0 %v5894
    %6000 = vmatpush.bf16.msra.mxu0 %v5890
    %6001 = vmatpush.bf16.msra.mxu0 %v5886
    %6002 = vmatpush.bf16.msra.mxu0 %v5882
    %6003 = vmatpush.bf16.msra.mxu0 %v5878
    %6004 = vmatpush.bf16.msra.mxu0 %v5874
    %6005 = vmatpush.bf16.msra.mxu0 %v5870
    %6006 = vmatpush.bf16.msra.mxu0 %v5866
    %6007 = vmatmul.bf16.gmra.mxu0 %v5900
    %v6008 = vpop.f32.mrf.mxu0
    %v6009 = vadd.f32 %v5995, %v6008
    %v6010 = vpop.f32.mrf.mxu0
    %v6011 = vadd.f32 %v5997, %v6010
    %6012 = vdwg.mxu0
    %6013 = vmatpush.bf16.msra.mxu0 %v5799
    %6014 = vmatpush.bf16.msra.mxu0 %v5795
    %6015 = vmatpush.bf16.msra.mxu0 %v5791
    %6016 = vmatpush.bf16.msra.mxu0 %v5787
    %6017 = vmatpush.bf16.msra.mxu0 %v5783
    %6018 = vmatpush.bf16.msra.mxu0 %v5779
    %6019 = vmatpush.bf16.msra.mxu0 %v5775
    %6020 = vmatpush.bf16.msra.mxu0 %v5771
    %6021 = vmatmul.bf16.gmra.mxu0 %v5897
    %v6022 = vpop.f32.mrf.mxu0
    %v6023 = vadd.f32 0.0, %v6022
    %v6024 = vpop.f32.mrf.mxu0
    %v6025 = vadd.f32 0.0, %v6024
    %6026 = vdwg.mxu0
    %6027 = vmatpush.bf16.msra.mxu0 %v5831
    %6028 = vmatpush.bf16.msra.mxu0 %v5827
    %6029 = vmatpush.bf16.msra.mxu0 %v5823
    %6030 = vmatpush.bf16.msra.mxu0 %v5819
    %6031 = vmatpush.bf16.msra.mxu0 %v5815
    %6032 = vmatpush.bf16.msra.mxu0 %v5811
    %6033 = vmatpush.bf16.msra.mxu0 %v5807
    %6034 = vmatpush.bf16.msra.mxu0 %v5803
    %6035 = vmatmul.bf16.gmra.mxu0 %v5898
    %v6036 = vpop.f32.mrf.mxu0
    %v6037 = vadd.f32 %v6023, %v6036
    %v6038 = vpop.f32.mrf.mxu0
    %v6039 = vadd.f32 %v6025, %v6038
    %6040 = vdwg.mxu0
    %6041 = vmatpush.bf16.msra.mxu0 %v5863
    %6042 = vmatpush.bf16.msra.mxu0 %v5859
    %6043 = vmatpush.bf16.msra.mxu0 %v5855
    %6044 = vmatpush.bf16.msra.mxu0 %v5851
    %6045 = vmatpush.bf16.msra.mxu0 %v5847
    %6046 = vmatpush.bf16.msra.mxu0 %v5843
    %6047 = vmatpush.bf16.msra.mxu0 %v5839
    %6048 = vmatpush.bf16.msra.mxu0 %v5835
    %6049 = vmatmul.bf16.gmra.mxu0 %v5899
    %v6050 = vpop.f32.mrf.mxu0
    %v6051 = vadd.f32 %v6037, %v6050
    %v6052 = vpop.f32.mrf.mxu0
    %v6053 = vadd.f32 %v6039, %v6052
    %6054 = vdwg.mxu0
    %6055 = vmatpush.bf16.msra.mxu0 %v5895
    %6056 = vmatpush.bf16.msra.mxu0 %v5891
    %6057 = vmatpush.bf16.msra.mxu0 %v5887
    %6058 = vmatpush.bf16.msra.mxu0 %v5883
    %6059 = vmatpush.bf16.msra.mxu0 %v5879
    %6060 = vmatpush.bf16.msra.mxu0 %v5875
    %6061 = vmatpush.bf16.msra.mxu0 %v5871
    %6062 = vmatpush.bf16.msra.mxu0 %v5867
    %6063 = vmatmul.bf16.gmra.mxu0 %v5900
    %v6064 = vpop.f32.mrf.mxu0
    %v6065 = vadd.f32 %v6051, %v6064
    %v6066 = vpop.f32.mrf.mxu0
    %v6067 = vadd.f32 %v6053, %v6066
    %6068 = vdwg.mxu0
    %6069 = vmatpush.bf16.msra.mxu0 %v5800
    %6070 = vmatpush.bf16.msra.mxu0 %v5796
    %6071 = vmatpush.bf16.msra.mxu0 %v5792
    %6072 = vmatpush.bf16.msra.mxu0 %v5788
    %6073 = vmatpush.bf16.msra.mxu0 %v5784
    %6074 = vmatpush.bf16.msra.mxu0 %v5780
    %6075 = vmatpush.bf16.msra.mxu0 %v5776
    %6076 = vmatpush.bf16.msra.mxu0 %v5772
    %6077 = vmatmul.bf16.gmra.mxu0 %v5897
    %v6078 = vpop.f32.mrf.mxu0
    %v6079 = vadd.f32 0.0, %v6078
    %v6080 = vpop.f32.mrf.mxu0
    %v6081 = vadd.f32 0.0, %v6080
    %6082 = vdwg.mxu0
    %6083 = vmatpush.bf16.msra.mxu0 %v5832
    %6084 = vmatpush.bf16.msra.mxu0 %v5828
    %6085 = vmatpush.bf16.msra.mxu0 %v5824
    %6086 = vmatpush.bf16.msra.mxu0 %v5820
    %6087 = vmatpush.bf16.msra.mxu0 %v5816
    %6088 = vmatpush.bf16.msra.mxu0 %v5812
    %6089 = vmatpush.bf16.msra.mxu0 %v5808
    %6090 = vmatpush.bf16.msra.mxu0 %v5804
    %6091 = vmatmul.bf16.gmra.mxu0 %v5898
    %v6092 = vpop.f32.mrf.mxu0
    %v6093 = vadd.f32 %v6079, %v6092
    %v6094 = vpop.f32.mrf.mxu0
    %v6095 = vadd.f32 %v6081, %v6094
    %6096 = vdwg.mxu0
    %6097 = vmatpush.bf16.msra.mxu0 %v5864
    %6098 = vmatpush.bf16.msra.mxu0 %v5860
    %6099 = vmatpush.bf16.msra.mxu0 %v5856
    %6100 = vmatpush.bf16.msra.mxu0 %v5852
    %6101 = vmatpush.bf16.msra.mxu0 %v5848
    %6102 = vmatpush.bf16.msra.mxu0 %v5844
    %6103 = vmatpush.bf16.msra.mxu0 %v5840
    %6104 = vmatpush.bf16.msra.mxu0 %v5836
    %6105 = vmatmul.bf16.gmra.mxu0 %v5899
    %v6106 = vpop.f32.mrf.mxu0
    %v6107 = vadd.f32 %v6093, %v6106
    %v6108 = vpop.f32.mrf.mxu0
    %v6109 = vadd.f32 %v6095, %v6108
    %6110 = vdwg.mxu0
    %6111 = vmatpush.bf16.msra.mxu0 %v5896
    %6112 = vmatpush.bf16.msra.mxu0 %v5892
    %6113 = vmatpush.bf16.msra.mxu0 %v5888
    %6114 = vmatpush.bf16.msra.mxu0 %v5884
    %6115 = vmatpush.bf16.msra.mxu0 %v5880
    %6116 = vmatpush.bf16.msra.mxu0 %v5876
    %6117 = vmatpush.bf16.msra.mxu0 %v5872
    %6118 = vmatpush.bf16.msra.mxu0 %v5868
    %6119 = vmatmul.bf16.gmra.mxu0 %v5900
    %v6120 = vpop.f32.mrf.mxu0
    %v6121 = vadd.f32 %v6107, %v6120
    %v6122 = vpop.f32.mrf.mxu0
    %v6123 = vadd.f32 %v6109, %v6122
    %6124 = vdwg.mxu0
    %s6125 = scalar_lea.vmem [#allocation10], 20
    %v6126 = vld [vmem:[%s6125] sm:$0xf]
    %v6128 = vperm.slane %v6126, 0
    %v6129 = vperm.slane %v6126, 1
    %v6130 = vperm.slane %v6126, 2
    %v6131 = vperm.slane %v6126, 3
    %v6136 = vmul.f32 %v5953, %v6128
    %v6137 = vmul.f32 %v6009, %v6129
    %v6138 = vmul.f32 %v6065, %v6130
    %v6139 = vmul.f32 %v6121, %v6131
    %v6140 = vmul.f32 %v5955, %v6128
    %v6141 = vmul.f32 %v6011, %v6129
    %v6142 = vmul.f32 %v6067, %v6130
    %v6143 = vmul.f32 %v6123, %v6131
    %s6144 = scalar_lea.vmem [#allocation11], 20
    %v6145 = vld [vmem:[%s6144] sm:$0xf]
    %v6147 = vperm.slane %v6145, 0
    %v6148 = vperm.slane %v6145, 1
    %v6149 = vperm.slane %v6145, 2
    %v6150 = vperm.slane %v6145, 3
    %v6155 = vadd.f32 %v6136, %v6147
    %v6156 = vadd.f32 %v6137, %v6148
    %v6157 = vadd.f32 %v6138, %v6149
    %v6158 = vadd.f32 %v6139, %v6150
    %v6159 = vadd.f32 %v6140, %v6147
    %v6160 = vadd.f32 %v6141, %v6148
    %v6161 = vadd.f32 %v6142, %v6149
    %v6162 = vadd.f32 %v6143, %v6150
    %v6163 = vmax.f32 %v6155, 0.0
    %v6164 = vmax.f32 %v6156, 0.0
    %v6165 = vmax.f32 %v6157, 0.0
    %v6166 = vmax.f32 %v6158, 0.0
    %v6167 = vmax.f32 %v6159, 0.0
    %v6168 = vmax.f32 %v6160, 0.0
    %v6169 = vmax.f32 %v6161, 0.0
    %v6170 = vmax.f32 %v6162, 0.0
    %s6171 = scalar_lea.vmem [#allocation8], 3072
    %v6172 = vld [vmem:[%s6171] sm:$0xff]
    %v6173 = vld [vmem:[%s6171 + $0x8] sm:$0xff]
    %v6174 = vld [vmem:[%s6171 + $0x10] sm:$0xff]
    %v6175 = vld [vmem:[%s6171 + $0x18] sm:$0xff]
    %v6176 = vld [vmem:[%s6171 + $0x20] sm:$0xff]
    %v6177 = vld [vmem:[%s6171 + $0x28] sm:$0xff]
    %v6178 = vld [vmem:[%s6171 + $0x30] sm:$0xff]
    %v6179 = vld [vmem:[%s6171 + $0x38] sm:$0xff]
    %v6180 = vld [vmem:[%s6171 + $0x40] sm:$0xff]
    %v6181 = vld [vmem:[%s6171 + $0x48] sm:$0xff]
    %v6182 = vld [vmem:[%s6171 + $0x50] sm:$0xff]
    %v6183 = vld [vmem:[%s6171 + $0x58] sm:$0xff]
    %v6184 = vld [vmem:[%s6171 + $0x60] sm:$0xff]
    %v6185 = vld [vmem:[%s6171 + $0x68] sm:$0xff]
    %v6186 = vld [vmem:[%s6171 + $0x70] sm:$0xff]
    %v6187 = vld [vmem:[%s6171 + $0x78] sm:$0xff]
    %v6188 = vld [vmem:[%s6171 + $0x80] sm:$0xff]
    %v6189 = vld [vmem:[%s6171 + $0x88] sm:$0xff]
    %v6190 = vld [vmem:[%s6171 + $0x90] sm:$0xff]
    %v6191 = vld [vmem:[%s6171 + $0x98] sm:$0xff]
    %v6192 = vld [vmem:[%s6171 + $0xa0] sm:$0xff]
    %v6193 = vld [vmem:[%s6171 + $0xa8] sm:$0xff]
    %v6194 = vld [vmem:[%s6171 + $0xb0] sm:$0xff]
    %v6195 = vld [vmem:[%s6171 + $0xb8] sm:$0xff]
    %v6196 = vld [vmem:[%s6171 + $0xc0] sm:$0xff]
    %v6197 = vld [vmem:[%s6171 + $0xc8] sm:$0xff]
    %v6198 = vld [vmem:[%s6171 + $0xd0] sm:$0xff]
    %v6199 = vld [vmem:[%s6171 + $0xd8] sm:$0xff]
    %v6200 = vld [vmem:[%s6171 + $0xe0] sm:$0xff]
    %v6201 = vld [vmem:[%s6171 + $0xe8] sm:$0xff]
    %v6202 = vld [vmem:[%s6171 + $0xf0] sm:$0xff]
    %v6203 = vld [vmem:[%s6171 + $0xf8] sm:$0xff]
    %v6204 = vld [vmem:[%s6171 + $0x100] sm:$0xff]
    %v6205 = vld [vmem:[%s6171 + $0x108] sm:$0xff]
    %v6206 = vld [vmem:[%s6171 + $0x110] sm:$0xff]
    %v6207 = vld [vmem:[%s6171 + $0x118] sm:$0xff]
    %v6208 = vld [vmem:[%s6171 + $0x120] sm:$0xff]
    %v6209 = vld [vmem:[%s6171 + $0x128] sm:$0xff]
    %v6210 = vld [vmem:[%s6171 + $0x130] sm:$0xff]
    %v6211 = vld [vmem:[%s6171 + $0x138] sm:$0xff]
    %v6212 = vld [vmem:[%s6171 + $0x140] sm:$0xff]
    %v6213 = vld [vmem:[%s6171 + $0x148] sm:$0xff]
    %v6214 = vld [vmem:[%s6171 + $0x150] sm:$0xff]
    %v6215 = vld [vmem:[%s6171 + $0x158] sm:$0xff]
    %v6216 = vld [vmem:[%s6171 + $0x160] sm:$0xff]
    %v6217 = vld [vmem:[%s6171 + $0x168] sm:$0xff]
    %v6218 = vld [vmem:[%s6171 + $0x170] sm:$0xff]
    %v6219 = vld [vmem:[%s6171 + $0x178] sm:$0xff]
    %v6220 = vld [vmem:[%s6171 + $0x180] sm:$0xff]
    %v6221 = vld [vmem:[%s6171 + $0x188] sm:$0xff]
    %v6222 = vld [vmem:[%s6171 + $0x190] sm:$0xff]
    %v6223 = vld [vmem:[%s6171 + $0x198] sm:$0xff]
    %v6224 = vld [vmem:[%s6171 + $0x1a0] sm:$0xff]
    %v6225 = vld [vmem:[%s6171 + $0x1a8] sm:$0xff]
    %v6226 = vld [vmem:[%s6171 + $0x1b0] sm:$0xff]
    %v6227 = vld [vmem:[%s6171 + $0x1b8] sm:$0xff]
    %v6228 = vld [vmem:[%s6171 + $0x1c0] sm:$0xff]
    %v6229 = vld [vmem:[%s6171 + $0x1c8] sm:$0xff]
    %v6230 = vld [vmem:[%s6171 + $0x1d0] sm:$0xff]
    %v6231 = vld [vmem:[%s6171 + $0x1d8] sm:$0xff]
    %v6232 = vld [vmem:[%s6171 + $0x1e0] sm:$0xff]
    %v6233 = vld [vmem:[%s6171 + $0x1e8] sm:$0xff]
    %v6234 = vld [vmem:[%s6171 + $0x1f0] sm:$0xff]
    %v6235 = vld [vmem:[%s6171 + $0x1f8] sm:$0xff]
    %v6236 = vunpack.c.0.s8 %v6172
    %v6237 = vunpack.c.0.s8 %v6173
    %v6238 = vunpack.c.0.s8 %v6174
    %v6239 = vunpack.c.0.s8 %v6175
    %v6240 = vunpack.c.1.s8 %v6172
    %v6241 = vunpack.c.1.s8 %v6173
    %v6242 = vunpack.c.1.s8 %v6174
    %v6243 = vunpack.c.1.s8 %v6175
    %v6244 = vunpack.c.2.s8 %v6172
    %v6245 = vunpack.c.2.s8 %v6173
    %v6246 = vunpack.c.2.s8 %v6174
    %v6247 = vunpack.c.2.s8 %v6175
    %v6248 = vunpack.c.3.s8 %v6172
    %v6249 = vunpack.c.3.s8 %v6173
    %v6250 = vunpack.c.3.s8 %v6174
    %v6251 = vunpack.c.3.s8 %v6175
    %v6252 = vunpack.c.0.s8 %v6176
    %v6253 = vunpack.c.0.s8 %v6177
    %v6254 = vunpack.c.0.s8 %v6178
    %v6255 = vunpack.c.0.s8 %v6179
    %v6256 = vunpack.c.1.s8 %v6176
    %v6257 = vunpack.c.1.s8 %v6177
    %v6258 = vunpack.c.1.s8 %v6178
    %v6259 = vunpack.c.1.s8 %v6179
    %v6260 = vunpack.c.2.s8 %v6176
    %v6261 = vunpack.c.2.s8 %v6177
    %v6262 = vunpack.c.2.s8 %v6178
    %v6263 = vunpack.c.2.s8 %v6179
    %v6264 = vunpack.c.3.s8 %v6176
    %v6265 = vunpack.c.3.s8 %v6177
    %v6266 = vunpack.c.3.s8 %v6178
    %v6267 = vunpack.c.3.s8 %v6179
    %v6268 = vunpack.c.0.s8 %v6180
    %v6269 = vunpack.c.0.s8 %v6181
    %v6270 = vunpack.c.0.s8 %v6182
    %v6271 = vunpack.c.0.s8 %v6183
    %v6272 = vunpack.c.1.s8 %v6180
    %v6273 = vunpack.c.1.s8 %v6181
    %v6274 = vunpack.c.1.s8 %v6182
    %v6275 = vunpack.c.1.s8 %v6183
    %v6276 = vunpack.c.2.s8 %v6180
    %v6277 = vunpack.c.2.s8 %v6181
    %v6278 = vunpack.c.2.s8 %v6182
    %v6279 = vunpack.c.2.s8 %v6183
    %v6280 = vunpack.c.3.s8 %v6180
    %v6281 = vunpack.c.3.s8 %v6181
    %v6282 = vunpack.c.3.s8 %v6182
    %v6283 = vunpack.c.3.s8 %v6183
    %v6284 = vunpack.c.0.s8 %v6184
    %v6285 = vunpack.c.0.s8 %v6185
    %v6286 = vunpack.c.0.s8 %v6186
    %v6287 = vunpack.c.0.s8 %v6187
    %v6288 = vunpack.c.1.s8 %v6184
    %v6289 = vunpack.c.1.s8 %v6185
    %v6290 = vunpack.c.1.s8 %v6186
    %v6291 = vunpack.c.1.s8 %v6187
    %v6292 = vunpack.c.2.s8 %v6184
    %v6293 = vunpack.c.2.s8 %v6185
    %v6294 = vunpack.c.2.s8 %v6186
    %v6295 = vunpack.c.2.s8 %v6187
    %v6296 = vunpack.c.3.s8 %v6184
    %v6297 = vunpack.c.3.s8 %v6185
    %v6298 = vunpack.c.3.s8 %v6186
    %v6299 = vunpack.c.3.s8 %v6187
    %v6300 = vunpack.c.0.s8 %v6188
    %v6301 = vunpack.c.0.s8 %v6189
    %v6302 = vunpack.c.0.s8 %v6190
    %v6303 = vunpack.c.0.s8 %v6191
    %v6304 = vunpack.c.1.s8 %v6188
    %v6305 = vunpack.c.1.s8 %v6189
    %v6306 = vunpack.c.1.s8 %v6190
    %v6307 = vunpack.c.1.s8 %v6191
    %v6308 = vunpack.c.2.s8 %v6188
    %v6309 = vunpack.c.2.s8 %v6189
    %v6310 = vunpack.c.2.s8 %v6190
    %v6311 = vunpack.c.2.s8 %v6191
    %v6312 = vunpack.c.3.s8 %v6188
    %v6313 = vunpack.c.3.s8 %v6189
    %v6314 = vunpack.c.3.s8 %v6190
    %v6315 = vunpack.c.3.s8 %v6191
    %v6316 = vunpack.c.0.s8 %v6192
    %v6317 = vunpack.c.0.s8 %v6193
    %v6318 = vunpack.c.0.s8 %v6194
    %v6319 = vunpack.c.0.s8 %v6195
    %v6320 = vunpack.c.1.s8 %v6192
    %v6321 = vunpack.c.1.s8 %v6193
    %v6322 = vunpack.c.1.s8 %v6194
    %v6323 = vunpack.c.1.s8 %v6195
    %v6324 = vunpack.c.2.s8 %v6192
    %v6325 = vunpack.c.2.s8 %v6193
    %v6326 = vunpack.c.2.s8 %v6194
    %v6327 = vunpack.c.2.s8 %v6195
    %v6328 = vunpack.c.3.s8 %v6192
    %v6329 = vunpack.c.3.s8 %v6193
    %v6330 = vunpack.c.3.s8 %v6194
    %v6331 = vunpack.c.3.s8 %v6195
    %v6332 = vunpack.c.0.s8 %v6196
    %v6333 = vunpack.c.0.s8 %v6197
    %v6334 = vunpack.c.0.s8 %v6198
    %v6335 = vunpack.c.0.s8 %v6199
    %v6336 = vunpack.c.1.s8 %v6196
    %v6337 = vunpack.c.1.s8 %v6197
    %v6338 = vunpack.c.1.s8 %v6198
    %v6339 = vunpack.c.1.s8 %v6199
    %v6340 = vunpack.c.2.s8 %v6196
    %v6341 = vunpack.c.2.s8 %v6197
    %v6342 = vunpack.c.2.s8 %v6198
    %v6343 = vunpack.c.2.s8 %v6199
    %v6344 = vunpack.c.3.s8 %v6196
    %v6345 = vunpack.c.3.s8 %v6197
    %v6346 = vunpack.c.3.s8 %v6198
    %v6347 = vunpack.c.3.s8 %v6199
    %v6348 = vunpack.c.0.s8 %v6200
    %v6349 = vunpack.c.0.s8 %v6201
    %v6350 = vunpack.c.0.s8 %v6202
    %v6351 = vunpack.c.0.s8 %v6203
    %v6352 = vunpack.c.1.s8 %v6200
    %v6353 = vunpack.c.1.s8 %v6201
    %v6354 = vunpack.c.1.s8 %v6202
    %v6355 = vunpack.c.1.s8 %v6203
    %v6356 = vunpack.c.2.s8 %v6200
    %v6357 = vunpack.c.2.s8 %v6201
    %v6358 = vunpack.c.2.s8 %v6202
    %v6359 = vunpack.c.2.s8 %v6203
    %v6360 = vunpack.c.3.s8 %v6200
    %v6361 = vunpack.c.3.s8 %v6201
    %v6362 = vunpack.c.3.s8 %v6202
    %v6363 = vunpack.c.3.s8 %v6203
    %v6364 = vunpack.c.0.s8 %v6204
    %v6365 = vunpack.c.0.s8 %v6205
    %v6366 = vunpack.c.0.s8 %v6206
    %v6367 = vunpack.c.0.s8 %v6207
    %v6368 = vunpack.c.1.s8 %v6204
    %v6369 = vunpack.c.1.s8 %v6205
    %v6370 = vunpack.c.1.s8 %v6206
    %v6371 = vunpack.c.1.s8 %v6207
    %v6372 = vunpack.c.2.s8 %v6204
    %v6373 = vunpack.c.2.s8 %v6205
    %v6374 = vunpack.c.2.s8 %v6206
    %v6375 = vunpack.c.2.s8 %v6207
    %v6376 = vunpack.c.3.s8 %v6204
    %v6377 = vunpack.c.3.s8 %v6205
    %v6378 = vunpack.c.3.s8 %v6206
    %v6379 = vunpack.c.3.s8 %v6207
    %v6380 = vunpack.c.0.s8 %v6208
    %v6381 = vunpack.c.0.s8 %v6209
    %v6382 = vunpack.c.0.s8 %v6210
    %v6383 = vunpack.c.0.s8 %v6211
    %v6384 = vunpack.c.1.s8 %v6208
    %v6385 = vunpack.c.1.s8 %v6209
    %v6386 = vunpack.c.1.s8 %v6210
    %v6387 = vunpack.c.1.s8 %v6211
    %v6388 = vunpack.c.2.s8 %v6208
    %v6389 = vunpack.c.2.s8 %v6209
    %v6390 = vunpack.c.2.s8 %v6210
    %v6391 = vunpack.c.2.s8 %v6211
    %v6392 = vunpack.c.3.s8 %v6208
    %v6393 = vunpack.c.3.s8 %v6209
    %v6394 = vunpack.c.3.s8 %v6210
    %v6395 = vunpack.c.3.s8 %v6211
    %v6396 = vunpack.c.0.s8 %v6212
    %v6397 = vunpack.c.0.s8 %v6213
    %v6398 = vunpack.c.0.s8 %v6214
    %v6399 = vunpack.c.0.s8 %v6215
    %v6400 = vunpack.c.1.s8 %v6212
    %v6401 = vunpack.c.1.s8 %v6213
    %v6402 = vunpack.c.1.s8 %v6214
    %v6403 = vunpack.c.1.s8 %v6215
    %v6404 = vunpack.c.2.s8 %v6212
    %v6405 = vunpack.c.2.s8 %v6213
    %v6406 = vunpack.c.2.s8 %v6214
    %v6407 = vunpack.c.2.s8 %v6215
    %v6408 = vunpack.c.3.s8 %v6212
    %v6409 = vunpack.c.3.s8 %v6213
    %v6410 = vunpack.c.3.s8 %v6214
    %v6411 = vunpack.c.3.s8 %v6215
    %v6412 = vunpack.c.0.s8 %v6216
    %v6413 = vunpack.c.0.s8 %v6217
    %v6414 = vunpack.c.0.s8 %v6218
    %v6415 = vunpack.c.0.s8 %v6219
    %v6416 = vunpack.c.1.s8 %v6216
    %v6417 = vunpack.c.1.s8 %v6217
    %v6418 = vunpack.c.1.s8 %v6218
    %v6419 = vunpack.c.1.s8 %v6219
    %v6420 = vunpack.c.2.s8 %v6216
    %v6421 = vunpack.c.2.s8 %v6217
    %v6422 = vunpack.c.2.s8 %v6218
    %v6423 = vunpack.c.2.s8 %v6219
    %v6424 = vunpack.c.3.s8 %v6216
    %v6425 = vunpack.c.3.s8 %v6217
    %v6426 = vunpack.c.3.s8 %v6218
    %v6427 = vunpack.c.3.s8 %v6219
    %v6428 = vunpack.c.0.s8 %v6220
    %v6429 = vunpack.c.0.s8 %v6221
    %v6430 = vunpack.c.0.s8 %v6222
    %v6431 = vunpack.c.0.s8 %v6223
    %v6432 = vunpack.c.1.s8 %v6220
    %v6433 = vunpack.c.1.s8 %v6221
    %v6434 = vunpack.c.1.s8 %v6222
    %v6435 = vunpack.c.1.s8 %v6223
    %v6436 = vunpack.c.2.s8 %v6220
    %v6437 = vunpack.c.2.s8 %v6221
    %v6438 = vunpack.c.2.s8 %v6222
    %v6439 = vunpack.c.2.s8 %v6223
    %v6440 = vunpack.c.3.s8 %v6220
    %v6441 = vunpack.c.3.s8 %v6221
    %v6442 = vunpack.c.3.s8 %v6222
    %v6443 = vunpack.c.3.s8 %v6223
    %v6444 = vunpack.c.0.s8 %v6224
    %v6445 = vunpack.c.0.s8 %v6225
    %v6446 = vunpack.c.0.s8 %v6226
    %v6447 = vunpack.c.0.s8 %v6227
    %v6448 = vunpack.c.1.s8 %v6224
    %v6449 = vunpack.c.1.s8 %v6225
    %v6450 = vunpack.c.1.s8 %v6226
    %v6451 = vunpack.c.1.s8 %v6227
    %v6452 = vunpack.c.2.s8 %v6224
    %v6453 = vunpack.c.2.s8 %v6225
    %v6454 = vunpack.c.2.s8 %v6226
    %v6455 = vunpack.c.2.s8 %v6227
    %v6456 = vunpack.c.3.s8 %v6224
    %v6457 = vunpack.c.3.s8 %v6225
    %v6458 = vunpack.c.3.s8 %v6226
    %v6459 = vunpack.c.3.s8 %v6227
    %v6460 = vunpack.c.0.s8 %v6228
    %v6461 = vunpack.c.0.s8 %v6229
    %v6462 = vunpack.c.0.s8 %v6230
    %v6463 = vunpack.c.0.s8 %v6231
    %v6464 = vunpack.c.1.s8 %v6228
    %v6465 = vunpack.c.1.s8 %v6229
    %v6466 = vunpack.c.1.s8 %v6230
    %v6467 = vunpack.c.1.s8 %v6231
    %v6468 = vunpack.c.2.s8 %v6228
    %v6469 = vunpack.c.2.s8 %v6229
    %v6470 = vunpack.c.2.s8 %v6230
    %v6471 = vunpack.c.2.s8 %v6231
    %v6472 = vunpack.c.3.s8 %v6228
    %v6473 = vunpack.c.3.s8 %v6229
    %v6474 = vunpack.c.3.s8 %v6230
    %v6475 = vunpack.c.3.s8 %v6231
    %v6476 = vunpack.c.0.s8 %v6232
    %v6477 = vunpack.c.0.s8 %v6233
    %v6478 = vunpack.c.0.s8 %v6234
    %v6479 = vunpack.c.0.s8 %v6235
    %v6480 = vunpack.c.1.s8 %v6232
    %v6481 = vunpack.c.1.s8 %v6233
    %v6482 = vunpack.c.1.s8 %v6234
    %v6483 = vunpack.c.1.s8 %v6235
    %v6484 = vunpack.c.2.s8 %v6232
    %v6485 = vunpack.c.2.s8 %v6233
    %v6486 = vunpack.c.2.s8 %v6234
    %v6487 = vunpack.c.2.s8 %v6235
    %v6488 = vunpack.c.3.s8 %v6232
    %v6489 = vunpack.c.3.s8 %v6233
    %v6490 = vunpack.c.3.s8 %v6234
    %v6491 = vunpack.c.3.s8 %v6235
    %v6492 = vcvt.s32.f32 %v6236
    %v6493 = vcvt.s32.f32 %v6237
    %v6494 = vcvt.s32.f32 %v6238
    %v6495 = vcvt.s32.f32 %v6239
    %v6496 = vcvt.s32.f32 %v6240
    %v6497 = vcvt.s32.f32 %v6241
    %v6498 = vcvt.s32.f32 %v6242
    %v6499 = vcvt.s32.f32 %v6243
    %v6500 = vcvt.s32.f32 %v6244
    %v6501 = vcvt.s32.f32 %v6245
    %v6502 = vcvt.s32.f32 %v6246
    %v6503 = vcvt.s32.f32 %v6247
    %v6504 = vcvt.s32.f32 %v6248
    %v6505 = vcvt.s32.f32 %v6249
    %v6506 = vcvt.s32.f32 %v6250
    %v6507 = vcvt.s32.f32 %v6251
    %v6508 = vcvt.s32.f32 %v6252
    %v6509 = vcvt.s32.f32 %v6253
    %v6510 = vcvt.s32.f32 %v6254
    %v6511 = vcvt.s32.f32 %v6255
    %v6512 = vcvt.s32.f32 %v6256
    %v6513 = vcvt.s32.f32 %v6257
    %v6514 = vcvt.s32.f32 %v6258
    %v6515 = vcvt.s32.f32 %v6259
    %v6516 = vcvt.s32.f32 %v6260
    %v6517 = vcvt.s32.f32 %v6261
    %v6518 = vcvt.s32.f32 %v6262
    %v6519 = vcvt.s32.f32 %v6263
    %v6520 = vcvt.s32.f32 %v6264
    %v6521 = vcvt.s32.f32 %v6265
    %v6522 = vcvt.s32.f32 %v6266
    %v6523 = vcvt.s32.f32 %v6267
    %v6524 = vcvt.s32.f32 %v6268
    %v6525 = vcvt.s32.f32 %v6269
    %v6526 = vcvt.s32.f32 %v6270
    %v6527 = vcvt.s32.f32 %v6271
    %v6528 = vcvt.s32.f32 %v6272
    %v6529 = vcvt.s32.f32 %v6273
    %v6530 = vcvt.s32.f32 %v6274
    %v6531 = vcvt.s32.f32 %v6275
    %v6532 = vcvt.s32.f32 %v6276
    %v6533 = vcvt.s32.f32 %v6277
    %v6534 = vcvt.s32.f32 %v6278
    %v6535 = vcvt.s32.f32 %v6279
    %v6536 = vcvt.s32.f32 %v6280
    %v6537 = vcvt.s32.f32 %v6281
    %v6538 = vcvt.s32.f32 %v6282
    %v6539 = vcvt.s32.f32 %v6283
    %v6540 = vcvt.s32.f32 %v6284
    %v6541 = vcvt.s32.f32 %v6285
    %v6542 = vcvt.s32.f32 %v6286
    %v6543 = vcvt.s32.f32 %v6287
    %v6544 = vcvt.s32.f32 %v6288
    %v6545 = vcvt.s32.f32 %v6289
    %v6546 = vcvt.s32.f32 %v6290
    %v6547 = vcvt.s32.f32 %v6291
    %v6548 = vcvt.s32.f32 %v6292
    %v6549 = vcvt.s32.f32 %v6293
    %v6550 = vcvt.s32.f32 %v6294
    %v6551 = vcvt.s32.f32 %v6295
    %v6552 = vcvt.s32.f32 %v6296
    %v6553 = vcvt.s32.f32 %v6297
    %v6554 = vcvt.s32.f32 %v6298
    %v6555 = vcvt.s32.f32 %v6299
    %v6556 = vcvt.s32.f32 %v6300
    %v6557 = vcvt.s32.f32 %v6301
    %v6558 = vcvt.s32.f32 %v6302
    %v6559 = vcvt.s32.f32 %v6303
    %v6560 = vcvt.s32.f32 %v6304
    %v6561 = vcvt.s32.f32 %v6305
    %v6562 = vcvt.s32.f32 %v6306
    %v6563 = vcvt.s32.f32 %v6307
    %v6564 = vcvt.s32.f32 %v6308
    %v6565 = vcvt.s32.f32 %v6309
    %v6566 = vcvt.s32.f32 %v6310
    %v6567 = vcvt.s32.f32 %v6311
    %v6568 = vcvt.s32.f32 %v6312
    %v6569 = vcvt.s32.f32 %v6313
    %v6570 = vcvt.s32.f32 %v6314
    %v6571 = vcvt.s32.f32 %v6315
    %v6572 = vcvt.s32.f32 %v6316
    %v6573 = vcvt.s32.f32 %v6317
    %v6574 = vcvt.s32.f32 %v6318
    %v6575 = vcvt.s32.f32 %v6319
    %v6576 = vcvt.s32.f32 %v6320
    %v6577 = vcvt.s32.f32 %v6321
    %v6578 = vcvt.s32.f32 %v6322
    %v6579 = vcvt.s32.f32 %v6323
    %v6580 = vcvt.s32.f32 %v6324
    %v6581 = vcvt.s32.f32 %v6325
    %v6582 = vcvt.s32.f32 %v6326
    %v6583 = vcvt.s32.f32 %v6327
    %v6584 = vcvt.s32.f32 %v6328
    %v6585 = vcvt.s32.f32 %v6329
    %v6586 = vcvt.s32.f32 %v6330
    %v6587 = vcvt.s32.f32 %v6331
    %v6588 = vcvt.s32.f32 %v6332
    %v6589 = vcvt.s32.f32 %v6333
    %v6590 = vcvt.s32.f32 %v6334
    %v6591 = vcvt.s32.f32 %v6335
    %v6592 = vcvt.s32.f32 %v6336
    %v6593 = vcvt.s32.f32 %v6337
    %v6594 = vcvt.s32.f32 %v6338
    %v6595 = vcvt.s32.f32 %v6339
    %v6596 = vcvt.s32.f32 %v6340
    %v6597 = vcvt.s32.f32 %v6341
    %v6598 = vcvt.s32.f32 %v6342
    %v6599 = vcvt.s32.f32 %v6343
    %v6600 = vcvt.s32.f32 %v6344
    %v6601 = vcvt.s32.f32 %v6345
    %v6602 = vcvt.s32.f32 %v6346
    %v6603 = vcvt.s32.f32 %v6347
    %v6604 = vcvt.s32.f32 %v6348
    %v6605 = vcvt.s32.f32 %v6349
    %v6606 = vcvt.s32.f32 %v6350
    %v6607 = vcvt.s32.f32 %v6351
    %v6608 = vcvt.s32.f32 %v6352
    %v6609 = vcvt.s32.f32 %v6353
    %v6610 = vcvt.s32.f32 %v6354
    %v6611 = vcvt.s32.f32 %v6355
    %v6612 = vcvt.s32.f32 %v6356
    %v6613 = vcvt.s32.f32 %v6357
    %v6614 = vcvt.s32.f32 %v6358
    %v6615 = vcvt.s32.f32 %v6359
    %v6616 = vcvt.s32.f32 %v6360
    %v6617 = vcvt.s32.f32 %v6361
    %v6618 = vcvt.s32.f32 %v6362
    %v6619 = vcvt.s32.f32 %v6363
    %v6620 = vcvt.s32.f32 %v6364
    %v6621 = vcvt.s32.f32 %v6365
    %v6622 = vcvt.s32.f32 %v6366
    %v6623 = vcvt.s32.f32 %v6367
    %v6624 = vcvt.s32.f32 %v6368
    %v6625 = vcvt.s32.f32 %v6369
    %v6626 = vcvt.s32.f32 %v6370
    %v6627 = vcvt.s32.f32 %v6371
    %v6628 = vcvt.s32.f32 %v6372
    %v6629 = vcvt.s32.f32 %v6373
    %v6630 = vcvt.s32.f32 %v6374
    %v6631 = vcvt.s32.f32 %v6375
    %v6632 = vcvt.s32.f32 %v6376
    %v6633 = vcvt.s32.f32 %v6377
    %v6634 = vcvt.s32.f32 %v6378
    %v6635 = vcvt.s32.f32 %v6379
    %v6636 = vcvt.s32.f32 %v6380
    %v6637 = vcvt.s32.f32 %v6381
    %v6638 = vcvt.s32.f32 %v6382
    %v6639 = vcvt.s32.f32 %v6383
    %v6640 = vcvt.s32.f32 %v6384
    %v6641 = vcvt.s32.f32 %v6385
    %v6642 = vcvt.s32.f32 %v6386
    %v6643 = vcvt.s32.f32 %v6387
    %v6644 = vcvt.s32.f32 %v6388
    %v6645 = vcvt.s32.f32 %v6389
    %v6646 = vcvt.s32.f32 %v6390
    %v6647 = vcvt.s32.f32 %v6391
    %v6648 = vcvt.s32.f32 %v6392
    %v6649 = vcvt.s32.f32 %v6393
    %v6650 = vcvt.s32.f32 %v6394
    %v6651 = vcvt.s32.f32 %v6395
    %v6652 = vcvt.s32.f32 %v6396
    %v6653 = vcvt.s32.f32 %v6397
    %v6654 = vcvt.s32.f32 %v6398
    %v6655 = vcvt.s32.f32 %v6399
    %v6656 = vcvt.s32.f32 %v6400
    %v6657 = vcvt.s32.f32 %v6401
    %v6658 = vcvt.s32.f32 %v6402
    %v6659 = vcvt.s32.f32 %v6403
    %v6660 = vcvt.s32.f32 %v6404
    %v6661 = vcvt.s32.f32 %v6405
    %v6662 = vcvt.s32.f32 %v6406
    %v6663 = vcvt.s32.f32 %v6407
    %v6664 = vcvt.s32.f32 %v6408
    %v6665 = vcvt.s32.f32 %v6409
    %v6666 = vcvt.s32.f32 %v6410
    %v6667 = vcvt.s32.f32 %v6411
    %v6668 = vcvt.s32.f32 %v6412
    %v6669 = vcvt.s32.f32 %v6413
    %v6670 = vcvt.s32.f32 %v6414
    %v6671 = vcvt.s32.f32 %v6415
    %v6672 = vcvt.s32.f32 %v6416
    %v6673 = vcvt.s32.f32 %v6417
    %v6674 = vcvt.s32.f32 %v6418
    %v6675 = vcvt.s32.f32 %v6419
    %v6676 = vcvt.s32.f32 %v6420
    %v6677 = vcvt.s32.f32 %v6421
    %v6678 = vcvt.s32.f32 %v6422
    %v6679 = vcvt.s32.f32 %v6423
    %v6680 = vcvt.s32.f32 %v6424
    %v6681 = vcvt.s32.f32 %v6425
    %v6682 = vcvt.s32.f32 %v6426
    %v6683 = vcvt.s32.f32 %v6427
    %v6684 = vcvt.s32.f32 %v6428
    %v6685 = vcvt.s32.f32 %v6429
    %v6686 = vcvt.s32.f32 %v6430
    %v6687 = vcvt.s32.f32 %v6431
    %v6688 = vcvt.s32.f32 %v6432
    %v6689 = vcvt.s32.f32 %v6433
    %v6690 = vcvt.s32.f32 %v6434
    %v6691 = vcvt.s32.f32 %v6435
    %v6692 = vcvt.s32.f32 %v6436
    %v6693 = vcvt.s32.f32 %v6437
    %v6694 = vcvt.s32.f32 %v6438
    %v6695 = vcvt.s32.f32 %v6439
    %v6696 = vcvt.s32.f32 %v6440
    %v6697 = vcvt.s32.f32 %v6441
    %v6698 = vcvt.s32.f32 %v6442
    %v6699 = vcvt.s32.f32 %v6443
    %v6700 = vcvt.s32.f32 %v6444
    %v6701 = vcvt.s32.f32 %v6445
    %v6702 = vcvt.s32.f32 %v6446
    %v6703 = vcvt.s32.f32 %v6447
    %v6704 = vcvt.s32.f32 %v6448
    %v6705 = vcvt.s32.f32 %v6449
    %v6706 = vcvt.s32.f32 %v6450
    %v6707 = vcvt.s32.f32 %v6451
    %v6708 = vcvt.s32.f32 %v6452
    %v6709 = vcvt.s32.f32 %v6453
    %v6710 = vcvt.s32.f32 %v6454
    %v6711 = vcvt.s32.f32 %v6455
    %v6712 = vcvt.s32.f32 %v6456
    %v6713 = vcvt.s32.f32 %v6457
    %v6714 = vcvt.s32.f32 %v6458
    %v6715 = vcvt.s32.f32 %v6459
    %v6716 = vcvt.s32.f32 %v6460
    %v6717 = vcvt.s32.f32 %v6461
    %v6718 = vcvt.s32.f32 %v6462
    %v6719 = vcvt.s32.f32 %v6463
    %v6720 = vcvt.s32.f32 %v6464
    %v6721 = vcvt.s32.f32 %v6465
    %v6722 = vcvt.s32.f32 %v6466
    %v6723 = vcvt.s32.f32 %v6467
    %v6724 = vcvt.s32.f32 %v6468
    %v6725 = vcvt.s32.f32 %v6469
    %v6726 = vcvt.s32.f32 %v6470
    %v6727 = vcvt.s32.f32 %v6471
    %v6728 = vcvt.s32.f32 %v6472
    %v6729 = vcvt.s32.f32 %v6473
    %v6730 = vcvt.s32.f32 %v6474
    %v6731 = vcvt.s32.f32 %v6475
    %v6732 = vcvt.s32.f32 %v6476
    %v6733 = vcvt.s32.f32 %v6477
    %v6734 = vcvt.s32.f32 %v6478
    %v6735 = vcvt.s32.f32 %v6479
    %v6736 = vcvt.s32.f32 %v6480
    %v6737 = vcvt.s32.f32 %v6481
    %v6738 = vcvt.s32.f32 %v6482
    %v6739 = vcvt.s32.f32 %v6483
    %v6740 = vcvt.s32.f32 %v6484
    %v6741 = vcvt.s32.f32 %v6485
    %v6742 = vcvt.s32.f32 %v6486
    %v6743 = vcvt.s32.f32 %v6487
    %v6744 = vcvt.s32.f32 %v6488
    %v6745 = vcvt.s32.f32 %v6489
    %v6746 = vcvt.s32.f32 %v6490
    %v6747 = vcvt.s32.f32 %v6491
    %v6748 = vpack.c.bf16 %v6496, %v6492
    %v6749 = vpack.c.bf16 %v6497, %v6493
    %v6750 = vpack.c.bf16 %v6498, %v6494
    %v6751 = vpack.c.bf16 %v6499, %v6495
    %v6752 = vpack.c.bf16 %v6504, %v6500
    %v6753 = vpack.c.bf16 %v6505, %v6501
    %v6754 = vpack.c.bf16 %v6506, %v6502
    %v6755 = vpack.c.bf16 %v6507, %v6503
    %v6756 = vpack.c.bf16 %v6512, %v6508
    %v6757 = vpack.c.bf16 %v6513, %v6509
    %v6758 = vpack.c.bf16 %v6514, %v6510
    %v6759 = vpack.c.bf16 %v6515, %v6511
    %v6760 = vpack.c.bf16 %v6520, %v6516
    %v6761 = vpack.c.bf16 %v6521, %v6517
    %v6762 = vpack.c.bf16 %v6522, %v6518
    %v6763 = vpack.c.bf16 %v6523, %v6519
    %v6764 = vpack.c.bf16 %v6528, %v6524
    %v6765 = vpack.c.bf16 %v6529, %v6525
    %v6766 = vpack.c.bf16 %v6530, %v6526
    %v6767 = vpack.c.bf16 %v6531, %v6527
    %v6768 = vpack.c.bf16 %v6536, %v6532
    %v6769 = vpack.c.bf16 %v6537, %v6533
    %v6770 = vpack.c.bf16 %v6538, %v6534
    %v6771 = vpack.c.bf16 %v6539, %v6535
    %v6772 = vpack.c.bf16 %v6544, %v6540
    %v6773 = vpack.c.bf16 %v6545, %v6541
    %v6774 = vpack.c.bf16 %v6546, %v6542
    %v6775 = vpack.c.bf16 %v6547, %v6543
    %v6776 = vpack.c.bf16 %v6552, %v6548
    %v6777 = vpack.c.bf16 %v6553, %v6549
    %v6778 = vpack.c.bf16 %v6554, %v6550
    %v6779 = vpack.c.bf16 %v6555, %v6551
    %v6780 = vpack.c.bf16 %v6560, %v6556
    %v6781 = vpack.c.bf16 %v6561, %v6557
    %v6782 = vpack.c.bf16 %v6562, %v6558
    %v6783 = vpack.c.bf16 %v6563, %v6559
    %v6784 = vpack.c.bf16 %v6568, %v6564
    %v6785 = vpack.c.bf16 %v6569, %v6565
    %v6786 = vpack.c.bf16 %v6570, %v6566
    %v6787 = vpack.c.bf16 %v6571, %v6567
    %v6788 = vpack.c.bf16 %v6576, %v6572
    %v6789 = vpack.c.bf16 %v6577, %v6573
    %v6790 = vpack.c.bf16 %v6578, %v6574
    %v6791 = vpack.c.bf16 %v6579, %v6575
    %v6792 = vpack.c.bf16 %v6584, %v6580
    %v6793 = vpack.c.bf16 %v6585, %v6581
    %v6794 = vpack.c.bf16 %v6586, %v6582
    %v6795 = vpack.c.bf16 %v6587, %v6583
    %v6796 = vpack.c.bf16 %v6592, %v6588
    %v6797 = vpack.c.bf16 %v6593, %v6589
    %v6798 = vpack.c.bf16 %v6594, %v6590
    %v6799 = vpack.c.bf16 %v6595, %v6591
    %v6800 = vpack.c.bf16 %v6600, %v6596
    %v6801 = vpack.c.bf16 %v6601, %v6597
    %v6802 = vpack.c.bf16 %v6602, %v6598
    %v6803 = vpack.c.bf16 %v6603, %v6599
    %v6804 = vpack.c.bf16 %v6608, %v6604
    %v6805 = vpack.c.bf16 %v6609, %v6605
    %v6806 = vpack.c.bf16 %v6610, %v6606
    %v6807 = vpack.c.bf16 %v6611, %v6607
    %v6808 = vpack.c.bf16 %v6616, %v6612
    %v6809 = vpack.c.bf16 %v6617, %v6613
    %v6810 = vpack.c.bf16 %v6618, %v6614
    %v6811 = vpack.c.bf16 %v6619, %v6615
    %v6812 = vpack.c.bf16 %v6624, %v6620
    %v6813 = vpack.c.bf16 %v6625, %v6621
    %v6814 = vpack.c.bf16 %v6626, %v6622
    %v6815 = vpack.c.bf16 %v6627, %v6623
    %v6816 = vpack.c.bf16 %v6632, %v6628
    %v6817 = vpack.c.bf16 %v6633, %v6629
    %v6818 = vpack.c.bf16 %v6634, %v6630
    %v6819 = vpack.c.bf16 %v6635, %v6631
    %v6820 = vpack.c.bf16 %v6640, %v6636
    %v6821 = vpack.c.bf16 %v6641, %v6637
    %v6822 = vpack.c.bf16 %v6642, %v6638
    %v6823 = vpack.c.bf16 %v6643, %v6639
    %v6824 = vpack.c.bf16 %v6648, %v6644
    %v6825 = vpack.c.bf16 %v6649, %v6645
    %v6826 = vpack.c.bf16 %v6650, %v6646
    %v6827 = vpack.c.bf16 %v6651, %v6647
    %v6828 = vpack.c.bf16 %v6656, %v6652
    %v6829 = vpack.c.bf16 %v6657, %v6653
    %v6830 = vpack.c.bf16 %v6658, %v6654
    %v6831 = vpack.c.bf16 %v6659, %v6655
    %v6832 = vpack.c.bf16 %v6664, %v6660
    %v6833 = vpack.c.bf16 %v6665, %v6661
    %v6834 = vpack.c.bf16 %v6666, %v6662
    %v6835 = vpack.c.bf16 %v6667, %v6663
    %v6836 = vpack.c.bf16 %v6672, %v6668
    %v6837 = vpack.c.bf16 %v6673, %v6669
    %v6838 = vpack.c.bf16 %v6674, %v6670
    %v6839 = vpack.c.bf16 %v6675, %v6671
    %v6840 = vpack.c.bf16 %v6680, %v6676
    %v6841 = vpack.c.bf16 %v6681, %v6677
    %v6842 = vpack.c.bf16 %v6682, %v6678
    %v6843 = vpack.c.bf16 %v6683, %v6679
    %v6844 = vpack.c.bf16 %v6688, %v6684
    %v6845 = vpack.c.bf16 %v6689, %v6685
    %v6846 = vpack.c.bf16 %v6690, %v6686
    %v6847 = vpack.c.bf16 %v6691, %v6687
    %v6848 = vpack.c.bf16 %v6696, %v6692
    %v6849 = vpack.c.bf16 %v6697, %v6693
    %v6850 = vpack.c.bf16 %v6698, %v6694
    %v6851 = vpack.c.bf16 %v6699, %v6695
    %v6852 = vpack.c.bf16 %v6704, %v6700
    %v6853 = vpack.c.bf16 %v6705, %v6701
    %v6854 = vpack.c.bf16 %v6706, %v6702
    %v6855 = vpack.c.bf16 %v6707, %v6703
    %v6856 = vpack.c.bf16 %v6712, %v6708
    %v6857 = vpack.c.bf16 %v6713, %v6709
    %v6858 = vpack.c.bf16 %v6714, %v6710
    %v6859 = vpack.c.bf16 %v6715, %v6711
    %v6860 = vpack.c.bf16 %v6720, %v6716
    %v6861 = vpack.c.bf16 %v6721, %v6717
    %v6862 = vpack.c.bf16 %v6722, %v6718
    %v6863 = vpack.c.bf16 %v6723, %v6719
    %v6864 = vpack.c.bf16 %v6728, %v6724
    %v6865 = vpack.c.bf16 %v6729, %v6725
    %v6866 = vpack.c.bf16 %v6730, %v6726
    %v6867 = vpack.c.bf16 %v6731, %v6727
    %v6868 = vpack.c.bf16 %v6736, %v6732
    %v6869 = vpack.c.bf16 %v6737, %v6733
    %v6870 = vpack.c.bf16 %v6738, %v6734
    %v6871 = vpack.c.bf16 %v6739, %v6735
    %v6872 = vpack.c.bf16 %v6744, %v6740
    %v6873 = vpack.c.bf16 %v6745, %v6741
    %v6874 = vpack.c.bf16 %v6746, %v6742
    %v6875 = vpack.c.bf16 %v6747, %v6743
    %v6876 = vpack.c.bf16 %v6167, %v6163
    %v6877 = vpack.c.bf16 %v6168, %v6164
    %v6878 = vpack.c.bf16 %v6169, %v6165
    %v6879 = vpack.c.bf16 %v6170, %v6166
    %6880 = vmatpush.bf16.msra.mxu0 %v6776
    %6881 = vmatpush.bf16.msra.mxu0 %v6772
    %6882 = vmatpush.bf16.msra.mxu0 %v6768
    %6883 = vmatpush.bf16.msra.mxu0 %v6764
    %6884 = vmatpush.bf16.msra.mxu0 %v6760
    %6885 = vmatpush.bf16.msra.mxu0 %v6756
    %6886 = vmatpush.bf16.msra.mxu0 %v6752
    %6887 = vmatpush.bf16.msra.mxu0 %v6748
    %6888 = vmatmul.bf16.gmra.mxu0 %v6876
    %v6889 = vpop.f32.mrf.mxu0
    %v6890 = vadd.f32 0.0, %v6889
    %v6891 = vpop.f32.mrf.mxu0
    %v6892 = vadd.f32 0.0, %v6891
    %6893 = vdwg.mxu0
    %6894 = vmatpush.bf16.msra.mxu0 %v6808
    %6895 = vmatpush.bf16.msra.mxu0 %v6804
    %6896 = vmatpush.bf16.msra.mxu0 %v6800
    %6897 = vmatpush.bf16.msra.mxu0 %v6796
    %6898 = vmatpush.bf16.msra.mxu0 %v6792
    %6899 = vmatpush.bf16.msra.mxu0 %v6788
    %6900 = vmatpush.bf16.msra.mxu0 %v6784
    %6901 = vmatpush.bf16.msra.mxu0 %v6780
    %6902 = vmatmul.bf16.gmra.mxu0 %v6877
    %v6903 = vpop.f32.mrf.mxu0
    %v6904 = vadd.f32 %v6890, %v6903
    %v6905 = vpop.f32.mrf.mxu0
    %v6906 = vadd.f32 %v6892, %v6905
    %6907 = vdwg.mxu0
    %6908 = vmatpush.bf16.msra.mxu0 %v6840
    %6909 = vmatpush.bf16.msra.mxu0 %v6836
    %6910 = vmatpush.bf16.msra.mxu0 %v6832
    %6911 = vmatpush.bf16.msra.mxu0 %v6828
    %6912 = vmatpush.bf16.msra.mxu0 %v6824
    %6913 = vmatpush.bf16.msra.mxu0 %v6820
    %6914 = vmatpush.bf16.msra.mxu0 %v6816
    %6915 = vmatpush.bf16.msra.mxu0 %v6812
    %6916 = vmatmul.bf16.gmra.mxu0 %v6878
    %v6917 = vpop.f32.mrf.mxu0
    %v6918 = vadd.f32 %v6904, %v6917
    %v6919 = vpop.f32.mrf.mxu0
    %v6920 = vadd.f32 %v6906, %v6919
    %6921 = vdwg.mxu0
    %6922 = vmatpush.bf16.msra.mxu0 %v6872
    %6923 = vmatpush.bf16.msra.mxu0 %v6868
    %6924 = vmatpush.bf16.msra.mxu0 %v6864
    %6925 = vmatpush.bf16.msra.mxu0 %v6860
    %6926 = vmatpush.bf16.msra.mxu0 %v6856
    %6927 = vmatpush.bf16.msra.mxu0 %v6852
    %6928 = vmatpush.bf16.msra.mxu0 %v6848
    %6929 = vmatpush.bf16.msra.mxu0 %v6844
    %6930 = vmatmul.bf16.gmra.mxu0 %v6879
    %v6931 = vpop.f32.mrf.mxu0
    %v6932 = vadd.f32 %v6918, %v6931
    %v6933 = vpop.f32.mrf.mxu0
    %v6934 = vadd.f32 %v6920, %v6933
    %6935 = vdwg.mxu0
    %6936 = vmatpush.bf16.msra.mxu0 %v6777
    %6937 = vmatpush.bf16.msra.mxu0 %v6773
    %6938 = vmatpush.bf16.msra.mxu0 %v6769
    %6939 = vmatpush.bf16.msra.mxu0 %v6765
    %6940 = vmatpush.bf16.msra.mxu0 %v6761
    %6941 = vmatpush.bf16.msra.mxu0 %v6757
    %6942 = vmatpush.bf16.msra.mxu0 %v6753
    %6943 = vmatpush.bf16.msra.mxu0 %v6749
    %6944 = vmatmul.bf16.gmra.mxu0 %v6876
    %v6945 = vpop.f32.mrf.mxu0
    %v6946 = vadd.f32 0.0, %v6945
    %v6947 = vpop.f32.mrf.mxu0
    %v6948 = vadd.f32 0.0, %v6947
    %6949 = vdwg.mxu0
    %6950 = vmatpush.bf16.msra.mxu0 %v6809
    %6951 = vmatpush.bf16.msra.mxu0 %v6805
    %6952 = vmatpush.bf16.msra.mxu0 %v6801
    %6953 = vmatpush.bf16.msra.mxu0 %v6797
    %6954 = vmatpush.bf16.msra.mxu0 %v6793
    %6955 = vmatpush.bf16.msra.mxu0 %v6789
    %6956 = vmatpush.bf16.msra.mxu0 %v6785
    %6957 = vmatpush.bf16.msra.mxu0 %v6781
    %6958 = vmatmul.bf16.gmra.mxu0 %v6877
    %v6959 = vpop.f32.mrf.mxu0
    %v6960 = vadd.f32 %v6946, %v6959
    %v6961 = vpop.f32.mrf.mxu0
    %v6962 = vadd.f32 %v6948, %v6961
    %6963 = vdwg.mxu0
    %6964 = vmatpush.bf16.msra.mxu0 %v6841
    %6965 = vmatpush.bf16.msra.mxu0 %v6837
    %6966 = vmatpush.bf16.msra.mxu0 %v6833
    %6967 = vmatpush.bf16.msra.mxu0 %v6829
    %6968 = vmatpush.bf16.msra.mxu0 %v6825
    %6969 = vmatpush.bf16.msra.mxu0 %v6821
    %6970 = vmatpush.bf16.msra.mxu0 %v6817
    %6971 = vmatpush.bf16.msra.mxu0 %v6813
    %6972 = vmatmul.bf16.gmra.mxu0 %v6878
    %v6973 = vpop.f32.mrf.mxu0
    %v6974 = vadd.f32 %v6960, %v6973
    %v6975 = vpop.f32.mrf.mxu0
    %v6976 = vadd.f32 %v6962, %v6975
    %6977 = vdwg.mxu0
    %6978 = vmatpush.bf16.msra.mxu0 %v6873
    %6979 = vmatpush.bf16.msra.mxu0 %v6869
    %6980 = vmatpush.bf16.msra.mxu0 %v6865
    %6981 = vmatpush.bf16.msra.mxu0 %v6861
    %6982 = vmatpush.bf16.msra.mxu0 %v6857
    %6983 = vmatpush.bf16.msra.mxu0 %v6853
    %6984 = vmatpush.bf16.msra.mxu0 %v6849
    %6985 = vmatpush.bf16.msra.mxu0 %v6845
    %6986 = vmatmul.bf16.gmra.mxu0 %v6879
    %v6987 = vpop.f32.mrf.mxu0
    %v6988 = vadd.f32 %v6974, %v6987
    %v6989 = vpop.f32.mrf.mxu0
    %v6990 = vadd.f32 %v6976, %v6989
    %6991 = vdwg.mxu0
    %6992 = vmatpush.bf16.msra.mxu0 %v6778
    %6993 = vmatpush.bf16.msra.mxu0 %v6774
    %6994 = vmatpush.bf16.msra.mxu0 %v6770
    %6995 = vmatpush.bf16.msra.mxu0 %v6766
    %6996 = vmatpush.bf16.msra.mxu0 %v6762
    %6997 = vmatpush.bf16.msra.mxu0 %v6758
    %6998 = vmatpush.bf16.msra.mxu0 %v6754
    %6999 = vmatpush.bf16.msra.mxu0 %v6750
    %7000 = vmatmul.bf16.gmra.mxu0 %v6876
    %v7001 = vpop.f32.mrf.mxu0
    %v7002 = vadd.f32 0.0, %v7001
    %v7003 = vpop.f32.mrf.mxu0
    %v7004 = vadd.f32 0.0, %v7003
    %7005 = vdwg.mxu0
    %7006 = vmatpush.bf16.msra.mxu0 %v6810
    %7007 = vmatpush.bf16.msra.mxu0 %v6806
    %7008 = vmatpush.bf16.msra.mxu0 %v6802
    %7009 = vmatpush.bf16.msra.mxu0 %v6798
    %7010 = vmatpush.bf16.msra.mxu0 %v6794
    %7011 = vmatpush.bf16.msra.mxu0 %v6790
    %7012 = vmatpush.bf16.msra.mxu0 %v6786
    %7013 = vmatpush.bf16.msra.mxu0 %v6782
    %7014 = vmatmul.bf16.gmra.mxu0 %v6877
    %v7015 = vpop.f32.mrf.mxu0
    %v7016 = vadd.f32 %v7002, %v7015
    %v7017 = vpop.f32.mrf.mxu0
    %v7018 = vadd.f32 %v7004, %v7017
    %7019 = vdwg.mxu0
    %7020 = vmatpush.bf16.msra.mxu0 %v6842
    %7021 = vmatpush.bf16.msra.mxu0 %v6838
    %7022 = vmatpush.bf16.msra.mxu0 %v6834
    %7023 = vmatpush.bf16.msra.mxu0 %v6830
    %7024 = vmatpush.bf16.msra.mxu0 %v6826
    %7025 = vmatpush.bf16.msra.mxu0 %v6822
    %7026 = vmatpush.bf16.msra.mxu0 %v6818
    %7027 = vmatpush.bf16.msra.mxu0 %v6814
    %7028 = vmatmul.bf16.gmra.mxu0 %v6878
    %v7029 = vpop.f32.mrf.mxu0
    %v7030 = vadd.f32 %v7016, %v7029
    %v7031 = vpop.f32.mrf.mxu0
    %v7032 = vadd.f32 %v7018, %v7031
    %7033 = vdwg.mxu0
    %7034 = vmatpush.bf16.msra.mxu0 %v6874
    %7035 = vmatpush.bf16.msra.mxu0 %v6870
    %7036 = vmatpush.bf16.msra.mxu0 %v6866
    %7037 = vmatpush.bf16.msra.mxu0 %v6862
    %7038 = vmatpush.bf16.msra.mxu0 %v6858
    %7039 = vmatpush.bf16.msra.mxu0 %v6854
    %7040 = vmatpush.bf16.msra.mxu0 %v6850
    %7041 = vmatpush.bf16.msra.mxu0 %v6846
    %7042 = vmatmul.bf16.gmra.mxu0 %v6879
    %v7043 = vpop.f32.mrf.mxu0
    %v7044 = vadd.f32 %v7030, %v7043
    %v7045 = vpop.f32.mrf.mxu0
    %v7046 = vadd.f32 %v7032, %v7045
    %7047 = vdwg.mxu0
    %7048 = vmatpush.bf16.msra.mxu0 %v6779
    %7049 = vmatpush.bf16.msra.mxu0 %v6775
    %7050 = vmatpush.bf16.msra.mxu0 %v6771
    %7051 = vmatpush.bf16.msra.mxu0 %v6767
    %7052 = vmatpush.bf16.msra.mxu0 %v6763
    %7053 = vmatpush.bf16.msra.mxu0 %v6759
    %7054 = vmatpush.bf16.msra.mxu0 %v6755
    %7055 = vmatpush.bf16.msra.mxu0 %v6751
    %7056 = vmatmul.bf16.gmra.mxu0 %v6876
    %v7057 = vpop.f32.mrf.mxu0
    %v7058 = vadd.f32 0.0, %v7057
    %v7059 = vpop.f32.mrf.mxu0
    %v7060 = vadd.f32 0.0, %v7059
    %7061 = vdwg.mxu0
    %7062 = vmatpush.bf16.msra.mxu0 %v6811
    %7063 = vmatpush.bf16.msra.mxu0 %v6807
    %7064 = vmatpush.bf16.msra.mxu0 %v6803
    %7065 = vmatpush.bf16.msra.mxu0 %v6799
    %7066 = vmatpush.bf16.msra.mxu0 %v6795
    %7067 = vmatpush.bf16.msra.mxu0 %v6791
    %7068 = vmatpush.bf16.msra.mxu0 %v6787
    %7069 = vmatpush.bf16.msra.mxu0 %v6783
    %7070 = vmatmul.bf16.gmra.mxu0 %v6877
    %v7071 = vpop.f32.mrf.mxu0
    %v7072 = vadd.f32 %v7058, %v7071
    %v7073 = vpop.f32.mrf.mxu0
    %v7074 = vadd.f32 %v7060, %v7073
    %7075 = vdwg.mxu0
    %7076 = vmatpush.bf16.msra.mxu0 %v6843
    %7077 = vmatpush.bf16.msra.mxu0 %v6839
    %7078 = vmatpush.bf16.msra.mxu0 %v6835
    %7079 = vmatpush.bf16.msra.mxu0 %v6831
    %7080 = vmatpush.bf16.msra.mxu0 %v6827
    %7081 = vmatpush.bf16.msra.mxu0 %v6823
    %7082 = vmatpush.bf16.msra.mxu0 %v6819
    %7083 = vmatpush.bf16.msra.mxu0 %v6815
    %7084 = vmatmul.bf16.gmra.mxu0 %v6878
    %v7085 = vpop.f32.mrf.mxu0
    %v7086 = vadd.f32 %v7072, %v7085
    %v7087 = vpop.f32.mrf.mxu0
    %v7088 = vadd.f32 %v7074, %v7087
    %7089 = vdwg.mxu0
    %7090 = vmatpush.bf16.msra.mxu0 %v6875
    %7091 = vmatpush.bf16.msra.mxu0 %v6871
    %7092 = vmatpush.bf16.msra.mxu0 %v6867
    %7093 = vmatpush.bf16.msra.mxu0 %v6863
    %7094 = vmatpush.bf16.msra.mxu0 %v6859
    %7095 = vmatpush.bf16.msra.mxu0 %v6855
    %7096 = vmatpush.bf16.msra.mxu0 %v6851
    %7097 = vmatpush.bf16.msra.mxu0 %v6847
    %7098 = vmatmul.bf16.gmra.mxu0 %v6879
    %v7099 = vpop.f32.mrf.mxu0
    %v7100 = vadd.f32 %v7086, %v7099
    %v7101 = vpop.f32.mrf.mxu0
    %v7102 = vadd.f32 %v7088, %v7101
    %7103 = vdwg.mxu0
    %s7104 = scalar_lea.vmem [#allocation10], 24
    %v7105 = vld [vmem:[%s7104] sm:$0xf]
    %v7107 = vperm.slane %v7105, 0
    %v7108 = vperm.slane %v7105, 1
    %v7109 = vperm.slane %v7105, 2
    %v7110 = vperm.slane %v7105, 3
    %v7115 = vmul.f32 %v6932, %v7107
    %v7116 = vmul.f32 %v6988, %v7108
    %v7117 = vmul.f32 %v7044, %v7109
    %v7118 = vmul.f32 %v7100, %v7110
    %v7119 = vmul.f32 %v6934, %v7107
    %v7120 = vmul.f32 %v6990, %v7108
    %v7121 = vmul.f32 %v7046, %v7109
    %v7122 = vmul.f32 %v7102, %v7110
    %s7123 = scalar_lea.vmem [#allocation11], 24
    %v7124 = vld [vmem:[%s7123] sm:$0xf]
    %v7126 = vperm.slane %v7124, 0
    %v7127 = vperm.slane %v7124, 1
    %v7128 = vperm.slane %v7124, 2
    %v7129 = vperm.slane %v7124, 3
    %v7134 = vadd.f32 %v7115, %v7126
    %v7135 = vadd.f32 %v7116, %v7127
    %v7136 = vadd.f32 %v7117, %v7128
    %v7137 = vadd.f32 %v7118, %v7129
    %v7138 = vadd.f32 %v7119, %v7126
    %v7139 = vadd.f32 %v7120, %v7127
    %v7140 = vadd.f32 %v7121, %v7128
    %v7141 = vadd.f32 %v7122, %v7129
    %v7142 = vmax.f32 %v7134, 0.0
    %v7143 = vmax.f32 %v7135, 0.0
    %v7144 = vmax.f32 %v7136, 0.0
    %v7145 = vmax.f32 %v7137, 0.0
    %v7146 = vmax.f32 %v7138, 0.0
    %v7147 = vmax.f32 %v7139, 0.0
    %v7148 = vmax.f32 %v7140, 0.0
    %v7149 = vmax.f32 %v7141, 0.0
    %s7150 = scalar_lea.vmem [#allocation8], 3584
    %v7151 = vld [vmem:[%s7150] sm:$0xff]
    %v7152 = vld [vmem:[%s7150 + $0x8] sm:$0xff]
    %v7153 = vld [vmem:[%s7150 + $0x10] sm:$0xff]
    %v7154 = vld [vmem:[%s7150 + $0x18] sm:$0xff]
    %v7155 = vld [vmem:[%s7150 + $0x20] sm:$0xff]
    %v7156 = vld [vmem:[%s7150 + $0x28] sm:$0xff]
    %v7157 = vld [vmem:[%s7150 + $0x30] sm:$0xff]
    %v7158 = vld [vmem:[%s7150 + $0x38] sm:$0xff]
    %v7159 = vld [vmem:[%s7150 + $0x40] sm:$0xff]
    %v7160 = vld [vmem:[%s7150 + $0x48] sm:$0xff]
    %v7161 = vld [vmem:[%s7150 + $0x50] sm:$0xff]
    %v7162 = vld [vmem:[%s7150 + $0x58] sm:$0xff]
    %v7163 = vld [vmem:[%s7150 + $0x60] sm:$0xff]
    %v7164 = vld [vmem:[%s7150 + $0x68] sm:$0xff]
    %v7165 = vld [vmem:[%s7150 + $0x70] sm:$0xff]
    %v7166 = vld [vmem:[%s7150 + $0x78] sm:$0xff]
    %v7167 = vld [vmem:[%s7150 + $0x80] sm:$0xff]
    %v7168 = vld [vmem:[%s7150 + $0x88] sm:$0xff]
    %v7169 = vld [vmem:[%s7150 + $0x90] sm:$0xff]
    %v7170 = vld [vmem:[%s7150 + $0x98] sm:$0xff]
    %v7171 = vld [vmem:[%s7150 + $0xa0] sm:$0xff]
    %v7172 = vld [vmem:[%s7150 + $0xa8] sm:$0xff]
    %v7173 = vld [vmem:[%s7150 + $0xb0] sm:$0xff]
    %v7174 = vld [vmem:[%s7150 + $0xb8] sm:$0xff]
    %v7175 = vld [vmem:[%s7150 + $0xc0] sm:$0xff]
    %v7176 = vld [vmem:[%s7150 + $0xc8] sm:$0xff]
    %v7177 = vld [vmem:[%s7150 + $0xd0] sm:$0xff]
    %v7178 = vld [vmem:[%s7150 + $0xd8] sm:$0xff]
    %v7179 = vld [vmem:[%s7150 + $0xe0] sm:$0xff]
    %v7180 = vld [vmem:[%s7150 + $0xe8] sm:$0xff]
    %v7181 = vld [vmem:[%s7150 + $0xf0] sm:$0xff]
    %v7182 = vld [vmem:[%s7150 + $0xf8] sm:$0xff]
    %v7183 = vld [vmem:[%s7150 + $0x100] sm:$0xff]
    %v7184 = vld [vmem:[%s7150 + $0x108] sm:$0xff]
    %v7185 = vld [vmem:[%s7150 + $0x110] sm:$0xff]
    %v7186 = vld [vmem:[%s7150 + $0x118] sm:$0xff]
    %v7187 = vld [vmem:[%s7150 + $0x120] sm:$0xff]
    %v7188 = vld [vmem:[%s7150 + $0x128] sm:$0xff]
    %v7189 = vld [vmem:[%s7150 + $0x130] sm:$0xff]
    %v7190 = vld [vmem:[%s7150 + $0x138] sm:$0xff]
    %v7191 = vld [vmem:[%s7150 + $0x140] sm:$0xff]
    %v7192 = vld [vmem:[%s7150 + $0x148] sm:$0xff]
    %v7193 = vld [vmem:[%s7150 + $0x150] sm:$0xff]
    %v7194 = vld [vmem:[%s7150 + $0x158] sm:$0xff]
    %v7195 = vld [vmem:[%s7150 + $0x160] sm:$0xff]
    %v7196 = vld [vmem:[%s7150 + $0x168] sm:$0xff]
    %v7197 = vld [vmem:[%s7150 + $0x170] sm:$0xff]
    %v7198 = vld [vmem:[%s7150 + $0x178] sm:$0xff]
    %v7199 = vld [vmem:[%s7150 + $0x180] sm:$0xff]
    %v7200 = vld [vmem:[%s7150 + $0x188] sm:$0xff]
    %v7201 = vld [vmem:[%s7150 + $0x190] sm:$0xff]
    %v7202 = vld [vmem:[%s7150 + $0x198] sm:$0xff]
    %v7203 = vld [vmem:[%s7150 + $0x1a0] sm:$0xff]
    %v7204 = vld [vmem:[%s7150 + $0x1a8] sm:$0xff]
    %v7205 = vld [vmem:[%s7150 + $0x1b0] sm:$0xff]
    %v7206 = vld [vmem:[%s7150 + $0x1b8] sm:$0xff]
    %v7207 = vld [vmem:[%s7150 + $0x1c0] sm:$0xff]
    %v7208 = vld [vmem:[%s7150 + $0x1c8] sm:$0xff]
    %v7209 = vld [vmem:[%s7150 + $0x1d0] sm:$0xff]
    %v7210 = vld [vmem:[%s7150 + $0x1d8] sm:$0xff]
    %v7211 = vld [vmem:[%s7150 + $0x1e0] sm:$0xff]
    %v7212 = vld [vmem:[%s7150 + $0x1e8] sm:$0xff]
    %v7213 = vld [vmem:[%s7150 + $0x1f0] sm:$0xff]
    %v7214 = vld [vmem:[%s7150 + $0x1f8] sm:$0xff]
    %v7215 = vunpack.c.0.s8 %v7151
    %v7216 = vunpack.c.0.s8 %v7152
    %v7217 = vunpack.c.0.s8 %v7153
    %v7218 = vunpack.c.0.s8 %v7154
    %v7219 = vunpack.c.1.s8 %v7151
    %v7220 = vunpack.c.1.s8 %v7152
    %v7221 = vunpack.c.1.s8 %v7153
    %v7222 = vunpack.c.1.s8 %v7154
    %v7223 = vunpack.c.2.s8 %v7151
    %v7224 = vunpack.c.2.s8 %v7152
    %v7225 = vunpack.c.2.s8 %v7153
    %v7226 = vunpack.c.2.s8 %v7154
    %v7227 = vunpack.c.3.s8 %v7151
    %v7228 = vunpack.c.3.s8 %v7152
    %v7229 = vunpack.c.3.s8 %v7153
    %v7230 = vunpack.c.3.s8 %v7154
    %v7231 = vunpack.c.0.s8 %v7155
    %v7232 = vunpack.c.0.s8 %v7156
    %v7233 = vunpack.c.0.s8 %v7157
    %v7234 = vunpack.c.0.s8 %v7158
    %v7235 = vunpack.c.1.s8 %v7155
    %v7236 = vunpack.c.1.s8 %v7156
    %v7237 = vunpack.c.1.s8 %v7157
    %v7238 = vunpack.c.1.s8 %v7158
    %v7239 = vunpack.c.2.s8 %v7155
    %v7240 = vunpack.c.2.s8 %v7156
    %v7241 = vunpack.c.2.s8 %v7157
    %v7242 = vunpack.c.2.s8 %v7158
    %v7243 = vunpack.c.3.s8 %v7155
    %v7244 = vunpack.c.3.s8 %v7156
    %v7245 = vunpack.c.3.s8 %v7157
    %v7246 = vunpack.c.3.s8 %v7158
    %v7247 = vunpack.c.0.s8 %v7159
    %v7248 = vunpack.c.0.s8 %v7160
    %v7249 = vunpack.c.0.s8 %v7161
    %v7250 = vunpack.c.0.s8 %v7162
    %v7251 = vunpack.c.1.s8 %v7159
    %v7252 = vunpack.c.1.s8 %v7160
    %v7253 = vunpack.c.1.s8 %v7161
    %v7254 = vunpack.c.1.s8 %v7162
    %v7255 = vunpack.c.2.s8 %v7159
    %v7256 = vunpack.c.2.s8 %v7160
    %v7257 = vunpack.c.2.s8 %v7161
    %v7258 = vunpack.c.2.s8 %v7162
    %v7259 = vunpack.c.3.s8 %v7159
    %v7260 = vunpack.c.3.s8 %v7160
    %v7261 = vunpack.c.3.s8 %v7161
    %v7262 = vunpack.c.3.s8 %v7162
    %v7263 = vunpack.c.0.s8 %v7163
    %v7264 = vunpack.c.0.s8 %v7164
    %v7265 = vunpack.c.0.s8 %v7165
    %v7266 = vunpack.c.0.s8 %v7166
    %v7267 = vunpack.c.1.s8 %v7163
    %v7268 = vunpack.c.1.s8 %v7164
    %v7269 = vunpack.c.1.s8 %v7165
    %v7270 = vunpack.c.1.s8 %v7166
    %v7271 = vunpack.c.2.s8 %v7163
    %v7272 = vunpack.c.2.s8 %v7164
    %v7273 = vunpack.c.2.s8 %v7165
    %v7274 = vunpack.c.2.s8 %v7166
    %v7275 = vunpack.c.3.s8 %v7163
    %v7276 = vunpack.c.3.s8 %v7164
    %v7277 = vunpack.c.3.s8 %v7165
    %v7278 = vunpack.c.3.s8 %v7166
    %v7279 = vunpack.c.0.s8 %v7167
    %v7280 = vunpack.c.0.s8 %v7168
    %v7281 = vunpack.c.0.s8 %v7169
    %v7282 = vunpack.c.0.s8 %v7170
    %v7283 = vunpack.c.1.s8 %v7167
    %v7284 = vunpack.c.1.s8 %v7168
    %v7285 = vunpack.c.1.s8 %v7169
    %v7286 = vunpack.c.1.s8 %v7170
    %v7287 = vunpack.c.2.s8 %v7167
    %v7288 = vunpack.c.2.s8 %v7168
    %v7289 = vunpack.c.2.s8 %v7169
    %v7290 = vunpack.c.2.s8 %v7170
    %v7291 = vunpack.c.3.s8 %v7167
    %v7292 = vunpack.c.3.s8 %v7168
    %v7293 = vunpack.c.3.s8 %v7169
    %v7294 = vunpack.c.3.s8 %v7170
    %v7295 = vunpack.c.0.s8 %v7171
    %v7296 = vunpack.c.0.s8 %v7172
    %v7297 = vunpack.c.0.s8 %v7173
    %v7298 = vunpack.c.0.s8 %v7174
    %v7299 = vunpack.c.1.s8 %v7171
    %v7300 = vunpack.c.1.s8 %v7172
    %v7301 = vunpack.c.1.s8 %v7173
    %v7302 = vunpack.c.1.s8 %v7174
    %v7303 = vunpack.c.2.s8 %v7171
    %v7304 = vunpack.c.2.s8 %v7172
    %v7305 = vunpack.c.2.s8 %v7173
    %v7306 = vunpack.c.2.s8 %v7174
    %v7307 = vunpack.c.3.s8 %v7171
    %v7308 = vunpack.c.3.s8 %v7172
    %v7309 = vunpack.c.3.s8 %v7173
    %v7310 = vunpack.c.3.s8 %v7174
    %v7311 = vunpack.c.0.s8 %v7175
    %v7312 = vunpack.c.0.s8 %v7176
    %v7313 = vunpack.c.0.s8 %v7177
    %v7314 = vunpack.c.0.s8 %v7178
    %v7315 = vunpack.c.1.s8 %v7175
    %v7316 = vunpack.c.1.s8 %v7176
    %v7317 = vunpack.c.1.s8 %v7177
    %v7318 = vunpack.c.1.s8 %v7178
    %v7319 = vunpack.c.2.s8 %v7175
    %v7320 = vunpack.c.2.s8 %v7176
    %v7321 = vunpack.c.2.s8 %v7177
    %v7322 = vunpack.c.2.s8 %v7178
    %v7323 = vunpack.c.3.s8 %v7175
    %v7324 = vunpack.c.3.s8 %v7176
    %v7325 = vunpack.c.3.s8 %v7177
    %v7326 = vunpack.c.3.s8 %v7178
    %v7327 = vunpack.c.0.s8 %v7179
    %v7328 = vunpack.c.0.s8 %v7180
    %v7329 = vunpack.c.0.s8 %v7181
    %v7330 = vunpack.c.0.s8 %v7182
    %v7331 = vunpack.c.1.s8 %v7179
    %v7332 = vunpack.c.1.s8 %v7180
    %v7333 = vunpack.c.1.s8 %v7181
    %v7334 = vunpack.c.1.s8 %v7182
    %v7335 = vunpack.c.2.s8 %v7179
    %v7336 = vunpack.c.2.s8 %v7180
    %v7337 = vunpack.c.2.s8 %v7181
    %v7338 = vunpack.c.2.s8 %v7182
    %v7339 = vunpack.c.3.s8 %v7179
    %v7340 = vunpack.c.3.s8 %v7180
    %v7341 = vunpack.c.3.s8 %v7181
    %v7342 = vunpack.c.3.s8 %v7182
    %v7343 = vunpack.c.0.s8 %v7183
    %v7344 = vunpack.c.0.s8 %v7184
    %v7345 = vunpack.c.0.s8 %v7185
    %v7346 = vunpack.c.0.s8 %v7186
    %v7347 = vunpack.c.1.s8 %v7183
    %v7348 = vunpack.c.1.s8 %v7184
    %v7349 = vunpack.c.1.s8 %v7185
    %v7350 = vunpack.c.1.s8 %v7186
    %v7351 = vunpack.c.2.s8 %v7183
    %v7352 = vunpack.c.2.s8 %v7184
    %v7353 = vunpack.c.2.s8 %v7185
    %v7354 = vunpack.c.2.s8 %v7186
    %v7355 = vunpack.c.3.s8 %v7183
    %v7356 = vunpack.c.3.s8 %v7184
    %v7357 = vunpack.c.3.s8 %v7185
    %v7358 = vunpack.c.3.s8 %v7186
    %v7359 = vunpack.c.0.s8 %v7187
    %v7360 = vunpack.c.0.s8 %v7188
    %v7361 = vunpack.c.0.s8 %v7189
    %v7362 = vunpack.c.0.s8 %v7190
    %v7363 = vunpack.c.1.s8 %v7187
    %v7364 = vunpack.c.1.s8 %v7188
    %v7365 = vunpack.c.1.s8 %v7189
    %v7366 = vunpack.c.1.s8 %v7190
    %v7367 = vunpack.c.2.s8 %v7187
    %v7368 = vunpack.c.2.s8 %v7188
    %v7369 = vunpack.c.2.s8 %v7189
    %v7370 = vunpack.c.2.s8 %v7190
    %v7371 = vunpack.c.3.s8 %v7187
    %v7372 = vunpack.c.3.s8 %v7188
    %v7373 = vunpack.c.3.s8 %v7189
    %v7374 = vunpack.c.3.s8 %v7190
    %v7375 = vunpack.c.0.s8 %v7191
    %v7376 = vunpack.c.0.s8 %v7192
    %v7377 = vunpack.c.0.s8 %v7193
    %v7378 = vunpack.c.0.s8 %v7194
    %v7379 = vunpack.c.1.s8 %v7191
    %v7380 = vunpack.c.1.s8 %v7192
    %v7381 = vunpack.c.1.s8 %v7193
    %v7382 = vunpack.c.1.s8 %v7194
    %v7383 = vunpack.c.2.s8 %v7191
    %v7384 = vunpack.c.2.s8 %v7192
    %v7385 = vunpack.c.2.s8 %v7193
    %v7386 = vunpack.c.2.s8 %v7194
    %v7387 = vunpack.c.3.s8 %v7191
    %v7388 = vunpack.c.3.s8 %v7192
    %v7389 = vunpack.c.3.s8 %v7193
    %v7390 = vunpack.c.3.s8 %v7194
    %v7391 = vunpack.c.0.s8 %v7195
    %v7392 = vunpack.c.0.s8 %v7196
    %v7393 = vunpack.c.0.s8 %v7197
    %v7394 = vunpack.c.0.s8 %v7198
    %v7395 = vunpack.c.1.s8 %v7195
    %v7396 = vunpack.c.1.s8 %v7196
    %v7397 = vunpack.c.1.s8 %v7197
    %v7398 = vunpack.c.1.s8 %v7198
    %v7399 = vunpack.c.2.s8 %v7195
    %v7400 = vunpack.c.2.s8 %v7196
    %v7401 = vunpack.c.2.s8 %v7197
    %v7402 = vunpack.c.2.s8 %v7198
    %v7403 = vunpack.c.3.s8 %v7195
    %v7404 = vunpack.c.3.s8 %v7196
    %v7405 = vunpack.c.3.s8 %v7197
    %v7406 = vunpack.c.3.s8 %v7198
    %v7407 = vunpack.c.0.s8 %v7199
    %v7408 = vunpack.c.0.s8 %v7200
    %v7409 = vunpack.c.0.s8 %v7201
    %v7410 = vunpack.c.0.s8 %v7202
    %v7411 = vunpack.c.1.s8 %v7199
    %v7412 = vunpack.c.1.s8 %v7200
    %v7413 = vunpack.c.1.s8 %v7201
    %v7414 = vunpack.c.1.s8 %v7202
    %v7415 = vunpack.c.2.s8 %v7199
    %v7416 = vunpack.c.2.s8 %v7200
    %v7417 = vunpack.c.2.s8 %v7201
    %v7418 = vunpack.c.2.s8 %v7202
    %v7419 = vunpack.c.3.s8 %v7199
    %v7420 = vunpack.c.3.s8 %v7200
    %v7421 = vunpack.c.3.s8 %v7201
    %v7422 = vunpack.c.3.s8 %v7202
    %v7423 = vunpack.c.0.s8 %v7203
    %v7424 = vunpack.c.0.s8 %v7204
    %v7425 = vunpack.c.0.s8 %v7205
    %v7426 = vunpack.c.0.s8 %v7206
    %v7427 = vunpack.c.1.s8 %v7203
    %v7428 = vunpack.c.1.s8 %v7204
    %v7429 = vunpack.c.1.s8 %v7205
    %v7430 = vunpack.c.1.s8 %v7206
    %v7431 = vunpack.c.2.s8 %v7203
    %v7432 = vunpack.c.2.s8 %v7204
    %v7433 = vunpack.c.2.s8 %v7205
    %v7434 = vunpack.c.2.s8 %v7206
    %v7435 = vunpack.c.3.s8 %v7203
    %v7436 = vunpack.c.3.s8 %v7204
    %v7437 = vunpack.c.3.s8 %v7205
    %v7438 = vunpack.c.3.s8 %v7206
    %v7439 = vunpack.c.0.s8 %v7207
    %v7440 = vunpack.c.0.s8 %v7208
    %v7441 = vunpack.c.0.s8 %v7209
    %v7442 = vunpack.c.0.s8 %v7210
    %v7443 = vunpack.c.1.s8 %v7207
    %v7444 = vunpack.c.1.s8 %v7208
    %v7445 = vunpack.c.1.s8 %v7209
    %v7446 = vunpack.c.1.s8 %v7210
    %v7447 = vunpack.c.2.s8 %v7207
    %v7448 = vunpack.c.2.s8 %v7208
    %v7449 = vunpack.c.2.s8 %v7209
    %v7450 = vunpack.c.2.s8 %v7210
    %v7451 = vunpack.c.3.s8 %v7207
    %v7452 = vunpack.c.3.s8 %v7208
    %v7453 = vunpack.c.3.s8 %v7209
    %v7454 = vunpack.c.3.s8 %v7210
    %v7455 = vunpack.c.0.s8 %v7211
    %v7456 = vunpack.c.0.s8 %v7212
    %v7457 = vunpack.c.0.s8 %v7213
    %v7458 = vunpack.c.0.s8 %v7214
    %v7459 = vunpack.c.1.s8 %v7211
    %v7460 = vunpack.c.1.s8 %v7212
    %v7461 = vunpack.c.1.s8 %v7213
    %v7462 = vunpack.c.1.s8 %v7214
    %v7463 = vunpack.c.2.s8 %v7211
    %v7464 = vunpack.c.2.s8 %v7212
    %v7465 = vunpack.c.2.s8 %v7213
    %v7466 = vunpack.c.2.s8 %v7214
    %v7467 = vunpack.c.3.s8 %v7211
    %v7468 = vunpack.c.3.s8 %v7212
    %v7469 = vunpack.c.3.s8 %v7213
    %v7470 = vunpack.c.3.s8 %v7214
    %v7471 = vcvt.s32.f32 %v7215
    %v7472 = vcvt.s32.f32 %v7216
    %v7473 = vcvt.s32.f32 %v7217
    %v7474 = vcvt.s32.f32 %v7218
    %v7475 = vcvt.s32.f32 %v7219
    %v7476 = vcvt.s32.f32 %v7220
    %v7477 = vcvt.s32.f32 %v7221
    %v7478 = vcvt.s32.f32 %v7222
    %v7479 = vcvt.s32.f32 %v7223
    %v7480 = vcvt.s32.f32 %v7224
    %v7481 = vcvt.s32.f32 %v7225
    %v7482 = vcvt.s32.f32 %v7226
    %v7483 = vcvt.s32.f32 %v7227
    %v7484 = vcvt.s32.f32 %v7228
    %v7485 = vcvt.s32.f32 %v7229
    %v7486 = vcvt.s32.f32 %v7230
    %v7487 = vcvt.s32.f32 %v7231
    %v7488 = vcvt.s32.f32 %v7232
    %v7489 = vcvt.s32.f32 %v7233
    %v7490 = vcvt.s32.f32 %v7234
    %v7491 = vcvt.s32.f32 %v7235
    %v7492 = vcvt.s32.f32 %v7236
    %v7493 = vcvt.s32.f32 %v7237
    %v7494 = vcvt.s32.f32 %v7238
    %v7495 = vcvt.s32.f32 %v7239
    %v7496 = vcvt.s32.f32 %v7240
    %v7497 = vcvt.s32.f32 %v7241
    %v7498 = vcvt.s32.f32 %v7242
    %v7499 = vcvt.s32.f32 %v7243
    %v7500 = vcvt.s32.f32 %v7244
    %v7501 = vcvt.s32.f32 %v7245
    %v7502 = vcvt.s32.f32 %v7246
    %v7503 = vcvt.s32.f32 %v7247
    %v7504 = vcvt.s32.f32 %v7248
    %v7505 = vcvt.s32.f32 %v7249
    %v7506 = vcvt.s32.f32 %v7250
    %v7507 = vcvt.s32.f32 %v7251
    %v7508 = vcvt.s32.f32 %v7252
    %v7509 = vcvt.s32.f32 %v7253
    %v7510 = vcvt.s32.f32 %v7254
    %v7511 = vcvt.s32.f32 %v7255
    %v7512 = vcvt.s32.f32 %v7256
    %v7513 = vcvt.s32.f32 %v7257
    %v7514 = vcvt.s32.f32 %v7258
    %v7515 = vcvt.s32.f32 %v7259
    %v7516 = vcvt.s32.f32 %v7260
    %v7517 = vcvt.s32.f32 %v7261
    %v7518 = vcvt.s32.f32 %v7262
    %v7519 = vcvt.s32.f32 %v7263
    %v7520 = vcvt.s32.f32 %v7264
    %v7521 = vcvt.s32.f32 %v7265
    %v7522 = vcvt.s32.f32 %v7266
    %v7523 = vcvt.s32.f32 %v7267
    %v7524 = vcvt.s32.f32 %v7268
    %v7525 = vcvt.s32.f32 %v7269
    %v7526 = vcvt.s32.f32 %v7270
    %v7527 = vcvt.s32.f32 %v7271
    %v7528 = vcvt.s32.f32 %v7272
    %v7529 = vcvt.s32.f32 %v7273
    %v7530 = vcvt.s32.f32 %v7274
    %v7531 = vcvt.s32.f32 %v7275
    %v7532 = vcvt.s32.f32 %v7276
    %v7533 = vcvt.s32.f32 %v7277
    %v7534 = vcvt.s32.f32 %v7278
    %v7535 = vcvt.s32.f32 %v7279
    %v7536 = vcvt.s32.f32 %v7280
    %v7537 = vcvt.s32.f32 %v7281
    %v7538 = vcvt.s32.f32 %v7282
    %v7539 = vcvt.s32.f32 %v7283
    %v7540 = vcvt.s32.f32 %v7284
    %v7541 = vcvt.s32.f32 %v7285
    %v7542 = vcvt.s32.f32 %v7286
    %v7543 = vcvt.s32.f32 %v7287
    %v7544 = vcvt.s32.f32 %v7288
    %v7545 = vcvt.s32.f32 %v7289
    %v7546 = vcvt.s32.f32 %v7290
    %v7547 = vcvt.s32.f32 %v7291
    %v7548 = vcvt.s32.f32 %v7292
    %v7549 = vcvt.s32.f32 %v7293
    %v7550 = vcvt.s32.f32 %v7294
    %v7551 = vcvt.s32.f32 %v7295
    %v7552 = vcvt.s32.f32 %v7296
    %v7553 = vcvt.s32.f32 %v7297
    %v7554 = vcvt.s32.f32 %v7298
    %v7555 = vcvt.s32.f32 %v7299
    %v7556 = vcvt.s32.f32 %v7300
    %v7557 = vcvt.s32.f32 %v7301
    %v7558 = vcvt.s32.f32 %v7302
    %v7559 = vcvt.s32.f32 %v7303
    %v7560 = vcvt.s32.f32 %v7304
    %v7561 = vcvt.s32.f32 %v7305
    %v7562 = vcvt.s32.f32 %v7306
    %v7563 = vcvt.s32.f32 %v7307
    %v7564 = vcvt.s32.f32 %v7308
    %v7565 = vcvt.s32.f32 %v7309
    %v7566 = vcvt.s32.f32 %v7310
    %v7567 = vcvt.s32.f32 %v7311
    %v7568 = vcvt.s32.f32 %v7312
    %v7569 = vcvt.s32.f32 %v7313
    %v7570 = vcvt.s32.f32 %v7314
    %v7571 = vcvt.s32.f32 %v7315
    %v7572 = vcvt.s32.f32 %v7316
    %v7573 = vcvt.s32.f32 %v7317
    %v7574 = vcvt.s32.f32 %v7318
    %v7575 = vcvt.s32.f32 %v7319
    %v7576 = vcvt.s32.f32 %v7320
    %v7577 = vcvt.s32.f32 %v7321
    %v7578 = vcvt.s32.f32 %v7322
    %v7579 = vcvt.s32.f32 %v7323
    %v7580 = vcvt.s32.f32 %v7324
    %v7581 = vcvt.s32.f32 %v7325
    %v7582 = vcvt.s32.f32 %v7326
    %v7583 = vcvt.s32.f32 %v7327
    %v7584 = vcvt.s32.f32 %v7328
    %v7585 = vcvt.s32.f32 %v7329
    %v7586 = vcvt.s32.f32 %v7330
    %v7587 = vcvt.s32.f32 %v7331
    %v7588 = vcvt.s32.f32 %v7332
    %v7589 = vcvt.s32.f32 %v7333
    %v7590 = vcvt.s32.f32 %v7334
    %v7591 = vcvt.s32.f32 %v7335
    %v7592 = vcvt.s32.f32 %v7336
    %v7593 = vcvt.s32.f32 %v7337
    %v7594 = vcvt.s32.f32 %v7338
    %v7595 = vcvt.s32.f32 %v7339
    %v7596 = vcvt.s32.f32 %v7340
    %v7597 = vcvt.s32.f32 %v7341
    %v7598 = vcvt.s32.f32 %v7342
    %v7599 = vcvt.s32.f32 %v7343
    %v7600 = vcvt.s32.f32 %v7344
    %v7601 = vcvt.s32.f32 %v7345
    %v7602 = vcvt.s32.f32 %v7346
    %v7603 = vcvt.s32.f32 %v7347
    %v7604 = vcvt.s32.f32 %v7348
    %v7605 = vcvt.s32.f32 %v7349
    %v7606 = vcvt.s32.f32 %v7350
    %v7607 = vcvt.s32.f32 %v7351
    %v7608 = vcvt.s32.f32 %v7352
    %v7609 = vcvt.s32.f32 %v7353
    %v7610 = vcvt.s32.f32 %v7354
    %v7611 = vcvt.s32.f32 %v7355
    %v7612 = vcvt.s32.f32 %v7356
    %v7613 = vcvt.s32.f32 %v7357
    %v7614 = vcvt.s32.f32 %v7358
    %v7615 = vcvt.s32.f32 %v7359
    %v7616 = vcvt.s32.f32 %v7360
    %v7617 = vcvt.s32.f32 %v7361
    %v7618 = vcvt.s32.f32 %v7362
    %v7619 = vcvt.s32.f32 %v7363
    %v7620 = vcvt.s32.f32 %v7364
    %v7621 = vcvt.s32.f32 %v7365
    %v7622 = vcvt.s32.f32 %v7366
    %v7623 = vcvt.s32.f32 %v7367
    %v7624 = vcvt.s32.f32 %v7368
    %v7625 = vcvt.s32.f32 %v7369
    %v7626 = vcvt.s32.f32 %v7370
    %v7627 = vcvt.s32.f32 %v7371
    %v7628 = vcvt.s32.f32 %v7372
    %v7629 = vcvt.s32.f32 %v7373
    %v7630 = vcvt.s32.f32 %v7374
    %v7631 = vcvt.s32.f32 %v7375
    %v7632 = vcvt.s32.f32 %v7376
    %v7633 = vcvt.s32.f32 %v7377
    %v7634 = vcvt.s32.f32 %v7378
    %v7635 = vcvt.s32.f32 %v7379
    %v7636 = vcvt.s32.f32 %v7380
    %v7637 = vcvt.s32.f32 %v7381
    %v7638 = vcvt.s32.f32 %v7382
    %v7639 = vcvt.s32.f32 %v7383
    %v7640 = vcvt.s32.f32 %v7384
    %v7641 = vcvt.s32.f32 %v7385
    %v7642 = vcvt.s32.f32 %v7386
    %v7643 = vcvt.s32.f32 %v7387
    %v7644 = vcvt.s32.f32 %v7388
    %v7645 = vcvt.s32.f32 %v7389
    %v7646 = vcvt.s32.f32 %v7390
    %v7647 = vcvt.s32.f32 %v7391
    %v7648 = vcvt.s32.f32 %v7392
    %v7649 = vcvt.s32.f32 %v7393
    %v7650 = vcvt.s32.f32 %v7394
    %v7651 = vcvt.s32.f32 %v7395
    %v7652 = vcvt.s32.f32 %v7396
    %v7653 = vcvt.s32.f32 %v7397
    %v7654 = vcvt.s32.f32 %v7398
    %v7655 = vcvt.s32.f32 %v7399
    %v7656 = vcvt.s32.f32 %v7400
    %v7657 = vcvt.s32.f32 %v7401
    %v7658 = vcvt.s32.f32 %v7402
    %v7659 = vcvt.s32.f32 %v7403
    %v7660 = vcvt.s32.f32 %v7404
    %v7661 = vcvt.s32.f32 %v7405
    %v7662 = vcvt.s32.f32 %v7406
    %v7663 = vcvt.s32.f32 %v7407
    %v7664 = vcvt.s32.f32 %v7408
    %v7665 = vcvt.s32.f32 %v7409
    %v7666 = vcvt.s32.f32 %v7410
    %v7667 = vcvt.s32.f32 %v7411
    %v7668 = vcvt.s32.f32 %v7412
    %v7669 = vcvt.s32.f32 %v7413
    %v7670 = vcvt.s32.f32 %v7414
    %v7671 = vcvt.s32.f32 %v7415
    %v7672 = vcvt.s32.f32 %v7416
    %v7673 = vcvt.s32.f32 %v7417
    %v7674 = vcvt.s32.f32 %v7418
    %v7675 = vcvt.s32.f32 %v7419
    %v7676 = vcvt.s32.f32 %v7420
    %v7677 = vcvt.s32.f32 %v7421
    %v7678 = vcvt.s32.f32 %v7422
    %v7679 = vcvt.s32.f32 %v7423
    %v7680 = vcvt.s32.f32 %v7424
    %v7681 = vcvt.s32.f32 %v7425
    %v7682 = vcvt.s32.f32 %v7426
    %v7683 = vcvt.s32.f32 %v7427
    %v7684 = vcvt.s32.f32 %v7428
    %v7685 = vcvt.s32.f32 %v7429
    %v7686 = vcvt.s32.f32 %v7430
    %v7687 = vcvt.s32.f32 %v7431
    %v7688 = vcvt.s32.f32 %v7432
    %v7689 = vcvt.s32.f32 %v7433
    %v7690 = vcvt.s32.f32 %v7434
    %v7691 = vcvt.s32.f32 %v7435
    %v7692 = vcvt.s32.f32 %v7436
    %v7693 = vcvt.s32.f32 %v7437
    %v7694 = vcvt.s32.f32 %v7438
    %v7695 = vcvt.s32.f32 %v7439
    %v7696 = vcvt.s32.f32 %v7440
    %v7697 = vcvt.s32.f32 %v7441
    %v7698 = vcvt.s32.f32 %v7442
    %v7699 = vcvt.s32.f32 %v7443
    %v7700 = vcvt.s32.f32 %v7444
    %v7701 = vcvt.s32.f32 %v7445
    %v7702 = vcvt.s32.f32 %v7446
    %v7703 = vcvt.s32.f32 %v7447
    %v7704 = vcvt.s32.f32 %v7448
    %v7705 = vcvt.s32.f32 %v7449
    %v7706 = vcvt.s32.f32 %v7450
    %v7707 = vcvt.s32.f32 %v7451
    %v7708 = vcvt.s32.f32 %v7452
    %v7709 = vcvt.s32.f32 %v7453
    %v7710 = vcvt.s32.f32 %v7454
    %v7711 = vcvt.s32.f32 %v7455
    %v7712 = vcvt.s32.f32 %v7456
    %v7713 = vcvt.s32.f32 %v7457
    %v7714 = vcvt.s32.f32 %v7458
    %v7715 = vcvt.s32.f32 %v7459
    %v7716 = vcvt.s32.f32 %v7460
    %v7717 = vcvt.s32.f32 %v7461
    %v7718 = vcvt.s32.f32 %v7462
    %v7719 = vcvt.s32.f32 %v7463
    %v7720 = vcvt.s32.f32 %v7464
    %v7721 = vcvt.s32.f32 %v7465
    %v7722 = vcvt.s32.f32 %v7466
    %v7723 = vcvt.s32.f32 %v7467
    %v7724 = vcvt.s32.f32 %v7468
    %v7725 = vcvt.s32.f32 %v7469
    %v7726 = vcvt.s32.f32 %v7470
    %v7727 = vpack.c.bf16 %v7475, %v7471
    %v7728 = vpack.c.bf16 %v7476, %v7472
    %v7729 = vpack.c.bf16 %v7477, %v7473
    %v7730 = vpack.c.bf16 %v7478, %v7474
    %v7731 = vpack.c.bf16 %v7483, %v7479
    %v7732 = vpack.c.bf16 %v7484, %v7480
    %v7733 = vpack.c.bf16 %v7485, %v7481
    %v7734 = vpack.c.bf16 %v7486, %v7482
    %v7735 = vpack.c.bf16 %v7491, %v7487
    %v7736 = vpack.c.bf16 %v7492, %v7488
    %v7737 = vpack.c.bf16 %v7493, %v7489
    %v7738 = vpack.c.bf16 %v7494, %v7490
    %v7739 = vpack.c.bf16 %v7499, %v7495
    %v7740 = vpack.c.bf16 %v7500, %v7496
    %v7741 = vpack.c.bf16 %v7501, %v7497
    %v7742 = vpack.c.bf16 %v7502, %v7498
    %v7743 = vpack.c.bf16 %v7507, %v7503
    %v7744 = vpack.c.bf16 %v7508, %v7504
    %v7745 = vpack.c.bf16 %v7509, %v7505
    %v7746 = vpack.c.bf16 %v7510, %v7506
    %v7747 = vpack.c.bf16 %v7515, %v7511
    %v7748 = vpack.c.bf16 %v7516, %v7512
    %v7749 = vpack.c.bf16 %v7517, %v7513
    %v7750 = vpack.c.bf16 %v7518, %v7514
    %v7751 = vpack.c.bf16 %v7523, %v7519
    %v7752 = vpack.c.bf16 %v7524, %v7520
    %v7753 = vpack.c.bf16 %v7525, %v7521
    %v7754 = vpack.c.bf16 %v7526, %v7522
    %v7755 = vpack.c.bf16 %v7531, %v7527
    %v7756 = vpack.c.bf16 %v7532, %v7528
    %v7757 = vpack.c.bf16 %v7533, %v7529
    %v7758 = vpack.c.bf16 %v7534, %v7530
    %v7759 = vpack.c.bf16 %v7539, %v7535
    %v7760 = vpack.c.bf16 %v7540, %v7536
    %v7761 = vpack.c.bf16 %v7541, %v7537
    %v7762 = vpack.c.bf16 %v7542, %v7538
    %v7763 = vpack.c.bf16 %v7547, %v7543
    %v7764 = vpack.c.bf16 %v7548, %v7544
    %v7765 = vpack.c.bf16 %v7549, %v7545
    %v7766 = vpack.c.bf16 %v7550, %v7546
    %v7767 = vpack.c.bf16 %v7555, %v7551
    %v7768 = vpack.c.bf16 %v7556, %v7552
    %v7769 = vpack.c.bf16 %v7557, %v7553
    %v7770 = vpack.c.bf16 %v7558, %v7554
    %v7771 = vpack.c.bf16 %v7563, %v7559
    %v7772 = vpack.c.bf16 %v7564, %v7560
    %v7773 = vpack.c.bf16 %v7565, %v7561
    %v7774 = vpack.c.bf16 %v7566, %v7562
    %v7775 = vpack.c.bf16 %v7571, %v7567
    %v7776 = vpack.c.bf16 %v7572, %v7568
    %v7777 = vpack.c.bf16 %v7573, %v7569
    %v7778 = vpack.c.bf16 %v7574, %v7570
    %v7779 = vpack.c.bf16 %v7579, %v7575
    %v7780 = vpack.c.bf16 %v7580, %v7576
    %v7781 = vpack.c.bf16 %v7581, %v7577
    %v7782 = vpack.c.bf16 %v7582, %v7578
    %v7783 = vpack.c.bf16 %v7587, %v7583
    %v7784 = vpack.c.bf16 %v7588, %v7584
    %v7785 = vpack.c.bf16 %v7589, %v7585
    %v7786 = vpack.c.bf16 %v7590, %v7586
    %v7787 = vpack.c.bf16 %v7595, %v7591
    %v7788 = vpack.c.bf16 %v7596, %v7592
    %v7789 = vpack.c.bf16 %v7597, %v7593
    %v7790 = vpack.c.bf16 %v7598, %v7594
    %v7791 = vpack.c.bf16 %v7603, %v7599
    %v7792 = vpack.c.bf16 %v7604, %v7600
    %v7793 = vpack.c.bf16 %v7605, %v7601
    %v7794 = vpack.c.bf16 %v7606, %v7602
    %v7795 = vpack.c.bf16 %v7611, %v7607
    %v7796 = vpack.c.bf16 %v7612, %v7608
    %v7797 = vpack.c.bf16 %v7613, %v7609
    %v7798 = vpack.c.bf16 %v7614, %v7610
    %v7799 = vpack.c.bf16 %v7619, %v7615
    %v7800 = vpack.c.bf16 %v7620, %v7616
    %v7801 = vpack.c.bf16 %v7621, %v7617
    %v7802 = vpack.c.bf16 %v7622, %v7618
    %v7803 = vpack.c.bf16 %v7627, %v7623
    %v7804 = vpack.c.bf16 %v7628, %v7624
    %v7805 = vpack.c.bf16 %v7629, %v7625
    %v7806 = vpack.c.bf16 %v7630, %v7626
    %v7807 = vpack.c.bf16 %v7635, %v7631
    %v7808 = vpack.c.bf16 %v7636, %v7632
    %v7809 = vpack.c.bf16 %v7637, %v7633
    %v7810 = vpack.c.bf16 %v7638, %v7634
    %v7811 = vpack.c.bf16 %v7643, %v7639
    %v7812 = vpack.c.bf16 %v7644, %v7640
    %v7813 = vpack.c.bf16 %v7645, %v7641
    %v7814 = vpack.c.bf16 %v7646, %v7642
    %v7815 = vpack.c.bf16 %v7651, %v7647
    %v7816 = vpack.c.bf16 %v7652, %v7648
    %v7817 = vpack.c.bf16 %v7653, %v7649
    %v7818 = vpack.c.bf16 %v7654, %v7650
    %v7819 = vpack.c.bf16 %v7659, %v7655
    %v7820 = vpack.c.bf16 %v7660, %v7656
    %v7821 = vpack.c.bf16 %v7661, %v7657
    %v7822 = vpack.c.bf16 %v7662, %v7658
    %v7823 = vpack.c.bf16 %v7667, %v7663
    %v7824 = vpack.c.bf16 %v7668, %v7664
    %v7825 = vpack.c.bf16 %v7669, %v7665
    %v7826 = vpack.c.bf16 %v7670, %v7666
    %v7827 = vpack.c.bf16 %v7675, %v7671
    %v7828 = vpack.c.bf16 %v7676, %v7672
    %v7829 = vpack.c.bf16 %v7677, %v7673
    %v7830 = vpack.c.bf16 %v7678, %v7674
    %v7831 = vpack.c.bf16 %v7683, %v7679
    %v7832 = vpack.c.bf16 %v7684, %v7680
    %v7833 = vpack.c.bf16 %v7685, %v7681
    %v7834 = vpack.c.bf16 %v7686, %v7682
    %v7835 = vpack.c.bf16 %v7691, %v7687
    %v7836 = vpack.c.bf16 %v7692, %v7688
    %v7837 = vpack.c.bf16 %v7693, %v7689
    %v7838 = vpack.c.bf16 %v7694, %v7690
    %v7839 = vpack.c.bf16 %v7699, %v7695
    %v7840 = vpack.c.bf16 %v7700, %v7696
    %v7841 = vpack.c.bf16 %v7701, %v7697
    %v7842 = vpack.c.bf16 %v7702, %v7698
    %v7843 = vpack.c.bf16 %v7707, %v7703
    %v7844 = vpack.c.bf16 %v7708, %v7704
    %v7845 = vpack.c.bf16 %v7709, %v7705
    %v7846 = vpack.c.bf16 %v7710, %v7706
    %v7847 = vpack.c.bf16 %v7715, %v7711
    %v7848 = vpack.c.bf16 %v7716, %v7712
    %v7849 = vpack.c.bf16 %v7717, %v7713
    %v7850 = vpack.c.bf16 %v7718, %v7714
    %v7851 = vpack.c.bf16 %v7723, %v7719
    %v7852 = vpack.c.bf16 %v7724, %v7720
    %v7853 = vpack.c.bf16 %v7725, %v7721
    %v7854 = vpack.c.bf16 %v7726, %v7722
    %v7855 = vpack.c.bf16 %v7146, %v7142
    %v7856 = vpack.c.bf16 %v7147, %v7143
    %v7857 = vpack.c.bf16 %v7148, %v7144
    %v7858 = vpack.c.bf16 %v7149, %v7145
    %7859 = vmatpush.bf16.msra.mxu0 %v7755
    %7860 = vmatpush.bf16.msra.mxu0 %v7751
    %7861 = vmatpush.bf16.msra.mxu0 %v7747
    %7862 = vmatpush.bf16.msra.mxu0 %v7743
    %7863 = vmatpush.bf16.msra.mxu0 %v7739
    %7864 = vmatpush.bf16.msra.mxu0 %v7735
    %7865 = vmatpush.bf16.msra.mxu0 %v7731
    %7866 = vmatpush.bf16.msra.mxu0 %v7727
    %7867 = vmatmul.bf16.gmra.mxu0 %v7855
    %v7868 = vpop.f32.mrf.mxu0
    %v7869 = vadd.f32 0.0, %v7868
    %v7870 = vpop.f32.mrf.mxu0
    %v7871 = vadd.f32 0.0, %v7870
    %7872 = vdwg.mxu0
    %7873 = vmatpush.bf16.msra.mxu0 %v7787
    %7874 = vmatpush.bf16.msra.mxu0 %v7783
    %7875 = vmatpush.bf16.msra.mxu0 %v7779
    %7876 = vmatpush.bf16.msra.mxu0 %v7775
    %7877 = vmatpush.bf16.msra.mxu0 %v7771
    %7878 = vmatpush.bf16.msra.mxu0 %v7767
    %7879 = vmatpush.bf16.msra.mxu0 %v7763
    %7880 = vmatpush.bf16.msra.mxu0 %v7759
    %7881 = vmatmul.bf16.gmra.mxu0 %v7856
    %v7882 = vpop.f32.mrf.mxu0
    %v7883 = vadd.f32 %v7869, %v7882
    %v7884 = vpop.f32.mrf.mxu0
    %v7885 = vadd.f32 %v7871, %v7884
    %7886 = vdwg.mxu0
    %7887 = vmatpush.bf16.msra.mxu0 %v7819
    %7888 = vmatpush.bf16.msra.mxu0 %v7815
    %7889 = vmatpush.bf16.msra.mxu0 %v7811
    %7890 = vmatpush.bf16.msra.mxu0 %v7807
    %7891 = vmatpush.bf16.msra.mxu0 %v7803
    %7892 = vmatpush.bf16.msra.mxu0 %v7799
    %7893 = vmatpush.bf16.msra.mxu0 %v7795
    %7894 = vmatpush.bf16.msra.mxu0 %v7791
    %7895 = vmatmul.bf16.gmra.mxu0 %v7857
    %v7896 = vpop.f32.mrf.mxu0
    %v7897 = vadd.f32 %v7883, %v7896
    %v7898 = vpop.f32.mrf.mxu0
    %v7899 = vadd.f32 %v7885, %v7898
    %7900 = vdwg.mxu0
    %7901 = vmatpush.bf16.msra.mxu0 %v7851
    %7902 = vmatpush.bf16.msra.mxu0 %v7847
    %7903 = vmatpush.bf16.msra.mxu0 %v7843
    %7904 = vmatpush.bf16.msra.mxu0 %v7839
    %7905 = vmatpush.bf16.msra.mxu0 %v7835
    %7906 = vmatpush.bf16.msra.mxu0 %v7831
    %7907 = vmatpush.bf16.msra.mxu0 %v7827
    %7908 = vmatpush.bf16.msra.mxu0 %v7823
    %7909 = vmatmul.bf16.gmra.mxu0 %v7858
    %v7910 = vpop.f32.mrf.mxu0
    %v7911 = vadd.f32 %v7897, %v7910
    %v7912 = vpop.f32.mrf.mxu0
    %v7913 = vadd.f32 %v7899, %v7912
    %7914 = vdwg.mxu0
    %7915 = vmatpush.bf16.msra.mxu0 %v7756
    %7916 = vmatpush.bf16.msra.mxu0 %v7752
    %7917 = vmatpush.bf16.msra.mxu0 %v7748
    %7918 = vmatpush.bf16.msra.mxu0 %v7744
    %7919 = vmatpush.bf16.msra.mxu0 %v7740
    %7920 = vmatpush.bf16.msra.mxu0 %v7736
    %7921 = vmatpush.bf16.msra.mxu0 %v7732
    %7922 = vmatpush.bf16.msra.mxu0 %v7728
    %7923 = vmatmul.bf16.gmra.mxu0 %v7855
    %v7924 = vpop.f32.mrf.mxu0
    %v7925 = vadd.f32 0.0, %v7924
    %v7926 = vpop.f32.mrf.mxu0
    %v7927 = vadd.f32 0.0, %v7926
    %7928 = vdwg.mxu0
    %7929 = vmatpush.bf16.msra.mxu0 %v7788
    %7930 = vmatpush.bf16.msra.mxu0 %v7784
    %7931 = vmatpush.bf16.msra.mxu0 %v7780
    %7932 = vmatpush.bf16.msra.mxu0 %v7776
    %7933 = vmatpush.bf16.msra.mxu0 %v7772
    %7934 = vmatpush.bf16.msra.mxu0 %v7768
    %7935 = vmatpush.bf16.msra.mxu0 %v7764
    %7936 = vmatpush.bf16.msra.mxu0 %v7760
    %7937 = vmatmul.bf16.gmra.mxu0 %v7856
    %v7938 = vpop.f32.mrf.mxu0
    %v7939 = vadd.f32 %v7925, %v7938
    %v7940 = vpop.f32.mrf.mxu0
    %v7941 = vadd.f32 %v7927, %v7940
    %7942 = vdwg.mxu0
    %7943 = vmatpush.bf16.msra.mxu0 %v7820
    %7944 = vmatpush.bf16.msra.mxu0 %v7816
    %7945 = vmatpush.bf16.msra.mxu0 %v7812
    %7946 = vmatpush.bf16.msra.mxu0 %v7808
    %7947 = vmatpush.bf16.msra.mxu0 %v7804
    %7948 = vmatpush.bf16.msra.mxu0 %v7800
    %7949 = vmatpush.bf16.msra.mxu0 %v7796
    %7950 = vmatpush.bf16.msra.mxu0 %v7792
    %7951 = vmatmul.bf16.gmra.mxu0 %v7857
    %v7952 = vpop.f32.mrf.mxu0
    %v7953 = vadd.f32 %v7939, %v7952
    %v7954 = vpop.f32.mrf.mxu0
    %v7955 = vadd.f32 %v7941, %v7954
    %7956 = vdwg.mxu0
    %7957 = vmatpush.bf16.msra.mxu0 %v7852
    %7958 = vmatpush.bf16.msra.mxu0 %v7848
    %7959 = vmatpush.bf16.msra.mxu0 %v7844
    %7960 = vmatpush.bf16.msra.mxu0 %v7840
    %7961 = vmatpush.bf16.msra.mxu0 %v7836
    %7962 = vmatpush.bf16.msra.mxu0 %v7832
    %7963 = vmatpush.bf16.msra.mxu0 %v7828
    %7964 = vmatpush.bf16.msra.mxu0 %v7824
    %7965 = vmatmul.bf16.gmra.mxu0 %v7858
    %v7966 = vpop.f32.mrf.mxu0
    %v7967 = vadd.f32 %v7953, %v7966
    %v7968 = vpop.f32.mrf.mxu0
    %v7969 = vadd.f32 %v7955, %v7968
    %7970 = vdwg.mxu0
    %7971 = vmatpush.bf16.msra.mxu0 %v7757
    %7972 = vmatpush.bf16.msra.mxu0 %v7753
    %7973 = vmatpush.bf16.msra.mxu0 %v7749
    %7974 = vmatpush.bf16.msra.mxu0 %v7745
    %7975 = vmatpush.bf16.msra.mxu0 %v7741
    %7976 = vmatpush.bf16.msra.mxu0 %v7737
    %7977 = vmatpush.bf16.msra.mxu0 %v7733
    %7978 = vmatpush.bf16.msra.mxu0 %v7729
    %7979 = vmatmul.bf16.gmra.mxu0 %v7855
    %v7980 = vpop.f32.mrf.mxu0
    %v7981 = vadd.f32 0.0, %v7980
    %v7982 = vpop.f32.mrf.mxu0
    %v7983 = vadd.f32 0.0, %v7982
    %7984 = vdwg.mxu0
    %7985 = vmatpush.bf16.msra.mxu0 %v7789
    %7986 = vmatpush.bf16.msra.mxu0 %v7785
    %7987 = vmatpush.bf16.msra.mxu0 %v7781
    %7988 = vmatpush.bf16.msra.mxu0 %v7777
    %7989 = vmatpush.bf16.msra.mxu0 %v7773
    %7990 = vmatpush.bf16.msra.mxu0 %v7769
    %7991 = vmatpush.bf16.msra.mxu0 %v7765
    %7992 = vmatpush.bf16.msra.mxu0 %v7761
    %7993 = vmatmul.bf16.gmra.mxu0 %v7856
    %v7994 = vpop.f32.mrf.mxu0
    %v7995 = vadd.f32 %v7981, %v7994
    %v7996 = vpop.f32.mrf.mxu0
    %v7997 = vadd.f32 %v7983, %v7996
    %7998 = vdwg.mxu0
    %7999 = vmatpush.bf16.msra.mxu0 %v7821
    %8000 = vmatpush.bf16.msra.mxu0 %v7817
    %8001 = vmatpush.bf16.msra.mxu0 %v7813
    %8002 = vmatpush.bf16.msra.mxu0 %v7809
    %8003 = vmatpush.bf16.msra.mxu0 %v7805
    %8004 = vmatpush.bf16.msra.mxu0 %v7801
    %8005 = vmatpush.bf16.msra.mxu0 %v7797
    %8006 = vmatpush.bf16.msra.mxu0 %v7793
    %8007 = vmatmul.bf16.gmra.mxu0 %v7857
    %v8008 = vpop.f32.mrf.mxu0
    %v8009 = vadd.f32 %v7995, %v8008
    %v8010 = vpop.f32.mrf.mxu0
    %v8011 = vadd.f32 %v7997, %v8010
    %8012 = vdwg.mxu0
    %8013 = vmatpush.bf16.msra.mxu0 %v7853
    %8014 = vmatpush.bf16.msra.mxu0 %v7849
    %8015 = vmatpush.bf16.msra.mxu0 %v7845
    %8016 = vmatpush.bf16.msra.mxu0 %v7841
    %8017 = vmatpush.bf16.msra.mxu0 %v7837
    %8018 = vmatpush.bf16.msra.mxu0 %v7833
    %8019 = vmatpush.bf16.msra.mxu0 %v7829
    %8020 = vmatpush.bf16.msra.mxu0 %v7825
    %8021 = vmatmul.bf16.gmra.mxu0 %v7858
    %v8022 = vpop.f32.mrf.mxu0
    %v8023 = vadd.f32 %v8009, %v8022
    %v8024 = vpop.f32.mrf.mxu0
    %v8025 = vadd.f32 %v8011, %v8024
    %8026 = vdwg.mxu0
    %8027 = vmatpush.bf16.msra.mxu0 %v7758
    %8028 = vmatpush.bf16.msra.mxu0 %v7754
    %8029 = vmatpush.bf16.msra.mxu0 %v7750
    %8030 = vmatpush.bf16.msra.mxu0 %v7746
    %8031 = vmatpush.bf16.msra.mxu0 %v7742
    %8032 = vmatpush.bf16.msra.mxu0 %v7738
    %8033 = vmatpush.bf16.msra.mxu0 %v7734
    %8034 = vmatpush.bf16.msra.mxu0 %v7730
    %8035 = vmatmul.bf16.gmra.mxu0 %v7855
    %v8036 = vpop.f32.mrf.mxu0
    %v8037 = vadd.f32 0.0, %v8036
    %v8038 = vpop.f32.mrf.mxu0
    %v8039 = vadd.f32 0.0, %v8038
    %8040 = vdwg.mxu0
    %8041 = vmatpush.bf16.msra.mxu0 %v7790
    %8042 = vmatpush.bf16.msra.mxu0 %v7786
    %8043 = vmatpush.bf16.msra.mxu0 %v7782
    %8044 = vmatpush.bf16.msra.mxu0 %v7778
    %8045 = vmatpush.bf16.msra.mxu0 %v7774
    %8046 = vmatpush.bf16.msra.mxu0 %v7770
    %8047 = vmatpush.bf16.msra.mxu0 %v7766
    %8048 = vmatpush.bf16.msra.mxu0 %v7762
    %8049 = vmatmul.bf16.gmra.mxu0 %v7856
    %v8050 = vpop.f32.mrf.mxu0
    %v8051 = vadd.f32 %v8037, %v8050
    %v8052 = vpop.f32.mrf.mxu0
    %v8053 = vadd.f32 %v8039, %v8052
    %8054 = vdwg.mxu0
    %8055 = vmatpush.bf16.msra.mxu0 %v7822
    %8056 = vmatpush.bf16.msra.mxu0 %v7818
    %8057 = vmatpush.bf16.msra.mxu0 %v7814
    %8058 = vmatpush.bf16.msra.mxu0 %v7810
    %8059 = vmatpush.bf16.msra.mxu0 %v7806
    %8060 = vmatpush.bf16.msra.mxu0 %v7802
    %8061 = vmatpush.bf16.msra.mxu0 %v7798
    %8062 = vmatpush.bf16.msra.mxu0 %v7794
    %8063 = vmatmul.bf16.gmra.mxu0 %v7857
    %v8064 = vpop.f32.mrf.mxu0
    %v8065 = vadd.f32 %v8051, %v8064
    %v8066 = vpop.f32.mrf.mxu0
    %v8067 = vadd.f32 %v8053, %v8066
    %8068 = vdwg.mxu0
    %8069 = vmatpush.bf16.msra.mxu0 %v7854
    %8070 = vmatpush.bf16.msra.mxu0 %v7850
    %8071 = vmatpush.bf16.msra.mxu0 %v7846
    %8072 = vmatpush.bf16.msra.mxu0 %v7842
    %8073 = vmatpush.bf16.msra.mxu0 %v7838
    %8074 = vmatpush.bf16.msra.mxu0 %v7834
    %8075 = vmatpush.bf16.msra.mxu0 %v7830
    %8076 = vmatpush.bf16.msra.mxu0 %v7826
    %8077 = vmatmul.bf16.gmra.mxu0 %v7858
    %v8078 = vpop.f32.mrf.mxu0
    %v8079 = vadd.f32 %v8065, %v8078
    %v8080 = vpop.f32.mrf.mxu0
    %v8081 = vadd.f32 %v8067, %v8080
    %8082 = vdwg.mxu0
    %s8083 = scalar_lea.vmem [#allocation10], 28
    %v8084 = vld [vmem:[%s8083] sm:$0xf]
    %v8086 = vperm.slane %v8084, 0
    %v8087 = vperm.slane %v8084, 1
    %v8088 = vperm.slane %v8084, 2
    %v8089 = vperm.slane %v8084, 3
    %v8094 = vmul.f32 %v7911, %v8086
    %v8095 = vmul.f32 %v7967, %v8087
    %v8096 = vmul.f32 %v8023, %v8088
    %v8097 = vmul.f32 %v8079, %v8089
    %v8098 = vmul.f32 %v7913, %v8086
    %v8099 = vmul.f32 %v7969, %v8087
    %v8100 = vmul.f32 %v8025, %v8088
    %v8101 = vmul.f32 %v8081, %v8089
    %s8102 = scalar_lea.vmem [#allocation11], 28
    %v8103 = vld [vmem:[%s8102] sm:$0xf]
    %v8105 = vperm.slane %v8103, 0
    %v8106 = vperm.slane %v8103, 1
    %v8107 = vperm.slane %v8103, 2
    %v8108 = vperm.slane %v8103, 3
    %v8113 = vadd.f32 %v8094, %v8105
    %v8114 = vadd.f32 %v8095, %v8106
    %v8115 = vadd.f32 %v8096, %v8107
    %v8116 = vadd.f32 %v8097, %v8108
    %v8117 = vadd.f32 %v8098, %v8105
    %v8118 = vadd.f32 %v8099, %v8106
    %v8119 = vadd.f32 %v8100, %v8107
    %v8120 = vadd.f32 %v8101, %v8108
    %v8121 = vmax.f32 %v8113, 0.0
    %v8122 = vmax.f32 %v8114, 0.0
    %v8123 = vmax.f32 %v8115, 0.0
    %v8124 = vmax.f32 %v8116, 0.0
    %v8125 = vmax.f32 %v8117, 0.0
    %v8126 = vmax.f32 %v8118, 0.0
    %v8127 = vmax.f32 %v8119, 0.0
    %v8128 = vmax.f32 %v8120, 0.0
    %s8129 = scalar_lea.vmem [#allocation8], 4096
    %v8130 = vld [vmem:[%s8129] sm:$0xff]
    %v8131 = vld [vmem:[%s8129 + $0x8] sm:$0xff]
    %v8132 = vld [vmem:[%s8129 + $0x10] sm:$0xff]
    %v8133 = vld [vmem:[%s8129 + $0x18] sm:$0xff]
    %v8134 = vld [vmem:[%s8129 + $0x20] sm:$0xff]
    %v8135 = vld [vmem:[%s8129 + $0x28] sm:$0xff]
    %v8136 = vld [vmem:[%s8129 + $0x30] sm:$0xff]
    %v8137 = vld [vmem:[%s8129 + $0x38] sm:$0xff]
    %v8138 = vld [vmem:[%s8129 + $0x40] sm:$0xff]
    %v8139 = vld [vmem:[%s8129 + $0x48] sm:$0xff]
    %v8140 = vld [vmem:[%s8129 + $0x50] sm:$0xff]
    %v8141 = vld [vmem:[%s8129 + $0x58] sm:$0xff]
    %v8142 = vld [vmem:[%s8129 + $0x60] sm:$0xff]
    %v8143 = vld [vmem:[%s8129 + $0x68] sm:$0xff]
    %v8144 = vld [vmem:[%s8129 + $0x70] sm:$0xff]
    %v8145 = vld [vmem:[%s8129 + $0x78] sm:$0xff]
    %v8146 = vld [vmem:[%s8129 + $0x80] sm:$0xff]
    %v8147 = vld [vmem:[%s8129 + $0x88] sm:$0xff]
    %v8148 = vld [vmem:[%s8129 + $0x90] sm:$0xff]
    %v8149 = vld [vmem:[%s8129 + $0x98] sm:$0xff]
    %v8150 = vld [vmem:[%s8129 + $0xa0] sm:$0xff]
    %v8151 = vld [vmem:[%s8129 + $0xa8] sm:$0xff]
    %v8152 = vld [vmem:[%s8129 + $0xb0] sm:$0xff]
    %v8153 = vld [vmem:[%s8129 + $0xb8] sm:$0xff]
    %v8154 = vld [vmem:[%s8129 + $0xc0] sm:$0xff]
    %v8155 = vld [vmem:[%s8129 + $0xc8] sm:$0xff]
    %v8156 = vld [vmem:[%s8129 + $0xd0] sm:$0xff]
    %v8157 = vld [vmem:[%s8129 + $0xd8] sm:$0xff]
    %v8158 = vld [vmem:[%s8129 + $0xe0] sm:$0xff]
    %v8159 = vld [vmem:[%s8129 + $0xe8] sm:$0xff]
    %v8160 = vld [vmem:[%s8129 + $0xf0] sm:$0xff]
    %v8161 = vld [vmem:[%s8129 + $0xf8] sm:$0xff]
    %v8162 = vld [vmem:[%s8129 + $0x100] sm:$0xff]
    %v8163 = vld [vmem:[%s8129 + $0x108] sm:$0xff]
    %v8164 = vld [vmem:[%s8129 + $0x110] sm:$0xff]
    %v8165 = vld [vmem:[%s8129 + $0x118] sm:$0xff]
    %v8166 = vld [vmem:[%s8129 + $0x120] sm:$0xff]
    %v8167 = vld [vmem:[%s8129 + $0x128] sm:$0xff]
    %v8168 = vld [vmem:[%s8129 + $0x130] sm:$0xff]
    %v8169 = vld [vmem:[%s8129 + $0x138] sm:$0xff]
    %v8170 = vld [vmem:[%s8129 + $0x140] sm:$0xff]
    %v8171 = vld [vmem:[%s8129 + $0x148] sm:$0xff]
    %v8172 = vld [vmem:[%s8129 + $0x150] sm:$0xff]
    %v8173 = vld [vmem:[%s8129 + $0x158] sm:$0xff]
    %v8174 = vld [vmem:[%s8129 + $0x160] sm:$0xff]
    %v8175 = vld [vmem:[%s8129 + $0x168] sm:$0xff]
    %v8176 = vld [vmem:[%s8129 + $0x170] sm:$0xff]
    %v8177 = vld [vmem:[%s8129 + $0x178] sm:$0xff]
    %v8178 = vld [vmem:[%s8129 + $0x180] sm:$0xff]
    %v8179 = vld [vmem:[%s8129 + $0x188] sm:$0xff]
    %v8180 = vld [vmem:[%s8129 + $0x190] sm:$0xff]
    %v8181 = vld [vmem:[%s8129 + $0x198] sm:$0xff]
    %v8182 = vld [vmem:[%s8129 + $0x1a0] sm:$0xff]
    %v8183 = vld [vmem:[%s8129 + $0x1a8] sm:$0xff]
    %v8184 = vld [vmem:[%s8129 + $0x1b0] sm:$0xff]
    %v8185 = vld [vmem:[%s8129 + $0x1b8] sm:$0xff]
    %v8186 = vld [vmem:[%s8129 + $0x1c0] sm:$0xff]
    %v8187 = vld [vmem:[%s8129 + $0x1c8] sm:$0xff]
    %v8188 = vld [vmem:[%s8129 + $0x1d0] sm:$0xff]
    %v8189 = vld [vmem:[%s8129 + $0x1d8] sm:$0xff]
    %v8190 = vld [vmem:[%s8129 + $0x1e0] sm:$0xff]
    %v8191 = vld [vmem:[%s8129 + $0x1e8] sm:$0xff]
    %v8192 = vld [vmem:[%s8129 + $0x1f0] sm:$0xff]
    %v8193 = vld [vmem:[%s8129 + $0x1f8] sm:$0xff]
    %v8194 = vunpack.c.0.s8 %v8130
    %v8195 = vunpack.c.0.s8 %v8131
    %v8196 = vunpack.c.0.s8 %v8132
    %v8197 = vunpack.c.0.s8 %v8133
    %v8198 = vunpack.c.1.s8 %v8130
    %v8199 = vunpack.c.1.s8 %v8131
    %v8200 = vunpack.c.1.s8 %v8132
    %v8201 = vunpack.c.1.s8 %v8133
    %v8202 = vunpack.c.2.s8 %v8130
    %v8203 = vunpack.c.2.s8 %v8131
    %v8204 = vunpack.c.2.s8 %v8132
    %v8205 = vunpack.c.2.s8 %v8133
    %v8206 = vunpack.c.3.s8 %v8130
    %v8207 = vunpack.c.3.s8 %v8131
    %v8208 = vunpack.c.3.s8 %v8132
    %v8209 = vunpack.c.3.s8 %v8133
    %v8210 = vunpack.c.0.s8 %v8134
    %v8211 = vunpack.c.0.s8 %v8135
    %v8212 = vunpack.c.0.s8 %v8136
    %v8213 = vunpack.c.0.s8 %v8137
    %v8214 = vunpack.c.1.s8 %v8134
    %v8215 = vunpack.c.1.s8 %v8135
    %v8216 = vunpack.c.1.s8 %v8136
    %v8217 = vunpack.c.1.s8 %v8137
    %v8218 = vunpack.c.2.s8 %v8134
    %v8219 = vunpack.c.2.s8 %v8135
    %v8220 = vunpack.c.2.s8 %v8136
    %v8221 = vunpack.c.2.s8 %v8137
    %v8222 = vunpack.c.3.s8 %v8134
    %v8223 = vunpack.c.3.s8 %v8135
    %v8224 = vunpack.c.3.s8 %v8136
    %v8225 = vunpack.c.3.s8 %v8137
    %v8226 = vunpack.c.0.s8 %v8138
    %v8227 = vunpack.c.0.s8 %v8139
    %v8228 = vunpack.c.0.s8 %v8140
    %v8229 = vunpack.c.0.s8 %v8141
    %v8230 = vunpack.c.1.s8 %v8138
    %v8231 = vunpack.c.1.s8 %v8139
    %v8232 = vunpack.c.1.s8 %v8140
    %v8233 = vunpack.c.1.s8 %v8141
    %v8234 = vunpack.c.2.s8 %v8138
    %v8235 = vunpack.c.2.s8 %v8139
    %v8236 = vunpack.c.2.s8 %v8140
    %v8237 = vunpack.c.2.s8 %v8141
    %v8238 = vunpack.c.3.s8 %v8138
    %v8239 = vunpack.c.3.s8 %v8139
    %v8240 = vunpack.c.3.s8 %v8140
    %v8241 = vunpack.c.3.s8 %v8141
    %v8242 = vunpack.c.0.s8 %v8142
    %v8243 = vunpack.c.0.s8 %v8143
    %v8244 = vunpack.c.0.s8 %v8144
    %v8245 = vunpack.c.0.s8 %v8145
    %v8246 = vunpack.c.1.s8 %v8142
    %v8247 = vunpack.c.1.s8 %v8143
    %v8248 = vunpack.c.1.s8 %v8144
    %v8249 = vunpack.c.1.s8 %v8145
    %v8250 = vunpack.c.2.s8 %v8142
    %v8251 = vunpack.c.2.s8 %v8143
    %v8252 = vunpack.c.2.s8 %v8144
    %v8253 = vunpack.c.2.s8 %v8145
    %v8254 = vunpack.c.3.s8 %v8142
    %v8255 = vunpack.c.3.s8 %v8143
    %v8256 = vunpack.c.3.s8 %v8144
    %v8257 = vunpack.c.3.s8 %v8145
    %v8258 = vunpack.c.0.s8 %v8146
    %v8259 = vunpack.c.0.s8 %v8147
    %v8260 = vunpack.c.0.s8 %v8148
    %v8261 = vunpack.c.0.s8 %v8149
    %v8262 = vunpack.c.1.s8 %v8146
    %v8263 = vunpack.c.1.s8 %v8147
    %v8264 = vunpack.c.1.s8 %v8148
    %v8265 = vunpack.c.1.s8 %v8149
    %v8266 = vunpack.c.2.s8 %v8146
    %v8267 = vunpack.c.2.s8 %v8147
    %v8268 = vunpack.c.2.s8 %v8148
    %v8269 = vunpack.c.2.s8 %v8149
    %v8270 = vunpack.c.3.s8 %v8146
    %v8271 = vunpack.c.3.s8 %v8147
    %v8272 = vunpack.c.3.s8 %v8148
    %v8273 = vunpack.c.3.s8 %v8149
    %v8274 = vunpack.c.0.s8 %v8150
    %v8275 = vunpack.c.0.s8 %v8151
    %v8276 = vunpack.c.0.s8 %v8152
    %v8277 = vunpack.c.0.s8 %v8153
    %v8278 = vunpack.c.1.s8 %v8150
    %v8279 = vunpack.c.1.s8 %v8151
    %v8280 = vunpack.c.1.s8 %v8152
    %v8281 = vunpack.c.1.s8 %v8153
    %v8282 = vunpack.c.2.s8 %v8150
    %v8283 = vunpack.c.2.s8 %v8151
    %v8284 = vunpack.c.2.s8 %v8152
    %v8285 = vunpack.c.2.s8 %v8153
    %v8286 = vunpack.c.3.s8 %v8150
    %v8287 = vunpack.c.3.s8 %v8151
    %v8288 = vunpack.c.3.s8 %v8152
    %v8289 = vunpack.c.3.s8 %v8153
    %v8290 = vunpack.c.0.s8 %v8154
    %v8291 = vunpack.c.0.s8 %v8155
    %v8292 = vunpack.c.0.s8 %v8156
    %v8293 = vunpack.c.0.s8 %v8157
    %v8294 = vunpack.c.1.s8 %v8154
    %v8295 = vunpack.c.1.s8 %v8155
    %v8296 = vunpack.c.1.s8 %v8156
    %v8297 = vunpack.c.1.s8 %v8157
    %v8298 = vunpack.c.2.s8 %v8154
    %v8299 = vunpack.c.2.s8 %v8155
    %v8300 = vunpack.c.2.s8 %v8156
    %v8301 = vunpack.c.2.s8 %v8157
    %v8302 = vunpack.c.3.s8 %v8154
    %v8303 = vunpack.c.3.s8 %v8155
    %v8304 = vunpack.c.3.s8 %v8156
    %v8305 = vunpack.c.3.s8 %v8157
    %v8306 = vunpack.c.0.s8 %v8158
    %v8307 = vunpack.c.0.s8 %v8159
    %v8308 = vunpack.c.0.s8 %v8160
    %v8309 = vunpack.c.0.s8 %v8161
    %v8310 = vunpack.c.1.s8 %v8158
    %v8311 = vunpack.c.1.s8 %v8159
    %v8312 = vunpack.c.1.s8 %v8160
    %v8313 = vunpack.c.1.s8 %v8161
    %v8314 = vunpack.c.2.s8 %v8158
    %v8315 = vunpack.c.2.s8 %v8159
    %v8316 = vunpack.c.2.s8 %v8160
    %v8317 = vunpack.c.2.s8 %v8161
    %v8318 = vunpack.c.3.s8 %v8158
    %v8319 = vunpack.c.3.s8 %v8159
    %v8320 = vunpack.c.3.s8 %v8160
    %v8321 = vunpack.c.3.s8 %v8161
    %v8322 = vunpack.c.0.s8 %v8162
    %v8323 = vunpack.c.0.s8 %v8163
    %v8324 = vunpack.c.0.s8 %v8164
    %v8325 = vunpack.c.0.s8 %v8165
    %v8326 = vunpack.c.1.s8 %v8162
    %v8327 = vunpack.c.1.s8 %v8163
    %v8328 = vunpack.c.1.s8 %v8164
    %v8329 = vunpack.c.1.s8 %v8165
    %v8330 = vunpack.c.2.s8 %v8162
    %v8331 = vunpack.c.2.s8 %v8163
    %v8332 = vunpack.c.2.s8 %v8164
    %v8333 = vunpack.c.2.s8 %v8165
    %v8334 = vunpack.c.3.s8 %v8162
    %v8335 = vunpack.c.3.s8 %v8163
    %v8336 = vunpack.c.3.s8 %v8164
    %v8337 = vunpack.c.3.s8 %v8165
    %v8338 = vunpack.c.0.s8 %v8166
    %v8339 = vunpack.c.0.s8 %v8167
    %v8340 = vunpack.c.0.s8 %v8168
    %v8341 = vunpack.c.0.s8 %v8169
    %v8342 = vunpack.c.1.s8 %v8166
    %v8343 = vunpack.c.1.s8 %v8167
    %v8344 = vunpack.c.1.s8 %v8168
    %v8345 = vunpack.c.1.s8 %v8169
    %v8346 = vunpack.c.2.s8 %v8166
    %v8347 = vunpack.c.2.s8 %v8167
    %v8348 = vunpack.c.2.s8 %v8168
    %v8349 = vunpack.c.2.s8 %v8169
    %v8350 = vunpack.c.3.s8 %v8166
    %v8351 = vunpack.c.3.s8 %v8167
    %v8352 = vunpack.c.3.s8 %v8168
    %v8353 = vunpack.c.3.s8 %v8169
    %v8354 = vunpack.c.0.s8 %v8170
    %v8355 = vunpack.c.0.s8 %v8171
    %v8356 = vunpack.c.0.s8 %v8172
    %v8357 = vunpack.c.0.s8 %v8173
    %v8358 = vunpack.c.1.s8 %v8170
    %v8359 = vunpack.c.1.s8 %v8171
    %v8360 = vunpack.c.1.s8 %v8172
    %v8361 = vunpack.c.1.s8 %v8173
    %v8362 = vunpack.c.2.s8 %v8170
    %v8363 = vunpack.c.2.s8 %v8171
    %v8364 = vunpack.c.2.s8 %v8172
    %v8365 = vunpack.c.2.s8 %v8173
    %v8366 = vunpack.c.3.s8 %v8170
    %v8367 = vunpack.c.3.s8 %v8171
    %v8368 = vunpack.c.3.s8 %v8172
    %v8369 = vunpack.c.3.s8 %v8173
    %v8370 = vunpack.c.0.s8 %v8174
    %v8371 = vunpack.c.0.s8 %v8175
    %v8372 = vunpack.c.0.s8 %v8176
    %v8373 = vunpack.c.0.s8 %v8177
    %v8374 = vunpack.c.1.s8 %v8174
    %v8375 = vunpack.c.1.s8 %v8175
    %v8376 = vunpack.c.1.s8 %v8176
    %v8377 = vunpack.c.1.s8 %v8177
    %v8378 = vunpack.c.2.s8 %v8174
    %v8379 = vunpack.c.2.s8 %v8175
    %v8380 = vunpack.c.2.s8 %v8176
    %v8381 = vunpack.c.2.s8 %v8177
    %v8382 = vunpack.c.3.s8 %v8174
    %v8383 = vunpack.c.3.s8 %v8175
    %v8384 = vunpack.c.3.s8 %v8176
    %v8385 = vunpack.c.3.s8 %v8177
    %v8386 = vunpack.c.0.s8 %v8178
    %v8387 = vunpack.c.0.s8 %v8179
    %v8388 = vunpack.c.0.s8 %v8180
    %v8389 = vunpack.c.0.s8 %v8181
    %v8390 = vunpack.c.1.s8 %v8178
    %v8391 = vunpack.c.1.s8 %v8179
    %v8392 = vunpack.c.1.s8 %v8180
    %v8393 = vunpack.c.1.s8 %v8181
    %v8394 = vunpack.c.2.s8 %v8178
    %v8395 = vunpack.c.2.s8 %v8179
    %v8396 = vunpack.c.2.s8 %v8180
    %v8397 = vunpack.c.2.s8 %v8181
    %v8398 = vunpack.c.3.s8 %v8178
    %v8399 = vunpack.c.3.s8 %v8179
    %v8400 = vunpack.c.3.s8 %v8180
    %v8401 = vunpack.c.3.s8 %v8181
    %v8402 = vunpack.c.0.s8 %v8182
    %v8403 = vunpack.c.0.s8 %v8183
    %v8404 = vunpack.c.0.s8 %v8184
    %v8405 = vunpack.c.0.s8 %v8185
    %v8406 = vunpack.c.1.s8 %v8182
    %v8407 = vunpack.c.1.s8 %v8183
    %v8408 = vunpack.c.1.s8 %v8184
    %v8409 = vunpack.c.1.s8 %v8185
    %v8410 = vunpack.c.2.s8 %v8182
    %v8411 = vunpack.c.2.s8 %v8183
    %v8412 = vunpack.c.2.s8 %v8184
    %v8413 = vunpack.c.2.s8 %v8185
    %v8414 = vunpack.c.3.s8 %v8182
    %v8415 = vunpack.c.3.s8 %v8183
    %v8416 = vunpack.c.3.s8 %v8184
    %v8417 = vunpack.c.3.s8 %v8185
    %v8418 = vunpack.c.0.s8 %v8186
    %v8419 = vunpack.c.0.s8 %v8187
    %v8420 = vunpack.c.0.s8 %v8188
    %v8421 = vunpack.c.0.s8 %v8189
    %v8422 = vunpack.c.1.s8 %v8186
    %v8423 = vunpack.c.1.s8 %v8187
    %v8424 = vunpack.c.1.s8 %v8188
    %v8425 = vunpack.c.1.s8 %v8189
    %v8426 = vunpack.c.2.s8 %v8186
    %v8427 = vunpack.c.2.s8 %v8187
    %v8428 = vunpack.c.2.s8 %v8188
    %v8429 = vunpack.c.2.s8 %v8189
    %v8430 = vunpack.c.3.s8 %v8186
    %v8431 = vunpack.c.3.s8 %v8187
    %v8432 = vunpack.c.3.s8 %v8188
    %v8433 = vunpack.c.3.s8 %v8189
    %v8434 = vunpack.c.0.s8 %v8190
    %v8435 = vunpack.c.0.s8 %v8191
    %v8436 = vunpack.c.0.s8 %v8192
    %v8437 = vunpack.c.0.s8 %v8193
    %v8438 = vunpack.c.1.s8 %v8190
    %v8439 = vunpack.c.1.s8 %v8191
    %v8440 = vunpack.c.1.s8 %v8192
    %v8441 = vunpack.c.1.s8 %v8193
    %v8442 = vunpack.c.2.s8 %v8190
    %v8443 = vunpack.c.2.s8 %v8191
    %v8444 = vunpack.c.2.s8 %v8192
    %v8445 = vunpack.c.2.s8 %v8193
    %v8446 = vunpack.c.3.s8 %v8190
    %v8447 = vunpack.c.3.s8 %v8191
    %v8448 = vunpack.c.3.s8 %v8192
    %v8449 = vunpack.c.3.s8 %v8193
    %v8450 = vcvt.s32.f32 %v8194
    %v8451 = vcvt.s32.f32 %v8195
    %v8452 = vcvt.s32.f32 %v8196
    %v8453 = vcvt.s32.f32 %v8197
    %v8454 = vcvt.s32.f32 %v8198
    %v8455 = vcvt.s32.f32 %v8199
    %v8456 = vcvt.s32.f32 %v8200
    %v8457 = vcvt.s32.f32 %v8201
    %v8458 = vcvt.s32.f32 %v8202
    %v8459 = vcvt.s32.f32 %v8203
    %v8460 = vcvt.s32.f32 %v8204
    %v8461 = vcvt.s32.f32 %v8205
    %v8462 = vcvt.s32.f32 %v8206
    %v8463 = vcvt.s32.f32 %v8207
    %v8464 = vcvt.s32.f32 %v8208
    %v8465 = vcvt.s32.f32 %v8209
    %v8466 = vcvt.s32.f32 %v8210
    %v8467 = vcvt.s32.f32 %v8211
    %v8468 = vcvt.s32.f32 %v8212
    %v8469 = vcvt.s32.f32 %v8213
    %v8470 = vcvt.s32.f32 %v8214
    %v8471 = vcvt.s32.f32 %v8215
    %v8472 = vcvt.s32.f32 %v8216
    %v8473 = vcvt.s32.f32 %v8217
    %v8474 = vcvt.s32.f32 %v8218
    %v8475 = vcvt.s32.f32 %v8219
    %v8476 = vcvt.s32.f32 %v8220
    %v8477 = vcvt.s32.f32 %v8221
    %v8478 = vcvt.s32.f32 %v8222
    %v8479 = vcvt.s32.f32 %v8223
    %v8480 = vcvt.s32.f32 %v8224
    %v8481 = vcvt.s32.f32 %v8225
    %v8482 = vcvt.s32.f32 %v8226
    %v8483 = vcvt.s32.f32 %v8227
    %v8484 = vcvt.s32.f32 %v8228
    %v8485 = vcvt.s32.f32 %v8229
    %v8486 = vcvt.s32.f32 %v8230
    %v8487 = vcvt.s32.f32 %v8231
    %v8488 = vcvt.s32.f32 %v8232
    %v8489 = vcvt.s32.f32 %v8233
    %v8490 = vcvt.s32.f32 %v8234
    %v8491 = vcvt.s32.f32 %v8235
    %v8492 = vcvt.s32.f32 %v8236
    %v8493 = vcvt.s32.f32 %v8237
    %v8494 = vcvt.s32.f32 %v8238
    %v8495 = vcvt.s32.f32 %v8239
    %v8496 = vcvt.s32.f32 %v8240
    %v8497 = vcvt.s32.f32 %v8241
    %v8498 = vcvt.s32.f32 %v8242
    %v8499 = vcvt.s32.f32 %v8243
    %v8500 = vcvt.s32.f32 %v8244
    %v8501 = vcvt.s32.f32 %v8245
    %v8502 = vcvt.s32.f32 %v8246
    %v8503 = vcvt.s32.f32 %v8247
    %v8504 = vcvt.s32.f32 %v8248
    %v8505 = vcvt.s32.f32 %v8249
    %v8506 = vcvt.s32.f32 %v8250
    %v8507 = vcvt.s32.f32 %v8251
    %v8508 = vcvt.s32.f32 %v8252
    %v8509 = vcvt.s32.f32 %v8253
    %v8510 = vcvt.s32.f32 %v8254
    %v8511 = vcvt.s32.f32 %v8255
    %v8512 = vcvt.s32.f32 %v8256
    %v8513 = vcvt.s32.f32 %v8257
    %v8514 = vcvt.s32.f32 %v8258
    %v8515 = vcvt.s32.f32 %v8259
    %v8516 = vcvt.s32.f32 %v8260
    %v8517 = vcvt.s32.f32 %v8261
    %v8518 = vcvt.s32.f32 %v8262
    %v8519 = vcvt.s32.f32 %v8263
    %v8520 = vcvt.s32.f32 %v8264
    %v8521 = vcvt.s32.f32 %v8265
    %v8522 = vcvt.s32.f32 %v8266
    %v8523 = vcvt.s32.f32 %v8267
    %v8524 = vcvt.s32.f32 %v8268
    %v8525 = vcvt.s32.f32 %v8269
    %v8526 = vcvt.s32.f32 %v8270
    %v8527 = vcvt.s32.f32 %v8271
    %v8528 = vcvt.s32.f32 %v8272
    %v8529 = vcvt.s32.f32 %v8273
    %v8530 = vcvt.s32.f32 %v8274
    %v8531 = vcvt.s32.f32 %v8275
    %v8532 = vcvt.s32.f32 %v8276
    %v8533 = vcvt.s32.f32 %v8277
    %v8534 = vcvt.s32.f32 %v8278
    %v8535 = vcvt.s32.f32 %v8279
    %v8536 = vcvt.s32.f32 %v8280
    %v8537 = vcvt.s32.f32 %v8281
    %v8538 = vcvt.s32.f32 %v8282
    %v8539 = vcvt.s32.f32 %v8283
    %v8540 = vcvt.s32.f32 %v8284
    %v8541 = vcvt.s32.f32 %v8285
    %v8542 = vcvt.s32.f32 %v8286
    %v8543 = vcvt.s32.f32 %v8287
    %v8544 = vcvt.s32.f32 %v8288
    %v8545 = vcvt.s32.f32 %v8289
    %v8546 = vcvt.s32.f32 %v8290
    %v8547 = vcvt.s32.f32 %v8291
    %v8548 = vcvt.s32.f32 %v8292
    %v8549 = vcvt.s32.f32 %v8293
    %v8550 = vcvt.s32.f32 %v8294
    %v8551 = vcvt.s32.f32 %v8295
    %v8552 = vcvt.s32.f32 %v8296
    %v8553 = vcvt.s32.f32 %v8297
    %v8554 = vcvt.s32.f32 %v8298
    %v8555 = vcvt.s32.f32 %v8299
    %v8556 = vcvt.s32.f32 %v8300
    %v8557 = vcvt.s32.f32 %v8301
    %v8558 = vcvt.s32.f32 %v8302
    %v8559 = vcvt.s32.f32 %v8303
    %v8560 = vcvt.s32.f32 %v8304
    %v8561 = vcvt.s32.f32 %v8305
    %v8562 = vcvt.s32.f32 %v8306
    %v8563 = vcvt.s32.f32 %v8307
    %v8564 = vcvt.s32.f32 %v8308
    %v8565 = vcvt.s32.f32 %v8309
    %v8566 = vcvt.s32.f32 %v8310
    %v8567 = vcvt.s32.f32 %v8311
    %v8568 = vcvt.s32.f32 %v8312
    %v8569 = vcvt.s32.f32 %v8313
    %v8570 = vcvt.s32.f32 %v8314
    %v8571 = vcvt.s32.f32 %v8315
    %v8572 = vcvt.s32.f32 %v8316
    %v8573 = vcvt.s32.f32 %v8317
    %v8574 = vcvt.s32.f32 %v8318
    %v8575 = vcvt.s32.f32 %v8319
    %v8576 = vcvt.s32.f32 %v8320
    %v8577 = vcvt.s32.f32 %v8321
    %v8578 = vcvt.s32.f32 %v8322
    %v8579 = vcvt.s32.f32 %v8323
    %v8580 = vcvt.s32.f32 %v8324
    %v8581 = vcvt.s32.f32 %v8325
    %v8582 = vcvt.s32.f32 %v8326
    %v8583 = vcvt.s32.f32 %v8327
    %v8584 = vcvt.s32.f32 %v8328
    %v8585 = vcvt.s32.f32 %v8329
    %v8586 = vcvt.s32.f32 %v8330
    %v8587 = vcvt.s32.f32 %v8331
    %v8588 = vcvt.s32.f32 %v8332
    %v8589 = vcvt.s32.f32 %v8333
    %v8590 = vcvt.s32.f32 %v8334
    %v8591 = vcvt.s32.f32 %v8335
    %v8592 = vcvt.s32.f32 %v8336
    %v8593 = vcvt.s32.f32 %v8337
    %v8594 = vcvt.s32.f32 %v8338
    %v8595 = vcvt.s32.f32 %v8339
    %v8596 = vcvt.s32.f32 %v8340
    %v8597 = vcvt.s32.f32 %v8341
    %v8598 = vcvt.s32.f32 %v8342
    %v8599 = vcvt.s32.f32 %v8343
    %v8600 = vcvt.s32.f32 %v8344
    %v8601 = vcvt.s32.f32 %v8345
    %v8602 = vcvt.s32.f32 %v8346
    %v8603 = vcvt.s32.f32 %v8347
    %v8604 = vcvt.s32.f32 %v8348
    %v8605 = vcvt.s32.f32 %v8349
    %v8606 = vcvt.s32.f32 %v8350
    %v8607 = vcvt.s32.f32 %v8351
    %v8608 = vcvt.s32.f32 %v8352
    %v8609 = vcvt.s32.f32 %v8353
    %v8610 = vcvt.s32.f32 %v8354
    %v8611 = vcvt.s32.f32 %v8355
    %v8612 = vcvt.s32.f32 %v8356
    %v8613 = vcvt.s32.f32 %v8357
    %v8614 = vcvt.s32.f32 %v8358
    %v8615 = vcvt.s32.f32 %v8359
    %v8616 = vcvt.s32.f32 %v8360
    %v8617 = vcvt.s32.f32 %v8361
    %v8618 = vcvt.s32.f32 %v8362
    %v8619 = vcvt.s32.f32 %v8363
    %v8620 = vcvt.s32.f32 %v8364
    %v8621 = vcvt.s32.f32 %v8365
    %v8622 = vcvt.s32.f32 %v8366
    %v8623 = vcvt.s32.f32 %v8367
    %v8624 = vcvt.s32.f32 %v8368
    %v8625 = vcvt.s32.f32 %v8369
    %v8626 = vcvt.s32.f32 %v8370
    %v8627 = vcvt.s32.f32 %v8371
    %v8628 = vcvt.s32.f32 %v8372
    %v8629 = vcvt.s32.f32 %v8373
    %v8630 = vcvt.s32.f32 %v8374
    %v8631 = vcvt.s32.f32 %v8375
    %v8632 = vcvt.s32.f32 %v8376
    %v8633 = vcvt.s32.f32 %v8377
    %v8634 = vcvt.s32.f32 %v8378
    %v8635 = vcvt.s32.f32 %v8379
    %v8636 = vcvt.s32.f32 %v8380
    %v8637 = vcvt.s32.f32 %v8381
    %v8638 = vcvt.s32.f32 %v8382
    %v8639 = vcvt.s32.f32 %v8383
    %v8640 = vcvt.s32.f32 %v8384
    %v8641 = vcvt.s32.f32 %v8385
    %v8642 = vcvt.s32.f32 %v8386
    %v8643 = vcvt.s32.f32 %v8387
    %v8644 = vcvt.s32.f32 %v8388
    %v8645 = vcvt.s32.f32 %v8389
    %v8646 = vcvt.s32.f32 %v8390
    %v8647 = vcvt.s32.f32 %v8391
    %v8648 = vcvt.s32.f32 %v8392
    %v8649 = vcvt.s32.f32 %v8393
    %v8650 = vcvt.s32.f32 %v8394
    %v8651 = vcvt.s32.f32 %v8395
    %v8652 = vcvt.s32.f32 %v8396
    %v8653 = vcvt.s32.f32 %v8397
    %v8654 = vcvt.s32.f32 %v8398
    %v8655 = vcvt.s32.f32 %v8399
    %v8656 = vcvt.s32.f32 %v8400
    %v8657 = vcvt.s32.f32 %v8401
    %v8658 = vcvt.s32.f32 %v8402
    %v8659 = vcvt.s32.f32 %v8403
    %v8660 = vcvt.s32.f32 %v8404
    %v8661 = vcvt.s32.f32 %v8405
    %v8662 = vcvt.s32.f32 %v8406
    %v8663 = vcvt.s32.f32 %v8407
    %v8664 = vcvt.s32.f32 %v8408
    %v8665 = vcvt.s32.f32 %v8409
    %v8666 = vcvt.s32.f32 %v8410
    %v8667 = vcvt.s32.f32 %v8411
    %v8668 = vcvt.s32.f32 %v8412
    %v8669 = vcvt.s32.f32 %v8413
    %v8670 = vcvt.s32.f32 %v8414
    %v8671 = vcvt.s32.f32 %v8415
    %v8672 = vcvt.s32.f32 %v8416
    %v8673 = vcvt.s32.f32 %v8417
    %v8674 = vcvt.s32.f32 %v8418
    %v8675 = vcvt.s32.f32 %v8419
    %v8676 = vcvt.s32.f32 %v8420
    %v8677 = vcvt.s32.f32 %v8421
    %v8678 = vcvt.s32.f32 %v8422
    %v8679 = vcvt.s32.f32 %v8423
    %v8680 = vcvt.s32.f32 %v8424
    %v8681 = vcvt.s32.f32 %v8425
    %v8682 = vcvt.s32.f32 %v8426
    %v8683 = vcvt.s32.f32 %v8427
    %v8684 = vcvt.s32.f32 %v8428
    %v8685 = vcvt.s32.f32 %v8429
    %v8686 = vcvt.s32.f32 %v8430
    %v8687 = vcvt.s32.f32 %v8431
    %v8688 = vcvt.s32.f32 %v8432
    %v8689 = vcvt.s32.f32 %v8433
    %v8690 = vcvt.s32.f32 %v8434
    %v8691 = vcvt.s32.f32 %v8435
    %v8692 = vcvt.s32.f32 %v8436
    %v8693 = vcvt.s32.f32 %v8437
    %v8694 = vcvt.s32.f32 %v8438
    %v8695 = vcvt.s32.f32 %v8439
    %v8696 = vcvt.s32.f32 %v8440
    %v8697 = vcvt.s32.f32 %v8441
    %v8698 = vcvt.s32.f32 %v8442
    %v8699 = vcvt.s32.f32 %v8443
    %v8700 = vcvt.s32.f32 %v8444
    %v8701 = vcvt.s32.f32 %v8445
    %v8702 = vcvt.s32.f32 %v8446
    %v8703 = vcvt.s32.f32 %v8447
    %v8704 = vcvt.s32.f32 %v8448
    %v8705 = vcvt.s32.f32 %v8449
    %v8706 = vpack.c.bf16 %v8454, %v8450
    %v8707 = vpack.c.bf16 %v8455, %v8451
    %v8708 = vpack.c.bf16 %v8456, %v8452
    %v8709 = vpack.c.bf16 %v8457, %v8453
    %v8710 = vpack.c.bf16 %v8462, %v8458
    %v8711 = vpack.c.bf16 %v8463, %v8459
    %v8712 = vpack.c.bf16 %v8464, %v8460
    %v8713 = vpack.c.bf16 %v8465, %v8461
    %v8714 = vpack.c.bf16 %v8470, %v8466
    %v8715 = vpack.c.bf16 %v8471, %v8467
    %v8716 = vpack.c.bf16 %v8472, %v8468
    %v8717 = vpack.c.bf16 %v8473, %v8469
    %v8718 = vpack.c.bf16 %v8478, %v8474
    %v8719 = vpack.c.bf16 %v8479, %v8475
    %v8720 = vpack.c.bf16 %v8480, %v8476
    %v8721 = vpack.c.bf16 %v8481, %v8477
    %v8722 = vpack.c.bf16 %v8486, %v8482
    %v8723 = vpack.c.bf16 %v8487, %v8483
    %v8724 = vpack.c.bf16 %v8488, %v8484
    %v8725 = vpack.c.bf16 %v8489, %v8485
    %v8726 = vpack.c.bf16 %v8494, %v8490
    %v8727 = vpack.c.bf16 %v8495, %v8491
    %v8728 = vpack.c.bf16 %v8496, %v8492
    %v8729 = vpack.c.bf16 %v8497, %v8493
    %v8730 = vpack.c.bf16 %v8502, %v8498
    %v8731 = vpack.c.bf16 %v8503, %v8499
    %v8732 = vpack.c.bf16 %v8504, %v8500
    %v8733 = vpack.c.bf16 %v8505, %v8501
    %v8734 = vpack.c.bf16 %v8510, %v8506
    %v8735 = vpack.c.bf16 %v8511, %v8507
    %v8736 = vpack.c.bf16 %v8512, %v8508
    %v8737 = vpack.c.bf16 %v8513, %v8509
    %v8738 = vpack.c.bf16 %v8518, %v8514
    %v8739 = vpack.c.bf16 %v8519, %v8515
    %v8740 = vpack.c.bf16 %v8520, %v8516
    %v8741 = vpack.c.bf16 %v8521, %v8517
    %v8742 = vpack.c.bf16 %v8526, %v8522
    %v8743 = vpack.c.bf16 %v8527, %v8523
    %v8744 = vpack.c.bf16 %v8528, %v8524
    %v8745 = vpack.c.bf16 %v8529, %v8525
    %v8746 = vpack.c.bf16 %v8534, %v8530
    %v8747 = vpack.c.bf16 %v8535, %v8531
    %v8748 = vpack.c.bf16 %v8536, %v8532
    %v8749 = vpack.c.bf16 %v8537, %v8533
    %v8750 = vpack.c.bf16 %v8542, %v8538
    %v8751 = vpack.c.bf16 %v8543, %v8539
    %v8752 = vpack.c.bf16 %v8544, %v8540
    %v8753 = vpack.c.bf16 %v8545, %v8541
    %v8754 = vpack.c.bf16 %v8550, %v8546
    %v8755 = vpack.c.bf16 %v8551, %v8547
    %v8756 = vpack.c.bf16 %v8552, %v8548
    %v8757 = vpack.c.bf16 %v8553, %v8549
    %v8758 = vpack.c.bf16 %v8558, %v8554
    %v8759 = vpack.c.bf16 %v8559, %v8555
    %v8760 = vpack.c.bf16 %v8560, %v8556
    %v8761 = vpack.c.bf16 %v8561, %v8557
    %v8762 = vpack.c.bf16 %v8566, %v8562
    %v8763 = vpack.c.bf16 %v8567, %v8563
    %v8764 = vpack.c.bf16 %v8568, %v8564
    %v8765 = vpack.c.bf16 %v8569, %v8565
    %v8766 = vpack.c.bf16 %v8574, %v8570
    %v8767 = vpack.c.bf16 %v8575, %v8571
    %v8768 = vpack.c.bf16 %v8576, %v8572
    %v8769 = vpack.c.bf16 %v8577, %v8573
    %v8770 = vpack.c.bf16 %v8582, %v8578
    %v8771 = vpack.c.bf16 %v8583, %v8579
    %v8772 = vpack.c.bf16 %v8584, %v8580
    %v8773 = vpack.c.bf16 %v8585, %v8581
    %v8774 = vpack.c.bf16 %v8590, %v8586
    %v8775 = vpack.c.bf16 %v8591, %v8587
    %v8776 = vpack.c.bf16 %v8592, %v8588
    %v8777 = vpack.c.bf16 %v8593, %v8589
    %v8778 = vpack.c.bf16 %v8598, %v8594
    %v8779 = vpack.c.bf16 %v8599, %v8595
    %v8780 = vpack.c.bf16 %v8600, %v8596
    %v8781 = vpack.c.bf16 %v8601, %v8597
    %v8782 = vpack.c.bf16 %v8606, %v8602
    %v8783 = vpack.c.bf16 %v8607, %v8603
    %v8784 = vpack.c.bf16 %v8608, %v8604
    %v8785 = vpack.c.bf16 %v8609, %v8605
    %v8786 = vpack.c.bf16 %v8614, %v8610
    %v8787 = vpack.c.bf16 %v8615, %v8611
    %v8788 = vpack.c.bf16 %v8616, %v8612
    %v8789 = vpack.c.bf16 %v8617, %v8613
    %v8790 = vpack.c.bf16 %v8622, %v8618
    %v8791 = vpack.c.bf16 %v8623, %v8619
    %v8792 = vpack.c.bf16 %v8624, %v8620
    %v8793 = vpack.c.bf16 %v8625, %v8621
    %v8794 = vpack.c.bf16 %v8630, %v8626
    %v8795 = vpack.c.bf16 %v8631, %v8627
    %v8796 = vpack.c.bf16 %v8632, %v8628
    %v8797 = vpack.c.bf16 %v8633, %v8629
    %v8798 = vpack.c.bf16 %v8638, %v8634
    %v8799 = vpack.c.bf16 %v8639, %v8635
    %v8800 = vpack.c.bf16 %v8640, %v8636
    %v8801 = vpack.c.bf16 %v8641, %v8637
    %v8802 = vpack.c.bf16 %v8646, %v8642
    %v8803 = vpack.c.bf16 %v8647, %v8643
    %v8804 = vpack.c.bf16 %v8648, %v8644
    %v8805 = vpack.c.bf16 %v8649, %v8645
    %v8806 = vpack.c.bf16 %v8654, %v8650
    %v8807 = vpack.c.bf16 %v8655, %v8651
    %v8808 = vpack.c.bf16 %v8656, %v8652
    %v8809 = vpack.c.bf16 %v8657, %v8653
    %v8810 = vpack.c.bf16 %v8662, %v8658
    %v8811 = vpack.c.bf16 %v8663, %v8659
    %v8812 = vpack.c.bf16 %v8664, %v8660
    %v8813 = vpack.c.bf16 %v8665, %v8661
    %v8814 = vpack.c.bf16 %v8670, %v8666
    %v8815 = vpack.c.bf16 %v8671, %v8667
    %v8816 = vpack.c.bf16 %v8672, %v8668
    %v8817 = vpack.c.bf16 %v8673, %v8669
    %v8818 = vpack.c.bf16 %v8678, %v8674
    %v8819 = vpack.c.bf16 %v8679, %v8675
    %v8820 = vpack.c.bf16 %v8680, %v8676
    %v8821 = vpack.c.bf16 %v8681, %v8677
    %v8822 = vpack.c.bf16 %v8686, %v8682
    %v8823 = vpack.c.bf16 %v8687, %v8683
    %v8824 = vpack.c.bf16 %v8688, %v8684
    %v8825 = vpack.c.bf16 %v8689, %v8685
    %v8826 = vpack.c.bf16 %v8694, %v8690
    %v8827 = vpack.c.bf16 %v8695, %v8691
    %v8828 = vpack.c.bf16 %v8696, %v8692
    %v8829 = vpack.c.bf16 %v8697, %v8693
    %v8830 = vpack.c.bf16 %v8702, %v8698
    %v8831 = vpack.c.bf16 %v8703, %v8699
    %v8832 = vpack.c.bf16 %v8704, %v8700
    %v8833 = vpack.c.bf16 %v8705, %v8701
    %v8834 = vpack.c.bf16 %v8125, %v8121
    %v8835 = vpack.c.bf16 %v8126, %v8122
    %v8836 = vpack.c.bf16 %v8127, %v8123
    %v8837 = vpack.c.bf16 %v8128, %v8124
    %8838 = vmatpush.bf16.msra.mxu0 %v8734
    %8839 = vmatpush.bf16.msra.mxu0 %v8730
    %8840 = vmatpush.bf16.msra.mxu0 %v8726
    %8841 = vmatpush.bf16.msra.mxu0 %v8722
    %8842 = vmatpush.bf16.msra.mxu0 %v8718
    %8843 = vmatpush.bf16.msra.mxu0 %v8714
    %8844 = vmatpush.bf16.msra.mxu0 %v8710
    %8845 = vmatpush.bf16.msra.mxu0 %v8706
    %8846 = vmatmul.bf16.gmra.mxu0 %v8834
    %v8847 = vpop.f32.mrf.mxu0
    %v8848 = vadd.f32 0.0, %v8847
    %v8849 = vpop.f32.mrf.mxu0
    %v8850 = vadd.f32 0.0, %v8849
    %8851 = vdwg.mxu0
    %8852 = vmatpush.bf16.msra.mxu0 %v8766
    %8853 = vmatpush.bf16.msra.mxu0 %v8762
    %8854 = vmatpush.bf16.msra.mxu0 %v8758
    %8855 = vmatpush.bf16.msra.mxu0 %v8754
    %8856 = vmatpush.bf16.msra.mxu0 %v8750
    %8857 = vmatpush.bf16.msra.mxu0 %v8746
    %8858 = vmatpush.bf16.msra.mxu0 %v8742
    %8859 = vmatpush.bf16.msra.mxu0 %v8738
    %8860 = vmatmul.bf16.gmra.mxu0 %v8835
    %v8861 = vpop.f32.mrf.mxu0
    %v8862 = vadd.f32 %v8848, %v8861
    %v8863 = vpop.f32.mrf.mxu0
    %v8864 = vadd.f32 %v8850, %v8863
    %8865 = vdwg.mxu0
    %8866 = vmatpush.bf16.msra.mxu0 %v8798
    %8867 = vmatpush.bf16.msra.mxu0 %v8794
    %8868 = vmatpush.bf16.msra.mxu0 %v8790
    %8869 = vmatpush.bf16.msra.mxu0 %v8786
    %8870 = vmatpush.bf16.msra.mxu0 %v8782
    %8871 = vmatpush.bf16.msra.mxu0 %v8778
    %8872 = vmatpush.bf16.msra.mxu0 %v8774
    %8873 = vmatpush.bf16.msra.mxu0 %v8770
    %8874 = vmatmul.bf16.gmra.mxu0 %v8836
    %v8875 = vpop.f32.mrf.mxu0
    %v8876 = vadd.f32 %v8862, %v8875
    %v8877 = vpop.f32.mrf.mxu0
    %v8878 = vadd.f32 %v8864, %v8877
    %8879 = vdwg.mxu0
    %8880 = vmatpush.bf16.msra.mxu0 %v8830
    %8881 = vmatpush.bf16.msra.mxu0 %v8826
    %8882 = vmatpush.bf16.msra.mxu0 %v8822
    %8883 = vmatpush.bf16.msra.mxu0 %v8818
    %8884 = vmatpush.bf16.msra.mxu0 %v8814
    %8885 = vmatpush.bf16.msra.mxu0 %v8810
    %8886 = vmatpush.bf16.msra.mxu0 %v8806
    %8887 = vmatpush.bf16.msra.mxu0 %v8802
    %8888 = vmatmul.bf16.gmra.mxu0 %v8837
    %v8889 = vpop.f32.mrf.mxu0
    %v8890 = vadd.f32 %v8876, %v8889
    %v8891 = vpop.f32.mrf.mxu0
    %v8892 = vadd.f32 %v8878, %v8891
    %8893 = vdwg.mxu0
    %8894 = vmatpush.bf16.msra.mxu0 %v8735
    %8895 = vmatpush.bf16.msra.mxu0 %v8731
    %8896 = vmatpush.bf16.msra.mxu0 %v8727
    %8897 = vmatpush.bf16.msra.mxu0 %v8723
    %8898 = vmatpush.bf16.msra.mxu0 %v8719
    %8899 = vmatpush.bf16.msra.mxu0 %v8715
    %8900 = vmatpush.bf16.msra.mxu0 %v8711
    %8901 = vmatpush.bf16.msra.mxu0 %v8707
    %8902 = vmatmul.bf16.gmra.mxu0 %v8834
    %v8903 = vpop.f32.mrf.mxu0
    %v8904 = vadd.f32 0.0, %v8903
    %v8905 = vpop.f32.mrf.mxu0
    %v8906 = vadd.f32 0.0, %v8905
    %8907 = vdwg.mxu0
    %8908 = vmatpush.bf16.msra.mxu0 %v8767
    %8909 = vmatpush.bf16.msra.mxu0 %v8763
    %8910 = vmatpush.bf16.msra.mxu0 %v8759
    %8911 = vmatpush.bf16.msra.mxu0 %v8755
    %8912 = vmatpush.bf16.msra.mxu0 %v8751
    %8913 = vmatpush.bf16.msra.mxu0 %v8747
    %8914 = vmatpush.bf16.msra.mxu0 %v8743
    %8915 = vmatpush.bf16.msra.mxu0 %v8739
    %8916 = vmatmul.bf16.gmra.mxu0 %v8835
    %v8917 = vpop.f32.mrf.mxu0
    %v8918 = vadd.f32 %v8904, %v8917
    %v8919 = vpop.f32.mrf.mxu0
    %v8920 = vadd.f32 %v8906, %v8919
    %8921 = vdwg.mxu0
    %8922 = vmatpush.bf16.msra.mxu0 %v8799
    %8923 = vmatpush.bf16.msra.mxu0 %v8795
    %8924 = vmatpush.bf16.msra.mxu0 %v8791
    %8925 = vmatpush.bf16.msra.mxu0 %v8787
    %8926 = vmatpush.bf16.msra.mxu0 %v8783
    %8927 = vmatpush.bf16.msra.mxu0 %v8779
    %8928 = vmatpush.bf16.msra.mxu0 %v8775
    %8929 = vmatpush.bf16.msra.mxu0 %v8771
    %8930 = vmatmul.bf16.gmra.mxu0 %v8836
    %v8931 = vpop.f32.mrf.mxu0
    %v8932 = vadd.f32 %v8918, %v8931
    %v8933 = vpop.f32.mrf.mxu0
    %v8934 = vadd.f32 %v8920, %v8933
    %8935 = vdwg.mxu0
    %8936 = vmatpush.bf16.msra.mxu0 %v8831
    %8937 = vmatpush.bf16.msra.mxu0 %v8827
    %8938 = vmatpush.bf16.msra.mxu0 %v8823
    %8939 = vmatpush.bf16.msra.mxu0 %v8819
    %8940 = vmatpush.bf16.msra.mxu0 %v8815
    %8941 = vmatpush.bf16.msra.mxu0 %v8811
    %8942 = vmatpush.bf16.msra.mxu0 %v8807
    %8943 = vmatpush.bf16.msra.mxu0 %v8803
    %8944 = vmatmul.bf16.gmra.mxu0 %v8837
    %v8945 = vpop.f32.mrf.mxu0
    %v8946 = vadd.f32 %v8932, %v8945
    %v8947 = vpop.f32.mrf.mxu0
    %v8948 = vadd.f32 %v8934, %v8947
    %8949 = vdwg.mxu0
    %8950 = vmatpush.bf16.msra.mxu0 %v8736
    %8951 = vmatpush.bf16.msra.mxu0 %v8732
    %8952 = vmatpush.bf16.msra.mxu0 %v8728
    %8953 = vmatpush.bf16.msra.mxu0 %v8724
    %8954 = vmatpush.bf16.msra.mxu0 %v8720
    %8955 = vmatpush.bf16.msra.mxu0 %v8716
    %8956 = vmatpush.bf16.msra.mxu0 %v8712
    %8957 = vmatpush.bf16.msra.mxu0 %v8708
    %8958 = vmatmul.bf16.gmra.mxu0 %v8834
    %v8959 = vpop.f32.mrf.mxu0
    %v8960 = vadd.f32 0.0, %v8959
    %v8961 = vpop.f32.mrf.mxu0
    %v8962 = vadd.f32 0.0, %v8961
    %8963 = vdwg.mxu0
    %8964 = vmatpush.bf16.msra.mxu0 %v8768
    %8965 = vmatpush.bf16.msra.mxu0 %v8764
    %8966 = vmatpush.bf16.msra.mxu0 %v8760
    %8967 = vmatpush.bf16.msra.mxu0 %v8756
    %8968 = vmatpush.bf16.msra.mxu0 %v8752
    %8969 = vmatpush.bf16.msra.mxu0 %v8748
    %8970 = vmatpush.bf16.msra.mxu0 %v8744
    %8971 = vmatpush.bf16.msra.mxu0 %v8740
    %8972 = vmatmul.bf16.gmra.mxu0 %v8835
    %v8973 = vpop.f32.mrf.mxu0
    %v8974 = vadd.f32 %v8960, %v8973
    %v8975 = vpop.f32.mrf.mxu0
    %v8976 = vadd.f32 %v8962, %v8975
    %8977 = vdwg.mxu0
    %8978 = vmatpush.bf16.msra.mxu0 %v8800
    %8979 = vmatpush.bf16.msra.mxu0 %v8796
    %8980 = vmatpush.bf16.msra.mxu0 %v8792
    %8981 = vmatpush.bf16.msra.mxu0 %v8788
    %8982 = vmatpush.bf16.msra.mxu0 %v8784
    %8983 = vmatpush.bf16.msra.mxu0 %v8780
    %8984 = vmatpush.bf16.msra.mxu0 %v8776
    %8985 = vmatpush.bf16.msra.mxu0 %v8772
    %8986 = vmatmul.bf16.gmra.mxu0 %v8836
    %v8987 = vpop.f32.mrf.mxu0
    %v8988 = vadd.f32 %v8974, %v8987
    %v8989 = vpop.f32.mrf.mxu0
    %v8990 = vadd.f32 %v8976, %v8989
    %8991 = vdwg.mxu0
    %8992 = vmatpush.bf16.msra.mxu0 %v8832
    %8993 = vmatpush.bf16.msra.mxu0 %v8828
    %8994 = vmatpush.bf16.msra.mxu0 %v8824
    %8995 = vmatpush.bf16.msra.mxu0 %v8820
    %8996 = vmatpush.bf16.msra.mxu0 %v8816
    %8997 = vmatpush.bf16.msra.mxu0 %v8812
    %8998 = vmatpush.bf16.msra.mxu0 %v8808
    %8999 = vmatpush.bf16.msra.mxu0 %v8804
    %9000 = vmatmul.bf16.gmra.mxu0 %v8837
    %v9001 = vpop.f32.mrf.mxu0
    %v9002 = vadd.f32 %v8988, %v9001
    %v9003 = vpop.f32.mrf.mxu0
    %v9004 = vadd.f32 %v8990, %v9003
    %9005 = vdwg.mxu0
    %9006 = vmatpush.bf16.msra.mxu0 %v8737
    %9007 = vmatpush.bf16.msra.mxu0 %v8733
    %9008 = vmatpush.bf16.msra.mxu0 %v8729
    %9009 = vmatpush.bf16.msra.mxu0 %v8725
    %9010 = vmatpush.bf16.msra.mxu0 %v8721
    %9011 = vmatpush.bf16.msra.mxu0 %v8717
    %9012 = vmatpush.bf16.msra.mxu0 %v8713
    %9013 = vmatpush.bf16.msra.mxu0 %v8709
    %9014 = vmatmul.bf16.gmra.mxu0 %v8834
    %v9015 = vpop.f32.mrf.mxu0
    %v9016 = vadd.f32 0.0, %v9015
    %v9017 = vpop.f32.mrf.mxu0
    %v9018 = vadd.f32 0.0, %v9017
    %9019 = vdwg.mxu0
    %9020 = vmatpush.bf16.msra.mxu0 %v8769
    %9021 = vmatpush.bf16.msra.mxu0 %v8765
    %9022 = vmatpush.bf16.msra.mxu0 %v8761
    %9023 = vmatpush.bf16.msra.mxu0 %v8757
    %9024 = vmatpush.bf16.msra.mxu0 %v8753
    %9025 = vmatpush.bf16.msra.mxu0 %v8749
    %9026 = vmatpush.bf16.msra.mxu0 %v8745
    %9027 = vmatpush.bf16.msra.mxu0 %v8741
    %9028 = vmatmul.bf16.gmra.mxu0 %v8835
    %v9029 = vpop.f32.mrf.mxu0
    %v9030 = vadd.f32 %v9016, %v9029
    %v9031 = vpop.f32.mrf.mxu0
    %v9032 = vadd.f32 %v9018, %v9031
    %9033 = vdwg.mxu0
    %9034 = vmatpush.bf16.msra.mxu0 %v8801
    %9035 = vmatpush.bf16.msra.mxu0 %v8797
    %9036 = vmatpush.bf16.msra.mxu0 %v8793
    %9037 = vmatpush.bf16.msra.mxu0 %v8789
    %9038 = vmatpush.bf16.msra.mxu0 %v8785
    %9039 = vmatpush.bf16.msra.mxu0 %v8781
    %9040 = vmatpush.bf16.msra.mxu0 %v8777
    %9041 = vmatpush.bf16.msra.mxu0 %v8773
    %9042 = vmatmul.bf16.gmra.mxu0 %v8836
    %v9043 = vpop.f32.mrf.mxu0
    %v9044 = vadd.f32 %v9030, %v9043
    %v9045 = vpop.f32.mrf.mxu0
    %v9046 = vadd.f32 %v9032, %v9045
    %9047 = vdwg.mxu0
    %9048 = vmatpush.bf16.msra.mxu0 %v8833
    %9049 = vmatpush.bf16.msra.mxu0 %v8829
    %9050 = vmatpush.bf16.msra.mxu0 %v8825
    %9051 = vmatpush.bf16.msra.mxu0 %v8821
    %9052 = vmatpush.bf16.msra.mxu0 %v8817
    %9053 = vmatpush.bf16.msra.mxu0 %v8813
    %9054 = vmatpush.bf16.msra.mxu0 %v8809
    %9055 = vmatpush.bf16.msra.mxu0 %v8805
    %9056 = vmatmul.bf16.gmra.mxu0 %v8837
    %v9057 = vpop.f32.mrf.mxu0
    %v9058 = vadd.f32 %v9044, %v9057
    %v9059 = vpop.f32.mrf.mxu0
    %v9060 = vadd.f32 %v9046, %v9059
    %9061 = vdwg.mxu0
    %s9062 = scalar_lea.vmem [#allocation10], 32
    %v9063 = vld [vmem:[%s9062] sm:$0xf]
    %v9065 = vperm.slane %v9063, 0
    %v9066 = vperm.slane %v9063, 1
    %v9067 = vperm.slane %v9063, 2
    %v9068 = vperm.slane %v9063, 3
    %v9073 = vmul.f32 %v8890, %v9065
    %v9074 = vmul.f32 %v8946, %v9066
    %v9075 = vmul.f32 %v9002, %v9067
    %v9076 = vmul.f32 %v9058, %v9068
    %v9077 = vmul.f32 %v8892, %v9065
    %v9078 = vmul.f32 %v8948, %v9066
    %v9079 = vmul.f32 %v9004, %v9067
    %v9080 = vmul.f32 %v9060, %v9068
    %s9081 = scalar_lea.vmem [#allocation11], 32
    %v9082 = vld [vmem:[%s9081] sm:$0xf]
    %v9084 = vperm.slane %v9082, 0
    %v9085 = vperm.slane %v9082, 1
    %v9086 = vperm.slane %v9082, 2
    %v9087 = vperm.slane %v9082, 3
    %v9092 = vadd.f32 %v9073, %v9084
    %v9093 = vadd.f32 %v9074, %v9085
    %v9094 = vadd.f32 %v9075, %v9086
    %v9095 = vadd.f32 %v9076, %v9087
    %v9096 = vadd.f32 %v9077, %v9084
    %v9097 = vadd.f32 %v9078, %v9085
    %v9098 = vadd.f32 %v9079, %v9086
    %v9099 = vadd.f32 %v9080, %v9087
    %v9100 = vmax.f32 %v9092, 0.0
    %v9101 = vmax.f32 %v9093, 0.0
    %v9102 = vmax.f32 %v9094, 0.0
    %v9103 = vmax.f32 %v9095, 0.0
    %v9104 = vmax.f32 %v9096, 0.0
    %v9105 = vmax.f32 %v9097, 0.0
    %v9106 = vmax.f32 %v9098, 0.0
    %v9107 = vmax.f32 %v9099, 0.0
    %v9108 = vpack.c.bf16 %v9104, %v9100
    %v9109 = vpack.c.bf16 %v9105, %v9101
    %v9110 = vpack.c.bf16 %v9106, %v9102
    %v9111 = vpack.c.bf16 %v9107, %v9103
    %v9112 = vld [vmem:[%s6] sm:$0xf]
    %v9113 = vld [vmem:[%s6 + $0x4] sm:$0xf]
    %v9114 = vld [vmem:[%s6 + $0x8] sm:$0xf]
    %v9115 = vld [vmem:[%s6 + $0xc] sm:$0xf]
    %v9116 = vld [vmem:[%s6 + $0x10] sm:$0xf]
    %v9117 = vld [vmem:[%s6 + $0x14] sm:$0xf]
    %v9118 = vld [vmem:[%s6 + $0x18] sm:$0xf]
    %v9119 = vld [vmem:[%s6 + $0x1c] sm:$0xf]
    %v9120 = vld [vmem:[%s6 + $0x20] sm:$0xf]
    %v9121 = vld [vmem:[%s6 + $0x24] sm:$0xf]
    %v9122 = vld [vmem:[%s6 + $0x28] sm:$0xf]
    %v9123 = vld [vmem:[%s6 + $0x2c] sm:$0xf]
    %v9124 = vld [vmem:[%s6 + $0x30] sm:$0xf]
    %v9125 = vld [vmem:[%s6 + $0x34] sm:$0xf]
    %v9126 = vld [vmem:[%s6 + $0x38] sm:$0xf]
    %v9127 = vld [vmem:[%s6 + $0x3c] sm:$0xf]
    %v9128 = vld [vmem:[%s6 + $0x40] sm:$0xf]
    %v9129 = vld [vmem:[%s6 + $0x44] sm:$0xf]
    %v9130 = vld [vmem:[%s6 + $0x48] sm:$0xf]
    %v9131 = vld [vmem:[%s6 + $0x4c] sm:$0xf]
    %v9132 = vld [vmem:[%s6 + $0x50] sm:$0xf]
    %v9133 = vld [vmem:[%s6 + $0x54] sm:$0xf]
    %v9134 = vld [vmem:[%s6 + $0x58] sm:$0xf]
    %v9135 = vld [vmem:[%s6 + $0x5c] sm:$0xf]
    %v9136 = vld [vmem:[%s6 + $0x60] sm:$0xf]
    %v9137 = vld [vmem:[%s6 + $0x64] sm:$0xf]
    %v9138 = vld [vmem:[%s6 + $0x68] sm:$0xf]
    %v9139 = vld [vmem:[%s6 + $0x6c] sm:$0xf]
    %v9140 = vld [vmem:[%s6 + $0x70] sm:$0xf]
    %v9141 = vld [vmem:[%s6 + $0x74] sm:$0xf]
    %v9142 = vld [vmem:[%s6 + $0x78] sm:$0xf]
    %v9143 = vld [vmem:[%s6 + $0x7c] sm:$0xf]
    %v9144 = vld [vmem:[%s6 + $0x80] sm:$0xf]
    %v9145 = vld [vmem:[%s6 + $0x84] sm:$0xf]
    %v9146 = vld [vmem:[%s6 + $0x88] sm:$0xf]
    %v9147 = vld [vmem:[%s6 + $0x8c] sm:$0xf]
    %v9148 = vld [vmem:[%s6 + $0x90] sm:$0xf]
    %v9149 = vld [vmem:[%s6 + $0x94] sm:$0xf]
    %v9150 = vld [vmem:[%s6 + $0x98] sm:$0xf]
    %v9151 = vld [vmem:[%s6 + $0x9c] sm:$0xf]
    %v9152 = vld [vmem:[%s6 + $0xa0] sm:$0xf]
    %v9153 = vld [vmem:[%s6 + $0xa4] sm:$0xf]
    %v9154 = vld [vmem:[%s6 + $0xa8] sm:$0xf]
    %v9155 = vld [vmem:[%s6 + $0xac] sm:$0xf]
    %v9156 = vld [vmem:[%s6 + $0xb0] sm:$0xf]
    %v9157 = vld [vmem:[%s6 + $0xb4] sm:$0xf]
    %v9158 = vld [vmem:[%s6 + $0xb8] sm:$0xf]
    %v9159 = vld [vmem:[%s6 + $0xbc] sm:$0xf]
    %v9160 = vld [vmem:[%s6 + $0xc0] sm:$0xf]
    %v9161 = vld [vmem:[%s6 + $0xc4] sm:$0xf]
    %v9162 = vld [vmem:[%s6 + $0xc8] sm:$0xf]
    %v9163 = vld [vmem:[%s6 + $0xcc] sm:$0xf]
    %v9164 = vld [vmem:[%s6 + $0xd0] sm:$0xf]
    %v9165 = vld [vmem:[%s6 + $0xd4] sm:$0xf]
    %v9166 = vld [vmem:[%s6 + $0xd8] sm:$0xf]
    %v9167 = vld [vmem:[%s6 + $0xdc] sm:$0xf]
    %v9168 = vld [vmem:[%s6 + $0xe0] sm:$0xf]
    %v9169 = vld [vmem:[%s6 + $0xe4] sm:$0xf]
    %v9170 = vld [vmem:[%s6 + $0xe8] sm:$0xf]
    %v9171 = vld [vmem:[%s6 + $0xec] sm:$0xf]
    %v9172 = vld [vmem:[%s6 + $0xf0] sm:$0xf]
    %v9173 = vld [vmem:[%s6 + $0xf4] sm:$0xf]
    %v9174 = vld [vmem:[%s6 + $0xf8] sm:$0xf]
    %v9175 = vld [vmem:[%s6 + $0xfc] sm:$0xf]
    %v9176 = vld [vmem:[#allocation13] sm:$0x1]
    %v9178 = vperm.slane %v9176, 0
    %v9244 = vunpack.c.l.b16 %v9112
    %v9245 = vunpack.c.l.b16 %v9113
    %v9246 = vunpack.c.l.b16 %v9114
    %v9247 = vunpack.c.l.b16 %v9115
    %v9248 = vunpack.c.l.b16 %v9116
    %v9249 = vunpack.c.l.b16 %v9117
    %v9250 = vunpack.c.l.b16 %v9118
    %v9251 = vunpack.c.l.b16 %v9119
    %v9252 = vunpack.c.l.b16 %v9120
    %v9253 = vunpack.c.l.b16 %v9121
    %v9254 = vunpack.c.l.b16 %v9122
    %v9255 = vunpack.c.l.b16 %v9123
    %v9256 = vunpack.c.l.b16 %v9124
    %v9257 = vunpack.c.l.b16 %v9125
    %v9258 = vunpack.c.l.b16 %v9126
    %v9259 = vunpack.c.l.b16 %v9127
    %v9260 = vunpack.c.l.b16 %v9128
    %v9261 = vunpack.c.l.b16 %v9129
    %v9262 = vunpack.c.l.b16 %v9130
    %v9263 = vunpack.c.l.b16 %v9131
    %v9264 = vunpack.c.l.b16 %v9132
    %v9265 = vunpack.c.l.b16 %v9133
    %v9266 = vunpack.c.l.b16 %v9134
    %v9267 = vunpack.c.l.b16 %v9135
    %v9268 = vunpack.c.l.b16 %v9136
    %v9269 = vunpack.c.l.b16 %v9137
    %v9270 = vunpack.c.l.b16 %v9138
    %v9271 = vunpack.c.l.b16 %v9139
    %v9272 = vunpack.c.l.b16 %v9140
    %v9273 = vunpack.c.l.b16 %v9141
    %v9274 = vunpack.c.l.b16 %v9142
    %v9275 = vunpack.c.l.b16 %v9143
    %v9276 = vunpack.c.l.b16 %v9144
    %v9277 = vunpack.c.l.b16 %v9145
    %v9278 = vunpack.c.l.b16 %v9146
    %v9279 = vunpack.c.l.b16 %v9147
    %v9280 = vunpack.c.l.b16 %v9148
    %v9281 = vunpack.c.l.b16 %v9149
    %v9282 = vunpack.c.l.b16 %v9150
    %v9283 = vunpack.c.l.b16 %v9151
    %v9284 = vunpack.c.l.b16 %v9152
    %v9285 = vunpack.c.l.b16 %v9153
    %v9286 = vunpack.c.l.b16 %v9154
    %v9287 = vunpack.c.l.b16 %v9155
    %v9288 = vunpack.c.l.b16 %v9156
    %v9289 = vunpack.c.l.b16 %v9157
    %v9290 = vunpack.c.l.b16 %v9158
    %v9291 = vunpack.c.l.b16 %v9159
    %v9292 = vunpack.c.l.b16 %v9160
    %v9293 = vunpack.c.l.b16 %v9161
    %v9294 = vunpack.c.l.b16 %v9162
    %v9295 = vunpack.c.l.b16 %v9163
    %v9296 = vunpack.c.l.b16 %v9164
    %v9297 = vunpack.c.l.b16 %v9165
    %v9298 = vunpack.c.l.b16 %v9166
    %v9299 = vunpack.c.l.b16 %v9167
    %v9300 = vunpack.c.l.b16 %v9168
    %v9301 = vunpack.c.l.b16 %v9169
    %v9302 = vunpack.c.l.b16 %v9170
    %v9303 = vunpack.c.l.b16 %v9171
    %v9304 = vunpack.c.l.b16 %v9172
    %v9305 = vunpack.c.l.b16 %v9173
    %v9306 = vunpack.c.l.b16 %v9174
    %v9307 = vunpack.c.l.b16 %v9175
    %v9308 = vpack.c.b16 %v9245, %v9244
    %v9309 = vpack.c.b16 %v9247, %v9246
    %v9310 = vpack.c.b16 %v9249, %v9248
    %v9311 = vpack.c.b16 %v9251, %v9250
    %v9312 = vpack.c.b16 %v9253, %v9252
    %v9313 = vpack.c.b16 %v9255, %v9254
    %v9314 = vpack.c.b16 %v9257, %v9256
    %v9315 = vpack.c.b16 %v9259, %v9258
    %v9316 = vpack.c.b16 %v9261, %v9260
    %v9317 = vpack.c.b16 %v9263, %v9262
    %v9318 = vpack.c.b16 %v9265, %v9264
    %v9319 = vpack.c.b16 %v9267, %v9266
    %v9320 = vpack.c.b16 %v9269, %v9268
    %v9321 = vpack.c.b16 %v9271, %v9270
    %v9322 = vpack.c.b16 %v9273, %v9272
    %v9323 = vpack.c.b16 %v9275, %v9274
    %v9324 = vpack.c.b16 %v9277, %v9276
    %v9325 = vpack.c.b16 %v9279, %v9278
    %v9326 = vpack.c.b16 %v9281, %v9280
    %v9327 = vpack.c.b16 %v9283, %v9282
    %v9328 = vpack.c.b16 %v9285, %v9284
    %v9329 = vpack.c.b16 %v9287, %v9286
    %v9330 = vpack.c.b16 %v9289, %v9288
    %v9331 = vpack.c.b16 %v9291, %v9290
    %v9332 = vpack.c.b16 %v9293, %v9292
    %v9333 = vpack.c.b16 %v9295, %v9294
    %v9334 = vpack.c.b16 %v9297, %v9296
    %v9335 = vpack.c.b16 %v9299, %v9298
    %v9336 = vpack.c.b16 %v9301, %v9300
    %v9337 = vpack.c.b16 %v9303, %v9302
    %v9338 = vpack.c.b16 %v9305, %v9304
    %v9339 = vpack.c.b16 %v9307, %v9306
    %9372 = vmatpush.bf16.msra.mxu0 %v9315
    %9373 = vmatpush.bf16.msra.mxu0 %v9314
    %9374 = vmatpush.bf16.msra.mxu0 %v9313
    %9375 = vmatpush.bf16.msra.mxu0 %v9312
    %9376 = vmatpush.bf16.msra.mxu0 %v9311
    %9377 = vmatpush.bf16.msra.mxu0 %v9310
    %9378 = vmatpush.bf16.msra.mxu0 %v9309
    %9379 = vmatpush.bf16.msra.mxu0 %v9308
    %9380 = vmatmul.bf16.gmra.mxu0 %v9108
    %v9381 = vpop.f32.mrf.mxu0
    %v9382 = vadd.f32 %v9178, %v9381
    %v9383 = vpop.f32.mrf.mxu0
    %v9384 = vadd.f32 %v9178, %v9383
    %9385 = vdwg.mxu0
    %9386 = vmatpush.bf16.msra.mxu0 %v9323
    %9387 = vmatpush.bf16.msra.mxu0 %v9322
    %9388 = vmatpush.bf16.msra.mxu0 %v9321
    %9389 = vmatpush.bf16.msra.mxu0 %v9320
    %9390 = vmatpush.bf16.msra.mxu0 %v9319
    %9391 = vmatpush.bf16.msra.mxu0 %v9318
    %9392 = vmatpush.bf16.msra.mxu0 %v9317
    %9393 = vmatpush.bf16.msra.mxu0 %v9316
    %9394 = vmatmul.bf16.gmra.mxu0 %v9109
    %v9395 = vpop.f32.mrf.mxu0
    %v9396 = vadd.f32 %v9382, %v9395
    %v9397 = vpop.f32.mrf.mxu0
    %v9398 = vadd.f32 %v9384, %v9397
    %9399 = vdwg.mxu0
    %9400 = vmatpush.bf16.msra.mxu0 %v9331
    %9401 = vmatpush.bf16.msra.mxu0 %v9330
    %9402 = vmatpush.bf16.msra.mxu0 %v9329
    %9403 = vmatpush.bf16.msra.mxu0 %v9328
    %9404 = vmatpush.bf16.msra.mxu0 %v9327
    %9405 = vmatpush.bf16.msra.mxu0 %v9326
    %9406 = vmatpush.bf16.msra.mxu0 %v9325
    %9407 = vmatpush.bf16.msra.mxu0 %v9324
    %9408 = vmatmul.bf16.gmra.mxu0 %v9110
    %v9409 = vpop.f32.mrf.mxu0
    %v9410 = vadd.f32 %v9396, %v9409
    %v9411 = vpop.f32.mrf.mxu0
    %v9412 = vadd.f32 %v9398, %v9411
    %9413 = vdwg.mxu0
    %9414 = vmatpush.bf16.msra.mxu0 %v9339
    %9415 = vmatpush.bf16.msra.mxu0 %v9338
    %9416 = vmatpush.bf16.msra.mxu0 %v9337
    %9417 = vmatpush.bf16.msra.mxu0 %v9336
    %9418 = vmatpush.bf16.msra.mxu0 %v9335
    %9419 = vmatpush.bf16.msra.mxu0 %v9334
    %9420 = vmatpush.bf16.msra.mxu0 %v9333
    %9421 = vmatpush.bf16.msra.mxu0 %v9332
    %9422 = vmatmul.bf16.gmra.mxu0 %v9111
    %v9423 = vpop.f32.mrf.mxu0
    %v9424 = vadd.f32 %v9410, %v9423
    %v9425 = vpop.f32.mrf.mxu0
    %v9426 = vadd.f32 %v9412, %v9425
    %9427 = vdwg.mxu0
    %v9428 = vmax.f32 %v9424, 0.0
    %v9429 = vmax.f32 %v9426, 0.0
    %v9430 = vpack.c.bf16 %v9429, %v9428
    %v9431 = vld [vmem:[#allocation14] sm:$0xf]
    %v9432 = vld [vmem:[#allocation14 + $0x4] sm:$0xf]
    %v9433 = vld [vmem:[#allocation14 + $0x8] sm:$0xf]
    %v9434 = vld [vmem:[#allocation14 + $0xc] sm:$0xf]
    %v9435 = vld [vmem:[#allocation16] sm:$0x1]
    %v9437 = vperm.slane %v9435, 0
    %v9443 = vunpack.c.l.b16 %v9431
    %v9444 = vunpack.c.l.b16 %v9432
    %v9445 = vunpack.c.l.b16 %v9433
    %v9446 = vunpack.c.l.b16 %v9434
    %v9447 = vpack.c.b16 %v9444, %v9443
    %v9448 = vpack.c.b16 %v9446, %v9445
    %v9452 = vsel %vm232, %v9430, 0
    %9454 = vmatpush.bf16.msra.mxu0 0
    %9455 = vmatpush.bf16.msra.mxu0 0
    %9456 = vmatpush.bf16.msra.mxu0 0
    %9457 = vmatpush.bf16.msra.mxu0 0
    %9458 = vmatpush.bf16.msra.mxu0 0
    %9459 = vmatpush.bf16.msra.mxu0 0
    %9460 = vmatpush.bf16.msra.mxu0 %v9448
    %9461 = vmatpush.bf16.msra.mxu0 %v9447
    %9462 = vmatmul.bf16.gmra.mxu0 %v9452
    %v9463 = vpop.f32.mrf.mxu0
    %v9464 = vadd.f32 %v9437, %v9463
    %v9465 = vpop.f32.mrf.mxu0
    %v9466 = vadd.f32 %v9437, %v9465
    %9467 = vdwg.mxu0
    %9468 = vst [vmem:[#allocation17] sm:$0xff] %v9464
    %9469 = vst [vmem:[#allocation17 + $0x8] sm:$0xff] %v9466
    // Predicated region
    $region78: #{tpu_custom_call.1} parent=1 // pred_check
      _
    $region79: #{tpu_custom_call.1} parent=1 // pred_check_branch
      %9471 = sbr.rel (0) target = $region81
    $region80: #{tpu_custom_call.1} parent=1 // pred_region
      %9473 = vsyncadd [#allocation4], 0
      %s9474 = sshll.u32 [#allocation17], 4
      %s9475 = int_to_ptr.vmem [resolvable:$true] %s9474
      %s9476 = sshll.u32 %s10, 4
      %s9477 = int_to_ptr.hbm [resolvable:$true] %s9476
      %9482 = dma.vmem_to_hbm [thread:$0]  %s9475, 256, %s9477, [#allocation4], 128, 128, 8
    $region81: #{tpu_custom_call.1} parent=1 // pred_fallthru
      _
    // Predicated region
    $region82: #{tpu_custom_call.1} parent=1 // pred_check
      _
    $region83: #{tpu_custom_call.1} parent=1 // pred_check_branch
      %9484 = sbr.rel (0) target = $region85
    $region84: #{tpu_custom_call.1} parent=1 // pred_region
      %9486 = dma.done [#allocation4], 256
    $region85: #{tpu_custom_call.1} parent=1 // pred_fallthru
      _
    %9487 = vsyncpa [#allocation3], 1
    %9488 = vsyncpa [#allocation6], 1
    %9489 = vsyncpa [#allocation9], 1
    %9490 = vsyncpa [#allocation12], 1
    %9491 = vsyncpa [#allocation15], 1
    %9492 = vsyncpa [#allocation4], 1

</llo_original>
